<compile_context>
chip_gen: v7x
topology: tpu7x:2x2x1
jax: 0.10.0
libtpu: 0.0.40
codegen_flags: <defaults>
</compile_context>

<pallas_src>
import functools
import math

import numpy as np
import jax
import jax.numpy as jnp
from jax.experimental import pallas as pl
from jax.experimental.pallas import tpu as pltpu


_ROW_TILE_TARGET = 512     # output rows per grid step (multiple of up and 8)
_COL_TILE_TARGET = 2048    # output cols per grid step (multiple of up and 128)


# -----------------------------------------------------------------------------
# Pallas kernels: slanted-plane / nearest upsample of ONE map tile
# -----------------------------------------------------------------------------
def _slant_kernel(d_ref, dx_ref, dy_ref, c_ref, cdj_ref, rr_ref, o_ref):
    """Slanted-plane upsample, offsets pre-folded into the one-hot operands.

    d/dx/dy : (h, w)        one map (d already scaled by up/ts)
    c       : (w, ct)       one-hot column replication
    cdj     : (w, ct)       C * dj  (per-column x offset folded in)
    rr      : (rt, 2h)      [R | R*di] (per-row y offset folded in)
    o       : (rt, ct)      output tile
    """
    c = c_ref[...]
    z1 = (jnp.dot(d_ref[...], c, preferred_element_type=jnp.float32)
          + jnp.dot(dx_ref[...], cdj_ref[...], preferred_element_type=jnp.float32))
    z2 = jnp.dot(dy_ref[...], c, preferred_element_type=jnp.float32)
    z = jnp.concatenate([z1, z2], axis=0)                       # (2h, ct)
    o_ref[...] = jnp.dot(rr_ref[...], z, preferred_element_type=jnp.float32)


def _nearest_kernel(d_ref, c_ref, r_ref, o_ref):
    """Nearest-neighbour upsample: o = R @ (d @ C)."""
    z = jnp.dot(d_ref[...], c_ref[...], preferred_element_type=jnp.float32)
    o_ref[...] = jnp.dot(r_ref[...], z, preferred_element_type=jnp.float32)


# -----------------------------------------------------------------------------
# Host-side constant construction (hoisted, cached per (up, h, w))
# -----------------------------------------------------------------------------
@functools.lru_cache(maxsize=None)
def _plane_consts(up, h, w):
    H, W = h * up, w * up
    center = (up - 1) / 2.0
    rows = np.arange(H)
    cols = np.arange(W)
    R = (rows[:, None] // up == np.arange(h)[None, :]).astype(np.float32)   # (H, h)
    di = ((rows % up).astype(np.float32) - center)[:, None]                  # (H, 1)
    RR = np.concatenate([R, R * di], axis=1)                                 # (H, 2h)
    C = (np.arange(w)[:, None] == (cols[None, :] // up)).astype(np.float32)  # (w, W)
    dj = ((cols % up).astype(np.float32) - center)[None, :]                  # (1, W)
    C_dj = C * dj                                                            # (w, W)
    return C, C_dj, R, RR


def _choose_tile(full, up, align, target):
    """Largest divisor of `full` that is a multiple of lcm(up, align) and
    <= target; falls back to the full extent (single tile)."""
    step = up * align // math.gcd(up, align)
    if full <= target or full % step != 0:
        return full
    best = None
    t = step
    while t <= target:
        if full % t == 0:
            best = t
        t += step
    return best if best is not None else full


# -----------------------------------------------------------------------------
# Fused per-level wrappers (one pallas_call per {slant, nearest} group)
# -----------------------------------------------------------------------------
def _slant_group(entries, up):
    """entries: list of (name, d, dx, dy, ts). Returns name -> (B,1,H,W)."""
    names = [e[0] for e in entries]
    N = len(entries)
    B, _, h, w = entries[0][1].shape
    H, W = h * up, w * up

    # TODO(synk): DispUpsampleBySlantedPlane's exact disparity scaling is
    # assumed to be d * (up / ts).
    d_all = jnp.concatenate(
        [e[1].astype(jnp.float32) * (float(up) / float(e[4])) for e in entries],
        axis=1)                                                  # (B, N, h, w)
    dx_all = jnp.concatenate([e[2].astype(jnp.float32) for e in entries], axis=1)
    dy_all = jnp.concatenate([e[3].astype(jnp.float32) for e in entries], axis=1)

    C, C_dj, _R, RR = _plane_consts(up, h, w)
    rt = _choose_tile(H, up, 8, _ROW_TILE_TARGET)
    ct = _choose_tile(W, up, 128, _COL_TILE_TARGET)

    map_spec = pl.BlockSpec((None, None, h, w), lambda b, n, r, c: (b, n, 0, 0))
    col_spec = pl.BlockSpec((w, ct), lambda b, n, r, c: (0, c))
    rr_spec = pl.BlockSpec((rt, 2 * h), lambda b, n, r, c: (r, 0))
    out_spec = pl.BlockSpec((None, None, rt, ct), lambda b, n, r, c: (b, n, r, c))

    out = pl.pallas_call(
        _slant_kernel,
        out_shape=jax.ShapeDtypeStruct((B, N, H, W), jnp.float32),
        grid=(B, N, H // rt, W // ct),
        in_specs=[map_spec, map_spec, map_spec, col_spec, col_spec, rr_spec],
        out_specs=out_spec,
        compiler_params=pltpu.CompilerParams(
            dimension_semantics=("parallel", "parallel", "parallel", "parallel")),
    )(d_all, dx_all, dy_all, jnp.asarray(C), jnp.asarray(C_dj), jnp.asarray(RR))
    return {name: out[:, n:n + 1] for n, name in enumerate(names)}


def _nearest_group(entries, up):
    """entries: list of (name, d, None, None, ts). Returns name -> (B,1,H,W)."""
    names = [e[0] for e in entries]
    N = len(entries)
    B, _, h, w = entries[0][1].shape
    H, W = h * up, w * up

    d_all = jnp.concatenate([e[1].astype(jnp.float32) for e in entries], axis=1)

    C, _C_dj, R, _RR = _plane_consts(up, h, w)
    rt = _choose_tile(H, up, 8, _ROW_TILE_TARGET)
    ct = _choose_tile(W, up, 128, _COL_TILE_TARGET)

    map_spec = pl.BlockSpec((None, None, h, w), lambda b, n, r, c: (b, n, 0, 0))
    col_spec = pl.BlockSpec((w, ct), lambda b, n, r, c: (0, c))
    r_spec = pl.BlockSpec((rt, h), lambda b, n, r, c: (r, 0))
    out_spec = pl.BlockSpec((None, None, rt, ct), lambda b, n, r, c: (b, n, r, c))

    out = pl.pallas_call(
        _nearest_kernel,
        out_shape=jax.ShapeDtypeStruct((B, N, H, W), jnp.float32),
        grid=(B, N, H // rt, W // ct),
        in_specs=[map_spec, col_spec, r_spec],
        out_specs=out_spec,
        compiler_params=pltpu.CompilerParams(
            dimension_semantics=("parallel", "parallel", "parallel", "parallel")),
    )(d_all, jnp.asarray(C), jnp.asarray(R))
    return {name: out[:, n:n + 1] for n, name in enumerate(names)}


def plane_upsample_level(entries, up):
    """entries: list of (name, d, dx, dy, ts); dx/dy None => nearest upsample.
    All maps of the level are computed by (at most) two pallas_calls."""
    slant = [e for e in entries if e[2] is not None]
    nearest = [e for e in entries if e[2] is None]
    out = {}
    if slant:
        out.update(_slant_group(slant, up))
    if nearest:
        out.update(_nearest_group(nearest, up))
    return out


# -----------------------------------------------------------------------------
# Deterministic stand-ins for the unprovided sub-modules (plain JAX glue)
# -----------------------------------------------------------------------------
def _avg_pool_nchw(x, k):
    B, C, H, W = x.shape
    return x.reshape(B, C, H // k, k, W // k, k).mean(axis=(3, 5))


def _make_tile(left, right, stride):
    """Synthesize a 19-channel tile-hypothesis map at 1/stride resolution."""
    lp = _avg_pool_nchw(left, stride).mean(axis=1, keepdims=True)
    rp = _avg_pool_nchw(right, stride).mean(axis=1, keepdims=True)
    base = lp - rp
    chans = [base * (0.1 * (c + 1)) + 0.01 * c for c in range(19)]
    return jnp.concatenate(chans, axis=1).astype(jnp.float32)               # (B,19,h,w)


def _make_tile_update_tuple(tile):
    """Mimic the 15-tuple returned by TileUpdate (tile + cur/pre planes)."""
    t = tile
    sig = jax.nn.sigmoid
    return (
        t,                                   # 0: refined tile
        t[:, 0:1], t[:, 0:1] * 0.9,          # 1,2  : dx-plane d   cur/pre
        t[:, 1:2], t[:, 1:2] * 0.9,          # 3,4  : fxx          cur/pre
        t[:, 2:3], t[:, 2:3] * 0.9,          # 5,6  : fxy          cur/pre
        sig(t[:, 3:4]), sig(t[:, 4:5]),      # 7,8  : confidence   cur/pre
        t[:, 16:17], t[:, 16:17] * 0.9,      # 9,10 : dy-plane d   cur/pre
        t[:, 17:18], t[:, 17:18] * 0.9,      # 11,12: fyx          cur/pre
        t[:, 18:19], t[:, 18:19] * 0.9,      # 13,14: fyy          cur/pre
    )


def _make_init_cv_pyramid(left, right):
    cvs = []
    for s in (16, 8, 4, 2, 1):
        diff = jnp.abs(_avg_pool_nchw(left, s) - _avg_pool_nchw(right, s))
        cv = jnp.concatenate([diff * (0.5 + 0.1 * k) for k in range(3)], axis=1)
        cvs.append(cv.astype(jnp.float32))
    return cvs


def _update_level_entries(t, tag):
    """The 14 full-resolution maps derived from one TileUpdate tuple."""
    return [
        (f'fx{tag}_cur', t[1], t[3], t[5], 1), (f'fx{tag}_pre', t[2], t[4], t[6], 1),
        (f'fy{tag}_cur', t[9], t[11], t[13], 1), (f'fy{tag}_pre', t[10], t[12], t[14], 1),
        (f'fxx{tag}_cur', t[3], None, None, 1), (f'fxx{tag}_pre', t[4], None, None, 1),
        (f'fxy{tag}_cur', t[5], None, None, 1), (f'fxy{tag}_pre', t[6], None, None, 1),
        (f'conf{tag}_cur', t[7], None, None, 1), (f'conf{tag}_pre', t[8], None, None, 1),
        (f'fyx{tag}_cur', t[11], None, None, 1), (f'fyx{tag}_pre', t[12], None, None, 1),
        (f'fyy{tag}_cur', t[13], None, None, 1), (f'fyy{tag}_pre', t[14], None, None, 1),
    ]


# -----------------------------------------------------------------------------
# HITNet forward (pyramid assembly exactly as in the reference)
# -----------------------------------------------------------------------------
def _hitnet_forward_impl(left_img, right_img, flow_gt, fxx_gt, fxy_gt, fyx_gt,
                         fyy_gt, training=True):
    # TODO(synk): feature_extractor / tile_init / tile_update* internals are not
    # available; their outputs are synthesized deterministically below.
    init_cv_pyramid = _make_init_cv_pyramid(left_img, right_img)

    rt16 = _make_tile(left_img, right_img, 64)                  # (B,19,H/64,W/64)
    tu8 = _make_tile_update_tuple(_make_tile(left_img, right_img, 32))
    tu4 = _make_tile_update_tuple(_make_tile(left_img, right_img, 16))
    tu2 = _make_tile_update_tuple(_make_tile(left_img, right_img, 8))
    tu1 = _make_tile_update_tuple(_make_tile(left_img, right_img, 4))
    rt1 = tu1[0]                                                # (B,19,H/4,W/4)
    rt05 = _make_tile(left_img, right_img, 2)                   # (B,19,H/2,W/2)

    # ---- at most two fused Pallas calls per upsample factor ----
    m64 = plane_upsample_level([
        ('fx16', rt16[:, 0:1], rt16[:, 1:2], rt16[:, 2:3], 1),
        ('fy16', rt16[:, 16:17], rt16[:, 17:18], rt16[:, 18:19], 1),
        ('fxx16', rt16[:, 1:2], None, None, 1),
        ('fxy16', rt16[:, 2:3], None, None, 1),
        ('fyx16', rt16[:, 17:18], None, None, 1),
        ('fyy16', rt16[:, 18:19], None, None, 1),
    ], up=64)
    m32 = plane_upsample_level(_update_level_entries(tu8, '8'), up=32)
    m16 = plane_upsample_level(_update_level_entries(tu4, '4'), up=16)
    m8 = plane_upsample_level(_update_level_entries(tu2, '2'), up=8)
    m4 = plane_upsample_level(
        _update_level_entries(tu1, '1t') + [
            ('fx1', rt1[:, 0:1], rt1[:, 1:2], rt1[:, 2:3], 1),
            ('fy1', rt1[:, 16:17], rt1[:, 17:18], rt1[:, 18:19], 1),
            ('fxx1', rt1[:, 1:2], None, None, 1),
            ('fxy1', rt1[:, 2:3], None, None, 1),
            ('fyx1', rt1[:, 17:18], None, None, 1),
            ('fyy1', rt1[:, 18:19], None, None, 1),
        ], up=4)
    m2 = plane_upsample_level([
        # TODO(synk): FinalTileUpdate == DispUpsampleBySlantedPlane(2, 2) applied
        # to the 1/2-resolution tile planes (stand-in, source not provided).
        ('final_fx', rt05[:, 0:1], rt05[:, 1:2], rt05[:, 2:3], 2),
        ('final_fy', rt05[:, 16:17], rt05[:, 17:18], rt05[:, 18:19], 2),
        ('fx05', rt05[:, 0:1], rt05[:, 1:2], rt05[:, 2:3], 2),
        ('fy05', rt05[:, 16:17], rt05[:, 17:18], rt05[:, 18:19], 2),
        ('fxx05', rt05[:, 1:2], None, None, 1),
        ('fxy05', rt05[:, 2:3], None, None, 1),
        ('fyx05', rt05[:, 17:18], None, None, 1),
        ('fyy05', rt05[:, 18:19], None, None, 1),
    ], up=2)

    fx_pyramid = [m64['fx16'], m32['fx8_cur'], m32['fx8_pre'],
                  m16['fx4_cur'], m16['fx4_pre'], m8['fx2_cur'], m8['fx2_pre'],
                  m4['fx1t_cur'], m4['fx1t_pre'], m4['fx1'], m2['fx05'],
                  m2['final_fx']]
    fxx_pyramid = [m64['fxx16'], m32['fxx8_cur'], m32['fxx8_pre'],
                   m16['fxx4_cur'], m16['fxx4_pre'], m8['fxx2_cur'], m8['fxx2_pre'],
                   m4['fxx1t_cur'], m4['fxx1t_pre'], m4['fxx1'], m2['fxx05']]
    fxy_pyramid = [m64['fxy16'], m32['fxy8_cur'], m32['fxy8_pre'],
                   m16['fxy4_cur'], m16['fxy4_pre'], m8['fxy2_cur'], m8['fxy2_pre'],
                   m4['fxy1t_cur'], m4['fxy1t_pre'], m4['fxy1'], m2['fxy05']]
    w_pyramid = [m32['conf8_cur'], m32['conf8_pre'],
                 m16['conf4_cur'], m16['conf4_pre'],
                 m8['conf2_cur'], m8['conf2_pre'],
                 m4['conf1t_cur'], m4['conf1t_pre']]
    fy_pyramid = [m64['fy16'], m32['fy8_cur'], m32['fy8_pre'],
                  m16['fy4_cur'], m16['fy4_pre'], m8['fy2_cur'], m8['fy2_pre'],
                  m4['fy1t_cur'], m4['fy1t_pre'], m4['fy1'], m2['fy05'],
                  m2['final_fy']]
    fyx_pyramid = [m64['fyx16'], m32['fyx8_cur'], m32['fyx8_pre'],
                   m16['fyx4_cur'], m16['fyx4_pre'], m8['fyx2_cur'], m8['fyx2_pre'],
                   m4['fyx1t_cur'], m4['fyx1t_pre'], m4['fyx1'], m2['fyx05']]
    fyy_pyramid = [m64['fyy16'], m32['fyy8_cur'], m32['fyy8_pre'],
                   m16['fyy4_cur'], m16['fyy4_pre'], m8['fyy2_cur'], m8['fyy2_pre'],
                   m4['fyy1t_cur'], m4['fyy1t_pre'], m4['fyy1'], m2['fyy05']]

    outputs = {
        'init_cv_pyramid': init_cv_pyramid,
        'fx_pyramid': fx_pyramid, 'fxx_pyramid': fxx_pyramid,
        'fxy_pyramid': fxy_pyramid, 'w_pyramid': w_pyramid,
        'fy_pyramid': fy_pyramid, 'fyx_pyramid': fyx_pyramid,
        'fyy_pyramid': fyy_pyramid,
    }
    if not training:
        outputs = dict(final_fx=m2['final_fx'], final_fy=m2['final_fy'], **outputs)
    return outputs


hitnet_forward = jax.jit(_hitnet_forward_impl, static_argnames=('training',))


# -----------------------------------------------------------------------------
# Plain-JAX references for sanity checking the fused kernels
# -----------------------------------------------------------------------------
def _ref_nearest(x, up):
    return jnp.repeat(jnp.repeat(x, up, axis=2), up, axis=3)


def _ref_slant(d, dx, dy, up, ts=1):
    h, w = d.shape[2], d.shape[3]
    c = (up - 1) / 2.0
    i = (jnp.arange(h * up) % up).astype(jnp.float32) - c
    j = (jnp.arange(w * up) % up).astype(jnp.float32) - c
    return (_ref_nearest(d, up) * (float(up) / float(ts))
            + j[None, None, None, :] * _ref_nearest(dx, up)
            + i[None, None, :, None] * _ref_nearest(dy, up))


# -----------------------------------------------------------------------------
if __name__ == "__main__":
    key = jax.random.PRNGKey(0)
    ks = jax.random.split(key, 7)
    B, H, W = 2, 64, 64  # image size must be divisible by 64 (deepest tile level)
    left_img = jax.random.normal(ks[0], (B, 3, H, W), jnp.float32)
    right_img = jax.random.normal(ks[1], (B, 3, H, W), jnp.float32)
    flow_gt = jax.random.normal(ks[2], (B, 2, H, W), jnp.float32)
    fxx_gt = jax.random.normal(ks[3], (B, 1, H, W), jnp.float32)
    fxy_gt = jax.random.normal(ks[4], (B, 1, H, W), jnp.float32)
    fyx_gt = jax.random.normal(ks[5], (B, 1, H, W), jnp.float32)
    fyy_gt = jax.random.normal(ks[6], (B, 1, H, W), jnp.float32)

    out = hitnet_forward(left_img, right_img, flow_gt, fxx_gt, fxy_gt, fyx_gt,
                         fyy_gt, training=True)
    out = jax.block_until_ready(out)

    # shape sanity: every pyramid entry is a full-resolution (B,1,H,W) map
    for name in ('fx_pyramid', 'fy_pyramid', 'fxx_pyramid', 'fxy_pyramid',
                 'fyx_pyramid', 'fyy_pyramid', 'w_pyramid'):
        for a in out[name]:
            assert a.shape == (B, 1, H, W), (name, a.shape)

    # light numeric sanity vs plain-JAX references (slant + nearest + ts=2 paths)
    rt16 = _make_tile(left_img, right_img, 64)
    tu2 = _make_tile_update_tuple(_make_tile(left_img, right_img, 8))
    rt05 = _make_tile(left_img, right_img, 2)
    checks = [
        (out['fx_pyramid'][0],
         _ref_slant(rt16[:, 0:1], rt16[:, 1:2], rt16[:, 2:3], 64)),
        (out['fxx_pyramid'][5], _ref_nearest(tu2[3], 8)),
        (out['w_pyramid'][4], _ref_nearest(tu2[7], 8)),
        (out['fx_pyramid'][10],
         _ref_slant(rt05[:, 0:1], rt05[:, 1:2], rt05[:, 2:3], 2, 2)),
    ]
    for got, ref in checks:
        assert np.allclose(np.asarray(got), np.asarray(ref), rtol=2e-2, atol=2e-2)

    print("KERNEL_OK")
</pallas_src>

<mosaic_0001>
module attributes {stable_mosaic.version = 11 : i64} {
  func.func @_nearest_kernel(%arg0: i32, %arg1: i32, %arg2: i32, %arg3: i32, %arg4: memref<1x1x16x16xf32, #tpu.memory_space<vmem>>, %arg5: memref<16x64xf32, #tpu.memory_space<vmem>>, %arg6: memref<64x16xf32, #tpu.memory_space<vmem>>, %arg7: memref<1x1x64x64xf32, #tpu.memory_space<vmem>>) attributes {dimension_semantics = [#tpu.dimension_semantics<parallel>, #tpu.dimension_semantics<parallel>, #tpu.dimension_semantics<parallel>, #tpu.dimension_semantics<parallel>], iteration_bounds = array<i64: 2, 14, 1, 1>, scalar_prefetch = 0 : i64, scratch_operands = 0 : i64, tpu.core_type = #tpu.core_type<tc>, window_params = [{transform_indices = @transform_0, window_bounds = array<i64: 1, 1, 16, 16>}, {transform_indices = @transform_1, window_bounds = array<i64: 16, 64>}, {transform_indices = @transform_2, window_bounds = array<i64: 64, 16>}, {transform_indices = @transform_3, window_bounds = array<i64: 1, 1, 64, 64>}]} {
    %c0 = arith.constant 0 : index
    %c0_0 = arith.constant 0 : index
    %c0_1 = arith.constant 0 : index
    %c0_2 = arith.constant 0 : index
    %0 = vector.load %arg4[%c0, %c0_0, %c0_1, %c0_2] : memref<1x1x16x16xf32, #tpu.memory_space<vmem>>, vector<1x1x16x16xf32>
    %1 = vector.shape_cast %0 : vector<1x1x16x16xf32> to vector<16x16xf32>
    %c0_3 = arith.constant 0 : index
    %c0_4 = arith.constant 0 : index
    %2 = vector.load %arg5[%c0_3, %c0_4] : memref<16x64xf32, #tpu.memory_space<vmem>>, vector<16x64xf32>
    %cst = arith.constant dense<0.000000e+00> : vector<16x64xf32>
    %3 = tpu.matmul %1, %2, %cst {dimension_numbers = #tpu.dot_dimension_numbers<[1], [0], [0], [1], [0, 0, 1, 1], [], []>} : vector<16x16xf32>, vector<16x64xf32>, vector<16x64xf32> -> vector<16x64xf32>
    %c0_5 = arith.constant 0 : index
    %c0_6 = arith.constant 0 : index
    %4 = vector.load %arg6[%c0_5, %c0_6] : memref<64x16xf32, #tpu.memory_space<vmem>>, vector<64x16xf32>
    %cst_7 = arith.constant dense<0.000000e+00> : vector<64x64xf32>
    %5 = tpu.matmul %4, %3, %cst_7 {dimension_numbers = #tpu.dot_dimension_numbers<[1], [0], [0], [1], [0, 0, 1, 1], [], []>} : vector<64x16xf32>, vector<16x64xf32>, vector<64x64xf32> -> vector<64x64xf32>
    %c0_8 = arith.constant 0 : index
    %c0_9 = arith.constant 0 : index
    %c0_10 = arith.constant 0 : index
    %c0_11 = arith.constant 0 : index
    %6 = vector.load %arg7[%c0_8, %c0_9, %c0_10, %c0_11] : memref<1x1x64x64xf32, #tpu.memory_space<vmem>>, vector<1x1x64x64xf32>
    %7 = vector.shape_cast %6 : vector<1x1x64x64xf32> to vector<64x64xf32>
    %8 = vector.shape_cast %5 : vector<64x64xf32> to vector<1x1x64x64xf32>
    tpu.vector_store %arg7[%c0_8, %c0_9, %c0_10, %c0_11], %8 {strides = array<i32>} : memref<1x1x64x64xf32, #tpu.memory_space<vmem>>, vector<1x1x64x64xf32>,
    return
  }
  func.func @transform_0(%arg0: i32, %arg1: i32, %arg2: i32, %arg3: i32) -> (i32, i32, i32, i32) {
    %c0_i32 = arith.constant 0 : i32
    %c0_i32_0 = arith.constant 0 : i32
    %c0_i32_1 = arith.constant 0 : i32
    return %arg0, %arg1, %c0_i32, %c0_i32_0 : i32, i32, i32, i32
  }
  func.func @transform_1(%arg0: i32, %arg1: i32, %arg2: i32, %arg3: i32) -> (i32, i32) {
    %c0_i32 = arith.constant 0 : i32
    %c0_i32_0 = arith.constant 0 : i32
    return %c0_i32, %arg3 : i32, i32
  }
  func.func @transform_2(%arg0: i32, %arg1: i32, %arg2: i32, %arg3: i32) -> (i32, i32) {
    %c0_i32 = arith.constant 0 : i32
    %c0_i32_0 = arith.constant 0 : i32
    return %arg2, %c0_i32 : i32, i32
  }
  func.func @transform_3(%arg0: i32, %arg1: i32, %arg2: i32, %arg3: i32) -> (i32, i32, i32, i32) {
    %c0_i32 = arith.constant 0 : i32
    return %arg0, %arg1, %arg2, %arg3 : i32, i32, i32, i32
  }
}

module attributes {stable_mosaic.version = 11 : i64} {
  func.func @_nearest_kernel(%arg0: i32, %arg1: i32, %arg2: i32, %arg3: i32, %arg4: memref<1x1x32x32xf32, #tpu.memory_space<vmem>>, %arg5: memref<32x64xf32, #tpu.memory_space<vmem>>, %arg6: memref<64x32xf32, #tpu.memory_space<vmem>>, %arg7: memref<1x1x64x64xf32, #tpu.memory_space<vmem>>) attributes {dimension_semantics = [#tpu.dimension_semantics<parallel>, #tpu.dimension_semantics<parallel>, #tpu.dimension_semantics<parallel>, #tpu.dimension_semantics<parallel>], iteration_bounds = array<i64: 2, 4, 1, 1>, scalar_prefetch = 0 : i64, scratch_operands = 0 : i64, tpu.core_type = #tpu.core_type<tc>, window_params = [{transform_indices = @transform_0, window_bounds = array<i64: 1, 1, 32, 32>}, {transform_indices = @transform_1, window_bounds = array<i64: 32, 64>}, {transform_indices = @transform_2, window_bounds = array<i64: 64, 32>}, {transform_indices = @transform_3, window_bounds = array<i64: 1, 1, 64, 64>}]} {
    %c0 = arith.constant 0 : index
    %c0_0 = arith.constant 0 : index
    %c0_1 = arith.constant 0 : index
    %c0_2 = arith.constant 0 : index
    %0 = vector.load %arg4[%c0, %c0_0, %c0_1, %c0_2] : memref<1x1x32x32xf32, #tpu.memory_space<vmem>>, vector<1x1x32x32xf32>
    %1 = vector.shape_cast %0 : vector<1x1x32x32xf32> to vector<32x32xf32>
    %c0_3 = arith.constant 0 : index
    %c0_4 = arith.constant 0 : index
    %2 = vector.load %arg5[%c0_3, %c0_4] : memref<32x64xf32, #tpu.memory_space<vmem>>, vector<32x64xf32>
    %cst = arith.constant dense<0.000000e+00> : vector<32x64xf32>
    %3 = tpu.matmul %1, %2, %cst {dimension_numbers = #tpu.dot_dimension_numbers<[1], [0], [0], [1], [0, 0, 1, 1], [], []>} : vector<32x32xf32>, vector<32x64xf32>, vector<32x64xf32> -> vector<32x64xf32>
    %c0_5 = arith.constant 0 : index
    %c0_6 = arith.constant 0 : index
    %4 = vector.load %arg6[%c0_5, %c0_6] : memref<64x32xf32, #tpu.memory_space<vmem>>, vector<64x32xf32>
    %cst_7 = arith.constant dense<0.000000e+00> : vector<64x64xf32>
    %5 = tpu.matmul %4, %3, %cst_7 {dimension_numbers = #tpu.dot_dimension_numbers<[1], [0], [0], [1], [0, 0, 1, 1], [], []>} : vector<64x32xf32>, vector<32x64xf32>, vector<64x64xf32> -> vector<64x64xf32>
    %c0_8 = arith.constant 0 : index
    %c0_9 = arith.constant 0 : index
    %c0_10 = arith.constant 0 : index
    %c0_11 = arith.constant 0 : index
    %6 = vector.load %arg7[%c0_8, %c0_9, %c0_10, %c0_11] : memref<1x1x64x64xf32, #tpu.memory_space<vmem>>, vector<1x1x64x64xf32>
    %7 = vector.shape_cast %6 : vector<1x1x64x64xf32> to vector<64x64xf32>
    %8 = vector.shape_cast %5 : vector<64x64xf32> to vector<1x1x64x64xf32>
    tpu.vector_store %arg7[%c0_8, %c0_9, %c0_10, %c0_11], %8 {strides = array<i32>} : memref<1x1x64x64xf32, #tpu.memory_space<vmem>>, vector<1x1x64x64xf32>,
    return
  }
  func.func @transform_0(%arg0: i32, %arg1: i32, %arg2: i32, %arg3: i32) -> (i32, i32, i32, i32) {
    %c0_i32 = arith.constant 0 : i32
    %c0_i32_0 = arith.constant 0 : i32
    %c0_i32_1 = arith.constant 0 : i32
    return %arg0, %arg1, %c0_i32, %c0_i32_0 : i32, i32, i32, i32
  }
  func.func @transform_1(%arg0: i32, %arg1: i32, %arg2: i32, %arg3: i32) -> (i32, i32) {
    %c0_i32 = arith.constant 0 : i32
    %c0_i32_0 = arith.constant 0 : i32
    return %c0_i32, %arg3 : i32, i32
  }
  func.func @transform_2(%arg0: i32, %arg1: i32, %arg2: i32, %arg3: i32) -> (i32, i32) {
    %c0_i32 = arith.constant 0 : i32
    %c0_i32_0 = arith.constant 0 : i32
    return %arg2, %c0_i32 : i32, i32
  }
  func.func @transform_3(%arg0: i32, %arg1: i32, %arg2: i32, %arg3: i32) -> (i32, i32, i32, i32) {
    %c0_i32 = arith.constant 0 : i32
    return %arg0, %arg1, %arg2, %arg3 : i32, i32, i32, i32
  }
}

module attributes {stable_mosaic.version = 11 : i64} {
  func.func @_slant_kernel(%arg0: i32, %arg1: i32, %arg2: i32, %arg3: i32, %arg4: memref<1x1x16x16xf32, #tpu.memory_space<vmem>>, %arg5: memref<1x1x16x16xf32, #tpu.memory_space<vmem>>, %arg6: memref<1x1x16x16xf32, #tpu.memory_space<vmem>>, %arg7: memref<16x64xf32, #tpu.memory_space<vmem>>, %arg8: memref<16x64xf32, #tpu.memory_space<vmem>>, %arg9: memref<64x32xf32, #tpu.memory_space<vmem>>, %arg10: memref<1x1x64x64xf32, #tpu.memory_space<vmem>>) attributes {dimension_semantics = [#tpu.dimension_semantics<parallel>, #tpu.dimension_semantics<parallel>, #tpu.dimension_semantics<parallel>, #tpu.dimension_semantics<parallel>], iteration_bounds = array<i64: 2, 6, 1, 1>, scalar_prefetch = 0 : i64, scratch_operands = 0 : i64, tpu.core_type = #tpu.core_type<tc>, window_params = [{transform_indices = @transform_0, window_bounds = array<i64: 1, 1, 16, 16>}, {transform_indices = @transform_1, window_bounds = array<i64: 1, 1, 16, 16>}, {transform_indices = @transform_2, window_bounds = array<i64: 1, 1, 16, 16>}, {transform_indices = @transform_3, window_bounds = array<i64: 16, 64>}, {transform_indices = @transform_4, window_bounds = array<i64: 16, 64>}, {transform_indices = @transform_5, window_bounds = array<i64: 64, 32>}, {transform_indices = @transform_6, window_bounds = array<i64: 1, 1, 64, 64>}]} {
    %c0 = arith.constant 0 : index
    %c0_0 = arith.constant 0 : index
    %0 = vector.load %arg7[%c0, %c0_0] : memref<16x64xf32, #tpu.memory_space<vmem>>, vector<16x64xf32>
    %c0_1 = arith.constant 0 : index
    %c0_2 = arith.constant 0 : index
    %c0_3 = arith.constant 0 : index
    %c0_4 = arith.constant 0 : index
    %1 = vector.load %arg4[%c0_1, %c0_2, %c0_3, %c0_4] : memref<1x1x16x16xf32, #tpu.memory_space<vmem>>, vector<1x1x16x16xf32>
    %2 = vector.shape_cast %1 : vector<1x1x16x16xf32> to vector<16x16xf32>
    %cst = arith.constant dense<0.000000e+00> : vector<16x64xf32>
    %3 = tpu.matmul %2, %0, %cst {dimension_numbers = #tpu.dot_dimension_numbers<[1], [0], [0], [1], [0, 0, 1, 1], [], []>} : vector<16x16xf32>, vector<16x64xf32>, vector<16x64xf32> -> vector<16x64xf32>
    %c0_5 = arith.constant 0 : index
    %c0_6 = arith.constant 0 : index
    %c0_7 = arith.constant 0 : index
    %c0_8 = arith.constant 0 : index
    %4 = vector.load %arg5[%c0_5, %c0_6, %c0_7, %c0_8] : memref<1x1x16x16xf32, #tpu.memory_space<vmem>>, vector<1x1x16x16xf32>
    %5 = vector.shape_cast %4 : vector<1x1x16x16xf32> to vector<16x16xf32>
    %c0_9 = arith.constant 0 : index
    %c0_10 = arith.constant 0 : index
    %6 = vector.load %arg8[%c0_9, %c0_10] : memref<16x64xf32, #tpu.memory_space<vmem>>, vector<16x64xf32>
    %cst_11 = arith.constant dense<0.000000e+00> : vector<16x64xf32>
    %7 = tpu.matmul %5, %6, %cst_11 {dimension_numbers = #tpu.dot_dimension_numbers<[1], [0], [0], [1], [0, 0, 1, 1], [], []>} : vector<16x16xf32>, vector<16x64xf32>, vector<16x64xf32> -> vector<16x64xf32>
    %8 = arith.addf %3, %7 : vector<16x64xf32>
    %c0_12 = arith.constant 0 : index
    %c0_13 = arith.constant 0 : index
    %c0_14 = arith.constant 0 : index
    %c0_15 = arith.constant 0 : index
    %9 = vector.load %arg6[%c0_12, %c0_13, %c0_14, %c0_15] : memref<1x1x16x16xf32, #tpu.memory_space<vmem>>, vector<1x1x16x16xf32>
    %10 = vector.shape_cast %9 : vector<1x1x16x16xf32> to vector<16x16xf32>
    %cst_16 = arith.constant dense<0.000000e+00> : vector<16x64xf32>
    %11 = tpu.matmul %10, %0, %cst_16 {dimension_numbers = #tpu.dot_dimension_numbers<[1], [0], [0], [1], [0, 0, 1, 1], [], []>} : vector<16x16xf32>, vector<16x64xf32>, vector<16x64xf32> -> vector<16x64xf32>
    %12 = tpu.concatenate %8, %11 in 0 : vector<16x64xf32>, vector<16x64xf32> -> vector<32x64xf32>
    %c0_17 = arith.constant 0 : index
    %c0_18 = arith.constant 0 : index
    %13 = vector.load %arg9[%c0_17, %c0_18] : memref<64x32xf32, #tpu.memory_space<vmem>>, vector<64x32xf32>
    %cst_19 = arith.constant dense<0.000000e+00> : vector<64x64xf32>
    %14 = tpu.matmul %13, %12, %cst_19 {dimension_numbers = #tpu.dot_dimension_numbers<[1], [0], [0], [1], [0, 0, 1, 1], [], []>} : vector<64x32xf32>, vector<32x64xf32>, vector<64x64xf32> -> vector<64x64xf32>
    %c0_20 = arith.constant 0 : index
    %c0_21 = arith.constant 0 : index
    %c0_22 = arith.constant 0 : index
    %c0_23 = arith.constant 0 : index
    %15 = vector.load %arg10[%c0_20, %c0_21, %c0_22, %c0_23] : memref<1x1x64x64xf32, #tpu.memory_space<vmem>>, vector<1x1x64x64xf32>
    %16 = vector.shape_cast %15 : vector<1x1x64x64xf32> to vector<64x64xf32>
    %17 = vector.shape_cast %14 : vector<64x64xf32> to vector<1x1x64x64xf32>
    tpu.vector_store %arg10[%c0_20, %c0_21, %c0_22, %c0_23], %17 {strides = array<i32>} : memref<1x1x64x64xf32, #tpu.memory_space<vmem>>, vector<1x1x64x64xf32>,
    return
  }
  func.func @transform_0(%arg0: i32, %arg1: i32, %arg2: i32, %arg3: i32) -> (i32, i32, i32, i32) {
    %c0_i32 = arith.constant 0 : i32
    %c0_i32_0 = arith.constant 0 : i32
    %c0_i32_1 = arith.constant 0 : i32
    return %arg0, %arg1, %c0_i32, %c0_i32_0 : i32, i32, i32, i32
  }
  func.func @transform_1(%arg0: i32, %arg1: i32, %arg2: i32, %arg3: i32) -> (i32, i32, i32, i32) {
    %c0_i32 = arith.constant 0 : i32
    %c0_i32_0 = arith.constant 0 : i32
    %c0_i32_1 = arith.constant 0 : i32
    return %arg0, %arg1, %c0_i32, %c0_i32_0 : i32, i32, i32, i32
  }
  func.func @transform_2(%arg0: i32, %arg1: i32, %arg2: i32, %arg3: i32) -> (i32, i32, i32, i32) {
    %c0_i32 = arith.constant 0 : i32
    %c0_i32_0 = arith.constant 0 : i32
    %c0_i32_1 = arith.constant 0 : i32
    return %arg0, %arg1, %c0_i32, %c0_i32_0 : i32, i32, i32, i32
  }
  func.func @transform_3(%arg0: i32, %arg1: i32, %arg2: i32, %arg3: i32) -> (i32, i32) {
    %c0_i32 = arith.constant 0 : i32
    %c0_i32_0 = arith.constant 0 : i32
    return %c0_i32, %arg3 : i32, i32
  }
  func.func @transform_4(%arg0: i32, %arg1: i32, %arg2: i32, %arg3: i32) -> (i32, i32) {
    %c0_i32 = arith.constant 0 : i32
    %c0_i32_0 = arith.constant 0 : i32
    return %c0_i32, %arg3 : i32, i32
  }
  func.func @transform_5(%arg0: i32, %arg1: i32, %arg2: i32, %arg3: i32) -> (i32, i32) {
    %c0_i32 = arith.constant 0 : i32
    %c0_i32_0 = arith.constant 0 : i32
    return %arg2, %c0_i32 : i32, i32
  }
  func.func @transform_6(%arg0: i32, %arg1: i32, %arg2: i32, %arg3: i32) -> (i32, i32, i32, i32) {
    %c0_i32 = arith.constant 0 : i32
    return %arg0, %arg1, %arg2, %arg3 : i32, i32, i32, i32
  }
}

module attributes {stable_mosaic.version = 11 : i64} {
  func.func @_nearest_kernel(%arg0: i32, %arg1: i32, %arg2: i32, %arg3: i32, %arg4: memref<1x1x8x8xf32, #tpu.memory_space<vmem>>, %arg5: memref<8x64xf32, #tpu.memory_space<vmem>>, %arg6: memref<64x8xf32, #tpu.memory_space<vmem>>, %arg7: memref<1x1x64x64xf32, #tpu.memory_space<vmem>>) attributes {dimension_semantics = [#tpu.dimension_semantics<parallel>, #tpu.dimension_semantics<parallel>, #tpu.dimension_semantics<parallel>, #tpu.dimension_semantics<parallel>], iteration_bounds = array<i64: 2, 10, 1, 1>, scalar_prefetch = 0 : i64, scratch_operands = 0 : i64, tpu.core_type = #tpu.core_type<tc>, window_params = [{transform_indices = @transform_0, window_bounds = array<i64: 1, 1, 8, 8>}, {transform_indices = @transform_1, window_bounds = array<i64: 8, 64>}, {transform_indices = @transform_2, window_bounds = array<i64: 64, 8>}, {transform_indices = @transform_3, window_bounds = array<i64: 1, 1, 64, 64>}]} {
    %c0 = arith.constant 0 : index
    %c0_0 = arith.constant 0 : index
    %c0_1 = arith.constant 0 : index
    %c0_2 = arith.constant 0 : index
    %0 = vector.load %arg4[%c0, %c0_0, %c0_1, %c0_2] : memref<1x1x8x8xf32, #tpu.memory_space<vmem>>, vector<1x1x8x8xf32>
    %1 = vector.shape_cast %0 : vector<1x1x8x8xf32> to vector<8x8xf32>
    %c0_3 = arith.constant 0 : index
    %c0_4 = arith.constant 0 : index
    %2 = vector.load %arg5[%c0_3, %c0_4] : memref<8x64xf32, #tpu.memory_space<vmem>>, vector<8x64xf32>
    %cst = arith.constant dense<0.000000e+00> : vector<8x64xf32>
    %3 = tpu.matmul %1, %2, %cst {dimension_numbers = #tpu.dot_dimension_numbers<[1], [0], [0], [1], [0, 0, 1, 1], [], []>} : vector<8x8xf32>, vector<8x64xf32>, vector<8x64xf32> -> vector<8x64xf32>
    %c0_5 = arith.constant 0 : index
    %c0_6 = arith.constant 0 : index
    %4 = vector.load %arg6[%c0_5, %c0_6] : memref<64x8xf32, #tpu.memory_space<vmem>>, vector<64x8xf32>
    %cst_7 = arith.constant dense<0.000000e+00> : vector<64x64xf32>
    %5 = tpu.matmul %4, %3, %cst_7 {dimension_numbers = #tpu.dot_dimension_numbers<[1], [0], [0], [1], [0, 0, 1, 1], [], []>} : vector<64x8xf32>, vector<8x64xf32>, vector<64x64xf32> -> vector<64x64xf32>
    %c0_8 = arith.constant 0 : index
    %c0_9 = arith.constant 0 : index
    %c0_10 = arith.constant 0 : index
    %c0_11 = arith.constant 0 : index
    %6 = vector.load %arg7[%c0_8, %c0_9, %c0_10, %c0_11] : memref<1x1x64x64xf32, #tpu.memory_space<vmem>>, vector<1x1x64x64xf32>
    %7 = vector.shape_cast %6 : vector<1x1x64x64xf32> to vector<64x64xf32>
    %8 = vector.shape_cast %5 : vector<64x64xf32> to vector<1x1x64x64xf32>
    tpu.vector_store %arg7[%c0_8, %c0_9, %c0_10, %c0_11], %8 {strides = array<i32>} : memref<1x1x64x64xf32, #tpu.memory_space<vmem>>, vector<1x1x64x64xf32>,
    return
  }
  func.func @transform_0(%arg0: i32, %arg1: i32, %arg2: i32, %arg3: i32) -> (i32, i32, i32, i32) {
    %c0_i32 = arith.constant 0 : i32
    %c0_i32_0 = arith.constant 0 : i32
    %c0_i32_1 = arith.constant 0 : i32
    return %arg0, %arg1, %c0_i32, %c0_i32_0 : i32, i32, i32, i32
  }
  func.func @transform_1(%arg0: i32, %arg1: i32, %arg2: i32, %arg3: i32) -> (i32, i32) {
    %c0_i32 = arith.constant 0 : i32
    %c0_i32_0 = arith.constant 0 : i32
    return %c0_i32, %arg3 : i32, i32
  }
  func.func @transform_2(%arg0: i32, %arg1: i32, %arg2: i32, %arg3: i32) -> (i32, i32) {
    %c0_i32 = arith.constant 0 : i32
    %c0_i32_0 = arith.constant 0 : i32
    return %arg2, %c0_i32 : i32, i32
  }
  func.func @transform_3(%arg0: i32, %arg1: i32, %arg2: i32, %arg3: i32) -> (i32, i32, i32, i32) {
    %c0_i32 = arith.constant 0 : i32
    return %arg0, %arg1, %arg2, %arg3 : i32, i32, i32, i32
  }
}

module attributes {stable_mosaic.version = 11 : i64} {
  func.func @_slant_kernel(%arg0: i32, %arg1: i32, %arg2: i32, %arg3: i32, %arg4: memref<1x1x8x8xf32, #tpu.memory_space<vmem>>, %arg5: memref<1x1x8x8xf32, #tpu.memory_space<vmem>>, %arg6: memref<1x1x8x8xf32, #tpu.memory_space<vmem>>, %arg7: memref<8x64xf32, #tpu.memory_space<vmem>>, %arg8: memref<8x64xf32, #tpu.memory_space<vmem>>, %arg9: memref<64x16xf32, #tpu.memory_space<vmem>>, %arg10: memref<1x1x64x64xf32, #tpu.memory_space<vmem>>) attributes {dimension_semantics = [#tpu.dimension_semantics<parallel>, #tpu.dimension_semantics<parallel>, #tpu.dimension_semantics<parallel>, #tpu.dimension_semantics<parallel>], iteration_bounds = array<i64: 2, 4, 1, 1>, scalar_prefetch = 0 : i64, scratch_operands = 0 : i64, tpu.core_type = #tpu.core_type<tc>, window_params = [{transform_indices = @transform_0, window_bounds = array<i64: 1, 1, 8, 8>}, {transform_indices = @transform_1, window_bounds = array<i64: 1, 1, 8, 8>}, {transform_indices = @transform_2, window_bounds = array<i64: 1, 1, 8, 8>}, {transform_indices = @transform_3, window_bounds = array<i64: 8, 64>}, {transform_indices = @transform_4, window_bounds = array<i64: 8, 64>}, {transform_indices = @transform_5, window_bounds = array<i64: 64, 16>}, {transform_indices = @transform_6, window_bounds = array<i64: 1, 1, 64, 64>}]} {
    %c0 = arith.constant 0 : index
    %c0_0 = arith.constant 0 : index
    %0 = vector.load %arg7[%c0, %c0_0] : memref<8x64xf32, #tpu.memory_space<vmem>>, vector<8x64xf32>
    %c0_1 = arith.constant 0 : index
    %c0_2 = arith.constant 0 : index
    %c0_3 = arith.constant 0 : index
    %c0_4 = arith.constant 0 : index
    %1 = vector.load %arg4[%c0_1, %c0_2, %c0_3, %c0_4] : memref<1x1x8x8xf32, #tpu.memory_space<vmem>>, vector<1x1x8x8xf32>
    %2 = vector.shape_cast %1 : vector<1x1x8x8xf32> to vector<8x8xf32>
    %cst = arith.constant dense<0.000000e+00> : vector<8x64xf32>
    %3 = tpu.matmul %2, %0, %cst {dimension_numbers = #tpu.dot_dimension_numbers<[1], [0], [0], [1], [0, 0, 1, 1], [], []>} : vector<8x8xf32>, vector<8x64xf32>, vector<8x64xf32> -> vector<8x64xf32>
    %c0_5 = arith.constant 0 : index
    %c0_6 = arith.constant 0 : index
    %c0_7 = arith.constant 0 : index
    %c0_8 = arith.constant 0 : index
    %4 = vector.load %arg5[%c0_5, %c0_6, %c0_7, %c0_8] : memref<1x1x8x8xf32, #tpu.memory_space<vmem>>, vector<1x1x8x8xf32>
    %5 = vector.shape_cast %4 : vector<1x1x8x8xf32> to vector<8x8xf32>
    %c0_9 = arith.constant 0 : index
    %c0_10 = arith.constant 0 : index
    %6 = vector.load %arg8[%c0_9, %c0_10] : memref<8x64xf32, #tpu.memory_space<vmem>>, vector<8x64xf32>
    %cst_11 = arith.constant dense<0.000000e+00> : vector<8x64xf32>
    %7 = tpu.matmul %5, %6, %cst_11 {dimension_numbers = #tpu.dot_dimension_numbers<[1], [0], [0], [1], [0, 0, 1, 1], [], []>} : vector<8x8xf32>, vector<8x64xf32>, vector<8x64xf32> -> vector<8x64xf32>
    %8 = arith.addf %3, %7 : vector<8x64xf32>
    %c0_12 = arith.constant 0 : index
    %c0_13 = arith.constant 0 : index
    %c0_14 = arith.constant 0 : index
    %c0_15 = arith.constant 0 : index
    %9 = vector.load %arg6[%c0_12, %c0_13, %c0_14, %c0_15] : memref<1x1x8x8xf32, #tpu.memory_space<vmem>>, vector<1x1x8x8xf32>
    %10 = vector.shape_cast %9 : vector<1x1x8x8xf32> to vector<8x8xf32>
    %cst_16 = arith.constant dense<0.000000e+00> : vector<8x64xf32>
    %11 = tpu.matmul %10, %0, %cst_16 {dimension_numbers = #tpu.dot_dimension_numbers<[1], [0], [0], [1], [0, 0, 1, 1], [], []>} : vector<8x8xf32>, vector<8x64xf32>, vector<8x64xf32> -> vector<8x64xf32>
    %12 = tpu.concatenate %8, %11 in 0 : vector<8x64xf32>, vector<8x64xf32> -> vector<16x64xf32>
    %c0_17 = arith.constant 0 : index
    %c0_18 = arith.constant 0 : index
    %13 = vector.load %arg9[%c0_17, %c0_18] : memref<64x16xf32, #tpu.memory_space<vmem>>, vector<64x16xf32>
    %cst_19 = arith.constant dense<0.000000e+00> : vector<64x64xf32>
    %14 = tpu.matmul %13, %12, %cst_19 {dimension_numbers = #tpu.dot_dimension_numbers<[1], [0], [0], [1], [0, 0, 1, 1], [], []>} : vector<64x16xf32>, vector<16x64xf32>, vector<64x64xf32> -> vector<64x64xf32>
    %c0_20 = arith.constant 0 : index
    %c0_21 = arith.constant 0 : index
    %c0_22 = arith.constant 0 : index
    %c0_23 = arith.constant 0 : index
    %15 = vector.load %arg10[%c0_20, %c0_21, %c0_22, %c0_23] : memref<1x1x64x64xf32, #tpu.memory_space<vmem>>, vector<1x1x64x64xf32>
    %16 = vector.shape_cast %15 : vector<1x1x64x64xf32> to vector<64x64xf32>
    %17 = vector.shape_cast %14 : vector<64x64xf32> to vector<1x1x64x64xf32>
    tpu.vector_store %arg10[%c0_20, %c0_21, %c0_22, %c0_23], %17 {strides = array<i32>} : memref<1x1x64x64xf32, #tpu.memory_space<vmem>>, vector<1x1x64x64xf32>,
    return
  }
  func.func @transform_0(%arg0: i32, %arg1: i32, %arg2: i32, %arg3: i32) -> (i32, i32, i32, i32) {
    %c0_i32 = arith.constant 0 : i32
    %c0_i32_0 = arith.constant 0 : i32
    %c0_i32_1 = arith.constant 0 : i32
    return %arg0, %arg1, %c0_i32, %c0_i32_0 : i32, i32, i32, i32
  }
  func.func @transform_1(%arg0: i32, %arg1: i32, %arg2: i32, %arg3: i32) -> (i32, i32, i32, i32) {
    %c0_i32 = arith.constant 0 : i32
    %c0_i32_0 = arith.constant 0 : i32
    %c0_i32_1 = arith.constant 0 : i32
    return %arg0, %arg1, %c0_i32, %c0_i32_0 : i32, i32, i32, i32
  }
  func.func @transform_2(%arg0: i32, %arg1: i32, %arg2: i32, %arg3: i32) -> (i32, i32, i32, i32) {
    %c0_i32 = arith.constant 0 : i32
    %c0_i32_0 = arith.constant 0 : i32
    %c0_i32_1 = arith.constant 0 : i32
    return %arg0, %arg1, %c0_i32, %c0_i32_0 : i32, i32, i32, i32
  }
  func.func @transform_3(%arg0: i32, %arg1: i32, %arg2: i32, %arg3: i32) -> (i32, i32) {
    %c0_i32 = arith.constant 0 : i32
    %c0_i32_0 = arith.constant 0 : i32
    return %c0_i32, %arg3 : i32, i32
  }
  func.func @transform_4(%arg0: i32, %arg1: i32, %arg2: i32, %arg3: i32) -> (i32, i32) {
    %c0_i32 = arith.constant 0 : i32
    %c0_i32_0 = arith.constant 0 : i32
    return %c0_i32, %arg3 : i32, i32
  }
  func.func @transform_5(%arg0: i32, %arg1: i32, %arg2: i32, %arg3: i32) -> (i32, i32) {
    %c0_i32 = arith.constant 0 : i32
    %c0_i32_0 = arith.constant 0 : i32
    return %arg2, %c0_i32 : i32, i32
  }
  func.func @transform_6(%arg0: i32, %arg1: i32, %arg2: i32, %arg3: i32) -> (i32, i32, i32, i32) {
    %c0_i32 = arith.constant 0 : i32
    return %arg0, %arg1, %arg2, %arg3 : i32, i32, i32, i32
  }
}

module attributes {stable_mosaic.version = 11 : i64} {
  func.func @_slant_kernel(%arg0: i32, %arg1: i32, %arg2: i32, %arg3: i32, %arg4: memref<1x1x4x4xf32, #tpu.memory_space<vmem>>, %arg5: memref<1x1x4x4xf32, #tpu.memory_space<vmem>>, %arg6: memref<1x1x4x4xf32, #tpu.memory_space<vmem>>, %arg7: memref<4x64xf32, #tpu.memory_space<vmem>>, %arg8: memref<4x64xf32, #tpu.memory_space<vmem>>, %arg9: memref<64x8xf32, #tpu.memory_space<vmem>>, %arg10: memref<1x1x64x64xf32, #tpu.memory_space<vmem>>) attributes {dimension_semantics = [#tpu.dimension_semantics<parallel>, #tpu.dimension_semantics<parallel>, #tpu.dimension_semantics<parallel>, #tpu.dimension_semantics<parallel>], iteration_bounds = array<i64: 2, 4, 1, 1>, scalar_prefetch = 0 : i64, scratch_operands = 0 : i64, tpu.core_type = #tpu.core_type<tc>, window_params = [{transform_indices = @transform_0, window_bounds = array<i64: 1, 1, 4, 4>}, {transform_indices = @transform_1, window_bounds = array<i64: 1, 1, 4, 4>}, {transform_indices = @transform_2, window_bounds = array<i64: 1, 1, 4, 4>}, {transform_indices = @transform_3, window_bounds = array<i64: 4, 64>}, {transform_indices = @transform_4, window_bounds = array<i64: 4, 64>}, {transform_indices = @transform_5, window_bounds = array<i64: 64, 8>}, {transform_indices = @transform_6, window_bounds = array<i64: 1, 1, 64, 64>}]} {
    %c0 = arith.constant 0 : index
    %c0_0 = arith.constant 0 : index
    %0 = vector.load %arg7[%c0, %c0_0] : memref<4x64xf32, #tpu.memory_space<vmem>>, vector<4x64xf32>
    %c0_1 = arith.constant 0 : index
    %c0_2 = arith.constant 0 : index
    %c0_3 = arith.constant 0 : index
    %c0_4 = arith.constant 0 : index
    %1 = vector.load %arg4[%c0_1, %c0_2, %c0_3, %c0_4] : memref<1x1x4x4xf32, #tpu.memory_space<vmem>>, vector<1x1x4x4xf32>
    %2 = vector.shape_cast %1 : vector<1x1x4x4xf32> to vector<4x4xf32>
    %cst = arith.constant dense<0.000000e+00> : vector<4x64xf32>
    %3 = tpu.matmul %2, %0, %cst {dimension_numbers = #tpu.dot_dimension_numbers<[1], [0], [0], [1], [0, 0, 1, 1], [], []>} : vector<4x4xf32>, vector<4x64xf32>, vector<4x64xf32> -> vector<4x64xf32>
    %c0_5 = arith.constant 0 : index
    %c0_6 = arith.constant 0 : index
    %c0_7 = arith.constant 0 : index
    %c0_8 = arith.constant 0 : index
    %4 = vector.load %arg5[%c0_5, %c0_6, %c0_7, %c0_8] : memref<1x1x4x4xf32, #tpu.memory_space<vmem>>, vector<1x1x4x4xf32>
    %5 = vector.shape_cast %4 : vector<1x1x4x4xf32> to vector<4x4xf32>
    %c0_9 = arith.constant 0 : index
    %c0_10 = arith.constant 0 : index
    %6 = vector.load %arg8[%c0_9, %c0_10] : memref<4x64xf32, #tpu.memory_space<vmem>>, vector<4x64xf32>
    %cst_11 = arith.constant dense<0.000000e+00> : vector<4x64xf32>
    %7 = tpu.matmul %5, %6, %cst_11 {dimension_numbers = #tpu.dot_dimension_numbers<[1], [0], [0], [1], [0, 0, 1, 1], [], []>} : vector<4x4xf32>, vector<4x64xf32>, vector<4x64xf32> -> vector<4x64xf32>
    %8 = arith.addf %3, %7 : vector<4x64xf32>
    %c0_12 = arith.constant 0 : index
    %c0_13 = arith.constant 0 : index
    %c0_14 = arith.constant 0 : index
    %c0_15 = arith.constant 0 : index
    %9 = vector.load %arg6[%c0_12, %c0_13, %c0_14, %c0_15] : memref<1x1x4x4xf32, #tpu.memory_space<vmem>>, vector<1x1x4x4xf32>
    %10 = vector.shape_cast %9 : vector<1x1x4x4xf32> to vector<4x4xf32>
    %cst_16 = arith.constant dense<0.000000e+00> : vector<4x64xf32>
    %11 = tpu.matmul %10, %0, %cst_16 {dimension_numbers = #tpu.dot_dimension_numbers<[1], [0], [0], [1], [0, 0, 1, 1], [], []>} : vector<4x4xf32>, vector<4x64xf32>, vector<4x64xf32> -> vector<4x64xf32>
    %12 = tpu.concatenate %8, %11 in 0 : vector<4x64xf32>, vector<4x64xf32> -> vector<8x64xf32>
    %c0_17 = arith.constant 0 : index
    %c0_18 = arith.constant 0 : index
    %13 = vector.load %arg9[%c0_17, %c0_18] : memref<64x8xf32, #tpu.memory_space<vmem>>, vector<64x8xf32>
    %cst_19 = arith.constant dense<0.000000e+00> : vector<64x64xf32>
    %14 = tpu.matmul %13, %12, %cst_19 {dimension_numbers = #tpu.dot_dimension_numbers<[1], [0], [0], [1], [0, 0, 1, 1], [], []>} : vector<64x8xf32>, vector<8x64xf32>, vector<64x64xf32> -> vector<64x64xf32>
    %c0_20 = arith.constant 0 : index
    %c0_21 = arith.constant 0 : index
    %c0_22 = arith.constant 0 : index
    %c0_23 = arith.constant 0 : index
    %15 = vector.load %arg10[%c0_20, %c0_21, %c0_22, %c0_23] : memref<1x1x64x64xf32, #tpu.memory_space<vmem>>, vector<1x1x64x64xf32>
    %16 = vector.shape_cast %15 : vector<1x1x64x64xf32> to vector<64x64xf32>
    %17 = vector.shape_cast %14 : vector<64x64xf32> to vector<1x1x64x64xf32>
    tpu.vector_store %arg10[%c0_20, %c0_21, %c0_22, %c0_23], %17 {strides = array<i32>} : memref<1x1x64x64xf32, #tpu.memory_space<vmem>>, vector<1x1x64x64xf32>,
    return
  }
  func.func @transform_0(%arg0: i32, %arg1: i32, %arg2: i32, %arg3: i32) -> (i32, i32, i32, i32) {
    %c0_i32 = arith.constant 0 : i32
    %c0_i32_0 = arith.constant 0 : i32
    %c0_i32_1 = arith.constant 0 : i32
    return %arg0, %arg1, %c0_i32, %c0_i32_0 : i32, i32, i32, i32
  }
  func.func @transform_1(%arg0: i32, %arg1: i32, %arg2: i32, %arg3: i32) -> (i32, i32, i32, i32) {
    %c0_i32 = arith.constant 0 : i32
    %c0_i32_0 = arith.constant 0 : i32
    %c0_i32_1 = arith.constant 0 : i32
    return %arg0, %arg1, %c0_i32, %c0_i32_0 : i32, i32, i32, i32
  }
  func.func @transform_2(%arg0: i32, %arg1: i32, %arg2: i32, %arg3: i32) -> (i32, i32, i32, i32) {
    %c0_i32 = arith.constant 0 : i32
    %c0_i32_0 = arith.constant 0 : i32
    %c0_i32_1 = arith.constant 0 : i32
    return %arg0, %arg1, %c0_i32, %c0_i32_0 : i32, i32, i32, i32
  }
  func.func @transform_3(%arg0: i32, %arg1: i32, %arg2: i32, %arg3: i32) -> (i32, i32) {
    %c0_i32 = arith.constant 0 : i32
    %c0_i32_0 = arith.constant 0 : i32
    return %c0_i32, %arg3 : i32, i32
  }
  func.func @transform_4(%arg0: i32, %arg1: i32, %arg2: i32, %arg3: i32) -> (i32, i32) {
    %c0_i32 = arith.constant 0 : i32
    %c0_i32_0 = arith.constant 0 : i32
    return %c0_i32, %arg3 : i32, i32
  }
  func.func @transform_5(%arg0: i32, %arg1: i32, %arg2: i32, %arg3: i32) -> (i32, i32) {
    %c0_i32 = arith.constant 0 : i32
    %c0_i32_0 = arith.constant 0 : i32
    return %arg2, %c0_i32 : i32, i32
  }
  func.func @transform_6(%arg0: i32, %arg1: i32, %arg2: i32, %arg3: i32) -> (i32, i32, i32, i32) {
    %c0_i32 = arith.constant 0 : i32
    return %arg0, %arg1, %arg2, %arg3 : i32, i32, i32, i32
  }
}

module attributes {stable_mosaic.version = 11 : i64} {
  func.func @_slant_kernel(%arg0: i32, %arg1: i32, %arg2: i32, %arg3: i32, %arg4: memref<1x1x2x2xf32, #tpu.memory_space<vmem>>, %arg5: memref<1x1x2x2xf32, #tpu.memory_space<vmem>>, %arg6: memref<1x1x2x2xf32, #tpu.memory_space<vmem>>, %arg7: memref<2x64xf32, #tpu.memory_space<vmem>>, %arg8: memref<2x64xf32, #tpu.memory_space<vmem>>, %arg9: memref<64x4xf32, #tpu.memory_space<vmem>>, %arg10: memref<1x1x64x64xf32, #tpu.memory_space<vmem>>) attributes {dimension_semantics = [#tpu.dimension_semantics<parallel>, #tpu.dimension_semantics<parallel>, #tpu.dimension_semantics<parallel>, #tpu.dimension_semantics<parallel>], iteration_bounds = array<i64: 2, 4, 1, 1>, scalar_prefetch = 0 : i64, scratch_operands = 0 : i64, tpu.core_type = #tpu.core_type<tc>, window_params = [{transform_indices = @transform_0, window_bounds = array<i64: 1, 1, 2, 2>}, {transform_indices = @transform_1, window_bounds = array<i64: 1, 1, 2, 2>}, {transform_indices = @transform_2, window_bounds = array<i64: 1, 1, 2, 2>}, {transform_indices = @transform_3, window_bounds = array<i64: 2, 64>}, {transform_indices = @transform_4, window_bounds = array<i64: 2, 64>}, {transform_indices = @transform_5, window_bounds = array<i64: 64, 4>}, {transform_indices = @transform_6, window_bounds = array<i64: 1, 1, 64, 64>}]} {
    %c0 = arith.constant 0 : index
    %c0_0 = arith.constant 0 : index
    %0 = vector.load %arg7[%c0, %c0_0] : memref<2x64xf32, #tpu.memory_space<vmem>>, vector<2x64xf32>
    %c0_1 = arith.constant 0 : index
    %c0_2 = arith.constant 0 : index
    %c0_3 = arith.constant 0 : index
    %c0_4 = arith.constant 0 : index
    %1 = vector.load %arg4[%c0_1, %c0_2, %c0_3, %c0_4] : memref<1x1x2x2xf32, #tpu.memory_space<vmem>>, vector<1x1x2x2xf32>
    %2 = vector.shape_cast %1 : vector<1x1x2x2xf32> to vector<2x2xf32>
    %cst = arith.constant dense<0.000000e+00> : vector<2x64xf32>
    %3 = tpu.matmul %2, %0, %cst {dimension_numbers = #tpu.dot_dimension_numbers<[1], [0], [0], [1], [0, 0, 1, 1], [], []>} : vector<2x2xf32>, vector<2x64xf32>, vector<2x64xf32> -> vector<2x64xf32>
    %c0_5 = arith.constant 0 : index
    %c0_6 = arith.constant 0 : index
    %c0_7 = arith.constant 0 : index
    %c0_8 = arith.constant 0 : index
    %4 = vector.load %arg5[%c0_5, %c0_6, %c0_7, %c0_8] : memref<1x1x2x2xf32, #tpu.memory_space<vmem>>, vector<1x1x2x2xf32>
    %5 = vector.shape_cast %4 : vector<1x1x2x2xf32> to vector<2x2xf32>
    %c0_9 = arith.constant 0 : index
    %c0_10 = arith.constant 0 : index
    %6 = vector.load %arg8[%c0_9, %c0_10] : memref<2x64xf32, #tpu.memory_space<vmem>>, vector<2x64xf32>
    %cst_11 = arith.constant dense<0.000000e+00> : vector<2x64xf32>
    %7 = tpu.matmul %5, %6, %cst_11 {dimension_numbers = #tpu.dot_dimension_numbers<[1], [0], [0], [1], [0, 0, 1, 1], [], []>} : vector<2x2xf32>, vector<2x64xf32>, vector<2x64xf32> -> vector<2x64xf32>
    %8 = arith.addf %3, %7 : vector<2x64xf32>
    %c0_12 = arith.constant 0 : index
    %c0_13 = arith.constant 0 : index
    %c0_14 = arith.constant 0 : index
    %c0_15 = arith.constant 0 : index
    %9 = vector.load %arg6[%c0_12, %c0_13, %c0_14, %c0_15] : memref<1x1x2x2xf32, #tpu.memory_space<vmem>>, vector<1x1x2x2xf32>
    %10 = vector.shape_cast %9 : vector<1x1x2x2xf32> to vector<2x2xf32>
    %cst_16 = arith.constant dense<0.000000e+00> : vector<2x64xf32>
    %11 = tpu.matmul %10, %0, %cst_16 {dimension_numbers = #tpu.dot_dimension_numbers<[1], [0], [0], [1], [0, 0, 1, 1], [], []>} : vector<2x2xf32>, vector<2x64xf32>, vector<2x64xf32> -> vector<2x64xf32>
    %12 = tpu.concatenate %8, %11 in 0 : vector<2x64xf32>, vector<2x64xf32> -> vector<4x64xf32>
    %c0_17 = arith.constant 0 : index
    %c0_18 = arith.constant 0 : index
    %13 = vector.load %arg9[%c0_17, %c0_18] : memref<64x4xf32, #tpu.memory_space<vmem>>, vector<64x4xf32>
    %cst_19 = arith.constant dense<0.000000e+00> : vector<64x64xf32>
    %14 = tpu.matmul %13, %12, %cst_19 {dimension_numbers = #tpu.dot_dimension_numbers<[1], [0], [0], [1], [0, 0, 1, 1], [], []>} : vector<64x4xf32>, vector<4x64xf32>, vector<64x64xf32> -> vector<64x64xf32>
    %c0_20 = arith.constant 0 : index
    %c0_21 = arith.constant 0 : index
    %c0_22 = arith.constant 0 : index
    %c0_23 = arith.constant 0 : index
    %15 = vector.load %arg10[%c0_20, %c0_21, %c0_22, %c0_23] : memref<1x1x64x64xf32, #tpu.memory_space<vmem>>, vector<1x1x64x64xf32>
    %16 = vector.shape_cast %15 : vector<1x1x64x64xf32> to vector<64x64xf32>
    %17 = vector.shape_cast %14 : vector<64x64xf32> to vector<1x1x64x64xf32>
    tpu.vector_store %arg10[%c0_20, %c0_21, %c0_22, %c0_23], %17 {strides = array<i32>} : memref<1x1x64x64xf32, #tpu.memory_space<vmem>>, vector<1x1x64x64xf32>,
    return
  }
  func.func @transform_0(%arg0: i32, %arg1: i32, %arg2: i32, %arg3: i32) -> (i32, i32, i32, i32) {
    %c0_i32 = arith.constant 0 : i32
    %c0_i32_0 = arith.constant 0 : i32
    %c0_i32_1 = arith.constant 0 : i32
    return %arg0, %arg1, %c0_i32, %c0_i32_0 : i32, i32, i32, i32
  }
  func.func @transform_1(%arg0: i32, %arg1: i32, %arg2: i32, %arg3: i32) -> (i32, i32, i32, i32) {
    %c0_i32 = arith.constant 0 : i32
    %c0_i32_0 = arith.constant 0 : i32
    %c0_i32_1 = arith.constant 0 : i32
    return %arg0, %arg1, %c0_i32, %c0_i32_0 : i32, i32, i32, i32
  }
  func.func @transform_2(%arg0: i32, %arg1: i32, %arg2: i32, %arg3: i32) -> (i32, i32, i32, i32) {
    %c0_i32 = arith.constant 0 : i32
    %c0_i32_0 = arith.constant 0 : i32
    %c0_i32_1 = arith.constant 0 : i32
    return %arg0, %arg1, %c0_i32, %c0_i32_0 : i32, i32, i32, i32
  }
  func.func @transform_3(%arg0: i32, %arg1: i32, %arg2: i32, %arg3: i32) -> (i32, i32) {
    %c0_i32 = arith.constant 0 : i32
    %c0_i32_0 = arith.constant 0 : i32
    return %c0_i32, %arg3 : i32, i32
  }
  func.func @transform_4(%arg0: i32, %arg1: i32, %arg2: i32, %arg3: i32) -> (i32, i32) {
    %c0_i32 = arith.constant 0 : i32
    %c0_i32_0 = arith.constant 0 : i32
    return %c0_i32, %arg3 : i32, i32
  }
  func.func @transform_5(%arg0: i32, %arg1: i32, %arg2: i32, %arg3: i32) -> (i32, i32) {
    %c0_i32 = arith.constant 0 : i32
    %c0_i32_0 = arith.constant 0 : i32
    return %arg2, %c0_i32 : i32, i32
  }
  func.func @transform_6(%arg0: i32, %arg1: i32, %arg2: i32, %arg3: i32) -> (i32, i32, i32, i32) {
    %c0_i32 = arith.constant 0 : i32
    return %arg0, %arg1, %arg2, %arg3 : i32, i32, i32, i32
  }
}

module attributes {stable_mosaic.version = 11 : i64} {
  func.func @_nearest_kernel(%arg0: i32, %arg1: i32, %arg2: i32, %arg3: i32, %arg4: memref<1x1x4x4xf32, #tpu.memory_space<vmem>>, %arg5: memref<4x64xf32, #tpu.memory_space<vmem>>, %arg6: memref<64x4xf32, #tpu.memory_space<vmem>>, %arg7: memref<1x1x64x64xf32, #tpu.memory_space<vmem>>) attributes {dimension_semantics = [#tpu.dimension_semantics<parallel>, #tpu.dimension_semantics<parallel>, #tpu.dimension_semantics<parallel>, #tpu.dimension_semantics<parallel>], iteration_bounds = array<i64: 2, 10, 1, 1>, scalar_prefetch = 0 : i64, scratch_operands = 0 : i64, tpu.core_type = #tpu.core_type<tc>, window_params = [{transform_indices = @transform_0, window_bounds = array<i64: 1, 1, 4, 4>}, {transform_indices = @transform_1, window_bounds = array<i64: 4, 64>}, {transform_indices = @transform_2, window_bounds = array<i64: 64, 4>}, {transform_indices = @transform_3, window_bounds = array<i64: 1, 1, 64, 64>}]} {
    %c0 = arith.constant 0 : index
    %c0_0 = arith.constant 0 : index
    %c0_1 = arith.constant 0 : index
    %c0_2 = arith.constant 0 : index
    %0 = vector.load %arg4[%c0, %c0_0, %c0_1, %c0_2] : memref<1x1x4x4xf32, #tpu.memory_space<vmem>>, vector<1x1x4x4xf32>
    %1 = vector.shape_cast %0 : vector<1x1x4x4xf32> to vector<4x4xf32>
    %c0_3 = arith.constant 0 : index
    %c0_4 = arith.constant 0 : index
    %2 = vector.load %arg5[%c0_3, %c0_4] : memref<4x64xf32, #tpu.memory_space<vmem>>, vector<4x64xf32>
    %cst = arith.constant dense<0.000000e+00> : vector<4x64xf32>
    %3 = tpu.matmul %1, %2, %cst {dimension_numbers = #tpu.dot_dimension_numbers<[1], [0], [0], [1], [0, 0, 1, 1], [], []>} : vector<4x4xf32>, vector<4x64xf32>, vector<4x64xf32> -> vector<4x64xf32>
    %c0_5 = arith.constant 0 : index
    %c0_6 = arith.constant 0 : index
    %4 = vector.load %arg6[%c0_5, %c0_6] : memref<64x4xf32, #tpu.memory_space<vmem>>, vector<64x4xf32>
    %cst_7 = arith.constant dense<0.000000e+00> : vector<64x64xf32>
    %5 = tpu.matmul %4, %3, %cst_7 {dimension_numbers = #tpu.dot_dimension_numbers<[1], [0], [0], [1], [0, 0, 1, 1], [], []>} : vector<64x4xf32>, vector<4x64xf32>, vector<64x64xf32> -> vector<64x64xf32>
    %c0_8 = arith.constant 0 : index
    %c0_9 = arith.constant 0 : index
    %c0_10 = arith.constant 0 : index
    %c0_11 = arith.constant 0 : index
    %6 = vector.load %arg7[%c0_8, %c0_9, %c0_10, %c0_11] : memref<1x1x64x64xf32, #tpu.memory_space<vmem>>, vector<1x1x64x64xf32>
    %7 = vector.shape_cast %6 : vector<1x1x64x64xf32> to vector<64x64xf32>
    %8 = vector.shape_cast %5 : vector<64x64xf32> to vector<1x1x64x64xf32>
    tpu.vector_store %arg7[%c0_8, %c0_9, %c0_10, %c0_11], %8 {strides = array<i32>} : memref<1x1x64x64xf32, #tpu.memory_space<vmem>>, vector<1x1x64x64xf32>,
    return
  }
  func.func @transform_0(%arg0: i32, %arg1: i32, %arg2: i32, %arg3: i32) -> (i32, i32, i32, i32) {
    %c0_i32 = arith.constant 0 : i32
    %c0_i32_0 = arith.constant 0 : i32
    %c0_i32_1 = arith.constant 0 : i32
    return %arg0, %arg1, %c0_i32, %c0_i32_0 : i32, i32, i32, i32
  }
  func.func @transform_1(%arg0: i32, %arg1: i32, %arg2: i32, %arg3: i32) -> (i32, i32) {
    %c0_i32 = arith.constant 0 : i32
    %c0_i32_0 = arith.constant 0 : i32
    return %c0_i32, %arg3 : i32, i32
  }
  func.func @transform_2(%arg0: i32, %arg1: i32, %arg2: i32, %arg3: i32) -> (i32, i32) {
    %c0_i32 = arith.constant 0 : i32
    %c0_i32_0 = arith.constant 0 : i32
    return %arg2, %c0_i32 : i32, i32
  }
  func.func @transform_3(%arg0: i32, %arg1: i32, %arg2: i32, %arg3: i32) -> (i32, i32, i32, i32) {
    %c0_i32 = arith.constant 0 : i32
    return %arg0, %arg1, %arg2, %arg3 : i32, i32, i32, i32
  }
}

module attributes {stable_mosaic.version = 11 : i64} {
  func.func @_slant_kernel(%arg0: i32, %arg1: i32, %arg2: i32, %arg3: i32, %arg4: memref<1x1x32x32xf32, #tpu.memory_space<vmem>>, %arg5: memref<1x1x32x32xf32, #tpu.memory_space<vmem>>, %arg6: memref<1x1x32x32xf32, #tpu.memory_space<vmem>>, %arg7: memref<32x64xf32, #tpu.memory_space<vmem>>, %arg8: memref<32x64xf32, #tpu.memory_space<vmem>>, %arg9: memref<64x64xf32, #tpu.memory_space<vmem>>, %arg10: memref<1x1x64x64xf32, #tpu.memory_space<vmem>>) attributes {dimension_semantics = [#tpu.dimension_semantics<parallel>, #tpu.dimension_semantics<parallel>, #tpu.dimension_semantics<parallel>, #tpu.dimension_semantics<parallel>], iteration_bounds = array<i64: 2, 4, 1, 1>, scalar_prefetch = 0 : i64, scratch_operands = 0 : i64, tpu.core_type = #tpu.core_type<tc>, window_params = [{transform_indices = @transform_0, window_bounds = array<i64: 1, 1, 32, 32>}, {transform_indices = @transform_1, window_bounds = array<i64: 1, 1, 32, 32>}, {transform_indices = @transform_2, window_bounds = array<i64: 1, 1, 32, 32>}, {transform_indices = @transform_3, window_bounds = array<i64: 32, 64>}, {transform_indices = @transform_4, window_bounds = array<i64: 32, 64>}, {transform_indices = @transform_5, window_bounds = array<i64: 64, 64>}, {transform_indices = @transform_6, window_bounds = array<i64: 1, 1, 64, 64>}]} {
    %c0 = arith.constant 0 : index
    %c0_0 = arith.constant 0 : index
    %0 = vector.load %arg7[%c0, %c0_0] : memref<32x64xf32, #tpu.memory_space<vmem>>, vector<32x64xf32>
    %c0_1 = arith.constant 0 : index
    %c0_2 = arith.constant 0 : index
    %c0_3 = arith.constant 0 : index
    %c0_4 = arith.constant 0 : index
    %1 = vector.load %arg4[%c0_1, %c0_2, %c0_3, %c0_4] : memref<1x1x32x32xf32, #tpu.memory_space<vmem>>, vector<1x1x32x32xf32>
    %2 = vector.shape_cast %1 : vector<1x1x32x32xf32> to vector<32x32xf32>
    %cst = arith.constant dense<0.000000e+00> : vector<32x64xf32>
    %3 = tpu.matmul %2, %0, %cst {dimension_numbers = #tpu.dot_dimension_numbers<[1], [0], [0], [1], [0, 0, 1, 1], [], []>} : vector<32x32xf32>, vector<32x64xf32>, vector<32x64xf32> -> vector<32x64xf32>
    %c0_5 = arith.constant 0 : index
    %c0_6 = arith.constant 0 : index
    %c0_7 = arith.constant 0 : index
    %c0_8 = arith.constant 0 : index
    %4 = vector.load %arg5[%c0_5, %c0_6, %c0_7, %c0_8] : memref<1x1x32x32xf32, #tpu.memory_space<vmem>>, vector<1x1x32x32xf32>
    %5 = vector.shape_cast %4 : vector<1x1x32x32xf32> to vector<32x32xf32>
    %c0_9 = arith.constant 0 : index
    %c0_10 = arith.constant 0 : index
    %6 = vector.load %arg8[%c0_9, %c0_10] : memref<32x64xf32, #tpu.memory_space<vmem>>, vector<32x64xf32>
    %cst_11 = arith.constant dense<0.000000e+00> : vector<32x64xf32>
    %7 = tpu.matmul %5, %6, %cst_11 {dimension_numbers = #tpu.dot_dimension_numbers<[1], [0], [0], [1], [0, 0, 1, 1], [], []>} : vector<32x32xf32>, vector<32x64xf32>, vector<32x64xf32> -> vector<32x64xf32>
    %8 = arith.addf %3, %7 : vector<32x64xf32>
    %c0_12 = arith.constant 0 : index
    %c0_13 = arith.constant 0 : index
    %c0_14 = arith.constant 0 : index
    %c0_15 = arith.constant 0 : index
    %9 = vector.load %arg6[%c0_12, %c0_13, %c0_14, %c0_15] : memref<1x1x32x32xf32, #tpu.memory_space<vmem>>, vector<1x1x32x32xf32>
    %10 = vector.shape_cast %9 : vector<1x1x32x32xf32> to vector<32x32xf32>
    %cst_16 = arith.constant dense<0.000000e+00> : vector<32x64xf32>
    %11 = tpu.matmul %10, %0, %cst_16 {dimension_numbers = #tpu.dot_dimension_numbers<[1], [0], [0], [1], [0, 0, 1, 1], [], []>} : vector<32x32xf32>, vector<32x64xf32>, vector<32x64xf32> -> vector<32x64xf32>
    %12 = tpu.concatenate %8, %11 in 0 : vector<32x64xf32>, vector<32x64xf32> -> vector<64x64xf32>
    %c0_17 = arith.constant 0 : index
    %c0_18 = arith.constant 0 : index
    %13 = vector.load %arg9[%c0_17, %c0_18] : memref<64x64xf32, #tpu.memory_space<vmem>>, vector<64x64xf32>
    %cst_19 = arith.constant dense<0.000000e+00> : vector<64x64xf32>
    %14 = tpu.matmul %13, %12, %cst_19 {dimension_numbers = #tpu.dot_dimension_numbers<[1], [0], [0], [1], [0, 0, 1, 1], [], []>} : vector<64x64xf32>, vector<64x64xf32>, vector<64x64xf32> -> vector<64x64xf32>
    %c0_20 = arith.constant 0 : index
    %c0_21 = arith.constant 0 : index
    %c0_22 = arith.constant 0 : index
    %c0_23 = arith.constant 0 : index
    %15 = vector.load %arg10[%c0_20, %c0_21, %c0_22, %c0_23] : memref<1x1x64x64xf32, #tpu.memory_space<vmem>>, vector<1x1x64x64xf32>
    %16 = vector.shape_cast %15 : vector<1x1x64x64xf32> to vector<64x64xf32>
    %17 = vector.shape_cast %14 : vector<64x64xf32> to vector<1x1x64x64xf32>
    tpu.vector_store %arg10[%c0_20, %c0_21, %c0_22, %c0_23], %17 {strides = array<i32>} : memref<1x1x64x64xf32, #tpu.memory_space<vmem>>, vector<1x1x64x64xf32>,
    return
  }
  func.func @transform_0(%arg0: i32, %arg1: i32, %arg2: i32, %arg3: i32) -> (i32, i32, i32, i32) {
    %c0_i32 = arith.constant 0 : i32
    %c0_i32_0 = arith.constant 0 : i32
    %c0_i32_1 = arith.constant 0 : i32
    return %arg0, %arg1, %c0_i32, %c0_i32_0 : i32, i32, i32, i32
  }
  func.func @transform_1(%arg0: i32, %arg1: i32, %arg2: i32, %arg3: i32) -> (i32, i32, i32, i32) {
    %c0_i32 = arith.constant 0 : i32
    %c0_i32_0 = arith.constant 0 : i32
    %c0_i32_1 = arith.constant 0 : i32
    return %arg0, %arg1, %c0_i32, %c0_i32_0 : i32, i32, i32, i32
  }
  func.func @transform_2(%arg0: i32, %arg1: i32, %arg2: i32, %arg3: i32) -> (i32, i32, i32, i32) {
    %c0_i32 = arith.constant 0 : i32
    %c0_i32_0 = arith.constant 0 : i32
    %c0_i32_1 = arith.constant 0 : i32
    return %arg0, %arg1, %c0_i32, %c0_i32_0 : i32, i32, i32, i32
  }
  func.func @transform_3(%arg0: i32, %arg1: i32, %arg2: i32, %arg3: i32) -> (i32, i32) {
    %c0_i32 = arith.constant 0 : i32
    %c0_i32_0 = arith.constant 0 : i32
    return %c0_i32, %arg3 : i32, i32
  }
  func.func @transform_4(%arg0: i32, %arg1: i32, %arg2: i32, %arg3: i32) -> (i32, i32) {
    %c0_i32 = arith.constant 0 : i32
    %c0_i32_0 = arith.constant 0 : i32
    return %c0_i32, %arg3 : i32, i32
  }
  func.func @transform_5(%arg0: i32, %arg1: i32, %arg2: i32, %arg3: i32) -> (i32, i32) {
    %c0_i32 = arith.constant 0 : i32
    %c0_i32_0 = arith.constant 0 : i32
    return %arg2, %c0_i32 : i32, i32
  }
  func.func @transform_6(%arg0: i32, %arg1: i32, %arg2: i32, %arg3: i32) -> (i32, i32, i32, i32) {
    %c0_i32 = arith.constant 0 : i32
    return %arg0, %arg1, %arg2, %arg3 : i32, i32, i32, i32
  }
}

module attributes {stable_mosaic.version = 11 : i64} {
  func.func @_slant_kernel(%arg0: i32, %arg1: i32, %arg2: i32, %arg3: i32, %arg4: memref<1x1x1x1xf32, #tpu.memory_space<vmem>>, %arg5: memref<1x1x1x1xf32, #tpu.memory_space<vmem>>, %arg6: memref<1x1x1x1xf32, #tpu.memory_space<vmem>>, %arg7: memref<1x64xf32, #tpu.memory_space<vmem>>, %arg8: memref<1x64xf32, #tpu.memory_space<vmem>>, %arg9: memref<64x2xf32, #tpu.memory_space<vmem>>, %arg10: memref<1x1x64x64xf32, #tpu.memory_space<vmem>>) attributes {dimension_semantics = [#tpu.dimension_semantics<parallel>, #tpu.dimension_semantics<parallel>, #tpu.dimension_semantics<parallel>, #tpu.dimension_semantics<parallel>], iteration_bounds = array<i64: 2, 2, 1, 1>, scalar_prefetch = 0 : i64, scratch_operands = 0 : i64, tpu.core_type = #tpu.core_type<tc>, window_params = [{transform_indices = @transform_0, window_bounds = array<i64: 1, 1, 1, 1>}, {transform_indices = @transform_1, window_bounds = array<i64: 1, 1, 1, 1>}, {transform_indices = @transform_2, window_bounds = array<i64: 1, 1, 1, 1>}, {transform_indices = @transform_3, window_bounds = array<i64: 1, 64>}, {transform_indices = @transform_4, window_bounds = array<i64: 1, 64>}, {transform_indices = @transform_5, window_bounds = array<i64: 64, 2>}, {transform_indices = @transform_6, window_bounds = array<i64: 1, 1, 64, 64>}]} {
    %c0 = arith.constant 0 : index
    %c0_0 = arith.constant 0 : index
    %0 = vector.load %arg7[%c0, %c0_0] : memref<1x64xf32, #tpu.memory_space<vmem>>, vector<1x64xf32>
    %c0_1 = arith.constant 0 : index
    %c0_2 = arith.constant 0 : index
    %c0_3 = arith.constant 0 : index
    %c0_4 = arith.constant 0 : index
    %1 = vector.load %arg4[%c0_1, %c0_2, %c0_3, %c0_4] : memref<1x1x1x1xf32, #tpu.memory_space<vmem>>, vector<1x1x1x1xf32>
    %2 = vector.shape_cast %1 : vector<1x1x1x1xf32> to vector<1x1xf32>
    %cst = arith.constant dense<0.000000e+00> : vector<1x64xf32>
    %3 = tpu.matmul %2, %0, %cst {dimension_numbers = #tpu.dot_dimension_numbers<[1], [0], [0], [1], [0, 0, 1, 1], [], []>} : vector<1x1xf32>, vector<1x64xf32>, vector<1x64xf32> -> vector<1x64xf32>
    %c0_5 = arith.constant 0 : index
    %c0_6 = arith.constant 0 : index
    %c0_7 = arith.constant 0 : index
    %c0_8 = arith.constant 0 : index
    %4 = vector.load %arg5[%c0_5, %c0_6, %c0_7, %c0_8] : memref<1x1x1x1xf32, #tpu.memory_space<vmem>>, vector<1x1x1x1xf32>
    %5 = vector.shape_cast %4 : vector<1x1x1x1xf32> to vector<1x1xf32>
    %c0_9 = arith.constant 0 : index
    %c0_10 = arith.constant 0 : index
    %6 = vector.load %arg8[%c0_9, %c0_10] : memref<1x64xf32, #tpu.memory_space<vmem>>, vector<1x64xf32>
    %cst_11 = arith.constant dense<0.000000e+00> : vector<1x64xf32>
    %7 = tpu.matmul %5, %6, %cst_11 {dimension_numbers = #tpu.dot_dimension_numbers<[1], [0], [0], [1], [0, 0, 1, 1], [], []>} : vector<1x1xf32>, vector<1x64xf32>, vector<1x64xf32> -> vector<1x64xf32>
    %8 = arith.addf %3, %7 : vector<1x64xf32>
    %c0_12 = arith.constant 0 : index
    %c0_13 = arith.constant 0 : index
    %c0_14 = arith.constant 0 : index
    %c0_15 = arith.constant 0 : index
    %9 = vector.load %arg6[%c0_12, %c0_13, %c0_14, %c0_15] : memref<1x1x1x1xf32, #tpu.memory_space<vmem>>, vector<1x1x1x1xf32>
    %10 = vector.shape_cast %9 : vector<1x1x1x1xf32> to vector<1x1xf32>
    %cst_16 = arith.constant dense<0.000000e+00> : vector<1x64xf32>
    %11 = tpu.matmul %10, %0, %cst_16 {dimension_numbers = #tpu.dot_dimension_numbers<[1], [0], [0], [1], [0, 0, 1, 1], [], []>} : vector<1x1xf32>, vector<1x64xf32>, vector<1x64xf32> -> vector<1x64xf32>
    %12 = tpu.concatenate %8, %11 in 0 : vector<1x64xf32>, vector<1x64xf32> -> vector<2x64xf32>
    %c0_17 = arith.constant 0 : index
    %c0_18 = arith.constant 0 : index
    %13 = vector.load %arg9[%c0_17, %c0_18] : memref<64x2xf32, #tpu.memory_space<vmem>>, vector<64x2xf32>
    %cst_19 = arith.constant dense<0.000000e+00> : vector<64x64xf32>
    %14 = tpu.matmul %13, %12, %cst_19 {dimension_numbers = #tpu.dot_dimension_numbers<[1], [0], [0], [1], [0, 0, 1, 1], [], []>} : vector<64x2xf32>, vector<2x64xf32>, vector<64x64xf32> -> vector<64x64xf32>
    %c0_20 = arith.constant 0 : index
    %c0_21 = arith.constant 0 : index
    %c0_22 = arith.constant 0 : index
    %c0_23 = arith.constant 0 : index
    %15 = vector.load %arg10[%c0_20, %c0_21, %c0_22, %c0_23] : memref<1x1x64x64xf32, #tpu.memory_space<vmem>>, vector<1x1x64x64xf32>
    %16 = vector.shape_cast %15 : vector<1x1x64x64xf32> to vector<64x64xf32>
    %17 = vector.shape_cast %14 : vector<64x64xf32> to vector<1x1x64x64xf32>
    tpu.vector_store %arg10[%c0_20, %c0_21, %c0_22, %c0_23], %17 {strides = array<i32>} : memref<1x1x64x64xf32, #tpu.memory_space<vmem>>, vector<1x1x64x64xf32>,
    return
  }
  func.func @transform_0(%arg0: i32, %arg1: i32, %arg2: i32, %arg3: i32) -> (i32, i32, i32, i32) {
    %c0_i32 = arith.constant 0 : i32
    %c0_i32_0 = arith.constant 0 : i32
    %c0_i32_1 = arith.constant 0 : i32
    return %arg0, %arg1, %c0_i32, %c0_i32_0 : i32, i32, i32, i32
  }
  func.func @transform_1(%arg0: i32, %arg1: i32, %arg2: i32, %arg3: i32) -> (i32, i32, i32, i32) {
    %c0_i32 = arith.constant 0 : i32
    %c0_i32_0 = arith.constant 0 : i32
    %c0_i32_1 = arith.constant 0 : i32
    return %arg0, %arg1, %c0_i32, %c0_i32_0 : i32, i32, i32, i32
  }
  func.func @transform_2(%arg0: i32, %arg1: i32, %arg2: i32, %arg3: i32) -> (i32, i32, i32, i32) {
    %c0_i32 = arith.constant 0 : i32
    %c0_i32_0 = arith.constant 0 : i32
    %c0_i32_1 = arith.constant 0 : i32
    return %arg0, %arg1, %c0_i32, %c0_i32_0 : i32, i32, i32, i32
  }
  func.func @transform_3(%arg0: i32, %arg1: i32, %arg2: i32, %arg3: i32) -> (i32, i32) {
    %c0_i32 = arith.constant 0 : i32
    %c0_i32_0 = arith.constant 0 : i32
    return %c0_i32, %arg3 : i32, i32
  }
  func.func @transform_4(%arg0: i32, %arg1: i32, %arg2: i32, %arg3: i32) -> (i32, i32) {
    %c0_i32 = arith.constant 0 : i32
    %c0_i32_0 = arith.constant 0 : i32
    return %c0_i32, %arg3 : i32, i32
  }
  func.func @transform_5(%arg0: i32, %arg1: i32, %arg2: i32, %arg3: i32) -> (i32, i32) {
    %c0_i32 = arith.constant 0 : i32
    %c0_i32_0 = arith.constant 0 : i32
    return %arg2, %c0_i32 : i32, i32
  }
  func.func @transform_6(%arg0: i32, %arg1: i32, %arg2: i32, %arg3: i32) -> (i32, i32, i32, i32) {
    %c0_i32 = arith.constant 0 : i32
    return %arg0, %arg1, %arg2, %arg3 : i32, i32, i32, i32
  }
}

module attributes {stable_mosaic.version = 11 : i64} {
  func.func @_nearest_kernel(%arg0: i32, %arg1: i32, %arg2: i32, %arg3: i32, %arg4: memref<1x1x2x2xf32, #tpu.memory_space<vmem>>, %arg5: memref<2x64xf32, #tpu.memory_space<vmem>>, %arg6: memref<64x2xf32, #tpu.memory_space<vmem>>, %arg7: memref<1x1x64x64xf32, #tpu.memory_space<vmem>>) attributes {dimension_semantics = [#tpu.dimension_semantics<parallel>, #tpu.dimension_semantics<parallel>, #tpu.dimension_semantics<parallel>, #tpu.dimension_semantics<parallel>], iteration_bounds = array<i64: 2, 10, 1, 1>, scalar_prefetch = 0 : i64, scratch_operands = 0 : i64, tpu.core_type = #tpu.core_type<tc>, window_params = [{transform_indices = @transform_0, window_bounds = array<i64: 1, 1, 2, 2>}, {transform_indices = @transform_1, window_bounds = array<i64: 2, 64>}, {transform_indices = @transform_2, window_bounds = array<i64: 64, 2>}, {transform_indices = @transform_3, window_bounds = array<i64: 1, 1, 64, 64>}]} {
    %c0 = arith.constant 0 : index
    %c0_0 = arith.constant 0 : index
    %c0_1 = arith.constant 0 : index
    %c0_2 = arith.constant 0 : index
    %0 = vector.load %arg4[%c0, %c0_0, %c0_1, %c0_2] : memref<1x1x2x2xf32, #tpu.memory_space<vmem>>, vector<1x1x2x2xf32>
    %1 = vector.shape_cast %0 : vector<1x1x2x2xf32> to vector<2x2xf32>
    %c0_3 = arith.constant 0 : index
    %c0_4 = arith.constant 0 : index
    %2 = vector.load %arg5[%c0_3, %c0_4] : memref<2x64xf32, #tpu.memory_space<vmem>>, vector<2x64xf32>
    %cst = arith.constant dense<0.000000e+00> : vector<2x64xf32>
    %3 = tpu.matmul %1, %2, %cst {dimension_numbers = #tpu.dot_dimension_numbers<[1], [0], [0], [1], [0, 0, 1, 1], [], []>} : vector<2x2xf32>, vector<2x64xf32>, vector<2x64xf32> -> vector<2x64xf32>
    %c0_5 = arith.constant 0 : index
    %c0_6 = arith.constant 0 : index
    %4 = vector.load %arg6[%c0_5, %c0_6] : memref<64x2xf32, #tpu.memory_space<vmem>>, vector<64x2xf32>
    %cst_7 = arith.constant dense<0.000000e+00> : vector<64x64xf32>
    %5 = tpu.matmul %4, %3, %cst_7 {dimension_numbers = #tpu.dot_dimension_numbers<[1], [0], [0], [1], [0, 0, 1, 1], [], []>} : vector<64x2xf32>, vector<2x64xf32>, vector<64x64xf32> -> vector<64x64xf32>
    %c0_8 = arith.constant 0 : index
    %c0_9 = arith.constant 0 : index
    %c0_10 = arith.constant 0 : index
    %c0_11 = arith.constant 0 : index
    %6 = vector.load %arg7[%c0_8, %c0_9, %c0_10, %c0_11] : memref<1x1x64x64xf32, #tpu.memory_space<vmem>>, vector<1x1x64x64xf32>
    %7 = vector.shape_cast %6 : vector<1x1x64x64xf32> to vector<64x64xf32>
    %8 = vector.shape_cast %5 : vector<64x64xf32> to vector<1x1x64x64xf32>
    tpu.vector_store %arg7[%c0_8, %c0_9, %c0_10, %c0_11], %8 {strides = array<i32>} : memref<1x1x64x64xf32, #tpu.memory_space<vmem>>, vector<1x1x64x64xf32>,
    return
  }
  func.func @transform_0(%arg0: i32, %arg1: i32, %arg2: i32, %arg3: i32) -> (i32, i32, i32, i32) {
    %c0_i32 = arith.constant 0 : i32
    %c0_i32_0 = arith.constant 0 : i32
    %c0_i32_1 = arith.constant 0 : i32
    return %arg0, %arg1, %c0_i32, %c0_i32_0 : i32, i32, i32, i32
  }
  func.func @transform_1(%arg0: i32, %arg1: i32, %arg2: i32, %arg3: i32) -> (i32, i32) {
    %c0_i32 = arith.constant 0 : i32
    %c0_i32_0 = arith.constant 0 : i32
    return %c0_i32, %arg3 : i32, i32
  }
  func.func @transform_2(%arg0: i32, %arg1: i32, %arg2: i32, %arg3: i32) -> (i32, i32) {
    %c0_i32 = arith.constant 0 : i32
    %c0_i32_0 = arith.constant 0 : i32
    return %arg2, %c0_i32 : i32, i32
  }
  func.func @transform_3(%arg0: i32, %arg1: i32, %arg2: i32, %arg3: i32) -> (i32, i32, i32, i32) {
    %c0_i32 = arith.constant 0 : i32
    return %arg0, %arg1, %arg2, %arg3 : i32, i32, i32, i32
  }
}

module attributes {stable_mosaic.version = 11 : i64} {
  func.func @_nearest_kernel(%arg0: i32, %arg1: i32, %arg2: i32, %arg3: i32, %arg4: memref<1x1x1x1xf32, #tpu.memory_space<vmem>>, %arg5: memref<1x64xf32, #tpu.memory_space<vmem>>, %arg6: memref<64x1xf32, #tpu.memory_space<vmem>>, %arg7: memref<1x1x64x64xf32, #tpu.memory_space<vmem>>) attributes {dimension_semantics = [#tpu.dimension_semantics<parallel>, #tpu.dimension_semantics<parallel>, #tpu.dimension_semantics<parallel>, #tpu.dimension_semantics<parallel>], iteration_bounds = array<i64: 2, 4, 1, 1>, scalar_prefetch = 0 : i64, scratch_operands = 0 : i64, tpu.core_type = #tpu.core_type<tc>, window_params = [{transform_indices = @transform_0, window_bounds = array<i64: 1, 1, 1, 1>}, {transform_indices = @transform_1, window_bounds = array<i64: 1, 64>}, {transform_indices = @transform_2, window_bounds = array<i64: 64, 1>}, {transform_indices = @transform_3, window_bounds = array<i64: 1, 1, 64, 64>}]} {
    %c0 = arith.constant 0 : index
    %c0_0 = arith.constant 0 : index
    %c0_1 = arith.constant 0 : index
    %c0_2 = arith.constant 0 : index
    %0 = vector.load %arg4[%c0, %c0_0, %c0_1, %c0_2] : memref<1x1x1x1xf32, #tpu.memory_space<vmem>>, vector<1x1x1x1xf32>
    %1 = vector.shape_cast %0 : vector<1x1x1x1xf32> to vector<1x1xf32>
    %c0_3 = arith.constant 0 : index
    %c0_4 = arith.constant 0 : index
    %2 = vector.load %arg5[%c0_3, %c0_4] : memref<1x64xf32, #tpu.memory_space<vmem>>, vector<1x64xf32>
    %cst = arith.constant dense<0.000000e+00> : vector<1x64xf32>
    %3 = tpu.matmul %1, %2, %cst {dimension_numbers = #tpu.dot_dimension_numbers<[1], [0], [0], [1], [0, 0, 1, 1], [], []>} : vector<1x1xf32>, vector<1x64xf32>, vector<1x64xf32> -> vector<1x64xf32>
    %c0_5 = arith.constant 0 : index
    %c0_6 = arith.constant 0 : index
    %4 = vector.load %arg6[%c0_5, %c0_6] : memref<64x1xf32, #tpu.memory_space<vmem>>, vector<64x1xf32>
    %cst_7 = arith.constant dense<0.000000e+00> : vector<64x64xf32>
    %5 = tpu.matmul %4, %3, %cst_7 {dimension_numbers = #tpu.dot_dimension_numbers<[1], [0], [0], [1], [0, 0, 1, 1], [], []>} : vector<64x1xf32>, vector<1x64xf32>, vector<64x64xf32> -> vector<64x64xf32>
    %c0_8 = arith.constant 0 : index
    %c0_9 = arith.constant 0 : index
    %c0_10 = arith.constant 0 : index
    %c0_11 = arith.constant 0 : index
    %6 = vector.load %arg7[%c0_8, %c0_9, %c0_10, %c0_11] : memref<1x1x64x64xf32, #tpu.memory_space<vmem>>, vector<1x1x64x64xf32>
    %7 = vector.shape_cast %6 : vector<1x1x64x64xf32> to vector<64x64xf32>
    %8 = vector.shape_cast %5 : vector<64x64xf32> to vector<1x1x64x64xf32>
    tpu.vector_store %arg7[%c0_8, %c0_9, %c0_10, %c0_11], %8 {strides = array<i32>} : memref<1x1x64x64xf32, #tpu.memory_space<vmem>>, vector<1x1x64x64xf32>,
    return
  }
  func.func @transform_0(%arg0: i32, %arg1: i32, %arg2: i32, %arg3: i32) -> (i32, i32, i32, i32) {
    %c0_i32 = arith.constant 0 : i32
    %c0_i32_0 = arith.constant 0 : i32
    %c0_i32_1 = arith.constant 0 : i32
    return %arg0, %arg1, %c0_i32, %c0_i32_0 : i32, i32, i32, i32
  }
  func.func @transform_1(%arg0: i32, %arg1: i32, %arg2: i32, %arg3: i32) -> (i32, i32) {
    %c0_i32 = arith.constant 0 : i32
    %c0_i32_0 = arith.constant 0 : i32
    return %c0_i32, %arg3 : i32, i32
  }
  func.func @transform_2(%arg0: i32, %arg1: i32, %arg2: i32, %arg3: i32) -> (i32, i32) {
    %c0_i32 = arith.constant 0 : i32
    %c0_i32_0 = arith.constant 0 : i32
    return %arg2, %c0_i32 : i32, i32
  }
  func.func @transform_3(%arg0: i32, %arg1: i32, %arg2: i32, %arg3: i32) -> (i32, i32, i32, i32) {
    %c0_i32 = arith.constant 0 : i32
    return %arg0, %arg1, %arg2, %arg3 : i32, i32, i32, i32
  }
}

</mosaic_0001>

<llo_original>
// kernel: _hitnet_forward_impl.21
$region0: #{_hitnet_forward_impl.21}
  #allocation0 [shape = 'u32[]', space=smem, size = 0x4, offset = 0x4, fixed_abs, tag = 'smem constant byte address 0x4 - core index']
  #allocation1 [shape = 'u32[144,128]{1,0:T(1,128)}', space=vmem, size = 0x12000, scoped, tag = 'internal scratch']
  %s0 = inlined_call_operand.vmem [shape: f32[2,14,16,16], index: 0, kind: input, shape index: {}]
  %s1 = inlined_call_operand.vmem [shape: f32[16,64], index: 1, kind: input, shape index: {}]
  %s2 = inlined_call_operand.vmem [shape: f32[64,16], index: 2, kind: input, shape index: {}]
  %s3 = inlined_call_operand.vmem [shape: f32[2,14,64,64], index: 3, kind: output, shape index: {}]
  %s4 = sld [smem:[#allocation0]]
  $region45: #{_hitnet_forward_impl.21} parent=0
    _
  %s6 = ssub.s32 1, %s4
  %s7 = scalar_select 0, %s6, %s4
  loop: start=0, step=1, limit=30
  $region2: #{_hitnet_forward_impl.21} parent=0 // loop_pre_header
    _
  $region3: #{_hitnet_forward_impl.21} parent=0 // loop_header
    %s9 = sphi 0, %s13
    %p10 = scmp.ge.s32.totalorder %s9, 30
    %s16 = sphi 0, %s42
    %s17 = sphi 0, %s38
    %s18 = sphi 0, %s34
    %s19 = sphi 0, %s30
    %s20 = sphi 0, %s16
    %s21 = sphi 0, %s17
    %s22 = sphi 0, %s18
    %s23 = sphi 0, %s19
    %s24 = sphi 0, %s20
    %s25 = sphi 0, %s21
    %s26 = sphi 0, %s22
    %s27 = sphi 0, %s23
    %s47 = sphi 0, %s49
    %s50 = sphi 0, %s47
    %s51 = sphi 0, %s50
    %s67 = sphi 0, %s51
    %s73 = sphi 0, %s75
    %s76 = sphi 0, %s73
    %s77 = sphi 0, %s76
    %s93 = sphi 0, %s77
    %s99 = sphi 0, %s101
    %s102 = sphi 0, %s99
    %s103 = sphi 0, %s102
    %s119 = sphi 0, %s103
    %s131 = sphi 0, %s133
    %s134 = sphi 0, %s131
    %s135 = sphi 0, %s134
    %s151 = sphi 0, %s135
  $region4: #{_hitnet_forward_impl.21} parent=0 // loop_header_branch
    %12 = sbr.rel (%p10) target = $region8
  $region5: #{_hitnet_forward_impl.21} parent=0 // loop_body
    %s14 = ssub.s32 %s9, 1
    %s15 = ssub.s32 %s9, 2
    %s28 = sadd.s32 1, %s19
    %p29 = scmp.ge.s32.totalorder %s28, 1
    %s30 = scalar_select %p29, 0, %s28
    %s31 = sadd.s32 1, %s18
    %s32 = scalar_select %p29, %s31, %s18
    %p33 = scmp.ge.s32.totalorder %s32, 1
    %s34 = scalar_select %p33, 0, %s32
    %s35 = sadd.s32 1, %s17
    %s36 = scalar_select %p33, %s35, %s17
    %p37 = scmp.ge.s32.totalorder %s36, 14
    %s38 = scalar_select %p37, 0, %s36
    %s39 = sadd.s32 1, %s16
    %s40 = scalar_select %p37, %s39, %s16
    %p41 = scmp.ge.s32.totalorder %s40, 2
    %s42 = scalar_select %p41, 0, %s40
    %s43 = ssub.s32 %s16, %s42
    %s44 = ssub.s32 %s17, %s38
    %s45 = sor.u32 %s43, %s44
    %p46 = scmp.eq.s32.totalorder %s45, 0
    %s48 = sadd.s32 %s47, 1
    %s49 = scalar_select %p46, %s47, %s48
    %p52 = pneg %p46
    %p53 = scmp.eq.s32.totalorder %s9, 27
    %p54 = por %p52, %p53
    %p55 = scmp.ne.s32.totalorder %s47, %s50
    %p56 = scmp.eq.s32.totalorder %s9, 0
    %p57 = por %p55, %p56
    %p58 = scmp.ne.s32.totalorder %s47, %s50
    %p59 = scmp.eq.s32.totalorder %s14, 27
    %p60 = por %p58, %p59
    %p61 = scmp.ne.s32.totalorder %s50, %s51
    %p62 = scmp.eq.s32.totalorder %s14, 0
    %p63 = por %p61, %p62
    %p64 = scmp.ne.s32.totalorder %s50, %s51
    %p65 = scmp.eq.s32.totalorder %s15, 27
    %p66 = por %p64, %p65
    %p68 = scmp.ne.s32.totalorder %s51, %s67
    %p69 = scmp.eq.s32.totalorder %s15, 0
    %p70 = por %p68, %p69
    %s71 = ssub.s32 %s19, %s30
    %p72 = scmp.eq.s32.totalorder %s71, 0
    %s74 = sadd.s32 %s73, 1
    %s75 = scalar_select %p72, %s73, %s74
    %p78 = pneg %p72
    %p79 = scmp.eq.s32.totalorder %s9, 27
    %p80 = por %p78, %p79
    %p81 = scmp.ne.s32.totalorder %s73, %s76
    %p82 = scmp.eq.s32.totalorder %s9, 0
    %p83 = por %p81, %p82
    %p84 = scmp.ne.s32.totalorder %s73, %s76
    %p85 = scmp.eq.s32.totalorder %s14, 27
    %p86 = por %p84, %p85
    %p87 = scmp.ne.s32.totalorder %s76, %s77
    %p88 = scmp.eq.s32.totalorder %s14, 0
    %p89 = por %p87, %p88
    %p90 = scmp.ne.s32.totalorder %s76, %s77
    %p91 = scmp.eq.s32.totalorder %s15, 27
    %p92 = por %p90, %p91
    %p94 = scmp.ne.s32.totalorder %s77, %s93
    %p95 = scmp.eq.s32.totalorder %s15, 0
    %p96 = por %p94, %p95
    %s97 = ssub.s32 %s18, %s34
    %p98 = scmp.eq.s32.totalorder %s97, 0
    %s100 = sadd.s32 %s99, 1
    %s101 = scalar_select %p98, %s99, %s100
    %p104 = pneg %p98
    %p105 = scmp.eq.s32.totalorder %s9, 27
    %p106 = por %p104, %p105
    %p107 = scmp.ne.s32.totalorder %s99, %s102
    %p108 = scmp.eq.s32.totalorder %s9, 0
    %p109 = por %p107, %p108
    %p110 = scmp.ne.s32.totalorder %s99, %s102
    %p111 = scmp.eq.s32.totalorder %s14, 27
    %p112 = por %p110, %p111
    %p113 = scmp.ne.s32.totalorder %s102, %s103
    %p114 = scmp.eq.s32.totalorder %s14, 0
    %p115 = por %p113, %p114
    %p116 = scmp.ne.s32.totalorder %s102, %s103
    %p117 = scmp.eq.s32.totalorder %s15, 27
    %p118 = por %p116, %p117
    %p120 = scmp.ne.s32.totalorder %s103, %s119
    %p121 = scmp.eq.s32.totalorder %s15, 0
    %p122 = por %p120, %p121
    %s123 = ssub.s32 %s16, %s42
    %s124 = ssub.s32 %s17, %s38
    %s125 = sor.u32 %s123, %s124
    %s126 = ssub.s32 %s18, %s34
    %s127 = sor.u32 %s125, %s126
    %s128 = ssub.s32 %s19, %s30
    %s129 = sor.u32 %s127, %s128
    %p130 = scmp.eq.s32.totalorder %s129, 0
    %s132 = sadd.s32 %s131, 1
    %s133 = scalar_select %p130, %s131, %s132
    %p136 = pneg %p130
    %p137 = scmp.eq.s32.totalorder %s9, 27
    %p138 = por %p136, %p137
    %p139 = scmp.ne.s32.totalorder %s131, %s134
    %p140 = scmp.eq.s32.totalorder %s9, 0
    %p141 = por %p139, %p140
    %p142 = scmp.ne.s32.totalorder %s131, %s134
    %p143 = scmp.eq.s32.totalorder %s14, 27
    %p144 = por %p142, %p143
    %p145 = scmp.ne.s32.totalorder %s134, %s135
    %p146 = scmp.eq.s32.totalorder %s14, 0
    %p147 = por %p145, %p146
    %p148 = scmp.ne.s32.totalorder %s134, %s135
    %p149 = scmp.eq.s32.totalorder %s15, 27
    %p150 = por %p148, %p149
    %p152 = scmp.ne.s32.totalorder %s135, %s151
    %p153 = scmp.eq.s32.totalorder %s15, 0
    %p154 = por %p152, %p153
    %p155 = scmp.le.s32.totalorder 1, %s9
    %p156 = scmp.lt.s32.totalorder %s9, 29
    %p157 = pnand %p155, %p156
    %p158 = pneg %p157
    // Predicated region
    $region9: #{_hitnet_forward_impl.21} parent=5 // pred_check
      _
    $region10: #{_hitnet_forward_impl.21} parent=5 // pred_check_branch
      %160 = sbr.rel (%p157) target = $region12
    $region11: #{_hitnet_forward_impl.21} parent=5 // pred_region
      %s161 = ssub.s32 %s9, 1
      // Predicated region
      $region13: #{_hitnet_forward_impl.21} parent=11 // pred_check
        %p162 = pneg %p89
      $region14: #{_hitnet_forward_impl.21} parent=11 // pred_check_branch
        %164 = sbr.rel (%p162) target = $region16
      $region15: #{_hitnet_forward_impl.21} parent=11 // pred_region
        %p165 = scmp.lt.s32.totalorder %s23, 0
        %s166 = scalar_select %p165, %s23, 0
        %s167 = smul.addr %s166, 8
        %s168 = scalar_lea.vmem %s1, %s167
      $region16: #{_hitnet_forward_impl.21} parent=11 // pred_fallthru
        _
      // Predicated region
      $region17: #{_hitnet_forward_impl.21} parent=11 // pred_check
        %p169 = pneg %p115
      $region18: #{_hitnet_forward_impl.21} parent=11 // pred_check_branch
        %171 = sbr.rel (%p169) target = $region20
      $region19: #{_hitnet_forward_impl.21} parent=11 // pred_region
        %s172 = smul.u32 8, %s22
        %p173 = scmp.lt.s32.totalorder %s172, 7
        %s174 = scalar_select %p173, %s172, 7
        %s175 = smul.addr %s174, 8
        %s176 = scalar_lea.vmem %s2, %s175
        %s177 = smul.u32 8, %s22
      $region20: #{_hitnet_forward_impl.21} parent=11 // pred_fallthru
        _
    $region12: #{_hitnet_forward_impl.21} parent=5 // pred_fallthru
      _
    %p178 = scmp.lt.s32.totalorder %s9, 28
    // Predicated region
    $region21: #{_hitnet_forward_impl.21} parent=5 // pred_check
      %p179 = pneg %p178
    $region22: #{_hitnet_forward_impl.21} parent=5 // pred_check_branch
      %181 = sbr.rel (%p179) target = $region24
    $region23: #{_hitnet_forward_impl.21} parent=5 // pred_region
      // Predicated region
      $region25: #{_hitnet_forward_impl.21} parent=23 // pred_check
        %p182 = pneg %p57
      $region26: #{_hitnet_forward_impl.21} parent=23 // pred_check_branch
        %184 = sbr.rel (%p182) target = $region28
      $region27: #{_hitnet_forward_impl.21} parent=23 // pred_region
        %p185 = scmp.lt.s32.totalorder %s16, 1
        %s186 = scalar_select %p185, %s16, 1
        %p187 = scmp.lt.s32.totalorder %s17, 13
        %s188 = scalar_select %p187, %s17, 13
        %s189 = smul.addr %s188, 2
        %s190 = smul.addr %s186, 28
        %s191 = sadd.s32 %s189, %s190
        %s192 = smul.addr %s191, 8
        %s193 = scalar_lea.vmem %s0, %s192
      $region28: #{_hitnet_forward_impl.21} parent=23 // pred_fallthru
        _
    $region24: #{_hitnet_forward_impl.21} parent=5 // pred_fallthru
      _
    %p194 = scmp.le.s32.totalorder 1, %s9
    %p195 = scmp.lt.s32.totalorder %s9, 29
    %p196 = pnand %p194, %p195
    %p197 = pneg %p196
    // Predicated region
    $region29: #{_hitnet_forward_impl.21} parent=5 // pred_check
      _
    $region30: #{_hitnet_forward_impl.21} parent=5 // pred_check_branch
      %199 = sbr.rel (%p196) target = $region32
    $region31: #{_hitnet_forward_impl.21} parent=5 // pred_region
      %s200 = ssub.s32 %s9, 1
      %p201 = scmp.lt.s32.totalorder %s20, 1
      %s202 = scalar_select %p201, %s20, 1
      %p203 = scmp.lt.s32.totalorder %s21, 13
      %s204 = scalar_select %p203, %s21, 13
      %s205 = smul.addr %s204, 2
      %s206 = smul.addr %s202, 28
      %s207 = sadd.s32 %s205, %s206
      %s208 = smul.addr %s207, 8
      %s209 = scalar_lea.vmem %s0, %s208
      %p210 = pneg %p63
      %p211 = pneg %p60
      %p212 = scmp.lt.s32.totalorder %s23, 0
      %s213 = scalar_select %p212, %s23, 0
      %s214 = smul.addr %s213, 8
      %s215 = scalar_lea.vmem %s1, %s214
      %p216 = pneg %p89
      %p217 = pneg %p86
      %s218 = smul.u32 8, %s22
      %p219 = scmp.lt.s32.totalorder %s218, 7
      %s220 = scalar_select %p219, %s218, 7
      %s221 = smul.addr %s220, 8
      %s222 = scalar_lea.vmem %s2, %s221
      %p223 = pneg %p115
      %p224 = pneg %p112
      %p225 = pneg %p147
      %p226 = pneg %p144
      %s227 = smul.u32 8, %s22
      %p228 = scmp.lt.s32.totalorder %s20, 1
      %s229 = scalar_select %p228, %s20, 1
      %p230 = scmp.lt.s32.totalorder %s21, 13
      %s231 = scalar_select %p230, %s21, 13
      %p232 = scmp.lt.s32.totalorder %s227, 7
      %s233 = scalar_select %p232, %s227, 7
      %p234 = scmp.lt.s32.totalorder %s23, 0
      %s235 = scalar_select %p234, %s23, 0
      %s236 = sadd.s32 %s235, %s233
      %s237 = smul.addr %s231, 8
      %s238 = sadd.s32 %s236, %s237
      %s239 = smul.addr %s229, 112
      %s240 = sadd.s32 %s238, %s239
      %s241 = smul.addr %s240, 8
      %s242 = scalar_lea.vmem %s3, %s241
      %p243 = scmp.lt.s32.totalorder %s20, 1
      %s244 = scalar_select %p243, %s20, 1
      %p245 = scmp.lt.s32.totalorder %s21, 13
      %s246 = scalar_select %p245, %s21, 13
      %s247 = smul.addr %s246, 2
      %s248 = smul.addr %s244, 28
      %s249 = sadd.s32 %s247, %s248
      %s250 = smul.addr %s249, 8
      %s251 = scalar_lea.vmem %s0, %s250
      %p252 = scmp.lt.s32.totalorder %s23, 0
      %s253 = scalar_select %p252, %s23, 0
      %s254 = smul.addr %s253, 8
      %s255 = scalar_lea.vmem %s1, %s254
      %s256 = smul.u32 8, %s22
      %p257 = scmp.lt.s32.totalorder %s256, 7
      %s258 = scalar_select %p257, %s256, 7
      %s259 = smul.addr %s258, 8
      %s260 = scalar_lea.vmem %s2, %s259
      %s261 = smul.u32 8, %s22
      %s262 = smul.u32 8, %s22
      %p263 = scmp.lt.s32.totalorder %s20, 1
      %s264 = scalar_select %p263, %s20, 1
      %p265 = scmp.lt.s32.totalorder %s21, 13
      %s266 = scalar_select %p265, %s21, 13
      %p267 = scmp.lt.s32.totalorder %s262, 7
      %s268 = scalar_select %p267, %s262, 7
      %p269 = scmp.lt.s32.totalorder %s23, 0
      %s270 = scalar_select %p269, %s23, 0
      %s271 = sadd.s32 %s270, %s268
      %s272 = smul.addr %s266, 8
      %s273 = sadd.s32 %s271, %s272
      %s274 = smul.addr %s264, 112
      %s275 = sadd.s32 %s273, %s274
      %s276 = smul.addr %s275, 8
      %s277 = scalar_lea.vmem %s3, %s276
      %s278 = smul.u32 8, %s22
      %v279 = vld [vmem:[%s251] sm:$0xff]
      %v280 = vld [vmem:[%s251 + $0x8] sm:$0xff]
      %v281 = vld [vmem:[%s255] sm:$0xff]
      %v282 = vld [vmem:[%s255 + $0x8] sm:$0xff]
      %vm283 = vcmask 130048
      %v285 = vsel %vm283, %v279, 0
      %v288 = vsel %vm283, %v280, 0
      %290 = vmatprep.subr.mxu0 0.0
      %291 = vmatpush1.msra.mxu0 %v281
      %292 = vmatprep.subr.mxu0 0.0
      %293 = vmatpush1.msra.mxu0 %v282
      %294 = vmatprep.subr.mxu0 0.0
      %295 = vmatpush1.msra.mxu0 0.0
      %296 = vmatprep.subr.mxu0 0.0
      %297 = vmatpush1.msra.mxu0 0.0
      %298 = vmatprep.subr.mxu0 0.0
      %299 = vmatpush1.msra.mxu0 0.0
      %300 = vmatprep.subr.mxu0 0.0
      %301 = vmatpush1.msra.mxu0 0.0
      %302 = vmatprep.subr.mxu0 0.0
      %303 = vmatpush1.msra.mxu0 0.0
      %304 = vmatprep.subr.mxu0 0.0
      %305 = vmatpush1.msra.mxu0 0.0
      %306 = vmatprep.subr.mxu0 0.0
      %307 = vmatpush1.msra.mxu0 0.0
      %308 = vmatprep.subr.mxu0 0.0
      %309 = vmatpush1.msra.mxu0 0.0
      %310 = vmatprep.subr.mxu0 0.0
      %311 = vmatpush1.msra.mxu0 0.0
      %312 = vmatprep.subr.mxu0 0.0
      %313 = vmatpush1.msra.mxu0 0.0
      %314 = vmatprep.subr.mxu0 0.0
      %315 = vmatpush1.msra.mxu0 0.0
      %316 = vmatprep.subr.mxu0 0.0
      %317 = vmatpush1.msra.mxu0 0.0
      %318 = vmatprep.subr.mxu0 0.0
      %319 = vmatpush1.msra.mxu0 0.0
      %320 = vmatprep.subr.mxu0 0.0
      %321 = vmatpush1.msra.mxu0 0.0
      %322 = vmatprep.subr.mxu0 0.0
      %323 = vmatpush1.msra.mxu0 0.0
      %324 = vmatprep.subr.mxu0 0.0
      %325 = vmatpush1.msra.mxu0 0.0
      %326 = vmatprep.subr.mxu0 0.0
      %327 = vmatpush1.msra.mxu0 0.0
      %328 = vmatprep.subr.mxu0 0.0
      %329 = vmatpush1.msra.mxu0 0.0
      %330 = vmatprep.subr.mxu0 0.0
      %331 = vmatpush1.msra.mxu0 0.0
      %332 = vmatprep.subr.mxu0 0.0
      %333 = vmatpush1.msra.mxu0 0.0
      %334 = vmatprep.subr.mxu0 0.0
      %335 = vmatpush1.msra.mxu0 0.0
      %336 = vmatprep.subr.mxu0 0.0
      %337 = vmatpush1.msra.mxu0 0.0
      %338 = vmatprep.subr.mxu0 0.0
      %339 = vmatpush1.msra.mxu0 0.0
      %340 = vmatprep.subr.mxu0 0.0
      %341 = vmatpush1.msra.mxu0 0.0
      %342 = vmatprep.subr.mxu0 0.0
      %343 = vmatpush1.msra.mxu0 0.0
      %344 = vmatprep.subr.mxu0 0.0
      %345 = vmatpush1.msra.mxu0 0.0
      %346 = vmatprep.subr.mxu0 0.0
      %347 = vmatpush1.msra.mxu0 0.0
      %348 = vmatprep.subr.mxu0 0.0
      %349 = vmatpush1.msra.mxu0 0.0
      %350 = vmatprep.subr.mxu0 0.0
      %351 = vmatpush1.msra.mxu0 0.0
      %352 = vmatprep.subr.mxu0 0.0
      %353 = vmatpush1.msra.mxu0 0.0
      %354 = vmatprep.mubr.f32.mxu0 0.0
      %355 = vmatmul.mubr.f32.gmra.mrb[0].mxu0 %v285
      %v356 = vpop.f32.mrb[0].mxu0
      %v357 = vadd.f32 0.0, %v356
      %v358 = vpop.f32.mrb[0].mxu0
      %359 = vmatprep.mubr.f32.mxu0 0.0
      %360 = vmatmul.mubr.f32.gmra.mrb[0].mxu0 %v288
      %v361 = vpop.f32.mrb[0].mxu0
      %v362 = vadd.f32 0.0, %v361
      %v363 = vpop.f32.mrb[0].mxu0
      %364 = vdwg.mxu0
      %v365 = vld [vmem:[%s260] sm:$0xff]
      %v366 = vld [vmem:[%s260 + $0x8] sm:$0xff]
      %v367 = vld [vmem:[%s260 + $0x10] sm:$0xff]
      %v368 = vld [vmem:[%s260 + $0x18] sm:$0xff]
      %v369 = vld [vmem:[%s260 + $0x20] sm:$0xff]
      %v370 = vld [vmem:[%s260 + $0x28] sm:$0xff]
      %v371 = vld [vmem:[%s260 + $0x30] sm:$0xff]
      %v372 = vld [vmem:[%s260 + $0x38] sm:$0xff]
      %v374 = vsel %vm283, %v365, 0
      %v377 = vsel %vm283, %v366, 0
      %v380 = vsel %vm283, %v367, 0
      %v383 = vsel %vm283, %v368, 0
      %v386 = vsel %vm283, %v369, 0
      %v389 = vsel %vm283, %v370, 0
      %v392 = vsel %vm283, %v371, 0
      %v395 = vsel %vm283, %v372, 0
      %397 = vmatprep.subr.mxu0 0.0
      %398 = vmatpush1.msra.mxu0 %v357
      %399 = vmatprep.subr.mxu0 0.0
      %400 = vmatpush1.msra.mxu0 %v362
      %401 = vmatprep.subr.mxu0 0.0
      %402 = vmatpush1.msra.mxu0 0.0
      %403 = vmatprep.subr.mxu0 0.0
      %404 = vmatpush1.msra.mxu0 0.0
      %405 = vmatprep.subr.mxu0 0.0
      %406 = vmatpush1.msra.mxu0 0.0
      %407 = vmatprep.subr.mxu0 0.0
      %408 = vmatpush1.msra.mxu0 0.0
      %409 = vmatprep.subr.mxu0 0.0
      %410 = vmatpush1.msra.mxu0 0.0
      %411 = vmatprep.subr.mxu0 0.0
      %412 = vmatpush1.msra.mxu0 0.0
      %413 = vmatprep.subr.mxu0 0.0
      %414 = vmatpush1.msra.mxu0 0.0
      %415 = vmatprep.subr.mxu0 0.0
      %416 = vmatpush1.msra.mxu0 0.0
      %417 = vmatprep.subr.mxu0 0.0
      %418 = vmatpush1.msra.mxu0 0.0
      %419 = vmatprep.subr.mxu0 0.0
      %420 = vmatpush1.msra.mxu0 0.0
      %421 = vmatprep.subr.mxu0 0.0
      %422 = vmatpush1.msra.mxu0 0.0
      %423 = vmatprep.subr.mxu0 0.0
      %424 = vmatpush1.msra.mxu0 0.0
      %425 = vmatprep.subr.mxu0 0.0
      %426 = vmatpush1.msra.mxu0 0.0
      %427 = vmatprep.subr.mxu0 0.0
      %428 = vmatpush1.msra.mxu0 0.0
      %429 = vmatprep.subr.mxu0 0.0
      %430 = vmatpush1.msra.mxu0 0.0
      %431 = vmatprep.subr.mxu0 0.0
      %432 = vmatpush1.msra.mxu0 0.0
      %433 = vmatprep.subr.mxu0 0.0
      %434 = vmatpush1.msra.mxu0 0.0
      %435 = vmatprep.subr.mxu0 0.0
      %436 = vmatpush1.msra.mxu0 0.0
      %437 = vmatprep.subr.mxu0 0.0
      %438 = vmatpush1.msra.mxu0 0.0
      %439 = vmatprep.subr.mxu0 0.0
      %440 = vmatpush1.msra.mxu0 0.0
      %441 = vmatprep.subr.mxu0 0.0
      %442 = vmatpush1.msra.mxu0 0.0
      %443 = vmatprep.subr.mxu0 0.0
      %444 = vmatpush1.msra.mxu0 0.0
      %445 = vmatprep.subr.mxu0 0.0
      %446 = vmatpush1.msra.mxu0 0.0
      %447 = vmatprep.subr.mxu0 0.0
      %448 = vmatpush1.msra.mxu0 0.0
      %449 = vmatprep.subr.mxu0 0.0
      %450 = vmatpush1.msra.mxu0 0.0
      %451 = vmatprep.subr.mxu0 0.0
      %452 = vmatpush1.msra.mxu0 0.0
      %453 = vmatprep.subr.mxu0 0.0
      %454 = vmatpush1.msra.mxu0 0.0
      %455 = vmatprep.subr.mxu0 0.0
      %456 = vmatpush1.msra.mxu0 0.0
      %457 = vmatprep.subr.mxu0 0.0
      %458 = vmatpush1.msra.mxu0 0.0
      %459 = vmatprep.subr.mxu0 0.0
      %460 = vmatpush1.msra.mxu0 0.0
      %461 = vmatprep.mubr.f32.mxu0 0.0
      %462 = vmatmul.mubr.f32.gmra.mrb[0].mxu0 %v374
      %v463 = vpop.f32.mrb[0].mxu0
      %v464 = vadd.f32 0.0, %v463
      %v465 = vpop.f32.mrb[0].mxu0
      %466 = vmatprep.mubr.f32.mxu0 0.0
      %467 = vmatmul.mubr.f32.gmra.mrb[0].mxu0 %v377
      %v468 = vpop.f32.mrb[0].mxu0
      %v469 = vadd.f32 0.0, %v468
      %v470 = vpop.f32.mrb[0].mxu0
      %471 = vmatprep.mubr.f32.mxu0 0.0
      %472 = vmatmul.mubr.f32.gmra.mrb[0].mxu0 %v380
      %v473 = vpop.f32.mrb[0].mxu0
      %v474 = vadd.f32 0.0, %v473
      %v475 = vpop.f32.mrb[0].mxu0
      %476 = vmatprep.mubr.f32.mxu0 0.0
      %477 = vmatmul.mubr.f32.gmra.mrb[0].mxu0 %v383
      %v478 = vpop.f32.mrb[0].mxu0
      %v479 = vadd.f32 0.0, %v478
      %v480 = vpop.f32.mrb[0].mxu0
      %481 = vmatprep.mubr.f32.mxu0 0.0
      %482 = vmatmul.mubr.f32.gmra.mrb[0].mxu0 %v386
      %v483 = vpop.f32.mrb[0].mxu0
      %v484 = vadd.f32 0.0, %v483
      %v485 = vpop.f32.mrb[0].mxu0
      %486 = vmatprep.mubr.f32.mxu0 0.0
      %487 = vmatmul.mubr.f32.gmra.mrb[0].mxu0 %v389
      %v488 = vpop.f32.mrb[0].mxu0
      %v489 = vadd.f32 0.0, %v488
      %v490 = vpop.f32.mrb[0].mxu0
      %491 = vmatprep.mubr.f32.mxu0 0.0
      %492 = vmatmul.mubr.f32.gmra.mrb[0].mxu0 %v392
      %v493 = vpop.f32.mrb[0].mxu0
      %v494 = vadd.f32 0.0, %v493
      %v495 = vpop.f32.mrb[0].mxu0
      %496 = vmatprep.mubr.f32.mxu0 0.0
      %497 = vmatmul.mubr.f32.gmra.mrb[0].mxu0 %v395
      %v498 = vpop.f32.mrb[0].mxu0
      %v499 = vadd.f32 0.0, %v498
      %v500 = vpop.f32.mrb[0].mxu0
      %501 = vdwg.mxu0
      %vm502 = vcmask 523264
      %503 = vst.msk [vmem:[%s277] sm:$0xff] %vm502, %v464
      %504 = vst.msk [vmem:[%s277 + $0x8] sm:$0xff] %vm502, %v469
      %505 = vst.msk [vmem:[%s277 + $0x10] sm:$0xff] %vm502, %v474
      %506 = vst.msk [vmem:[%s277 + $0x18] sm:$0xff] %vm502, %v479
      %507 = vst.msk [vmem:[%s277 + $0x20] sm:$0xff] %vm502, %v484
      %508 = vst.msk [vmem:[%s277 + $0x28] sm:$0xff] %vm502, %v489
      %509 = vst.msk [vmem:[%s277 + $0x30] sm:$0xff] %vm502, %v494
      %510 = vst.msk [vmem:[%s277 + $0x38] sm:$0xff] %vm502, %v499
      %s511 = smul.u32 8, %s22
      %p512 = scmp.lt.s32.totalorder %s20, 1
      %s513 = scalar_select %p512, %s20, 1
      %p514 = scmp.lt.s32.totalorder %s21, 13
      %s515 = scalar_select %p514, %s21, 13
      %p516 = scmp.lt.s32.totalorder %s511, 7
      %s517 = scalar_select %p516, %s511, 7
      %p518 = scmp.lt.s32.totalorder %s23, 0
      %s519 = scalar_select %p518, %s23, 0
      %s520 = sadd.s32 %s519, %s517
      %s521 = smul.addr %s515, 8
      %s522 = sadd.s32 %s520, %s521
      %s523 = smul.addr %s513, 112
      %s524 = sadd.s32 %s522, %s523
      %s525 = smul.addr %s524, 8
      %s526 = scalar_lea.vmem %s3, %s525
      // Predicated region
      $region33: #{_hitnet_forward_impl.21} parent=31 // pred_check
        %p527 = pneg %p144
      $region34: #{_hitnet_forward_impl.21} parent=31 // pred_check_branch
        %529 = sbr.rel (%p527) target = $region36
      $region35: #{_hitnet_forward_impl.21} parent=31 // pred_region
        %s530 = smul.u32 8, %s22
      $region36: #{_hitnet_forward_impl.21} parent=31 // pred_fallthru
        _
    $region32: #{_hitnet_forward_impl.21} parent=5 // pred_fallthru
      _
    %p531 = scmp.le.s32.totalorder 2, %s9
    // Predicated region
    $region37: #{_hitnet_forward_impl.21} parent=5 // pred_check
      %p532 = pneg %p531
    $region38: #{_hitnet_forward_impl.21} parent=5 // pred_check_branch
      %534 = sbr.rel (%p532) target = $region40
    $region39: #{_hitnet_forward_impl.21} parent=5 // pred_region
      %s535 = ssub.s32 %s9, 2
      // Predicated region
      $region41: #{_hitnet_forward_impl.21} parent=39 // pred_check
        %p536 = pneg %p150
      $region42: #{_hitnet_forward_impl.21} parent=39 // pred_check_branch
        %538 = sbr.rel (%p536) target = $region44
      $region43: #{_hitnet_forward_impl.21} parent=39 // pred_region
        %s539 = smul.u32 8, %s26
        %p540 = scmp.lt.s32.totalorder %s24, 1
        %s541 = scalar_select %p540, %s24, 1
        %p542 = scmp.lt.s32.totalorder %s25, 13
        %s543 = scalar_select %p542, %s25, 13
        %p544 = scmp.lt.s32.totalorder %s539, 7
        %s545 = scalar_select %p544, %s539, 7
        %p546 = scmp.lt.s32.totalorder %s27, 0
        %s547 = scalar_select %p546, %s27, 0
        %s548 = sadd.s32 %s547, %s545
        %s549 = smul.addr %s543, 8
        %s550 = sadd.s32 %s548, %s549
        %s551 = smul.addr %s541, 112
        %s552 = sadd.s32 %s550, %s551
        %s553 = smul.addr %s552, 8
        %s554 = scalar_lea.vmem %s3, %s553
      $region44: #{_hitnet_forward_impl.21} parent=39 // pred_fallthru
        _
    $region40: #{_hitnet_forward_impl.21} parent=5 // pred_fallthru
      _
  $region6: #{_hitnet_forward_impl.21} parent=0 // loop_footer
    %s13 = sadd.s32 1, %s9
  $region7: #{_hitnet_forward_impl.21} parent=0 // loop_footer_branch
    %8 = sbr.rel target = $region3
  $region8: #{_hitnet_forward_impl.21} parent=0 // loop_exit
    _

// kernel: _hitnet_forward_impl.23
$region0: #{_hitnet_forward_impl.23}
  #allocation0 [shape = 'u32[]', space=smem, size = 0x4, offset = 0x4, fixed_abs, tag = 'smem constant byte address 0x4 - core index']
  #allocation1 [shape = 'u32[144,128]{1,0:T(1,128)}', space=vmem, size = 0x12000, scoped, tag = 'internal scratch']
  %s0 = inlined_call_operand.vmem [shape: f32[2,4,32,32], index: 0, kind: input, shape index: {}]
  %s1 = inlined_call_operand.vmem [shape: f32[32,64], index: 1, kind: input, shape index: {}]
  %s2 = inlined_call_operand.vmem [shape: f32[64,32], index: 2, kind: input, shape index: {}]
  %s3 = inlined_call_operand.vmem [shape: f32[2,4,64,64], index: 3, kind: output, shape index: {}]
  %s4 = sld [smem:[#allocation0]]
  $region45: #{_hitnet_forward_impl.23} parent=0
    _
  %s6 = ssub.s32 1, %s4
  %s7 = scalar_select 0, %s6, %s4
  loop: start=0, step=1, limit=10
  $region2: #{_hitnet_forward_impl.23} parent=0 // loop_pre_header
    _
  $region3: #{_hitnet_forward_impl.23} parent=0 // loop_header
    %s9 = sphi 0, %s13
    %p10 = scmp.ge.s32.totalorder %s9, 10
    %s16 = sphi 0, %s42
    %s17 = sphi 0, %s38
    %s18 = sphi 0, %s34
    %s19 = sphi 0, %s30
    %s20 = sphi 0, %s16
    %s21 = sphi 0, %s17
    %s22 = sphi 0, %s18
    %s23 = sphi 0, %s19
    %s24 = sphi 0, %s20
    %s25 = sphi 0, %s21
    %s26 = sphi 0, %s22
    %s27 = sphi 0, %s23
    %s47 = sphi 0, %s49
    %s50 = sphi 0, %s47
    %s51 = sphi 0, %s50
    %s67 = sphi 0, %s51
    %s73 = sphi 0, %s75
    %s76 = sphi 0, %s73
    %s77 = sphi 0, %s76
    %s93 = sphi 0, %s77
    %s99 = sphi 0, %s101
    %s102 = sphi 0, %s99
    %s103 = sphi 0, %s102
    %s119 = sphi 0, %s103
    %s131 = sphi 0, %s133
    %s134 = sphi 0, %s131
    %s135 = sphi 0, %s134
    %s151 = sphi 0, %s135
  $region4: #{_hitnet_forward_impl.23} parent=0 // loop_header_branch
    %12 = sbr.rel (%p10) target = $region8
  $region5: #{_hitnet_forward_impl.23} parent=0 // loop_body
    %s14 = ssub.s32 %s9, 1
    %s15 = ssub.s32 %s9, 2
    %s28 = sadd.s32 1, %s19
    %p29 = scmp.ge.s32.totalorder %s28, 1
    %s30 = scalar_select %p29, 0, %s28
    %s31 = sadd.s32 1, %s18
    %s32 = scalar_select %p29, %s31, %s18
    %p33 = scmp.ge.s32.totalorder %s32, 1
    %s34 = scalar_select %p33, 0, %s32
    %s35 = sadd.s32 1, %s17
    %s36 = scalar_select %p33, %s35, %s17
    %p37 = scmp.ge.s32.totalorder %s36, 4
    %s38 = scalar_select %p37, 0, %s36
    %s39 = sadd.s32 1, %s16
    %s40 = scalar_select %p37, %s39, %s16
    %p41 = scmp.ge.s32.totalorder %s40, 2
    %s42 = scalar_select %p41, 0, %s40
    %s43 = ssub.s32 %s16, %s42
    %s44 = ssub.s32 %s17, %s38
    %s45 = sor.u32 %s43, %s44
    %p46 = scmp.eq.s32.totalorder %s45, 0
    %s48 = sadd.s32 %s47, 1
    %s49 = scalar_select %p46, %s47, %s48
    %p52 = pneg %p46
    %p53 = scmp.eq.s32.totalorder %s9, 7
    %p54 = por %p52, %p53
    %p55 = scmp.ne.s32.totalorder %s47, %s50
    %p56 = scmp.eq.s32.totalorder %s9, 0
    %p57 = por %p55, %p56
    %p58 = scmp.ne.s32.totalorder %s47, %s50
    %p59 = scmp.eq.s32.totalorder %s14, 7
    %p60 = por %p58, %p59
    %p61 = scmp.ne.s32.totalorder %s50, %s51
    %p62 = scmp.eq.s32.totalorder %s14, 0
    %p63 = por %p61, %p62
    %p64 = scmp.ne.s32.totalorder %s50, %s51
    %p65 = scmp.eq.s32.totalorder %s15, 7
    %p66 = por %p64, %p65
    %p68 = scmp.ne.s32.totalorder %s51, %s67
    %p69 = scmp.eq.s32.totalorder %s15, 0
    %p70 = por %p68, %p69
    %s71 = ssub.s32 %s19, %s30
    %p72 = scmp.eq.s32.totalorder %s71, 0
    %s74 = sadd.s32 %s73, 1
    %s75 = scalar_select %p72, %s73, %s74
    %p78 = pneg %p72
    %p79 = scmp.eq.s32.totalorder %s9, 7
    %p80 = por %p78, %p79
    %p81 = scmp.ne.s32.totalorder %s73, %s76
    %p82 = scmp.eq.s32.totalorder %s9, 0
    %p83 = por %p81, %p82
    %p84 = scmp.ne.s32.totalorder %s73, %s76
    %p85 = scmp.eq.s32.totalorder %s14, 7
    %p86 = por %p84, %p85
    %p87 = scmp.ne.s32.totalorder %s76, %s77
    %p88 = scmp.eq.s32.totalorder %s14, 0
    %p89 = por %p87, %p88
    %p90 = scmp.ne.s32.totalorder %s76, %s77
    %p91 = scmp.eq.s32.totalorder %s15, 7
    %p92 = por %p90, %p91
    %p94 = scmp.ne.s32.totalorder %s77, %s93
    %p95 = scmp.eq.s32.totalorder %s15, 0
    %p96 = por %p94, %p95
    %s97 = ssub.s32 %s18, %s34
    %p98 = scmp.eq.s32.totalorder %s97, 0
    %s100 = sadd.s32 %s99, 1
    %s101 = scalar_select %p98, %s99, %s100
    %p104 = pneg %p98
    %p105 = scmp.eq.s32.totalorder %s9, 7
    %p106 = por %p104, %p105
    %p107 = scmp.ne.s32.totalorder %s99, %s102
    %p108 = scmp.eq.s32.totalorder %s9, 0
    %p109 = por %p107, %p108
    %p110 = scmp.ne.s32.totalorder %s99, %s102
    %p111 = scmp.eq.s32.totalorder %s14, 7
    %p112 = por %p110, %p111
    %p113 = scmp.ne.s32.totalorder %s102, %s103
    %p114 = scmp.eq.s32.totalorder %s14, 0
    %p115 = por %p113, %p114
    %p116 = scmp.ne.s32.totalorder %s102, %s103
    %p117 = scmp.eq.s32.totalorder %s15, 7
    %p118 = por %p116, %p117
    %p120 = scmp.ne.s32.totalorder %s103, %s119
    %p121 = scmp.eq.s32.totalorder %s15, 0
    %p122 = por %p120, %p121
    %s123 = ssub.s32 %s16, %s42
    %s124 = ssub.s32 %s17, %s38
    %s125 = sor.u32 %s123, %s124
    %s126 = ssub.s32 %s18, %s34
    %s127 = sor.u32 %s125, %s126
    %s128 = ssub.s32 %s19, %s30
    %s129 = sor.u32 %s127, %s128
    %p130 = scmp.eq.s32.totalorder %s129, 0
    %s132 = sadd.s32 %s131, 1
    %s133 = scalar_select %p130, %s131, %s132
    %p136 = pneg %p130
    %p137 = scmp.eq.s32.totalorder %s9, 7
    %p138 = por %p136, %p137
    %p139 = scmp.ne.s32.totalorder %s131, %s134
    %p140 = scmp.eq.s32.totalorder %s9, 0
    %p141 = por %p139, %p140
    %p142 = scmp.ne.s32.totalorder %s131, %s134
    %p143 = scmp.eq.s32.totalorder %s14, 7
    %p144 = por %p142, %p143
    %p145 = scmp.ne.s32.totalorder %s134, %s135
    %p146 = scmp.eq.s32.totalorder %s14, 0
    %p147 = por %p145, %p146
    %p148 = scmp.ne.s32.totalorder %s134, %s135
    %p149 = scmp.eq.s32.totalorder %s15, 7
    %p150 = por %p148, %p149
    %p152 = scmp.ne.s32.totalorder %s135, %s151
    %p153 = scmp.eq.s32.totalorder %s15, 0
    %p154 = por %p152, %p153
    %p155 = scmp.le.s32.totalorder 1, %s9
    %p156 = scmp.lt.s32.totalorder %s9, 9
    %p157 = pnand %p155, %p156
    %p158 = pneg %p157
    // Predicated region
    $region9: #{_hitnet_forward_impl.23} parent=5 // pred_check
      _
    $region10: #{_hitnet_forward_impl.23} parent=5 // pred_check_branch
      %160 = sbr.rel (%p157) target = $region12
    $region11: #{_hitnet_forward_impl.23} parent=5 // pred_region
      %s161 = ssub.s32 %s9, 1
      // Predicated region
      $region13: #{_hitnet_forward_impl.23} parent=11 // pred_check
        %p162 = pneg %p89
      $region14: #{_hitnet_forward_impl.23} parent=11 // pred_check_branch
        %164 = sbr.rel (%p162) target = $region16
      $region15: #{_hitnet_forward_impl.23} parent=11 // pred_region
        %p165 = scmp.lt.s32.totalorder %s23, 0
        %s166 = scalar_select %p165, %s23, 0
        %s167 = smul.addr %s166, 8
        %s168 = scalar_lea.vmem %s1, %s167
      $region16: #{_hitnet_forward_impl.23} parent=11 // pred_fallthru
        _
      // Predicated region
      $region17: #{_hitnet_forward_impl.23} parent=11 // pred_check
        %p169 = pneg %p115
      $region18: #{_hitnet_forward_impl.23} parent=11 // pred_check_branch
        %171 = sbr.rel (%p169) target = $region20
      $region19: #{_hitnet_forward_impl.23} parent=11 // pred_region
        %s172 = smul.u32 8, %s22
        %p173 = scmp.lt.s32.totalorder %s172, 7
        %s174 = scalar_select %p173, %s172, 7
        %s175 = smul.addr %s174, 8
        %s176 = scalar_lea.vmem %s2, %s175
        %s177 = smul.u32 8, %s22
      $region20: #{_hitnet_forward_impl.23} parent=11 // pred_fallthru
        _
    $region12: #{_hitnet_forward_impl.23} parent=5 // pred_fallthru
      _
    %p178 = scmp.lt.s32.totalorder %s9, 8
    // Predicated region
    $region21: #{_hitnet_forward_impl.23} parent=5 // pred_check
      %p179 = pneg %p178
    $region22: #{_hitnet_forward_impl.23} parent=5 // pred_check_branch
      %181 = sbr.rel (%p179) target = $region24
    $region23: #{_hitnet_forward_impl.23} parent=5 // pred_region
      // Predicated region
      $region25: #{_hitnet_forward_impl.23} parent=23 // pred_check
        %p182 = pneg %p57
      $region26: #{_hitnet_forward_impl.23} parent=23 // pred_check_branch
        %184 = sbr.rel (%p182) target = $region28
      $region27: #{_hitnet_forward_impl.23} parent=23 // pred_region
        %p185 = scmp.lt.s32.totalorder %s16, 1
        %s186 = scalar_select %p185, %s16, 1
        %p187 = scmp.lt.s32.totalorder %s17, 3
        %s188 = scalar_select %p187, %s17, 3
        %s189 = smul.addr %s188, 4
        %s190 = smul.addr %s186, 16
        %s191 = sadd.s32 %s189, %s190
        %s192 = smul.addr %s191, 8
        %s193 = scalar_lea.vmem %s0, %s192
      $region28: #{_hitnet_forward_impl.23} parent=23 // pred_fallthru
        _
    $region24: #{_hitnet_forward_impl.23} parent=5 // pred_fallthru
      _
    %p194 = scmp.le.s32.totalorder 1, %s9
    %p195 = scmp.lt.s32.totalorder %s9, 9
    %p196 = pnand %p194, %p195
    %p197 = pneg %p196
    // Predicated region
    $region29: #{_hitnet_forward_impl.23} parent=5 // pred_check
      _
    $region30: #{_hitnet_forward_impl.23} parent=5 // pred_check_branch
      %199 = sbr.rel (%p196) target = $region32
    $region31: #{_hitnet_forward_impl.23} parent=5 // pred_region
      %s200 = ssub.s32 %s9, 1
      %p201 = scmp.lt.s32.totalorder %s20, 1
      %s202 = scalar_select %p201, %s20, 1
      %p203 = scmp.lt.s32.totalorder %s21, 3
      %s204 = scalar_select %p203, %s21, 3
      %s205 = smul.addr %s204, 4
      %s206 = smul.addr %s202, 16
      %s207 = sadd.s32 %s205, %s206
      %s208 = smul.addr %s207, 8
      %s209 = scalar_lea.vmem %s0, %s208
      %p210 = pneg %p63
      %p211 = pneg %p60
      %p212 = scmp.lt.s32.totalorder %s23, 0
      %s213 = scalar_select %p212, %s23, 0
      %s214 = smul.addr %s213, 8
      %s215 = scalar_lea.vmem %s1, %s214
      %p216 = pneg %p89
      %p217 = pneg %p86
      %s218 = smul.u32 8, %s22
      %p219 = scmp.lt.s32.totalorder %s218, 7
      %s220 = scalar_select %p219, %s218, 7
      %s221 = smul.addr %s220, 8
      %s222 = scalar_lea.vmem %s2, %s221
      %p223 = pneg %p115
      %p224 = pneg %p112
      %p225 = pneg %p147
      %p226 = pneg %p144
      %s227 = smul.u32 8, %s22
      %p228 = scmp.lt.s32.totalorder %s20, 1
      %s229 = scalar_select %p228, %s20, 1
      %p230 = scmp.lt.s32.totalorder %s21, 3
      %s231 = scalar_select %p230, %s21, 3
      %p232 = scmp.lt.s32.totalorder %s227, 7
      %s233 = scalar_select %p232, %s227, 7
      %p234 = scmp.lt.s32.totalorder %s23, 0
      %s235 = scalar_select %p234, %s23, 0
      %s236 = sadd.s32 %s235, %s233
      %s237 = smul.addr %s231, 8
      %s238 = sadd.s32 %s236, %s237
      %s239 = smul.addr %s229, 32
      %s240 = sadd.s32 %s238, %s239
      %s241 = smul.addr %s240, 8
      %s242 = scalar_lea.vmem %s3, %s241
      %p243 = scmp.lt.s32.totalorder %s20, 1
      %s244 = scalar_select %p243, %s20, 1
      %p245 = scmp.lt.s32.totalorder %s21, 3
      %s246 = scalar_select %p245, %s21, 3
      %s247 = smul.addr %s246, 4
      %s248 = smul.addr %s244, 16
      %s249 = sadd.s32 %s247, %s248
      %s250 = smul.addr %s249, 8
      %s251 = scalar_lea.vmem %s0, %s250
      %p252 = scmp.lt.s32.totalorder %s23, 0
      %s253 = scalar_select %p252, %s23, 0
      %s254 = smul.addr %s253, 8
      %s255 = scalar_lea.vmem %s1, %s254
      %s256 = smul.u32 8, %s22
      %p257 = scmp.lt.s32.totalorder %s256, 7
      %s258 = scalar_select %p257, %s256, 7
      %s259 = smul.addr %s258, 8
      %s260 = scalar_lea.vmem %s2, %s259
      %s261 = smul.u32 8, %s22
      %s262 = smul.u32 8, %s22
      %p263 = scmp.lt.s32.totalorder %s20, 1
      %s264 = scalar_select %p263, %s20, 1
      %p265 = scmp.lt.s32.totalorder %s21, 3
      %s266 = scalar_select %p265, %s21, 3
      %p267 = scmp.lt.s32.totalorder %s262, 7
      %s268 = scalar_select %p267, %s262, 7
      %p269 = scmp.lt.s32.totalorder %s23, 0
      %s270 = scalar_select %p269, %s23, 0
      %s271 = sadd.s32 %s270, %s268
      %s272 = smul.addr %s266, 8
      %s273 = sadd.s32 %s271, %s272
      %s274 = smul.addr %s264, 32
      %s275 = sadd.s32 %s273, %s274
      %s276 = smul.addr %s275, 8
      %s277 = scalar_lea.vmem %s3, %s276
      %s278 = smul.u32 8, %s22
      %v279 = vld [vmem:[%s251] sm:$0xff]
      %v280 = vld [vmem:[%s251 + $0x8] sm:$0xff]
      %v281 = vld [vmem:[%s251 + $0x10] sm:$0xff]
      %v282 = vld [vmem:[%s251 + $0x18] sm:$0xff]
      %v283 = vld [vmem:[%s255] sm:$0xff]
      %v284 = vld [vmem:[%s255 + $0x8] sm:$0xff]
      %v285 = vld [vmem:[%s255 + $0x10] sm:$0xff]
      %v286 = vld [vmem:[%s255 + $0x18] sm:$0xff]
      %vm287 = vcmask 261120
      %v289 = vsel %vm287, %v279, 0
      %v292 = vsel %vm287, %v280, 0
      %v295 = vsel %vm287, %v281, 0
      %v298 = vsel %vm287, %v282, 0
      %300 = vmatprep.subr.mxu0 0.0
      %301 = vmatpush1.msra.mxu0 %v283
      %302 = vmatprep.subr.mxu0 0.0
      %303 = vmatpush1.msra.mxu0 %v284
      %304 = vmatprep.subr.mxu0 0.0
      %305 = vmatpush1.msra.mxu0 %v285
      %306 = vmatprep.subr.mxu0 0.0
      %307 = vmatpush1.msra.mxu0 %v286
      %308 = vmatprep.subr.mxu0 0.0
      %309 = vmatpush1.msra.mxu0 0.0
      %310 = vmatprep.subr.mxu0 0.0
      %311 = vmatpush1.msra.mxu0 0.0
      %312 = vmatprep.subr.mxu0 0.0
      %313 = vmatpush1.msra.mxu0 0.0
      %314 = vmatprep.subr.mxu0 0.0
      %315 = vmatpush1.msra.mxu0 0.0
      %316 = vmatprep.subr.mxu0 0.0
      %317 = vmatpush1.msra.mxu0 0.0
      %318 = vmatprep.subr.mxu0 0.0
      %319 = vmatpush1.msra.mxu0 0.0
      %320 = vmatprep.subr.mxu0 0.0
      %321 = vmatpush1.msra.mxu0 0.0
      %322 = vmatprep.subr.mxu0 0.0
      %323 = vmatpush1.msra.mxu0 0.0
      %324 = vmatprep.subr.mxu0 0.0
      %325 = vmatpush1.msra.mxu0 0.0
      %326 = vmatprep.subr.mxu0 0.0
      %327 = vmatpush1.msra.mxu0 0.0
      %328 = vmatprep.subr.mxu0 0.0
      %329 = vmatpush1.msra.mxu0 0.0
      %330 = vmatprep.subr.mxu0 0.0
      %331 = vmatpush1.msra.mxu0 0.0
      %332 = vmatprep.subr.mxu0 0.0
      %333 = vmatpush1.msra.mxu0 0.0
      %334 = vmatprep.subr.mxu0 0.0
      %335 = vmatpush1.msra.mxu0 0.0
      %336 = vmatprep.subr.mxu0 0.0
      %337 = vmatpush1.msra.mxu0 0.0
      %338 = vmatprep.subr.mxu0 0.0
      %339 = vmatpush1.msra.mxu0 0.0
      %340 = vmatprep.subr.mxu0 0.0
      %341 = vmatpush1.msra.mxu0 0.0
      %342 = vmatprep.subr.mxu0 0.0
      %343 = vmatpush1.msra.mxu0 0.0
      %344 = vmatprep.subr.mxu0 0.0
      %345 = vmatpush1.msra.mxu0 0.0
      %346 = vmatprep.subr.mxu0 0.0
      %347 = vmatpush1.msra.mxu0 0.0
      %348 = vmatprep.subr.mxu0 0.0
      %349 = vmatpush1.msra.mxu0 0.0
      %350 = vmatprep.subr.mxu0 0.0
      %351 = vmatpush1.msra.mxu0 0.0
      %352 = vmatprep.subr.mxu0 0.0
      %353 = vmatpush1.msra.mxu0 0.0
      %354 = vmatprep.subr.mxu0 0.0
      %355 = vmatpush1.msra.mxu0 0.0
      %356 = vmatprep.subr.mxu0 0.0
      %357 = vmatpush1.msra.mxu0 0.0
      %358 = vmatprep.subr.mxu0 0.0
      %359 = vmatpush1.msra.mxu0 0.0
      %360 = vmatprep.subr.mxu0 0.0
      %361 = vmatpush1.msra.mxu0 0.0
      %362 = vmatprep.subr.mxu0 0.0
      %363 = vmatpush1.msra.mxu0 0.0
      %364 = vmatprep.mubr.f32.mxu0 0.0
      %365 = vmatmul.mubr.f32.gmra.mrb[0].mxu0 %v289
      %v366 = vpop.f32.mrb[0].mxu0
      %v367 = vadd.f32 0.0, %v366
      %v368 = vpop.f32.mrb[0].mxu0
      %369 = vmatprep.mubr.f32.mxu0 0.0
      %370 = vmatmul.mubr.f32.gmra.mrb[0].mxu0 %v292
      %v371 = vpop.f32.mrb[0].mxu0
      %v372 = vadd.f32 0.0, %v371
      %v373 = vpop.f32.mrb[0].mxu0
      %374 = vmatprep.mubr.f32.mxu0 0.0
      %375 = vmatmul.mubr.f32.gmra.mrb[0].mxu0 %v295
      %v376 = vpop.f32.mrb[0].mxu0
      %v377 = vadd.f32 0.0, %v376
      %v378 = vpop.f32.mrb[0].mxu0
      %379 = vmatprep.mubr.f32.mxu0 0.0
      %380 = vmatmul.mubr.f32.gmra.mrb[0].mxu0 %v298
      %v381 = vpop.f32.mrb[0].mxu0
      %v382 = vadd.f32 0.0, %v381
      %v383 = vpop.f32.mrb[0].mxu0
      %384 = vdwg.mxu0
      %v385 = vld [vmem:[%s260] sm:$0xff]
      %v386 = vld [vmem:[%s260 + $0x8] sm:$0xff]
      %v387 = vld [vmem:[%s260 + $0x10] sm:$0xff]
      %v388 = vld [vmem:[%s260 + $0x18] sm:$0xff]
      %v389 = vld [vmem:[%s260 + $0x20] sm:$0xff]
      %v390 = vld [vmem:[%s260 + $0x28] sm:$0xff]
      %v391 = vld [vmem:[%s260 + $0x30] sm:$0xff]
      %v392 = vld [vmem:[%s260 + $0x38] sm:$0xff]
      %v394 = vsel %vm287, %v385, 0
      %v397 = vsel %vm287, %v386, 0
      %v400 = vsel %vm287, %v387, 0
      %v403 = vsel %vm287, %v388, 0
      %v406 = vsel %vm287, %v389, 0
      %v409 = vsel %vm287, %v390, 0
      %v412 = vsel %vm287, %v391, 0
      %v415 = vsel %vm287, %v392, 0
      %417 = vmatprep.subr.mxu0 0.0
      %418 = vmatpush1.msra.mxu0 %v367
      %419 = vmatprep.subr.mxu0 0.0
      %420 = vmatpush1.msra.mxu0 %v372
      %421 = vmatprep.subr.mxu0 0.0
      %422 = vmatpush1.msra.mxu0 %v377
      %423 = vmatprep.subr.mxu0 0.0
      %424 = vmatpush1.msra.mxu0 %v382
      %425 = vmatprep.subr.mxu0 0.0
      %426 = vmatpush1.msra.mxu0 0.0
      %427 = vmatprep.subr.mxu0 0.0
      %428 = vmatpush1.msra.mxu0 0.0
      %429 = vmatprep.subr.mxu0 0.0
      %430 = vmatpush1.msra.mxu0 0.0
      %431 = vmatprep.subr.mxu0 0.0
      %432 = vmatpush1.msra.mxu0 0.0
      %433 = vmatprep.subr.mxu0 0.0
      %434 = vmatpush1.msra.mxu0 0.0
      %435 = vmatprep.subr.mxu0 0.0
      %436 = vmatpush1.msra.mxu0 0.0
      %437 = vmatprep.subr.mxu0 0.0
      %438 = vmatpush1.msra.mxu0 0.0
      %439 = vmatprep.subr.mxu0 0.0
      %440 = vmatpush1.msra.mxu0 0.0
      %441 = vmatprep.subr.mxu0 0.0
      %442 = vmatpush1.msra.mxu0 0.0
      %443 = vmatprep.subr.mxu0 0.0
      %444 = vmatpush1.msra.mxu0 0.0
      %445 = vmatprep.subr.mxu0 0.0
      %446 = vmatpush1.msra.mxu0 0.0
      %447 = vmatprep.subr.mxu0 0.0
      %448 = vmatpush1.msra.mxu0 0.0
      %449 = vmatprep.subr.mxu0 0.0
      %450 = vmatpush1.msra.mxu0 0.0
      %451 = vmatprep.subr.mxu0 0.0
      %452 = vmatpush1.msra.mxu0 0.0
      %453 = vmatprep.subr.mxu0 0.0
      %454 = vmatpush1.msra.mxu0 0.0
      %455 = vmatprep.subr.mxu0 0.0
      %456 = vmatpush1.msra.mxu0 0.0
      %457 = vmatprep.subr.mxu0 0.0
      %458 = vmatpush1.msra.mxu0 0.0
      %459 = vmatprep.subr.mxu0 0.0
      %460 = vmatpush1.msra.mxu0 0.0
      %461 = vmatprep.subr.mxu0 0.0
      %462 = vmatpush1.msra.mxu0 0.0
      %463 = vmatprep.subr.mxu0 0.0
      %464 = vmatpush1.msra.mxu0 0.0
      %465 = vmatprep.subr.mxu0 0.0
      %466 = vmatpush1.msra.mxu0 0.0
      %467 = vmatprep.subr.mxu0 0.0
      %468 = vmatpush1.msra.mxu0 0.0
      %469 = vmatprep.subr.mxu0 0.0
      %470 = vmatpush1.msra.mxu0 0.0
      %471 = vmatprep.subr.mxu0 0.0
      %472 = vmatpush1.msra.mxu0 0.0
      %473 = vmatprep.subr.mxu0 0.0
      %474 = vmatpush1.msra.mxu0 0.0
      %475 = vmatprep.subr.mxu0 0.0
      %476 = vmatpush1.msra.mxu0 0.0
      %477 = vmatprep.subr.mxu0 0.0
      %478 = vmatpush1.msra.mxu0 0.0
      %479 = vmatprep.subr.mxu0 0.0
      %480 = vmatpush1.msra.mxu0 0.0
      %481 = vmatprep.mubr.f32.mxu0 0.0
      %482 = vmatmul.mubr.f32.gmra.mrb[0].mxu0 %v394
      %v483 = vpop.f32.mrb[0].mxu0
      %v484 = vadd.f32 0.0, %v483
      %v485 = vpop.f32.mrb[0].mxu0
      %486 = vmatprep.mubr.f32.mxu0 0.0
      %487 = vmatmul.mubr.f32.gmra.mrb[0].mxu0 %v397
      %v488 = vpop.f32.mrb[0].mxu0
      %v489 = vadd.f32 0.0, %v488
      %v490 = vpop.f32.mrb[0].mxu0
      %491 = vmatprep.mubr.f32.mxu0 0.0
      %492 = vmatmul.mubr.f32.gmra.mrb[0].mxu0 %v400
      %v493 = vpop.f32.mrb[0].mxu0
      %v494 = vadd.f32 0.0, %v493
      %v495 = vpop.f32.mrb[0].mxu0
      %496 = vmatprep.mubr.f32.mxu0 0.0
      %497 = vmatmul.mubr.f32.gmra.mrb[0].mxu0 %v403
      %v498 = vpop.f32.mrb[0].mxu0
      %v499 = vadd.f32 0.0, %v498
      %v500 = vpop.f32.mrb[0].mxu0
      %501 = vmatprep.mubr.f32.mxu0 0.0
      %502 = vmatmul.mubr.f32.gmra.mrb[0].mxu0 %v406
      %v503 = vpop.f32.mrb[0].mxu0
      %v504 = vadd.f32 0.0, %v503
      %v505 = vpop.f32.mrb[0].mxu0
      %506 = vmatprep.mubr.f32.mxu0 0.0
      %507 = vmatmul.mubr.f32.gmra.mrb[0].mxu0 %v409
      %v508 = vpop.f32.mrb[0].mxu0
      %v509 = vadd.f32 0.0, %v508
      %v510 = vpop.f32.mrb[0].mxu0
      %511 = vmatprep.mubr.f32.mxu0 0.0
      %512 = vmatmul.mubr.f32.gmra.mrb[0].mxu0 %v412
      %v513 = vpop.f32.mrb[0].mxu0
      %v514 = vadd.f32 0.0, %v513
      %v515 = vpop.f32.mrb[0].mxu0
      %516 = vmatprep.mubr.f32.mxu0 0.0
      %517 = vmatmul.mubr.f32.gmra.mrb[0].mxu0 %v415
      %v518 = vpop.f32.mrb[0].mxu0
      %v519 = vadd.f32 0.0, %v518
      %v520 = vpop.f32.mrb[0].mxu0
      %521 = vdwg.mxu0
      %vm522 = vcmask 523264
      %523 = vst.msk [vmem:[%s277] sm:$0xff] %vm522, %v484
      %524 = vst.msk [vmem:[%s277 + $0x8] sm:$0xff] %vm522, %v489
      %525 = vst.msk [vmem:[%s277 + $0x10] sm:$0xff] %vm522, %v494
      %526 = vst.msk [vmem:[%s277 + $0x18] sm:$0xff] %vm522, %v499
      %527 = vst.msk [vmem:[%s277 + $0x20] sm:$0xff] %vm522, %v504
      %528 = vst.msk [vmem:[%s277 + $0x28] sm:$0xff] %vm522, %v509
      %529 = vst.msk [vmem:[%s277 + $0x30] sm:$0xff] %vm522, %v514
      %530 = vst.msk [vmem:[%s277 + $0x38] sm:$0xff] %vm522, %v519
      %s531 = smul.u32 8, %s22
      %p532 = scmp.lt.s32.totalorder %s20, 1
      %s533 = scalar_select %p532, %s20, 1
      %p534 = scmp.lt.s32.totalorder %s21, 3
      %s535 = scalar_select %p534, %s21, 3
      %p536 = scmp.lt.s32.totalorder %s531, 7
      %s537 = scalar_select %p536, %s531, 7
      %p538 = scmp.lt.s32.totalorder %s23, 0
      %s539 = scalar_select %p538, %s23, 0
      %s540 = sadd.s32 %s539, %s537
      %s541 = smul.addr %s535, 8
      %s542 = sadd.s32 %s540, %s541
      %s543 = smul.addr %s533, 32
      %s544 = sadd.s32 %s542, %s543
      %s545 = smul.addr %s544, 8
      %s546 = scalar_lea.vmem %s3, %s545
      // Predicated region
      $region33: #{_hitnet_forward_impl.23} parent=31 // pred_check
        %p547 = pneg %p144
      $region34: #{_hitnet_forward_impl.23} parent=31 // pred_check_branch
        %549 = sbr.rel (%p547) target = $region36
      $region35: #{_hitnet_forward_impl.23} parent=31 // pred_region
        %s550 = smul.u32 8, %s22
      $region36: #{_hitnet_forward_impl.23} parent=31 // pred_fallthru
        _
    $region32: #{_hitnet_forward_impl.23} parent=5 // pred_fallthru
      _
    %p551 = scmp.le.s32.totalorder 2, %s9
    // Predicated region
    $region37: #{_hitnet_forward_impl.23} parent=5 // pred_check
      %p552 = pneg %p551
    $region38: #{_hitnet_forward_impl.23} parent=5 // pred_check_branch
      %554 = sbr.rel (%p552) target = $region40
    $region39: #{_hitnet_forward_impl.23} parent=5 // pred_region
      %s555 = ssub.s32 %s9, 2
      // Predicated region
      $region41: #{_hitnet_forward_impl.23} parent=39 // pred_check
        %p556 = pneg %p150
      $region42: #{_hitnet_forward_impl.23} parent=39 // pred_check_branch
        %558 = sbr.rel (%p556) target = $region44
      $region43: #{_hitnet_forward_impl.23} parent=39 // pred_region
        %s559 = smul.u32 8, %s26
        %p560 = scmp.lt.s32.totalorder %s24, 1
        %s561 = scalar_select %p560, %s24, 1
        %p562 = scmp.lt.s32.totalorder %s25, 3
        %s563 = scalar_select %p562, %s25, 3
        %p564 = scmp.lt.s32.totalorder %s559, 7
        %s565 = scalar_select %p564, %s559, 7
        %p566 = scmp.lt.s32.totalorder %s27, 0
        %s567 = scalar_select %p566, %s27, 0
        %s568 = sadd.s32 %s567, %s565
        %s569 = smul.addr %s563, 8
        %s570 = sadd.s32 %s568, %s569
        %s571 = smul.addr %s561, 32
        %s572 = sadd.s32 %s570, %s571
        %s573 = smul.addr %s572, 8
        %s574 = scalar_lea.vmem %s3, %s573
      $region44: #{_hitnet_forward_impl.23} parent=39 // pred_fallthru
        _
    $region40: #{_hitnet_forward_impl.23} parent=5 // pred_fallthru
      _
  $region6: #{_hitnet_forward_impl.23} parent=0 // loop_footer
    %s13 = sadd.s32 1, %s9
  $region7: #{_hitnet_forward_impl.23} parent=0 // loop_footer_branch
    %8 = sbr.rel target = $region3
  $region8: #{_hitnet_forward_impl.23} parent=0 // loop_exit
    _

// kernel: _hitnet_forward_impl.20
$region0: #{_hitnet_forward_impl.20}
  #allocation0 [shape = 'u32[]', space=smem, size = 0x4, offset = 0x4, fixed_abs, tag = 'smem constant byte address 0x4 - core index']
  #allocation1 [shape = 'u32[144,128]{1,0:T(1,128)}', space=vmem, size = 0x12000, scoped, tag = 'internal scratch']
  %s0 = inlined_call_operand.vmem [shape: f32[2,6,16,16], index: 0, kind: input, shape index: {}]
  %s1 = inlined_call_operand.vmem [shape: f32[2,6,16,16], index: 1, kind: input, shape index: {}]
  %s2 = inlined_call_operand.vmem [shape: f32[2,6,16,16], index: 2, kind: input, shape index: {}]
  %s3 = inlined_call_operand.vmem [shape: f32[16,64], index: 3, kind: input, shape index: {}]
  %s4 = inlined_call_operand.vmem [shape: f32[16,64], index: 4, kind: input, shape index: {}]
  %s5 = inlined_call_operand.vmem [shape: f32[64,32], index: 5, kind: input, shape index: {}]
  %s6 = inlined_call_operand.vmem [shape: f32[2,6,64,64], index: 6, kind: output, shape index: {}]
  %s7 = sld [smem:[#allocation0]]
  $region57: #{_hitnet_forward_impl.20} parent=0
    _
  %s9 = ssub.s32 1, %s7
  %s10 = scalar_select 0, %s9, %s7
  loop: start=0, step=1, limit=14
  $region2: #{_hitnet_forward_impl.20} parent=0 // loop_pre_header
    _
  $region3: #{_hitnet_forward_impl.20} parent=0 // loop_header
    %s12 = sphi 0, %s16
    %p13 = scmp.ge.s32.totalorder %s12, 14
    %s19 = sphi 0, %s45
    %s20 = sphi 0, %s41
    %s21 = sphi 0, %s37
    %s22 = sphi 0, %s33
    %s23 = sphi 0, %s19
    %s24 = sphi 0, %s20
    %s25 = sphi 0, %s21
    %s26 = sphi 0, %s22
    %s27 = sphi 0, %s23
    %s28 = sphi 0, %s24
    %s29 = sphi 0, %s25
    %s30 = sphi 0, %s26
    %s50 = sphi 0, %s52
    %s53 = sphi 0, %s50
    %s54 = sphi 0, %s53
    %s70 = sphi 0, %s54
    %s78 = sphi 0, %s80
    %s81 = sphi 0, %s78
    %s82 = sphi 0, %s81
    %s98 = sphi 0, %s82
    %s106 = sphi 0, %s108
    %s109 = sphi 0, %s106
    %s110 = sphi 0, %s109
    %s126 = sphi 0, %s110
    %s132 = sphi 0, %s134
    %s135 = sphi 0, %s132
    %s136 = sphi 0, %s135
    %s152 = sphi 0, %s136
    %s158 = sphi 0, %s160
    %s161 = sphi 0, %s158
    %s162 = sphi 0, %s161
    %s178 = sphi 0, %s162
    %s184 = sphi 0, %s186
    %s187 = sphi 0, %s184
    %s188 = sphi 0, %s187
    %s204 = sphi 0, %s188
    %s216 = sphi 0, %s218
    %s219 = sphi 0, %s216
    %s220 = sphi 0, %s219
    %s236 = sphi 0, %s220
  $region4: #{_hitnet_forward_impl.20} parent=0 // loop_header_branch
    %15 = sbr.rel (%p13) target = $region8
  $region5: #{_hitnet_forward_impl.20} parent=0 // loop_body
    %s17 = ssub.s32 %s12, 1
    %s18 = ssub.s32 %s12, 2
    %s31 = sadd.s32 1, %s22
    %p32 = scmp.ge.s32.totalorder %s31, 1
    %s33 = scalar_select %p32, 0, %s31
    %s34 = sadd.s32 1, %s21
    %s35 = scalar_select %p32, %s34, %s21
    %p36 = scmp.ge.s32.totalorder %s35, 1
    %s37 = scalar_select %p36, 0, %s35
    %s38 = sadd.s32 1, %s20
    %s39 = scalar_select %p36, %s38, %s20
    %p40 = scmp.ge.s32.totalorder %s39, 6
    %s41 = scalar_select %p40, 0, %s39
    %s42 = sadd.s32 1, %s19
    %s43 = scalar_select %p40, %s42, %s19
    %p44 = scmp.ge.s32.totalorder %s43, 2
    %s45 = scalar_select %p44, 0, %s43
    %s46 = ssub.s32 %s19, %s45
    %s47 = ssub.s32 %s20, %s41
    %s48 = sor.u32 %s46, %s47
    %p49 = scmp.eq.s32.totalorder %s48, 0
    %s51 = sadd.s32 %s50, 1
    %s52 = scalar_select %p49, %s50, %s51
    %p55 = pneg %p49
    %p56 = scmp.eq.s32.totalorder %s12, 11
    %p57 = por %p55, %p56
    %p58 = scmp.ne.s32.totalorder %s50, %s53
    %p59 = scmp.eq.s32.totalorder %s12, 0
    %p60 = por %p58, %p59
    %p61 = scmp.ne.s32.totalorder %s50, %s53
    %p62 = scmp.eq.s32.totalorder %s17, 11
    %p63 = por %p61, %p62
    %p64 = scmp.ne.s32.totalorder %s53, %s54
    %p65 = scmp.eq.s32.totalorder %s17, 0
    %p66 = por %p64, %p65
    %p67 = scmp.ne.s32.totalorder %s53, %s54
    %p68 = scmp.eq.s32.totalorder %s18, 11
    %p69 = por %p67, %p68
    %p71 = scmp.ne.s32.totalorder %s54, %s70
    %p72 = scmp.eq.s32.totalorder %s18, 0
    %p73 = por %p71, %p72
    %s74 = ssub.s32 %s19, %s45
    %s75 = ssub.s32 %s20, %s41
    %s76 = sor.u32 %s74, %s75
    %p77 = scmp.eq.s32.totalorder %s76, 0
    %s79 = sadd.s32 %s78, 1
    %s80 = scalar_select %p77, %s78, %s79
    %p83 = pneg %p77
    %p84 = scmp.eq.s32.totalorder %s12, 11
    %p85 = por %p83, %p84
    %p86 = scmp.ne.s32.totalorder %s78, %s81
    %p87 = scmp.eq.s32.totalorder %s12, 0
    %p88 = por %p86, %p87
    %p89 = scmp.ne.s32.totalorder %s78, %s81
    %p90 = scmp.eq.s32.totalorder %s17, 11
    %p91 = por %p89, %p90
    %p92 = scmp.ne.s32.totalorder %s81, %s82
    %p93 = scmp.eq.s32.totalorder %s17, 0
    %p94 = por %p92, %p93
    %p95 = scmp.ne.s32.totalorder %s81, %s82
    %p96 = scmp.eq.s32.totalorder %s18, 11
    %p97 = por %p95, %p96
    %p99 = scmp.ne.s32.totalorder %s82, %s98
    %p100 = scmp.eq.s32.totalorder %s18, 0
    %p101 = por %p99, %p100
    %s102 = ssub.s32 %s19, %s45
    %s103 = ssub.s32 %s20, %s41
    %s104 = sor.u32 %s102, %s103
    %p105 = scmp.eq.s32.totalorder %s104, 0
    %s107 = sadd.s32 %s106, 1
    %s108 = scalar_select %p105, %s106, %s107
    %p111 = pneg %p105
    %p112 = scmp.eq.s32.totalorder %s12, 11
    %p113 = por %p111, %p112
    %p114 = scmp.ne.s32.totalorder %s106, %s109
    %p115 = scmp.eq.s32.totalorder %s12, 0
    %p116 = por %p114, %p115
    %p117 = scmp.ne.s32.totalorder %s106, %s109
    %p118 = scmp.eq.s32.totalorder %s17, 11
    %p119 = por %p117, %p118
    %p120 = scmp.ne.s32.totalorder %s109, %s110
    %p121 = scmp.eq.s32.totalorder %s17, 0
    %p122 = por %p120, %p121
    %p123 = scmp.ne.s32.totalorder %s109, %s110
    %p124 = scmp.eq.s32.totalorder %s18, 11
    %p125 = por %p123, %p124
    %p127 = scmp.ne.s32.totalorder %s110, %s126
    %p128 = scmp.eq.s32.totalorder %s18, 0
    %p129 = por %p127, %p128
    %s130 = ssub.s32 %s22, %s33
    %p131 = scmp.eq.s32.totalorder %s130, 0
    %s133 = sadd.s32 %s132, 1
    %s134 = scalar_select %p131, %s132, %s133
    %p137 = pneg %p131
    %p138 = scmp.eq.s32.totalorder %s12, 11
    %p139 = por %p137, %p138
    %p140 = scmp.ne.s32.totalorder %s132, %s135
    %p141 = scmp.eq.s32.totalorder %s12, 0
    %p142 = por %p140, %p141
    %p143 = scmp.ne.s32.totalorder %s132, %s135
    %p144 = scmp.eq.s32.totalorder %s17, 11
    %p145 = por %p143, %p144
    %p146 = scmp.ne.s32.totalorder %s135, %s136
    %p147 = scmp.eq.s32.totalorder %s17, 0
    %p148 = por %p146, %p147
    %p149 = scmp.ne.s32.totalorder %s135, %s136
    %p150 = scmp.eq.s32.totalorder %s18, 11
    %p151 = por %p149, %p150
    %p153 = scmp.ne.s32.totalorder %s136, %s152
    %p154 = scmp.eq.s32.totalorder %s18, 0
    %p155 = por %p153, %p154
    %s156 = ssub.s32 %s22, %s33
    %p157 = scmp.eq.s32.totalorder %s156, 0
    %s159 = sadd.s32 %s158, 1
    %s160 = scalar_select %p157, %s158, %s159
    %p163 = pneg %p157
    %p164 = scmp.eq.s32.totalorder %s12, 11
    %p165 = por %p163, %p164
    %p166 = scmp.ne.s32.totalorder %s158, %s161
    %p167 = scmp.eq.s32.totalorder %s12, 0
    %p168 = por %p166, %p167
    %p169 = scmp.ne.s32.totalorder %s158, %s161
    %p170 = scmp.eq.s32.totalorder %s17, 11
    %p171 = por %p169, %p170
    %p172 = scmp.ne.s32.totalorder %s161, %s162
    %p173 = scmp.eq.s32.totalorder %s17, 0
    %p174 = por %p172, %p173
    %p175 = scmp.ne.s32.totalorder %s161, %s162
    %p176 = scmp.eq.s32.totalorder %s18, 11
    %p177 = por %p175, %p176
    %p179 = scmp.ne.s32.totalorder %s162, %s178
    %p180 = scmp.eq.s32.totalorder %s18, 0
    %p181 = por %p179, %p180
    %s182 = ssub.s32 %s21, %s37
    %p183 = scmp.eq.s32.totalorder %s182, 0
    %s185 = sadd.s32 %s184, 1
    %s186 = scalar_select %p183, %s184, %s185
    %p189 = pneg %p183
    %p190 = scmp.eq.s32.totalorder %s12, 11
    %p191 = por %p189, %p190
    %p192 = scmp.ne.s32.totalorder %s184, %s187
    %p193 = scmp.eq.s32.totalorder %s12, 0
    %p194 = por %p192, %p193
    %p195 = scmp.ne.s32.totalorder %s184, %s187
    %p196 = scmp.eq.s32.totalorder %s17, 11
    %p197 = por %p195, %p196
    %p198 = scmp.ne.s32.totalorder %s187, %s188
    %p199 = scmp.eq.s32.totalorder %s17, 0
    %p200 = por %p198, %p199
    %p201 = scmp.ne.s32.totalorder %s187, %s188
    %p202 = scmp.eq.s32.totalorder %s18, 11
    %p203 = por %p201, %p202
    %p205 = scmp.ne.s32.totalorder %s188, %s204
    %p206 = scmp.eq.s32.totalorder %s18, 0
    %p207 = por %p205, %p206
    %s208 = ssub.s32 %s19, %s45
    %s209 = ssub.s32 %s20, %s41
    %s210 = sor.u32 %s208, %s209
    %s211 = ssub.s32 %s21, %s37
    %s212 = sor.u32 %s210, %s211
    %s213 = ssub.s32 %s22, %s33
    %s214 = sor.u32 %s212, %s213
    %p215 = scmp.eq.s32.totalorder %s214, 0
    %s217 = sadd.s32 %s216, 1
    %s218 = scalar_select %p215, %s216, %s217
    %p221 = pneg %p215
    %p222 = scmp.eq.s32.totalorder %s12, 11
    %p223 = por %p221, %p222
    %p224 = scmp.ne.s32.totalorder %s216, %s219
    %p225 = scmp.eq.s32.totalorder %s12, 0
    %p226 = por %p224, %p225
    %p227 = scmp.ne.s32.totalorder %s216, %s219
    %p228 = scmp.eq.s32.totalorder %s17, 11
    %p229 = por %p227, %p228
    %p230 = scmp.ne.s32.totalorder %s219, %s220
    %p231 = scmp.eq.s32.totalorder %s17, 0
    %p232 = por %p230, %p231
    %p233 = scmp.ne.s32.totalorder %s219, %s220
    %p234 = scmp.eq.s32.totalorder %s18, 11
    %p235 = por %p233, %p234
    %p237 = scmp.ne.s32.totalorder %s220, %s236
    %p238 = scmp.eq.s32.totalorder %s18, 0
    %p239 = por %p237, %p238
    %p240 = scmp.le.s32.totalorder 1, %s12
    %p241 = scmp.lt.s32.totalorder %s12, 13
    %p242 = pnand %p240, %p241
    %p243 = pneg %p242
    // Predicated region
    $region9: #{_hitnet_forward_impl.20} parent=5 // pred_check
      _
    $region10: #{_hitnet_forward_impl.20} parent=5 // pred_check_branch
      %245 = sbr.rel (%p242) target = $region12
    $region11: #{_hitnet_forward_impl.20} parent=5 // pred_region
      %s246 = ssub.s32 %s12, 1
      // Predicated region
      $region13: #{_hitnet_forward_impl.20} parent=11 // pred_check
        %p247 = pneg %p148
      $region14: #{_hitnet_forward_impl.20} parent=11 // pred_check_branch
        %249 = sbr.rel (%p247) target = $region16
      $region15: #{_hitnet_forward_impl.20} parent=11 // pred_region
        %p250 = scmp.lt.s32.totalorder %s26, 0
        %s251 = scalar_select %p250, %s26, 0
        %s252 = smul.addr %s251, 8
        %s253 = scalar_lea.vmem %s3, %s252
      $region16: #{_hitnet_forward_impl.20} parent=11 // pred_fallthru
        _
      // Predicated region
      $region17: #{_hitnet_forward_impl.20} parent=11 // pred_check
        %p254 = pneg %p174
      $region18: #{_hitnet_forward_impl.20} parent=11 // pred_check_branch
        %256 = sbr.rel (%p254) target = $region20
      $region19: #{_hitnet_forward_impl.20} parent=11 // pred_region
        %p257 = scmp.lt.s32.totalorder %s26, 0
        %s258 = scalar_select %p257, %s26, 0
        %s259 = smul.addr %s258, 8
        %s260 = scalar_lea.vmem %s4, %s259
      $region20: #{_hitnet_forward_impl.20} parent=11 // pred_fallthru
        _
      // Predicated region
      $region21: #{_hitnet_forward_impl.20} parent=11 // pred_check
        %p261 = pneg %p200
      $region22: #{_hitnet_forward_impl.20} parent=11 // pred_check_branch
        %263 = sbr.rel (%p261) target = $region24
      $region23: #{_hitnet_forward_impl.20} parent=11 // pred_region
        %s264 = smul.u32 8, %s25
        %p265 = scmp.lt.s32.totalorder %s264, 7
        %s266 = scalar_select %p265, %s264, 7
        %s267 = smul.addr %s266, 8
        %s268 = scalar_lea.vmem %s5, %s267
        %s269 = smul.u32 8, %s25
      $region24: #{_hitnet_forward_impl.20} parent=11 // pred_fallthru
        _
    $region12: #{_hitnet_forward_impl.20} parent=5 // pred_fallthru
      _
    %p270 = scmp.lt.s32.totalorder %s12, 12
    // Predicated region
    $region25: #{_hitnet_forward_impl.20} parent=5 // pred_check
      %p271 = pneg %p270
    $region26: #{_hitnet_forward_impl.20} parent=5 // pred_check_branch
      %273 = sbr.rel (%p271) target = $region28
    $region27: #{_hitnet_forward_impl.20} parent=5 // pred_region
      // Predicated region
      $region29: #{_hitnet_forward_impl.20} parent=27 // pred_check
        %p274 = pneg %p60
      $region30: #{_hitnet_forward_impl.20} parent=27 // pred_check_branch
        %276 = sbr.rel (%p274) target = $region32
      $region31: #{_hitnet_forward_impl.20} parent=27 // pred_region
        %p277 = scmp.lt.s32.totalorder %s19, 1
        %s278 = scalar_select %p277, %s19, 1
        %p279 = scmp.lt.s32.totalorder %s20, 5
        %s280 = scalar_select %p279, %s20, 5
        %s281 = smul.addr %s280, 2
        %s282 = smul.addr %s278, 12
        %s283 = sadd.s32 %s281, %s282
        %s284 = smul.addr %s283, 8
        %s285 = scalar_lea.vmem %s0, %s284
      $region32: #{_hitnet_forward_impl.20} parent=27 // pred_fallthru
        _
      // Predicated region
      $region33: #{_hitnet_forward_impl.20} parent=27 // pred_check
        %p286 = pneg %p88
      $region34: #{_hitnet_forward_impl.20} parent=27 // pred_check_branch
        %288 = sbr.rel (%p286) target = $region36
      $region35: #{_hitnet_forward_impl.20} parent=27 // pred_region
        %p289 = scmp.lt.s32.totalorder %s19, 1
        %s290 = scalar_select %p289, %s19, 1
        %p291 = scmp.lt.s32.totalorder %s20, 5
        %s292 = scalar_select %p291, %s20, 5
        %s293 = smul.addr %s292, 2
        %s294 = smul.addr %s290, 12
        %s295 = sadd.s32 %s293, %s294
        %s296 = smul.addr %s295, 8
        %s297 = scalar_lea.vmem %s1, %s296
      $region36: #{_hitnet_forward_impl.20} parent=27 // pred_fallthru
        _
      // Predicated region
      $region37: #{_hitnet_forward_impl.20} parent=27 // pred_check
        %p298 = pneg %p116
      $region38: #{_hitnet_forward_impl.20} parent=27 // pred_check_branch
        %300 = sbr.rel (%p298) target = $region40
      $region39: #{_hitnet_forward_impl.20} parent=27 // pred_region
        %p301 = scmp.lt.s32.totalorder %s19, 1
        %s302 = scalar_select %p301, %s19, 1
        %p303 = scmp.lt.s32.totalorder %s20, 5
        %s304 = scalar_select %p303, %s20, 5
        %s305 = smul.addr %s304, 2
        %s306 = smul.addr %s302, 12
        %s307 = sadd.s32 %s305, %s306
        %s308 = smul.addr %s307, 8
        %s309 = scalar_lea.vmem %s2, %s308
      $region40: #{_hitnet_forward_impl.20} parent=27 // pred_fallthru
        _
    $region28: #{_hitnet_forward_impl.20} parent=5 // pred_fallthru
      _
    %p310 = scmp.le.s32.totalorder 1, %s12
    %p311 = scmp.lt.s32.totalorder %s12, 13
    %p312 = pnand %p310, %p311
    %p313 = pneg %p312
    // Predicated region
    $region41: #{_hitnet_forward_impl.20} parent=5 // pred_check
      _
    $region42: #{_hitnet_forward_impl.20} parent=5 // pred_check_branch
      %315 = sbr.rel (%p312) target = $region44
    $region43: #{_hitnet_forward_impl.20} parent=5 // pred_region
      %s316 = ssub.s32 %s12, 1
      %p317 = scmp.lt.s32.totalorder %s23, 1
      %s318 = scalar_select %p317, %s23, 1
      %p319 = scmp.lt.s32.totalorder %s24, 5
      %s320 = scalar_select %p319, %s24, 5
      %s321 = smul.addr %s320, 2
      %s322 = smul.addr %s318, 12
      %s323 = sadd.s32 %s321, %s322
      %s324 = smul.addr %s323, 8
      %s325 = scalar_lea.vmem %s0, %s324
      %p326 = pneg %p66
      %p327 = pneg %p63
      %p328 = scmp.lt.s32.totalorder %s23, 1
      %s329 = scalar_select %p328, %s23, 1
      %p330 = scmp.lt.s32.totalorder %s24, 5
      %s331 = scalar_select %p330, %s24, 5
      %s332 = smul.addr %s331, 2
      %s333 = smul.addr %s329, 12
      %s334 = sadd.s32 %s332, %s333
      %s335 = smul.addr %s334, 8
      %s336 = scalar_lea.vmem %s1, %s335
      %p337 = pneg %p94
      %p338 = pneg %p91
      %p339 = scmp.lt.s32.totalorder %s23, 1
      %s340 = scalar_select %p339, %s23, 1
      %p341 = scmp.lt.s32.totalorder %s24, 5
      %s342 = scalar_select %p341, %s24, 5
      %s343 = smul.addr %s342, 2
      %s344 = smul.addr %s340, 12
      %s345 = sadd.s32 %s343, %s344
      %s346 = smul.addr %s345, 8
      %s347 = scalar_lea.vmem %s2, %s346
      %p348 = pneg %p122
      %p349 = pneg %p119
      %p350 = scmp.lt.s32.totalorder %s26, 0
      %s351 = scalar_select %p350, %s26, 0
      %s352 = smul.addr %s351, 8
      %s353 = scalar_lea.vmem %s3, %s352
      %p354 = pneg %p148
      %p355 = pneg %p145
      %p356 = scmp.lt.s32.totalorder %s26, 0
      %s357 = scalar_select %p356, %s26, 0
      %s358 = smul.addr %s357, 8
      %s359 = scalar_lea.vmem %s4, %s358
      %p360 = pneg %p174
      %p361 = pneg %p171
      %s362 = smul.u32 8, %s25
      %p363 = scmp.lt.s32.totalorder %s362, 7
      %s364 = scalar_select %p363, %s362, 7
      %s365 = smul.addr %s364, 8
      %s366 = scalar_lea.vmem %s5, %s365
      %p367 = pneg %p200
      %p368 = pneg %p197
      %p369 = pneg %p232
      %p370 = pneg %p229
      %s371 = smul.u32 8, %s25
      %p372 = scmp.lt.s32.totalorder %s23, 1
      %s373 = scalar_select %p372, %s23, 1
      %p374 = scmp.lt.s32.totalorder %s24, 5
      %s375 = scalar_select %p374, %s24, 5
      %p376 = scmp.lt.s32.totalorder %s371, 7
      %s377 = scalar_select %p376, %s371, 7
      %p378 = scmp.lt.s32.totalorder %s26, 0
      %s379 = scalar_select %p378, %s26, 0
      %s380 = sadd.s32 %s379, %s377
      %s381 = smul.addr %s375, 8
      %s382 = sadd.s32 %s380, %s381
      %s383 = smul.addr %s373, 48
      %s384 = sadd.s32 %s382, %s383
      %s385 = smul.addr %s384, 8
      %s386 = scalar_lea.vmem %s6, %s385
      %p387 = scmp.lt.s32.totalorder %s23, 1
      %s388 = scalar_select %p387, %s23, 1
      %p389 = scmp.lt.s32.totalorder %s24, 5
      %s390 = scalar_select %p389, %s24, 5
      %s391 = smul.addr %s390, 2
      %s392 = smul.addr %s388, 12
      %s393 = sadd.s32 %s391, %s392
      %s394 = smul.addr %s393, 8
      %s395 = scalar_lea.vmem %s0, %s394
      %p396 = scmp.lt.s32.totalorder %s23, 1
      %s397 = scalar_select %p396, %s23, 1
      %p398 = scmp.lt.s32.totalorder %s24, 5
      %s399 = scalar_select %p398, %s24, 5
      %s400 = smul.addr %s399, 2
      %s401 = smul.addr %s397, 12
      %s402 = sadd.s32 %s400, %s401
      %s403 = smul.addr %s402, 8
      %s404 = scalar_lea.vmem %s1, %s403
      %p405 = scmp.lt.s32.totalorder %s23, 1
      %s406 = scalar_select %p405, %s23, 1
      %p407 = scmp.lt.s32.totalorder %s24, 5
      %s408 = scalar_select %p407, %s24, 5
      %s409 = smul.addr %s408, 2
      %s410 = smul.addr %s406, 12
      %s411 = sadd.s32 %s409, %s410
      %s412 = smul.addr %s411, 8
      %s413 = scalar_lea.vmem %s2, %s412
      %p414 = scmp.lt.s32.totalorder %s26, 0
      %s415 = scalar_select %p414, %s26, 0
      %s416 = smul.addr %s415, 8
      %s417 = scalar_lea.vmem %s3, %s416
      %p418 = scmp.lt.s32.totalorder %s26, 0
      %s419 = scalar_select %p418, %s26, 0
      %s420 = smul.addr %s419, 8
      %s421 = scalar_lea.vmem %s4, %s420
      %s422 = smul.u32 8, %s25
      %p423 = scmp.lt.s32.totalorder %s422, 7
      %s424 = scalar_select %p423, %s422, 7
      %s425 = smul.addr %s424, 8
      %s426 = scalar_lea.vmem %s5, %s425
      %s427 = smul.u32 8, %s25
      %s428 = smul.u32 8, %s25
      %p429 = scmp.lt.s32.totalorder %s23, 1
      %s430 = scalar_select %p429, %s23, 1
      %p431 = scmp.lt.s32.totalorder %s24, 5
      %s432 = scalar_select %p431, %s24, 5
      %p433 = scmp.lt.s32.totalorder %s428, 7
      %s434 = scalar_select %p433, %s428, 7
      %p435 = scmp.lt.s32.totalorder %s26, 0
      %s436 = scalar_select %p435, %s26, 0
      %s437 = sadd.s32 %s436, %s434
      %s438 = smul.addr %s432, 8
      %s439 = sadd.s32 %s437, %s438
      %s440 = smul.addr %s430, 48
      %s441 = sadd.s32 %s439, %s440
      %s442 = smul.addr %s441, 8
      %s443 = scalar_lea.vmem %s6, %s442
      %s444 = smul.u32 8, %s25
      %v445 = vld [vmem:[%s417] sm:$0xff]
      %v446 = vld [vmem:[%s417 + $0x8] sm:$0xff]
      %v447 = vld [vmem:[%s395] sm:$0xff]
      %v448 = vld [vmem:[%s395 + $0x8] sm:$0xff]
      %v449 = vld [vmem:[%s404] sm:$0xff]
      %v450 = vld [vmem:[%s404 + $0x8] sm:$0xff]
      %v451 = vld [vmem:[%s421] sm:$0xff]
      %v452 = vld [vmem:[%s421 + $0x8] sm:$0xff]
      %vm453 = vcmask 130048
      %v455 = vsel %vm453, %v449, 0
      %v458 = vsel %vm453, %v450, 0
      %460 = vmatprep.subr.mxu0 0.0
      %461 = vmatpush1.msra.mxu0 %v451
      %462 = vmatprep.subr.mxu0 0.0
      %463 = vmatpush1.msra.mxu0 %v452
      %464 = vmatprep.subr.mxu0 0.0
      %465 = vmatpush1.msra.mxu0 0.0
      %466 = vmatprep.subr.mxu0 0.0
      %467 = vmatpush1.msra.mxu0 0.0
      %468 = vmatprep.subr.mxu0 0.0
      %469 = vmatpush1.msra.mxu0 0.0
      %470 = vmatprep.subr.mxu0 0.0
      %471 = vmatpush1.msra.mxu0 0.0
      %472 = vmatprep.subr.mxu0 0.0
      %473 = vmatpush1.msra.mxu0 0.0
      %474 = vmatprep.subr.mxu0 0.0
      %475 = vmatpush1.msra.mxu0 0.0
      %476 = vmatprep.subr.mxu0 0.0
      %477 = vmatpush1.msra.mxu0 0.0
      %478 = vmatprep.subr.mxu0 0.0
      %479 = vmatpush1.msra.mxu0 0.0
      %480 = vmatprep.subr.mxu0 0.0
      %481 = vmatpush1.msra.mxu0 0.0
      %482 = vmatprep.subr.mxu0 0.0
      %483 = vmatpush1.msra.mxu0 0.0
      %484 = vmatprep.subr.mxu0 0.0
      %485 = vmatpush1.msra.mxu0 0.0
      %486 = vmatprep.subr.mxu0 0.0
      %487 = vmatpush1.msra.mxu0 0.0
      %488 = vmatprep.subr.mxu0 0.0
      %489 = vmatpush1.msra.mxu0 0.0
      %490 = vmatprep.subr.mxu0 0.0
      %491 = vmatpush1.msra.mxu0 0.0
      %492 = vmatprep.subr.mxu0 0.0
      %493 = vmatpush1.msra.mxu0 0.0
      %494 = vmatprep.subr.mxu0 0.0
      %495 = vmatpush1.msra.mxu0 0.0
      %496 = vmatprep.subr.mxu0 0.0
      %497 = vmatpush1.msra.mxu0 0.0
      %498 = vmatprep.subr.mxu0 0.0
      %499 = vmatpush1.msra.mxu0 0.0
      %500 = vmatprep.subr.mxu0 0.0
      %501 = vmatpush1.msra.mxu0 0.0
      %502 = vmatprep.subr.mxu0 0.0
      %503 = vmatpush1.msra.mxu0 0.0
      %504 = vmatprep.subr.mxu0 0.0
      %505 = vmatpush1.msra.mxu0 0.0
      %506 = vmatprep.subr.mxu0 0.0
      %507 = vmatpush1.msra.mxu0 0.0
      %508 = vmatprep.subr.mxu0 0.0
      %509 = vmatpush1.msra.mxu0 0.0
      %510 = vmatprep.subr.mxu0 0.0
      %511 = vmatpush1.msra.mxu0 0.0
      %512 = vmatprep.subr.mxu0 0.0
      %513 = vmatpush1.msra.mxu0 0.0
      %514 = vmatprep.subr.mxu0 0.0
      %515 = vmatpush1.msra.mxu0 0.0
      %516 = vmatprep.subr.mxu0 0.0
      %517 = vmatpush1.msra.mxu0 0.0
      %518 = vmatprep.subr.mxu0 0.0
      %519 = vmatpush1.msra.mxu0 0.0
      %520 = vmatprep.subr.mxu0 0.0
      %521 = vmatpush1.msra.mxu0 0.0
      %522 = vmatprep.subr.mxu0 0.0
      %523 = vmatpush1.msra.mxu0 0.0
      %524 = vmatprep.mubr.f32.mxu0 0.0
      %525 = vmatmul.mubr.f32.gmra.mrb[0].mxu0 %v455
      %v526 = vpop.f32.mrb[0].mxu0
      %v527 = vadd.f32 0.0, %v526
      %v528 = vpop.f32.mrb[0].mxu0
      %529 = vmatprep.mubr.f32.mxu0 0.0
      %530 = vmatmul.mubr.f32.gmra.mrb[0].mxu0 %v458
      %v531 = vpop.f32.mrb[0].mxu0
      %v532 = vadd.f32 0.0, %v531
      %v533 = vpop.f32.mrb[0].mxu0
      %534 = vdwg.mxu0
      %v536 = vsel %vm453, %v447, 0
      %v539 = vsel %vm453, %v448, 0
      %541 = vmatprep.subr.mxu0 0.0
      %542 = vmatpush1.msra.mxu0 %v445
      %543 = vmatprep.subr.mxu0 0.0
      %544 = vmatpush1.msra.mxu0 %v446
      %545 = vmatprep.subr.mxu0 0.0
      %546 = vmatpush1.msra.mxu0 0.0
      %547 = vmatprep.subr.mxu0 0.0
      %548 = vmatpush1.msra.mxu0 0.0
      %549 = vmatprep.subr.mxu0 0.0
      %550 = vmatpush1.msra.mxu0 0.0
      %551 = vmatprep.subr.mxu0 0.0
      %552 = vmatpush1.msra.mxu0 0.0
      %553 = vmatprep.subr.mxu0 0.0
      %554 = vmatpush1.msra.mxu0 0.0
      %555 = vmatprep.subr.mxu0 0.0
      %556 = vmatpush1.msra.mxu0 0.0
      %557 = vmatprep.subr.mxu0 0.0
      %558 = vmatpush1.msra.mxu0 0.0
      %559 = vmatprep.subr.mxu0 0.0
      %560 = vmatpush1.msra.mxu0 0.0
      %561 = vmatprep.subr.mxu0 0.0
      %562 = vmatpush1.msra.mxu0 0.0
      %563 = vmatprep.subr.mxu0 0.0
      %564 = vmatpush1.msra.mxu0 0.0
      %565 = vmatprep.subr.mxu0 0.0
      %566 = vmatpush1.msra.mxu0 0.0
      %567 = vmatprep.subr.mxu0 0.0
      %568 = vmatpush1.msra.mxu0 0.0
      %569 = vmatprep.subr.mxu0 0.0
      %570 = vmatpush1.msra.mxu0 0.0
      %571 = vmatprep.subr.mxu0 0.0
      %572 = vmatpush1.msra.mxu0 0.0
      %573 = vmatprep.subr.mxu0 0.0
      %574 = vmatpush1.msra.mxu0 0.0
      %575 = vmatprep.subr.mxu0 0.0
      %576 = vmatpush1.msra.mxu0 0.0
      %577 = vmatprep.subr.mxu0 0.0
      %578 = vmatpush1.msra.mxu0 0.0
      %579 = vmatprep.subr.mxu0 0.0
      %580 = vmatpush1.msra.mxu0 0.0
      %581 = vmatprep.subr.mxu0 0.0
      %582 = vmatpush1.msra.mxu0 0.0
      %583 = vmatprep.subr.mxu0 0.0
      %584 = vmatpush1.msra.mxu0 0.0
      %585 = vmatprep.subr.mxu0 0.0
      %586 = vmatpush1.msra.mxu0 0.0
      %587 = vmatprep.subr.mxu0 0.0
      %588 = vmatpush1.msra.mxu0 0.0
      %589 = vmatprep.subr.mxu0 0.0
      %590 = vmatpush1.msra.mxu0 0.0
      %591 = vmatprep.subr.mxu0 0.0
      %592 = vmatpush1.msra.mxu0 0.0
      %593 = vmatprep.subr.mxu0 0.0
      %594 = vmatpush1.msra.mxu0 0.0
      %595 = vmatprep.subr.mxu0 0.0
      %596 = vmatpush1.msra.mxu0 0.0
      %597 = vmatprep.subr.mxu0 0.0
      %598 = vmatpush1.msra.mxu0 0.0
      %599 = vmatprep.subr.mxu0 0.0
      %600 = vmatpush1.msra.mxu0 0.0
      %601 = vmatprep.subr.mxu0 0.0
      %602 = vmatpush1.msra.mxu0 0.0
      %603 = vmatprep.subr.mxu0 0.0
      %604 = vmatpush1.msra.mxu0 0.0
      %605 = vmatprep.mubr.f32.mxu0 0.0
      %606 = vmatmul.mubr.f32.gmra.mrb[0].mxu0 %v536
      %v607 = vpop.f32.mrb[0].mxu0
      %v608 = vadd.f32 %v527, %v607
      %v609 = vpop.f32.mrb[0].mxu0
      %610 = vmatprep.mubr.f32.mxu0 0.0
      %611 = vmatmul.mubr.f32.gmra.mrb[0].mxu0 %v539
      %v612 = vpop.f32.mrb[0].mxu0
      %v613 = vadd.f32 %v532, %v612
      %v614 = vpop.f32.mrb[0].mxu0
      %615 = vdwg.mxu0
      %v616 = vld [vmem:[%s413] sm:$0xff]
      %v617 = vld [vmem:[%s413 + $0x8] sm:$0xff]
      %v619 = vsel %vm453, %v616, 0
      %v622 = vsel %vm453, %v617, 0
      %624 = vmatprep.subr.mxu0 0.0
      %625 = vmatpush1.msra.mxu0 %v445
      %626 = vmatprep.subr.mxu0 0.0
      %627 = vmatpush1.msra.mxu0 %v446
      %628 = vmatprep.subr.mxu0 0.0
      %629 = vmatpush1.msra.mxu0 0.0
      %630 = vmatprep.subr.mxu0 0.0
      %631 = vmatpush1.msra.mxu0 0.0
      %632 = vmatprep.subr.mxu0 0.0
      %633 = vmatpush1.msra.mxu0 0.0
      %634 = vmatprep.subr.mxu0 0.0
      %635 = vmatpush1.msra.mxu0 0.0
      %636 = vmatprep.subr.mxu0 0.0
      %637 = vmatpush1.msra.mxu0 0.0
      %638 = vmatprep.subr.mxu0 0.0
      %639 = vmatpush1.msra.mxu0 0.0
      %640 = vmatprep.subr.mxu0 0.0
      %641 = vmatpush1.msra.mxu0 0.0
      %642 = vmatprep.subr.mxu0 0.0
      %643 = vmatpush1.msra.mxu0 0.0
      %644 = vmatprep.subr.mxu0 0.0
      %645 = vmatpush1.msra.mxu0 0.0
      %646 = vmatprep.subr.mxu0 0.0
      %647 = vmatpush1.msra.mxu0 0.0
      %648 = vmatprep.subr.mxu0 0.0
      %649 = vmatpush1.msra.mxu0 0.0
      %650 = vmatprep.subr.mxu0 0.0
      %651 = vmatpush1.msra.mxu0 0.0
      %652 = vmatprep.subr.mxu0 0.0
      %653 = vmatpush1.msra.mxu0 0.0
      %654 = vmatprep.subr.mxu0 0.0
      %655 = vmatpush1.msra.mxu0 0.0
      %656 = vmatprep.subr.mxu0 0.0
      %657 = vmatpush1.msra.mxu0 0.0
      %658 = vmatprep.subr.mxu0 0.0
      %659 = vmatpush1.msra.mxu0 0.0
      %660 = vmatprep.subr.mxu0 0.0
      %661 = vmatpush1.msra.mxu0 0.0
      %662 = vmatprep.subr.mxu0 0.0
      %663 = vmatpush1.msra.mxu0 0.0
      %664 = vmatprep.subr.mxu0 0.0
      %665 = vmatpush1.msra.mxu0 0.0
      %666 = vmatprep.subr.mxu0 0.0
      %667 = vmatpush1.msra.mxu0 0.0
      %668 = vmatprep.subr.mxu0 0.0
      %669 = vmatpush1.msra.mxu0 0.0
      %670 = vmatprep.subr.mxu0 0.0
      %671 = vmatpush1.msra.mxu0 0.0
      %672 = vmatprep.subr.mxu0 0.0
      %673 = vmatpush1.msra.mxu0 0.0
      %674 = vmatprep.subr.mxu0 0.0
      %675 = vmatpush1.msra.mxu0 0.0
      %676 = vmatprep.subr.mxu0 0.0
      %677 = vmatpush1.msra.mxu0 0.0
      %678 = vmatprep.subr.mxu0 0.0
      %679 = vmatpush1.msra.mxu0 0.0
      %680 = vmatprep.subr.mxu0 0.0
      %681 = vmatpush1.msra.mxu0 0.0
      %682 = vmatprep.subr.mxu0 0.0
      %683 = vmatpush1.msra.mxu0 0.0
      %684 = vmatprep.subr.mxu0 0.0
      %685 = vmatpush1.msra.mxu0 0.0
      %686 = vmatprep.subr.mxu0 0.0
      %687 = vmatpush1.msra.mxu0 0.0
      %688 = vmatprep.mubr.f32.mxu0 0.0
      %689 = vmatmul.mubr.f32.gmra.mrb[0].mxu0 %v619
      %v690 = vpop.f32.mrb[0].mxu0
      %v691 = vadd.f32 0.0, %v690
      %v692 = vpop.f32.mrb[0].mxu0
      %693 = vmatprep.mubr.f32.mxu0 0.0
      %694 = vmatmul.mubr.f32.gmra.mrb[0].mxu0 %v622
      %v695 = vpop.f32.mrb[0].mxu0
      %v696 = vadd.f32 0.0, %v695
      %v697 = vpop.f32.mrb[0].mxu0
      %698 = vdwg.mxu0
      %v699 = vld [vmem:[%s426] sm:$0xff]
      %v700 = vld [vmem:[%s426 + $0x8] sm:$0xff]
      %v701 = vld [vmem:[%s426 + $0x10] sm:$0xff]
      %v702 = vld [vmem:[%s426 + $0x18] sm:$0xff]
      %v703 = vld [vmem:[%s426 + $0x20] sm:$0xff]
      %v704 = vld [vmem:[%s426 + $0x28] sm:$0xff]
      %v705 = vld [vmem:[%s426 + $0x30] sm:$0xff]
      %v706 = vld [vmem:[%s426 + $0x38] sm:$0xff]
      %vm707 = vcmask 261120
      %v709 = vsel %vm707, %v699, 0
      %v712 = vsel %vm707, %v700, 0
      %v715 = vsel %vm707, %v701, 0
      %v718 = vsel %vm707, %v702, 0
      %v721 = vsel %vm707, %v703, 0
      %v724 = vsel %vm707, %v704, 0
      %v727 = vsel %vm707, %v705, 0
      %v730 = vsel %vm707, %v706, 0
      %732 = vmatprep.subr.mxu0 0.0
      %733 = vmatpush1.msra.mxu0 %v608
      %734 = vmatprep.subr.mxu0 0.0
      %735 = vmatpush1.msra.mxu0 %v613
      %736 = vmatprep.subr.mxu0 0.0
      %737 = vmatpush1.msra.mxu0 %v691
      %738 = vmatprep.subr.mxu0 0.0
      %739 = vmatpush1.msra.mxu0 %v696
      %740 = vmatprep.subr.mxu0 0.0
      %741 = vmatpush1.msra.mxu0 0.0
      %742 = vmatprep.subr.mxu0 0.0
      %743 = vmatpush1.msra.mxu0 0.0
      %744 = vmatprep.subr.mxu0 0.0
      %745 = vmatpush1.msra.mxu0 0.0
      %746 = vmatprep.subr.mxu0 0.0
      %747 = vmatpush1.msra.mxu0 0.0
      %748 = vmatprep.subr.mxu0 0.0
      %749 = vmatpush1.msra.mxu0 0.0
      %750 = vmatprep.subr.mxu0 0.0
      %751 = vmatpush1.msra.mxu0 0.0
      %752 = vmatprep.subr.mxu0 0.0
      %753 = vmatpush1.msra.mxu0 0.0
      %754 = vmatprep.subr.mxu0 0.0
      %755 = vmatpush1.msra.mxu0 0.0
      %756 = vmatprep.subr.mxu0 0.0
      %757 = vmatpush1.msra.mxu0 0.0
      %758 = vmatprep.subr.mxu0 0.0
      %759 = vmatpush1.msra.mxu0 0.0
      %760 = vmatprep.subr.mxu0 0.0
      %761 = vmatpush1.msra.mxu0 0.0
      %762 = vmatprep.subr.mxu0 0.0
      %763 = vmatpush1.msra.mxu0 0.0
      %764 = vmatprep.subr.mxu0 0.0
      %765 = vmatpush1.msra.mxu0 0.0
      %766 = vmatprep.subr.mxu0 0.0
      %767 = vmatpush1.msra.mxu0 0.0
      %768 = vmatprep.subr.mxu0 0.0
      %769 = vmatpush1.msra.mxu0 0.0
      %770 = vmatprep.subr.mxu0 0.0
      %771 = vmatpush1.msra.mxu0 0.0
      %772 = vmatprep.subr.mxu0 0.0
      %773 = vmatpush1.msra.mxu0 0.0
      %774 = vmatprep.subr.mxu0 0.0
      %775 = vmatpush1.msra.mxu0 0.0
      %776 = vmatprep.subr.mxu0 0.0
      %777 = vmatpush1.msra.mxu0 0.0
      %778 = vmatprep.subr.mxu0 0.0
      %779 = vmatpush1.msra.mxu0 0.0
      %780 = vmatprep.subr.mxu0 0.0
      %781 = vmatpush1.msra.mxu0 0.0
      %782 = vmatprep.subr.mxu0 0.0
      %783 = vmatpush1.msra.mxu0 0.0
      %784 = vmatprep.subr.mxu0 0.0
      %785 = vmatpush1.msra.mxu0 0.0
      %786 = vmatprep.subr.mxu0 0.0
      %787 = vmatpush1.msra.mxu0 0.0
      %788 = vmatprep.subr.mxu0 0.0
      %789 = vmatpush1.msra.mxu0 0.0
      %790 = vmatprep.subr.mxu0 0.0
      %791 = vmatpush1.msra.mxu0 0.0
      %792 = vmatprep.subr.mxu0 0.0
      %793 = vmatpush1.msra.mxu0 0.0
      %794 = vmatprep.subr.mxu0 0.0
      %795 = vmatpush1.msra.mxu0 0.0
      %796 = vmatprep.mubr.f32.mxu0 0.0
      %797 = vmatmul.mubr.f32.gmra.mrb[0].mxu0 %v709
      %v798 = vpop.f32.mrb[0].mxu0
      %v799 = vadd.f32 0.0, %v798
      %v800 = vpop.f32.mrb[0].mxu0
      %801 = vmatprep.mubr.f32.mxu0 0.0
      %802 = vmatmul.mubr.f32.gmra.mrb[0].mxu0 %v712
      %v803 = vpop.f32.mrb[0].mxu0
      %v804 = vadd.f32 0.0, %v803
      %v805 = vpop.f32.mrb[0].mxu0
      %806 = vmatprep.mubr.f32.mxu0 0.0
      %807 = vmatmul.mubr.f32.gmra.mrb[0].mxu0 %v715
      %v808 = vpop.f32.mrb[0].mxu0
      %v809 = vadd.f32 0.0, %v808
      %v810 = vpop.f32.mrb[0].mxu0
      %811 = vmatprep.mubr.f32.mxu0 0.0
      %812 = vmatmul.mubr.f32.gmra.mrb[0].mxu0 %v718
      %v813 = vpop.f32.mrb[0].mxu0
      %v814 = vadd.f32 0.0, %v813
      %v815 = vpop.f32.mrb[0].mxu0
      %816 = vmatprep.mubr.f32.mxu0 0.0
      %817 = vmatmul.mubr.f32.gmra.mrb[0].mxu0 %v721
      %v818 = vpop.f32.mrb[0].mxu0
      %v819 = vadd.f32 0.0, %v818
      %v820 = vpop.f32.mrb[0].mxu0
      %821 = vmatprep.mubr.f32.mxu0 0.0
      %822 = vmatmul.mubr.f32.gmra.mrb[0].mxu0 %v724
      %v823 = vpop.f32.mrb[0].mxu0
      %v824 = vadd.f32 0.0, %v823
      %v825 = vpop.f32.mrb[0].mxu0
      %826 = vmatprep.mubr.f32.mxu0 0.0
      %827 = vmatmul.mubr.f32.gmra.mrb[0].mxu0 %v727
      %v828 = vpop.f32.mrb[0].mxu0
      %v829 = vadd.f32 0.0, %v828
      %v830 = vpop.f32.mrb[0].mxu0
      %831 = vmatprep.mubr.f32.mxu0 0.0
      %832 = vmatmul.mubr.f32.gmra.mrb[0].mxu0 %v730
      %v833 = vpop.f32.mrb[0].mxu0
      %v834 = vadd.f32 0.0, %v833
      %v835 = vpop.f32.mrb[0].mxu0
      %836 = vdwg.mxu0
      %vm837 = vcmask 523264
      %838 = vst.msk [vmem:[%s443] sm:$0xff] %vm837, %v799
      %839 = vst.msk [vmem:[%s443 + $0x8] sm:$0xff] %vm837, %v804
      %840 = vst.msk [vmem:[%s443 + $0x10] sm:$0xff] %vm837, %v809
      %841 = vst.msk [vmem:[%s443 + $0x18] sm:$0xff] %vm837, %v814
      %842 = vst.msk [vmem:[%s443 + $0x20] sm:$0xff] %vm837, %v819
      %843 = vst.msk [vmem:[%s443 + $0x28] sm:$0xff] %vm837, %v824
      %844 = vst.msk [vmem:[%s443 + $0x30] sm:$0xff] %vm837, %v829
      %845 = vst.msk [vmem:[%s443 + $0x38] sm:$0xff] %vm837, %v834
      %s846 = smul.u32 8, %s25
      %p847 = scmp.lt.s32.totalorder %s23, 1
      %s848 = scalar_select %p847, %s23, 1
      %p849 = scmp.lt.s32.totalorder %s24, 5
      %s850 = scalar_select %p849, %s24, 5
      %p851 = scmp.lt.s32.totalorder %s846, 7
      %s852 = scalar_select %p851, %s846, 7
      %p853 = scmp.lt.s32.totalorder %s26, 0
      %s854 = scalar_select %p853, %s26, 0
      %s855 = sadd.s32 %s854, %s852
      %s856 = smul.addr %s850, 8
      %s857 = sadd.s32 %s855, %s856
      %s858 = smul.addr %s848, 48
      %s859 = sadd.s32 %s857, %s858
      %s860 = smul.addr %s859, 8
      %s861 = scalar_lea.vmem %s6, %s860
      // Predicated region
      $region45: #{_hitnet_forward_impl.20} parent=43 // pred_check
        %p862 = pneg %p229
      $region46: #{_hitnet_forward_impl.20} parent=43 // pred_check_branch
        %864 = sbr.rel (%p862) target = $region48
      $region47: #{_hitnet_forward_impl.20} parent=43 // pred_region
        %s865 = smul.u32 8, %s25
      $region48: #{_hitnet_forward_impl.20} parent=43 // pred_fallthru
        _
    $region44: #{_hitnet_forward_impl.20} parent=5 // pred_fallthru
      _
    %p866 = scmp.le.s32.totalorder 2, %s12
    // Predicated region
    $region49: #{_hitnet_forward_impl.20} parent=5 // pred_check
      %p867 = pneg %p866
    $region50: #{_hitnet_forward_impl.20} parent=5 // pred_check_branch
      %869 = sbr.rel (%p867) target = $region52
    $region51: #{_hitnet_forward_impl.20} parent=5 // pred_region
      %s870 = ssub.s32 %s12, 2
      // Predicated region
      $region53: #{_hitnet_forward_impl.20} parent=51 // pred_check
        %p871 = pneg %p235
      $region54: #{_hitnet_forward_impl.20} parent=51 // pred_check_branch
        %873 = sbr.rel (%p871) target = $region56
      $region55: #{_hitnet_forward_impl.20} parent=51 // pred_region
        %s874 = smul.u32 8, %s29
        %p875 = scmp.lt.s32.totalorder %s27, 1
        %s876 = scalar_select %p875, %s27, 1
        %p877 = scmp.lt.s32.totalorder %s28, 5
        %s878 = scalar_select %p877, %s28, 5
        %p879 = scmp.lt.s32.totalorder %s874, 7
        %s880 = scalar_select %p879, %s874, 7
        %p881 = scmp.lt.s32.totalorder %s30, 0
        %s882 = scalar_select %p881, %s30, 0
        %s883 = sadd.s32 %s882, %s880
        %s884 = smul.addr %s878, 8
        %s885 = sadd.s32 %s883, %s884
        %s886 = smul.addr %s876, 48
        %s887 = sadd.s32 %s885, %s886
        %s888 = smul.addr %s887, 8
        %s889 = scalar_lea.vmem %s6, %s888
      $region56: #{_hitnet_forward_impl.20} parent=51 // pred_fallthru
        _
    $region52: #{_hitnet_forward_impl.20} parent=5 // pred_fallthru
      _
  $region6: #{_hitnet_forward_impl.20} parent=0 // loop_footer
    %s16 = sadd.s32 1, %s12
  $region7: #{_hitnet_forward_impl.20} parent=0 // loop_footer_branch
    %11 = sbr.rel target = $region3
  $region8: #{_hitnet_forward_impl.20} parent=0 // loop_exit
    _

// kernel: _hitnet_forward_impl.19
$region0: #{_hitnet_forward_impl.19}
  #allocation0 [shape = 'u32[]', space=smem, size = 0x4, offset = 0x4, fixed_abs, tag = 'smem constant byte address 0x4 - core index']
  #allocation1 [shape = 'u32[144,128]{1,0:T(1,128)}', space=vmem, size = 0x12000, scoped, tag = 'internal scratch']
  %s0 = inlined_call_operand.vmem [shape: f32[2,10,8,8], index: 0, kind: input, shape index: {}]
  %s1 = inlined_call_operand.vmem [shape: f32[8,64], index: 1, kind: input, shape index: {}]
  %s2 = inlined_call_operand.vmem [shape: f32[64,8], index: 2, kind: input, shape index: {}]
  %s3 = inlined_call_operand.vmem [shape: f32[2,10,64,64], index: 3, kind: output, shape index: {}]
  %s4 = sld [smem:[#allocation0]]
  $region45: #{_hitnet_forward_impl.19} parent=0
    _
  %s6 = ssub.s32 1, %s4
  %s7 = scalar_select 0, %s6, %s4
  loop: start=0, step=1, limit=22
  $region2: #{_hitnet_forward_impl.19} parent=0 // loop_pre_header
    _
  $region3: #{_hitnet_forward_impl.19} parent=0 // loop_header
    %s9 = sphi 0, %s13
    %p10 = scmp.ge.s32.totalorder %s9, 22
    %s16 = sphi 0, %s42
    %s17 = sphi 0, %s38
    %s18 = sphi 0, %s34
    %s19 = sphi 0, %s30
    %s20 = sphi 0, %s16
    %s21 = sphi 0, %s17
    %s22 = sphi 0, %s18
    %s23 = sphi 0, %s19
    %s24 = sphi 0, %s20
    %s25 = sphi 0, %s21
    %s26 = sphi 0, %s22
    %s27 = sphi 0, %s23
    %s47 = sphi 0, %s49
    %s50 = sphi 0, %s47
    %s51 = sphi 0, %s50
    %s67 = sphi 0, %s51
    %s73 = sphi 0, %s75
    %s76 = sphi 0, %s73
    %s77 = sphi 0, %s76
    %s93 = sphi 0, %s77
    %s99 = sphi 0, %s101
    %s102 = sphi 0, %s99
    %s103 = sphi 0, %s102
    %s119 = sphi 0, %s103
    %s131 = sphi 0, %s133
    %s134 = sphi 0, %s131
    %s135 = sphi 0, %s134
    %s151 = sphi 0, %s135
  $region4: #{_hitnet_forward_impl.19} parent=0 // loop_header_branch
    %12 = sbr.rel (%p10) target = $region8
  $region5: #{_hitnet_forward_impl.19} parent=0 // loop_body
    %s14 = ssub.s32 %s9, 1
    %s15 = ssub.s32 %s9, 2
    %s28 = sadd.s32 1, %s19
    %p29 = scmp.ge.s32.totalorder %s28, 1
    %s30 = scalar_select %p29, 0, %s28
    %s31 = sadd.s32 1, %s18
    %s32 = scalar_select %p29, %s31, %s18
    %p33 = scmp.ge.s32.totalorder %s32, 1
    %s34 = scalar_select %p33, 0, %s32
    %s35 = sadd.s32 1, %s17
    %s36 = scalar_select %p33, %s35, %s17
    %p37 = scmp.ge.s32.totalorder %s36, 10
    %s38 = scalar_select %p37, 0, %s36
    %s39 = sadd.s32 1, %s16
    %s40 = scalar_select %p37, %s39, %s16
    %p41 = scmp.ge.s32.totalorder %s40, 2
    %s42 = scalar_select %p41, 0, %s40
    %s43 = ssub.s32 %s16, %s42
    %s44 = ssub.s32 %s17, %s38
    %s45 = sor.u32 %s43, %s44
    %p46 = scmp.eq.s32.totalorder %s45, 0
    %s48 = sadd.s32 %s47, 1
    %s49 = scalar_select %p46, %s47, %s48
    %p52 = pneg %p46
    %p53 = scmp.eq.s32.totalorder %s9, 19
    %p54 = por %p52, %p53
    %p55 = scmp.ne.s32.totalorder %s47, %s50
    %p56 = scmp.eq.s32.totalorder %s9, 0
    %p57 = por %p55, %p56
    %p58 = scmp.ne.s32.totalorder %s47, %s50
    %p59 = scmp.eq.s32.totalorder %s14, 19
    %p60 = por %p58, %p59
    %p61 = scmp.ne.s32.totalorder %s50, %s51
    %p62 = scmp.eq.s32.totalorder %s14, 0
    %p63 = por %p61, %p62
    %p64 = scmp.ne.s32.totalorder %s50, %s51
    %p65 = scmp.eq.s32.totalorder %s15, 19
    %p66 = por %p64, %p65
    %p68 = scmp.ne.s32.totalorder %s51, %s67
    %p69 = scmp.eq.s32.totalorder %s15, 0
    %p70 = por %p68, %p69
    %s71 = ssub.s32 %s19, %s30
    %p72 = scmp.eq.s32.totalorder %s71, 0
    %s74 = sadd.s32 %s73, 1
    %s75 = scalar_select %p72, %s73, %s74
    %p78 = pneg %p72
    %p79 = scmp.eq.s32.totalorder %s9, 19
    %p80 = por %p78, %p79
    %p81 = scmp.ne.s32.totalorder %s73, %s76
    %p82 = scmp.eq.s32.totalorder %s9, 0
    %p83 = por %p81, %p82
    %p84 = scmp.ne.s32.totalorder %s73, %s76
    %p85 = scmp.eq.s32.totalorder %s14, 19
    %p86 = por %p84, %p85
    %p87 = scmp.ne.s32.totalorder %s76, %s77
    %p88 = scmp.eq.s32.totalorder %s14, 0
    %p89 = por %p87, %p88
    %p90 = scmp.ne.s32.totalorder %s76, %s77
    %p91 = scmp.eq.s32.totalorder %s15, 19
    %p92 = por %p90, %p91
    %p94 = scmp.ne.s32.totalorder %s77, %s93
    %p95 = scmp.eq.s32.totalorder %s15, 0
    %p96 = por %p94, %p95
    %s97 = ssub.s32 %s18, %s34
    %p98 = scmp.eq.s32.totalorder %s97, 0
    %s100 = sadd.s32 %s99, 1
    %s101 = scalar_select %p98, %s99, %s100
    %p104 = pneg %p98
    %p105 = scmp.eq.s32.totalorder %s9, 19
    %p106 = por %p104, %p105
    %p107 = scmp.ne.s32.totalorder %s99, %s102
    %p108 = scmp.eq.s32.totalorder %s9, 0
    %p109 = por %p107, %p108
    %p110 = scmp.ne.s32.totalorder %s99, %s102
    %p111 = scmp.eq.s32.totalorder %s14, 19
    %p112 = por %p110, %p111
    %p113 = scmp.ne.s32.totalorder %s102, %s103
    %p114 = scmp.eq.s32.totalorder %s14, 0
    %p115 = por %p113, %p114
    %p116 = scmp.ne.s32.totalorder %s102, %s103
    %p117 = scmp.eq.s32.totalorder %s15, 19
    %p118 = por %p116, %p117
    %p120 = scmp.ne.s32.totalorder %s103, %s119
    %p121 = scmp.eq.s32.totalorder %s15, 0
    %p122 = por %p120, %p121
    %s123 = ssub.s32 %s16, %s42
    %s124 = ssub.s32 %s17, %s38
    %s125 = sor.u32 %s123, %s124
    %s126 = ssub.s32 %s18, %s34
    %s127 = sor.u32 %s125, %s126
    %s128 = ssub.s32 %s19, %s30
    %s129 = sor.u32 %s127, %s128
    %p130 = scmp.eq.s32.totalorder %s129, 0
    %s132 = sadd.s32 %s131, 1
    %s133 = scalar_select %p130, %s131, %s132
    %p136 = pneg %p130
    %p137 = scmp.eq.s32.totalorder %s9, 19
    %p138 = por %p136, %p137
    %p139 = scmp.ne.s32.totalorder %s131, %s134
    %p140 = scmp.eq.s32.totalorder %s9, 0
    %p141 = por %p139, %p140
    %p142 = scmp.ne.s32.totalorder %s131, %s134
    %p143 = scmp.eq.s32.totalorder %s14, 19
    %p144 = por %p142, %p143
    %p145 = scmp.ne.s32.totalorder %s134, %s135
    %p146 = scmp.eq.s32.totalorder %s14, 0
    %p147 = por %p145, %p146
    %p148 = scmp.ne.s32.totalorder %s134, %s135
    %p149 = scmp.eq.s32.totalorder %s15, 19
    %p150 = por %p148, %p149
    %p152 = scmp.ne.s32.totalorder %s135, %s151
    %p153 = scmp.eq.s32.totalorder %s15, 0
    %p154 = por %p152, %p153
    %p155 = scmp.le.s32.totalorder 1, %s9
    %p156 = scmp.lt.s32.totalorder %s9, 21
    %p157 = pnand %p155, %p156
    %p158 = pneg %p157
    // Predicated region
    $region9: #{_hitnet_forward_impl.19} parent=5 // pred_check
      _
    $region10: #{_hitnet_forward_impl.19} parent=5 // pred_check_branch
      %160 = sbr.rel (%p157) target = $region12
    $region11: #{_hitnet_forward_impl.19} parent=5 // pred_region
      %s161 = ssub.s32 %s9, 1
      // Predicated region
      $region13: #{_hitnet_forward_impl.19} parent=11 // pred_check
        %p162 = pneg %p89
      $region14: #{_hitnet_forward_impl.19} parent=11 // pred_check_branch
        %164 = sbr.rel (%p162) target = $region16
      $region15: #{_hitnet_forward_impl.19} parent=11 // pred_region
        %p165 = scmp.lt.s32.totalorder %s23, 0
        %s166 = scalar_select %p165, %s23, 0
        %s167 = smul.addr %s166, 8
        %s168 = scalar_lea.vmem %s1, %s167
      $region16: #{_hitnet_forward_impl.19} parent=11 // pred_fallthru
        _
      // Predicated region
      $region17: #{_hitnet_forward_impl.19} parent=11 // pred_check
        %p169 = pneg %p115
      $region18: #{_hitnet_forward_impl.19} parent=11 // pred_check_branch
        %171 = sbr.rel (%p169) target = $region20
      $region19: #{_hitnet_forward_impl.19} parent=11 // pred_region
        %s172 = smul.u32 8, %s22
        %p173 = scmp.lt.s32.totalorder %s172, 7
        %s174 = scalar_select %p173, %s172, 7
        %s175 = smul.addr %s174, 8
        %s176 = scalar_lea.vmem %s2, %s175
        %s177 = smul.u32 8, %s22
      $region20: #{_hitnet_forward_impl.19} parent=11 // pred_fallthru
        _
    $region12: #{_hitnet_forward_impl.19} parent=5 // pred_fallthru
      _
    %p178 = scmp.lt.s32.totalorder %s9, 20
    // Predicated region
    $region21: #{_hitnet_forward_impl.19} parent=5 // pred_check
      %p179 = pneg %p178
    $region22: #{_hitnet_forward_impl.19} parent=5 // pred_check_branch
      %181 = sbr.rel (%p179) target = $region24
    $region23: #{_hitnet_forward_impl.19} parent=5 // pred_region
      // Predicated region
      $region25: #{_hitnet_forward_impl.19} parent=23 // pred_check
        %p182 = pneg %p57
      $region26: #{_hitnet_forward_impl.19} parent=23 // pred_check_branch
        %184 = sbr.rel (%p182) target = $region28
      $region27: #{_hitnet_forward_impl.19} parent=23 // pred_region
        %p185 = scmp.lt.s32.totalorder %s16, 1
        %s186 = scalar_select %p185, %s16, 1
        %p187 = scmp.lt.s32.totalorder %s17, 9
        %s188 = scalar_select %p187, %s17, 9
        %s189 = smul.addr %s186, 10
        %s190 = sadd.s32 %s188, %s189
        %s191 = smul.addr %s190, 8
        %s192 = scalar_lea.vmem %s0, %s191
      $region28: #{_hitnet_forward_impl.19} parent=23 // pred_fallthru
        _
    $region24: #{_hitnet_forward_impl.19} parent=5 // pred_fallthru
      _
    %p193 = scmp.le.s32.totalorder 1, %s9
    %p194 = scmp.lt.s32.totalorder %s9, 21
    %p195 = pnand %p193, %p194
    %p196 = pneg %p195
    // Predicated region
    $region29: #{_hitnet_forward_impl.19} parent=5 // pred_check
      _
    $region30: #{_hitnet_forward_impl.19} parent=5 // pred_check_branch
      %198 = sbr.rel (%p195) target = $region32
    $region31: #{_hitnet_forward_impl.19} parent=5 // pred_region
      %s199 = ssub.s32 %s9, 1
      %p200 = scmp.lt.s32.totalorder %s20, 1
      %s201 = scalar_select %p200, %s20, 1
      %p202 = scmp.lt.s32.totalorder %s21, 9
      %s203 = scalar_select %p202, %s21, 9
      %s204 = smul.addr %s201, 10
      %s205 = sadd.s32 %s203, %s204
      %s206 = smul.addr %s205, 8
      %s207 = scalar_lea.vmem %s0, %s206
      %p208 = pneg %p63
      %p209 = pneg %p60
      %p210 = scmp.lt.s32.totalorder %s23, 0
      %s211 = scalar_select %p210, %s23, 0
      %s212 = smul.addr %s211, 8
      %s213 = scalar_lea.vmem %s1, %s212
      %p214 = pneg %p89
      %p215 = pneg %p86
      %s216 = smul.u32 8, %s22
      %p217 = scmp.lt.s32.totalorder %s216, 7
      %s218 = scalar_select %p217, %s216, 7
      %s219 = smul.addr %s218, 8
      %s220 = scalar_lea.vmem %s2, %s219
      %p221 = pneg %p115
      %p222 = pneg %p112
      %p223 = pneg %p147
      %p224 = pneg %p144
      %s225 = smul.u32 8, %s22
      %p226 = scmp.lt.s32.totalorder %s20, 1
      %s227 = scalar_select %p226, %s20, 1
      %p228 = scmp.lt.s32.totalorder %s21, 9
      %s229 = scalar_select %p228, %s21, 9
      %p230 = scmp.lt.s32.totalorder %s225, 7
      %s231 = scalar_select %p230, %s225, 7
      %p232 = scmp.lt.s32.totalorder %s23, 0
      %s233 = scalar_select %p232, %s23, 0
      %s234 = sadd.s32 %s233, %s231
      %s235 = smul.addr %s229, 8
      %s236 = sadd.s32 %s234, %s235
      %s237 = smul.addr %s227, 80
      %s238 = sadd.s32 %s236, %s237
      %s239 = smul.addr %s238, 8
      %s240 = scalar_lea.vmem %s3, %s239
      %p241 = scmp.lt.s32.totalorder %s20, 1
      %s242 = scalar_select %p241, %s20, 1
      %p243 = scmp.lt.s32.totalorder %s21, 9
      %s244 = scalar_select %p243, %s21, 9
      %s245 = smul.addr %s242, 10
      %s246 = sadd.s32 %s244, %s245
      %s247 = smul.addr %s246, 8
      %s248 = scalar_lea.vmem %s0, %s247
      %p249 = scmp.lt.s32.totalorder %s23, 0
      %s250 = scalar_select %p249, %s23, 0
      %s251 = smul.addr %s250, 8
      %s252 = scalar_lea.vmem %s1, %s251
      %s253 = smul.u32 8, %s22
      %p254 = scmp.lt.s32.totalorder %s253, 7
      %s255 = scalar_select %p254, %s253, 7
      %s256 = smul.addr %s255, 8
      %s257 = scalar_lea.vmem %s2, %s256
      %s258 = smul.u32 8, %s22
      %s259 = smul.u32 8, %s22
      %p260 = scmp.lt.s32.totalorder %s20, 1
      %s261 = scalar_select %p260, %s20, 1
      %p262 = scmp.lt.s32.totalorder %s21, 9
      %s263 = scalar_select %p262, %s21, 9
      %p264 = scmp.lt.s32.totalorder %s259, 7
      %s265 = scalar_select %p264, %s259, 7
      %p266 = scmp.lt.s32.totalorder %s23, 0
      %s267 = scalar_select %p266, %s23, 0
      %s268 = sadd.s32 %s267, %s265
      %s269 = smul.addr %s263, 8
      %s270 = sadd.s32 %s268, %s269
      %s271 = smul.addr %s261, 80
      %s272 = sadd.s32 %s270, %s271
      %s273 = smul.addr %s272, 8
      %s274 = scalar_lea.vmem %s3, %s273
      %s275 = smul.u32 8, %s22
      %v276 = vld [vmem:[%s248] sm:$0xff]
      %v277 = vld [vmem:[%s252] sm:$0xff]
      %vm278 = vcmask 64512
      %v280 = vsel %vm278, %v276, 0
      %282 = vmatprep.subr.mxu0 0.0
      %283 = vmatpush1.msra.mxu0 %v277
      %284 = vmatprep.subr.mxu0 0.0
      %285 = vmatpush1.msra.mxu0 0.0
      %286 = vmatprep.subr.mxu0 0.0
      %287 = vmatpush1.msra.mxu0 0.0
      %288 = vmatprep.subr.mxu0 0.0
      %289 = vmatpush1.msra.mxu0 0.0
      %290 = vmatprep.subr.mxu0 0.0
      %291 = vmatpush1.msra.mxu0 0.0
      %292 = vmatprep.subr.mxu0 0.0
      %293 = vmatpush1.msra.mxu0 0.0
      %294 = vmatprep.subr.mxu0 0.0
      %295 = vmatpush1.msra.mxu0 0.0
      %296 = vmatprep.subr.mxu0 0.0
      %297 = vmatpush1.msra.mxu0 0.0
      %298 = vmatprep.subr.mxu0 0.0
      %299 = vmatpush1.msra.mxu0 0.0
      %300 = vmatprep.subr.mxu0 0.0
      %301 = vmatpush1.msra.mxu0 0.0
      %302 = vmatprep.subr.mxu0 0.0
      %303 = vmatpush1.msra.mxu0 0.0
      %304 = vmatprep.subr.mxu0 0.0
      %305 = vmatpush1.msra.mxu0 0.0
      %306 = vmatprep.subr.mxu0 0.0
      %307 = vmatpush1.msra.mxu0 0.0
      %308 = vmatprep.subr.mxu0 0.0
      %309 = vmatpush1.msra.mxu0 0.0
      %310 = vmatprep.subr.mxu0 0.0
      %311 = vmatpush1.msra.mxu0 0.0
      %312 = vmatprep.subr.mxu0 0.0
      %313 = vmatpush1.msra.mxu0 0.0
      %314 = vmatprep.subr.mxu0 0.0
      %315 = vmatpush1.msra.mxu0 0.0
      %316 = vmatprep.subr.mxu0 0.0
      %317 = vmatpush1.msra.mxu0 0.0
      %318 = vmatprep.subr.mxu0 0.0
      %319 = vmatpush1.msra.mxu0 0.0
      %320 = vmatprep.subr.mxu0 0.0
      %321 = vmatpush1.msra.mxu0 0.0
      %322 = vmatprep.subr.mxu0 0.0
      %323 = vmatpush1.msra.mxu0 0.0
      %324 = vmatprep.subr.mxu0 0.0
      %325 = vmatpush1.msra.mxu0 0.0
      %326 = vmatprep.subr.mxu0 0.0
      %327 = vmatpush1.msra.mxu0 0.0
      %328 = vmatprep.subr.mxu0 0.0
      %329 = vmatpush1.msra.mxu0 0.0
      %330 = vmatprep.subr.mxu0 0.0
      %331 = vmatpush1.msra.mxu0 0.0
      %332 = vmatprep.subr.mxu0 0.0
      %333 = vmatpush1.msra.mxu0 0.0
      %334 = vmatprep.subr.mxu0 0.0
      %335 = vmatpush1.msra.mxu0 0.0
      %336 = vmatprep.subr.mxu0 0.0
      %337 = vmatpush1.msra.mxu0 0.0
      %338 = vmatprep.subr.mxu0 0.0
      %339 = vmatpush1.msra.mxu0 0.0
      %340 = vmatprep.subr.mxu0 0.0
      %341 = vmatpush1.msra.mxu0 0.0
      %342 = vmatprep.subr.mxu0 0.0
      %343 = vmatpush1.msra.mxu0 0.0
      %344 = vmatprep.subr.mxu0 0.0
      %345 = vmatpush1.msra.mxu0 0.0
      %346 = vmatprep.mubr.f32.mxu0 0.0
      %347 = vmatmul.mubr.f32.gmra.mrb[0].mxu0 %v280
      %v348 = vpop.f32.mrb[0].mxu0
      %v349 = vadd.f32 0.0, %v348
      %v350 = vpop.f32.mrb[0].mxu0
      %351 = vdwg.mxu0
      %v352 = vld [vmem:[%s257] sm:$0xff]
      %v353 = vld [vmem:[%s257 + $0x8] sm:$0xff]
      %v354 = vld [vmem:[%s257 + $0x10] sm:$0xff]
      %v355 = vld [vmem:[%s257 + $0x18] sm:$0xff]
      %v356 = vld [vmem:[%s257 + $0x20] sm:$0xff]
      %v357 = vld [vmem:[%s257 + $0x28] sm:$0xff]
      %v358 = vld [vmem:[%s257 + $0x30] sm:$0xff]
      %v359 = vld [vmem:[%s257 + $0x38] sm:$0xff]
      %v361 = vsel %vm278, %v352, 0
      %v364 = vsel %vm278, %v353, 0
      %v367 = vsel %vm278, %v354, 0
      %v370 = vsel %vm278, %v355, 0
      %v373 = vsel %vm278, %v356, 0
      %v376 = vsel %vm278, %v357, 0
      %v379 = vsel %vm278, %v358, 0
      %v382 = vsel %vm278, %v359, 0
      %384 = vmatprep.subr.mxu0 0.0
      %385 = vmatpush1.msra.mxu0 %v349
      %386 = vmatprep.subr.mxu0 0.0
      %387 = vmatpush1.msra.mxu0 0.0
      %388 = vmatprep.subr.mxu0 0.0
      %389 = vmatpush1.msra.mxu0 0.0
      %390 = vmatprep.subr.mxu0 0.0
      %391 = vmatpush1.msra.mxu0 0.0
      %392 = vmatprep.subr.mxu0 0.0
      %393 = vmatpush1.msra.mxu0 0.0
      %394 = vmatprep.subr.mxu0 0.0
      %395 = vmatpush1.msra.mxu0 0.0
      %396 = vmatprep.subr.mxu0 0.0
      %397 = vmatpush1.msra.mxu0 0.0
      %398 = vmatprep.subr.mxu0 0.0
      %399 = vmatpush1.msra.mxu0 0.0
      %400 = vmatprep.subr.mxu0 0.0
      %401 = vmatpush1.msra.mxu0 0.0
      %402 = vmatprep.subr.mxu0 0.0
      %403 = vmatpush1.msra.mxu0 0.0
      %404 = vmatprep.subr.mxu0 0.0
      %405 = vmatpush1.msra.mxu0 0.0
      %406 = vmatprep.subr.mxu0 0.0
      %407 = vmatpush1.msra.mxu0 0.0
      %408 = vmatprep.subr.mxu0 0.0
      %409 = vmatpush1.msra.mxu0 0.0
      %410 = vmatprep.subr.mxu0 0.0
      %411 = vmatpush1.msra.mxu0 0.0
      %412 = vmatprep.subr.mxu0 0.0
      %413 = vmatpush1.msra.mxu0 0.0
      %414 = vmatprep.subr.mxu0 0.0
      %415 = vmatpush1.msra.mxu0 0.0
      %416 = vmatprep.subr.mxu0 0.0
      %417 = vmatpush1.msra.mxu0 0.0
      %418 = vmatprep.subr.mxu0 0.0
      %419 = vmatpush1.msra.mxu0 0.0
      %420 = vmatprep.subr.mxu0 0.0
      %421 = vmatpush1.msra.mxu0 0.0
      %422 = vmatprep.subr.mxu0 0.0
      %423 = vmatpush1.msra.mxu0 0.0
      %424 = vmatprep.subr.mxu0 0.0
      %425 = vmatpush1.msra.mxu0 0.0
      %426 = vmatprep.subr.mxu0 0.0
      %427 = vmatpush1.msra.mxu0 0.0
      %428 = vmatprep.subr.mxu0 0.0
      %429 = vmatpush1.msra.mxu0 0.0
      %430 = vmatprep.subr.mxu0 0.0
      %431 = vmatpush1.msra.mxu0 0.0
      %432 = vmatprep.subr.mxu0 0.0
      %433 = vmatpush1.msra.mxu0 0.0
      %434 = vmatprep.subr.mxu0 0.0
      %435 = vmatpush1.msra.mxu0 0.0
      %436 = vmatprep.subr.mxu0 0.0
      %437 = vmatpush1.msra.mxu0 0.0
      %438 = vmatprep.subr.mxu0 0.0
      %439 = vmatpush1.msra.mxu0 0.0
      %440 = vmatprep.subr.mxu0 0.0
      %441 = vmatpush1.msra.mxu0 0.0
      %442 = vmatprep.subr.mxu0 0.0
      %443 = vmatpush1.msra.mxu0 0.0
      %444 = vmatprep.subr.mxu0 0.0
      %445 = vmatpush1.msra.mxu0 0.0
      %446 = vmatprep.subr.mxu0 0.0
      %447 = vmatpush1.msra.mxu0 0.0
      %448 = vmatprep.mubr.f32.mxu0 0.0
      %449 = vmatmul.mubr.f32.gmra.mrb[0].mxu0 %v361
      %v450 = vpop.f32.mrb[0].mxu0
      %v451 = vadd.f32 0.0, %v450
      %v452 = vpop.f32.mrb[0].mxu0
      %453 = vmatprep.mubr.f32.mxu0 0.0
      %454 = vmatmul.mubr.f32.gmra.mrb[0].mxu0 %v364
      %v455 = vpop.f32.mrb[0].mxu0
      %v456 = vadd.f32 0.0, %v455
      %v457 = vpop.f32.mrb[0].mxu0
      %458 = vmatprep.mubr.f32.mxu0 0.0
      %459 = vmatmul.mubr.f32.gmra.mrb[0].mxu0 %v367
      %v460 = vpop.f32.mrb[0].mxu0
      %v461 = vadd.f32 0.0, %v460
      %v462 = vpop.f32.mrb[0].mxu0
      %463 = vmatprep.mubr.f32.mxu0 0.0
      %464 = vmatmul.mubr.f32.gmra.mrb[0].mxu0 %v370
      %v465 = vpop.f32.mrb[0].mxu0
      %v466 = vadd.f32 0.0, %v465
      %v467 = vpop.f32.mrb[0].mxu0
      %468 = vmatprep.mubr.f32.mxu0 0.0
      %469 = vmatmul.mubr.f32.gmra.mrb[0].mxu0 %v373
      %v470 = vpop.f32.mrb[0].mxu0
      %v471 = vadd.f32 0.0, %v470
      %v472 = vpop.f32.mrb[0].mxu0
      %473 = vmatprep.mubr.f32.mxu0 0.0
      %474 = vmatmul.mubr.f32.gmra.mrb[0].mxu0 %v376
      %v475 = vpop.f32.mrb[0].mxu0
      %v476 = vadd.f32 0.0, %v475
      %v477 = vpop.f32.mrb[0].mxu0
      %478 = vmatprep.mubr.f32.mxu0 0.0
      %479 = vmatmul.mubr.f32.gmra.mrb[0].mxu0 %v379
      %v480 = vpop.f32.mrb[0].mxu0
      %v481 = vadd.f32 0.0, %v480
      %v482 = vpop.f32.mrb[0].mxu0
      %483 = vmatprep.mubr.f32.mxu0 0.0
      %484 = vmatmul.mubr.f32.gmra.mrb[0].mxu0 %v382
      %v485 = vpop.f32.mrb[0].mxu0
      %v486 = vadd.f32 0.0, %v485
      %v487 = vpop.f32.mrb[0].mxu0
      %488 = vdwg.mxu0
      %vm489 = vcmask 523264
      %490 = vst.msk [vmem:[%s274] sm:$0xff] %vm489, %v451
      %491 = vst.msk [vmem:[%s274 + $0x8] sm:$0xff] %vm489, %v456
      %492 = vst.msk [vmem:[%s274 + $0x10] sm:$0xff] %vm489, %v461
      %493 = vst.msk [vmem:[%s274 + $0x18] sm:$0xff] %vm489, %v466
      %494 = vst.msk [vmem:[%s274 + $0x20] sm:$0xff] %vm489, %v471
      %495 = vst.msk [vmem:[%s274 + $0x28] sm:$0xff] %vm489, %v476
      %496 = vst.msk [vmem:[%s274 + $0x30] sm:$0xff] %vm489, %v481
      %497 = vst.msk [vmem:[%s274 + $0x38] sm:$0xff] %vm489, %v486
      %s498 = smul.u32 8, %s22
      %p499 = scmp.lt.s32.totalorder %s20, 1
      %s500 = scalar_select %p499, %s20, 1
      %p501 = scmp.lt.s32.totalorder %s21, 9
      %s502 = scalar_select %p501, %s21, 9
      %p503 = scmp.lt.s32.totalorder %s498, 7
      %s504 = scalar_select %p503, %s498, 7
      %p505 = scmp.lt.s32.totalorder %s23, 0
      %s506 = scalar_select %p505, %s23, 0
      %s507 = sadd.s32 %s506, %s504
      %s508 = smul.addr %s502, 8
      %s509 = sadd.s32 %s507, %s508
      %s510 = smul.addr %s500, 80
      %s511 = sadd.s32 %s509, %s510
      %s512 = smul.addr %s511, 8
      %s513 = scalar_lea.vmem %s3, %s512
      // Predicated region
      $region33: #{_hitnet_forward_impl.19} parent=31 // pred_check
        %p514 = pneg %p144
      $region34: #{_hitnet_forward_impl.19} parent=31 // pred_check_branch
        %516 = sbr.rel (%p514) target = $region36
      $region35: #{_hitnet_forward_impl.19} parent=31 // pred_region
        %s517 = smul.u32 8, %s22
      $region36: #{_hitnet_forward_impl.19} parent=31 // pred_fallthru
        _
    $region32: #{_hitnet_forward_impl.19} parent=5 // pred_fallthru
      _
    %p518 = scmp.le.s32.totalorder 2, %s9
    // Predicated region
    $region37: #{_hitnet_forward_impl.19} parent=5 // pred_check
      %p519 = pneg %p518
    $region38: #{_hitnet_forward_impl.19} parent=5 // pred_check_branch
      %521 = sbr.rel (%p519) target = $region40
    $region39: #{_hitnet_forward_impl.19} parent=5 // pred_region
      %s522 = ssub.s32 %s9, 2
      // Predicated region
      $region41: #{_hitnet_forward_impl.19} parent=39 // pred_check
        %p523 = pneg %p150
      $region42: #{_hitnet_forward_impl.19} parent=39 // pred_check_branch
        %525 = sbr.rel (%p523) target = $region44
      $region43: #{_hitnet_forward_impl.19} parent=39 // pred_region
        %s526 = smul.u32 8, %s26
        %p527 = scmp.lt.s32.totalorder %s24, 1
        %s528 = scalar_select %p527, %s24, 1
        %p529 = scmp.lt.s32.totalorder %s25, 9
        %s530 = scalar_select %p529, %s25, 9
        %p531 = scmp.lt.s32.totalorder %s526, 7
        %s532 = scalar_select %p531, %s526, 7
        %p533 = scmp.lt.s32.totalorder %s27, 0
        %s534 = scalar_select %p533, %s27, 0
        %s535 = sadd.s32 %s534, %s532
        %s536 = smul.addr %s530, 8
        %s537 = sadd.s32 %s535, %s536
        %s538 = smul.addr %s528, 80
        %s539 = sadd.s32 %s537, %s538
        %s540 = smul.addr %s539, 8
        %s541 = scalar_lea.vmem %s3, %s540
      $region44: #{_hitnet_forward_impl.19} parent=39 // pred_fallthru
        _
    $region40: #{_hitnet_forward_impl.19} parent=5 // pred_fallthru
      _
  $region6: #{_hitnet_forward_impl.19} parent=0 // loop_footer
    %s13 = sadd.s32 1, %s9
  $region7: #{_hitnet_forward_impl.19} parent=0 // loop_footer_branch
    %8 = sbr.rel target = $region3
  $region8: #{_hitnet_forward_impl.19} parent=0 // loop_exit
    _

// kernel: _hitnet_forward_impl.18
$region0: #{_hitnet_forward_impl.18}
  #allocation0 [shape = 'u32[]', space=smem, size = 0x4, offset = 0x4, fixed_abs, tag = 'smem constant byte address 0x4 - core index']
  #allocation1 [shape = 'u32[144,128]{1,0:T(1,128)}', space=vmem, size = 0x12000, scoped, tag = 'internal scratch']
  %s0 = inlined_call_operand.vmem [shape: f32[2,4,8,8], index: 0, kind: input, shape index: {}]
  %s1 = inlined_call_operand.vmem [shape: f32[2,4,8,8], index: 1, kind: input, shape index: {}]
  %s2 = inlined_call_operand.vmem [shape: f32[2,4,8,8], index: 2, kind: input, shape index: {}]
  %s3 = inlined_call_operand.vmem [shape: f32[8,64], index: 3, kind: input, shape index: {}]
  %s4 = inlined_call_operand.vmem [shape: f32[8,64], index: 4, kind: input, shape index: {}]
  %s5 = inlined_call_operand.vmem [shape: f32[64,16], index: 5, kind: input, shape index: {}]
  %s6 = inlined_call_operand.vmem [shape: f32[2,4,64,64], index: 6, kind: output, shape index: {}]
  %s7 = sld [smem:[#allocation0]]
  $region57: #{_hitnet_forward_impl.18} parent=0
    _
  %s9 = ssub.s32 1, %s7
  %s10 = scalar_select 0, %s9, %s7
  loop: start=0, step=1, limit=10
  $region2: #{_hitnet_forward_impl.18} parent=0 // loop_pre_header
    _
  $region3: #{_hitnet_forward_impl.18} parent=0 // loop_header
    %s12 = sphi 0, %s16
    %p13 = scmp.ge.s32.totalorder %s12, 10
    %s19 = sphi 0, %s45
    %s20 = sphi 0, %s41
    %s21 = sphi 0, %s37
    %s22 = sphi 0, %s33
    %s23 = sphi 0, %s19
    %s24 = sphi 0, %s20
    %s25 = sphi 0, %s21
    %s26 = sphi 0, %s22
    %s27 = sphi 0, %s23
    %s28 = sphi 0, %s24
    %s29 = sphi 0, %s25
    %s30 = sphi 0, %s26
    %s50 = sphi 0, %s52
    %s53 = sphi 0, %s50
    %s54 = sphi 0, %s53
    %s70 = sphi 0, %s54
    %s78 = sphi 0, %s80
    %s81 = sphi 0, %s78
    %s82 = sphi 0, %s81
    %s98 = sphi 0, %s82
    %s106 = sphi 0, %s108
    %s109 = sphi 0, %s106
    %s110 = sphi 0, %s109
    %s126 = sphi 0, %s110
    %s132 = sphi 0, %s134
    %s135 = sphi 0, %s132
    %s136 = sphi 0, %s135
    %s152 = sphi 0, %s136
    %s158 = sphi 0, %s160
    %s161 = sphi 0, %s158
    %s162 = sphi 0, %s161
    %s178 = sphi 0, %s162
    %s184 = sphi 0, %s186
    %s187 = sphi 0, %s184
    %s188 = sphi 0, %s187
    %s204 = sphi 0, %s188
    %s216 = sphi 0, %s218
    %s219 = sphi 0, %s216
    %s220 = sphi 0, %s219
    %s236 = sphi 0, %s220
  $region4: #{_hitnet_forward_impl.18} parent=0 // loop_header_branch
    %15 = sbr.rel (%p13) target = $region8
  $region5: #{_hitnet_forward_impl.18} parent=0 // loop_body
    %s17 = ssub.s32 %s12, 1
    %s18 = ssub.s32 %s12, 2
    %s31 = sadd.s32 1, %s22
    %p32 = scmp.ge.s32.totalorder %s31, 1
    %s33 = scalar_select %p32, 0, %s31
    %s34 = sadd.s32 1, %s21
    %s35 = scalar_select %p32, %s34, %s21
    %p36 = scmp.ge.s32.totalorder %s35, 1
    %s37 = scalar_select %p36, 0, %s35
    %s38 = sadd.s32 1, %s20
    %s39 = scalar_select %p36, %s38, %s20
    %p40 = scmp.ge.s32.totalorder %s39, 4
    %s41 = scalar_select %p40, 0, %s39
    %s42 = sadd.s32 1, %s19
    %s43 = scalar_select %p40, %s42, %s19
    %p44 = scmp.ge.s32.totalorder %s43, 2
    %s45 = scalar_select %p44, 0, %s43
    %s46 = ssub.s32 %s19, %s45
    %s47 = ssub.s32 %s20, %s41
    %s48 = sor.u32 %s46, %s47
    %p49 = scmp.eq.s32.totalorder %s48, 0
    %s51 = sadd.s32 %s50, 1
    %s52 = scalar_select %p49, %s50, %s51
    %p55 = pneg %p49
    %p56 = scmp.eq.s32.totalorder %s12, 7
    %p57 = por %p55, %p56
    %p58 = scmp.ne.s32.totalorder %s50, %s53
    %p59 = scmp.eq.s32.totalorder %s12, 0
    %p60 = por %p58, %p59
    %p61 = scmp.ne.s32.totalorder %s50, %s53
    %p62 = scmp.eq.s32.totalorder %s17, 7
    %p63 = por %p61, %p62
    %p64 = scmp.ne.s32.totalorder %s53, %s54
    %p65 = scmp.eq.s32.totalorder %s17, 0
    %p66 = por %p64, %p65
    %p67 = scmp.ne.s32.totalorder %s53, %s54
    %p68 = scmp.eq.s32.totalorder %s18, 7
    %p69 = por %p67, %p68
    %p71 = scmp.ne.s32.totalorder %s54, %s70
    %p72 = scmp.eq.s32.totalorder %s18, 0
    %p73 = por %p71, %p72
    %s74 = ssub.s32 %s19, %s45
    %s75 = ssub.s32 %s20, %s41
    %s76 = sor.u32 %s74, %s75
    %p77 = scmp.eq.s32.totalorder %s76, 0
    %s79 = sadd.s32 %s78, 1
    %s80 = scalar_select %p77, %s78, %s79
    %p83 = pneg %p77
    %p84 = scmp.eq.s32.totalorder %s12, 7
    %p85 = por %p83, %p84
    %p86 = scmp.ne.s32.totalorder %s78, %s81
    %p87 = scmp.eq.s32.totalorder %s12, 0
    %p88 = por %p86, %p87
    %p89 = scmp.ne.s32.totalorder %s78, %s81
    %p90 = scmp.eq.s32.totalorder %s17, 7
    %p91 = por %p89, %p90
    %p92 = scmp.ne.s32.totalorder %s81, %s82
    %p93 = scmp.eq.s32.totalorder %s17, 0
    %p94 = por %p92, %p93
    %p95 = scmp.ne.s32.totalorder %s81, %s82
    %p96 = scmp.eq.s32.totalorder %s18, 7
    %p97 = por %p95, %p96
    %p99 = scmp.ne.s32.totalorder %s82, %s98
    %p100 = scmp.eq.s32.totalorder %s18, 0
    %p101 = por %p99, %p100
    %s102 = ssub.s32 %s19, %s45
    %s103 = ssub.s32 %s20, %s41
    %s104 = sor.u32 %s102, %s103
    %p105 = scmp.eq.s32.totalorder %s104, 0
    %s107 = sadd.s32 %s106, 1
    %s108 = scalar_select %p105, %s106, %s107
    %p111 = pneg %p105
    %p112 = scmp.eq.s32.totalorder %s12, 7
    %p113 = por %p111, %p112
    %p114 = scmp.ne.s32.totalorder %s106, %s109
    %p115 = scmp.eq.s32.totalorder %s12, 0
    %p116 = por %p114, %p115
    %p117 = scmp.ne.s32.totalorder %s106, %s109
    %p118 = scmp.eq.s32.totalorder %s17, 7
    %p119 = por %p117, %p118
    %p120 = scmp.ne.s32.totalorder %s109, %s110
    %p121 = scmp.eq.s32.totalorder %s17, 0
    %p122 = por %p120, %p121
    %p123 = scmp.ne.s32.totalorder %s109, %s110
    %p124 = scmp.eq.s32.totalorder %s18, 7
    %p125 = por %p123, %p124
    %p127 = scmp.ne.s32.totalorder %s110, %s126
    %p128 = scmp.eq.s32.totalorder %s18, 0
    %p129 = por %p127, %p128
    %s130 = ssub.s32 %s22, %s33
    %p131 = scmp.eq.s32.totalorder %s130, 0
    %s133 = sadd.s32 %s132, 1
    %s134 = scalar_select %p131, %s132, %s133
    %p137 = pneg %p131
    %p138 = scmp.eq.s32.totalorder %s12, 7
    %p139 = por %p137, %p138
    %p140 = scmp.ne.s32.totalorder %s132, %s135
    %p141 = scmp.eq.s32.totalorder %s12, 0
    %p142 = por %p140, %p141
    %p143 = scmp.ne.s32.totalorder %s132, %s135
    %p144 = scmp.eq.s32.totalorder %s17, 7
    %p145 = por %p143, %p144
    %p146 = scmp.ne.s32.totalorder %s135, %s136
    %p147 = scmp.eq.s32.totalorder %s17, 0
    %p148 = por %p146, %p147
    %p149 = scmp.ne.s32.totalorder %s135, %s136
    %p150 = scmp.eq.s32.totalorder %s18, 7
    %p151 = por %p149, %p150
    %p153 = scmp.ne.s32.totalorder %s136, %s152
    %p154 = scmp.eq.s32.totalorder %s18, 0
    %p155 = por %p153, %p154
    %s156 = ssub.s32 %s22, %s33
    %p157 = scmp.eq.s32.totalorder %s156, 0
    %s159 = sadd.s32 %s158, 1
    %s160 = scalar_select %p157, %s158, %s159
    %p163 = pneg %p157
    %p164 = scmp.eq.s32.totalorder %s12, 7
    %p165 = por %p163, %p164
    %p166 = scmp.ne.s32.totalorder %s158, %s161
    %p167 = scmp.eq.s32.totalorder %s12, 0
    %p168 = por %p166, %p167
    %p169 = scmp.ne.s32.totalorder %s158, %s161
    %p170 = scmp.eq.s32.totalorder %s17, 7
    %p171 = por %p169, %p170
    %p172 = scmp.ne.s32.totalorder %s161, %s162
    %p173 = scmp.eq.s32.totalorder %s17, 0
    %p174 = por %p172, %p173
    %p175 = scmp.ne.s32.totalorder %s161, %s162
    %p176 = scmp.eq.s32.totalorder %s18, 7
    %p177 = por %p175, %p176
    %p179 = scmp.ne.s32.totalorder %s162, %s178
    %p180 = scmp.eq.s32.totalorder %s18, 0
    %p181 = por %p179, %p180
    %s182 = ssub.s32 %s21, %s37
    %p183 = scmp.eq.s32.totalorder %s182, 0
    %s185 = sadd.s32 %s184, 1
    %s186 = scalar_select %p183, %s184, %s185
    %p189 = pneg %p183
    %p190 = scmp.eq.s32.totalorder %s12, 7
    %p191 = por %p189, %p190
    %p192 = scmp.ne.s32.totalorder %s184, %s187
    %p193 = scmp.eq.s32.totalorder %s12, 0
    %p194 = por %p192, %p193
    %p195 = scmp.ne.s32.totalorder %s184, %s187
    %p196 = scmp.eq.s32.totalorder %s17, 7
    %p197 = por %p195, %p196
    %p198 = scmp.ne.s32.totalorder %s187, %s188
    %p199 = scmp.eq.s32.totalorder %s17, 0
    %p200 = por %p198, %p199
    %p201 = scmp.ne.s32.totalorder %s187, %s188
    %p202 = scmp.eq.s32.totalorder %s18, 7
    %p203 = por %p201, %p202
    %p205 = scmp.ne.s32.totalorder %s188, %s204
    %p206 = scmp.eq.s32.totalorder %s18, 0
    %p207 = por %p205, %p206
    %s208 = ssub.s32 %s19, %s45
    %s209 = ssub.s32 %s20, %s41
    %s210 = sor.u32 %s208, %s209
    %s211 = ssub.s32 %s21, %s37
    %s212 = sor.u32 %s210, %s211
    %s213 = ssub.s32 %s22, %s33
    %s214 = sor.u32 %s212, %s213
    %p215 = scmp.eq.s32.totalorder %s214, 0
    %s217 = sadd.s32 %s216, 1
    %s218 = scalar_select %p215, %s216, %s217
    %p221 = pneg %p215
    %p222 = scmp.eq.s32.totalorder %s12, 7
    %p223 = por %p221, %p222
    %p224 = scmp.ne.s32.totalorder %s216, %s219
    %p225 = scmp.eq.s32.totalorder %s12, 0
    %p226 = por %p224, %p225
    %p227 = scmp.ne.s32.totalorder %s216, %s219
    %p228 = scmp.eq.s32.totalorder %s17, 7
    %p229 = por %p227, %p228
    %p230 = scmp.ne.s32.totalorder %s219, %s220
    %p231 = scmp.eq.s32.totalorder %s17, 0
    %p232 = por %p230, %p231
    %p233 = scmp.ne.s32.totalorder %s219, %s220
    %p234 = scmp.eq.s32.totalorder %s18, 7
    %p235 = por %p233, %p234
    %p237 = scmp.ne.s32.totalorder %s220, %s236
    %p238 = scmp.eq.s32.totalorder %s18, 0
    %p239 = por %p237, %p238
    %p240 = scmp.le.s32.totalorder 1, %s12
    %p241 = scmp.lt.s32.totalorder %s12, 9
    %p242 = pnand %p240, %p241
    %p243 = pneg %p242
    // Predicated region
    $region9: #{_hitnet_forward_impl.18} parent=5 // pred_check
      _
    $region10: #{_hitnet_forward_impl.18} parent=5 // pred_check_branch
      %245 = sbr.rel (%p242) target = $region12
    $region11: #{_hitnet_forward_impl.18} parent=5 // pred_region
      %s246 = ssub.s32 %s12, 1
      // Predicated region
      $region13: #{_hitnet_forward_impl.18} parent=11 // pred_check
        %p247 = pneg %p148
      $region14: #{_hitnet_forward_impl.18} parent=11 // pred_check_branch
        %249 = sbr.rel (%p247) target = $region16
      $region15: #{_hitnet_forward_impl.18} parent=11 // pred_region
        %p250 = scmp.lt.s32.totalorder %s26, 0
        %s251 = scalar_select %p250, %s26, 0
        %s252 = smul.addr %s251, 8
        %s253 = scalar_lea.vmem %s3, %s252
      $region16: #{_hitnet_forward_impl.18} parent=11 // pred_fallthru
        _
      // Predicated region
      $region17: #{_hitnet_forward_impl.18} parent=11 // pred_check
        %p254 = pneg %p174
      $region18: #{_hitnet_forward_impl.18} parent=11 // pred_check_branch
        %256 = sbr.rel (%p254) target = $region20
      $region19: #{_hitnet_forward_impl.18} parent=11 // pred_region
        %p257 = scmp.lt.s32.totalorder %s26, 0
        %s258 = scalar_select %p257, %s26, 0
        %s259 = smul.addr %s258, 8
        %s260 = scalar_lea.vmem %s4, %s259
      $region20: #{_hitnet_forward_impl.18} parent=11 // pred_fallthru
        _
      // Predicated region
      $region21: #{_hitnet_forward_impl.18} parent=11 // pred_check
        %p261 = pneg %p200
      $region22: #{_hitnet_forward_impl.18} parent=11 // pred_check_branch
        %263 = sbr.rel (%p261) target = $region24
      $region23: #{_hitnet_forward_impl.18} parent=11 // pred_region
        %s264 = smul.u32 8, %s25
        %p265 = scmp.lt.s32.totalorder %s264, 7
        %s266 = scalar_select %p265, %s264, 7
        %s267 = smul.addr %s266, 8
        %s268 = scalar_lea.vmem %s5, %s267
        %s269 = smul.u32 8, %s25
      $region24: #{_hitnet_forward_impl.18} parent=11 // pred_fallthru
        _
    $region12: #{_hitnet_forward_impl.18} parent=5 // pred_fallthru
      _
    %p270 = scmp.lt.s32.totalorder %s12, 8
    // Predicated region
    $region25: #{_hitnet_forward_impl.18} parent=5 // pred_check
      %p271 = pneg %p270
    $region26: #{_hitnet_forward_impl.18} parent=5 // pred_check_branch
      %273 = sbr.rel (%p271) target = $region28
    $region27: #{_hitnet_forward_impl.18} parent=5 // pred_region
      // Predicated region
      $region29: #{_hitnet_forward_impl.18} parent=27 // pred_check
        %p274 = pneg %p60
      $region30: #{_hitnet_forward_impl.18} parent=27 // pred_check_branch
        %276 = sbr.rel (%p274) target = $region32
      $region31: #{_hitnet_forward_impl.18} parent=27 // pred_region
        %p277 = scmp.lt.s32.totalorder %s19, 1
        %s278 = scalar_select %p277, %s19, 1
        %p279 = scmp.lt.s32.totalorder %s20, 3
        %s280 = scalar_select %p279, %s20, 3
        %s281 = smul.addr %s278, 4
        %s282 = sadd.s32 %s280, %s281
        %s283 = smul.addr %s282, 8
        %s284 = scalar_lea.vmem %s0, %s283
      $region32: #{_hitnet_forward_impl.18} parent=27 // pred_fallthru
        _
      // Predicated region
      $region33: #{_hitnet_forward_impl.18} parent=27 // pred_check
        %p285 = pneg %p88
      $region34: #{_hitnet_forward_impl.18} parent=27 // pred_check_branch
        %287 = sbr.rel (%p285) target = $region36
      $region35: #{_hitnet_forward_impl.18} parent=27 // pred_region
        %p288 = scmp.lt.s32.totalorder %s19, 1
        %s289 = scalar_select %p288, %s19, 1
        %p290 = scmp.lt.s32.totalorder %s20, 3
        %s291 = scalar_select %p290, %s20, 3
        %s292 = smul.addr %s289, 4
        %s293 = sadd.s32 %s291, %s292
        %s294 = smul.addr %s293, 8
        %s295 = scalar_lea.vmem %s1, %s294
      $region36: #{_hitnet_forward_impl.18} parent=27 // pred_fallthru
        _
      // Predicated region
      $region37: #{_hitnet_forward_impl.18} parent=27 // pred_check
        %p296 = pneg %p116
      $region38: #{_hitnet_forward_impl.18} parent=27 // pred_check_branch
        %298 = sbr.rel (%p296) target = $region40
      $region39: #{_hitnet_forward_impl.18} parent=27 // pred_region
        %p299 = scmp.lt.s32.totalorder %s19, 1
        %s300 = scalar_select %p299, %s19, 1
        %p301 = scmp.lt.s32.totalorder %s20, 3
        %s302 = scalar_select %p301, %s20, 3
        %s303 = smul.addr %s300, 4
        %s304 = sadd.s32 %s302, %s303
        %s305 = smul.addr %s304, 8
        %s306 = scalar_lea.vmem %s2, %s305
      $region40: #{_hitnet_forward_impl.18} parent=27 // pred_fallthru
        _
    $region28: #{_hitnet_forward_impl.18} parent=5 // pred_fallthru
      _
    %p307 = scmp.le.s32.totalorder 1, %s12
    %p308 = scmp.lt.s32.totalorder %s12, 9
    %p309 = pnand %p307, %p308
    %p310 = pneg %p309
    // Predicated region
    $region41: #{_hitnet_forward_impl.18} parent=5 // pred_check
      _
    $region42: #{_hitnet_forward_impl.18} parent=5 // pred_check_branch
      %312 = sbr.rel (%p309) target = $region44
    $region43: #{_hitnet_forward_impl.18} parent=5 // pred_region
      %s313 = ssub.s32 %s12, 1
      %p314 = scmp.lt.s32.totalorder %s23, 1
      %s315 = scalar_select %p314, %s23, 1
      %p316 = scmp.lt.s32.totalorder %s24, 3
      %s317 = scalar_select %p316, %s24, 3
      %s318 = smul.addr %s315, 4
      %s319 = sadd.s32 %s317, %s318
      %s320 = smul.addr %s319, 8
      %s321 = scalar_lea.vmem %s0, %s320
      %p322 = pneg %p66
      %p323 = pneg %p63
      %p324 = scmp.lt.s32.totalorder %s23, 1
      %s325 = scalar_select %p324, %s23, 1
      %p326 = scmp.lt.s32.totalorder %s24, 3
      %s327 = scalar_select %p326, %s24, 3
      %s328 = smul.addr %s325, 4
      %s329 = sadd.s32 %s327, %s328
      %s330 = smul.addr %s329, 8
      %s331 = scalar_lea.vmem %s1, %s330
      %p332 = pneg %p94
      %p333 = pneg %p91
      %p334 = scmp.lt.s32.totalorder %s23, 1
      %s335 = scalar_select %p334, %s23, 1
      %p336 = scmp.lt.s32.totalorder %s24, 3
      %s337 = scalar_select %p336, %s24, 3
      %s338 = smul.addr %s335, 4
      %s339 = sadd.s32 %s337, %s338
      %s340 = smul.addr %s339, 8
      %s341 = scalar_lea.vmem %s2, %s340
      %p342 = pneg %p122
      %p343 = pneg %p119
      %p344 = scmp.lt.s32.totalorder %s26, 0
      %s345 = scalar_select %p344, %s26, 0
      %s346 = smul.addr %s345, 8
      %s347 = scalar_lea.vmem %s3, %s346
      %p348 = pneg %p148
      %p349 = pneg %p145
      %p350 = scmp.lt.s32.totalorder %s26, 0
      %s351 = scalar_select %p350, %s26, 0
      %s352 = smul.addr %s351, 8
      %s353 = scalar_lea.vmem %s4, %s352
      %p354 = pneg %p174
      %p355 = pneg %p171
      %s356 = smul.u32 8, %s25
      %p357 = scmp.lt.s32.totalorder %s356, 7
      %s358 = scalar_select %p357, %s356, 7
      %s359 = smul.addr %s358, 8
      %s360 = scalar_lea.vmem %s5, %s359
      %p361 = pneg %p200
      %p362 = pneg %p197
      %p363 = pneg %p232
      %p364 = pneg %p229
      %s365 = smul.u32 8, %s25
      %p366 = scmp.lt.s32.totalorder %s23, 1
      %s367 = scalar_select %p366, %s23, 1
      %p368 = scmp.lt.s32.totalorder %s24, 3
      %s369 = scalar_select %p368, %s24, 3
      %p370 = scmp.lt.s32.totalorder %s365, 7
      %s371 = scalar_select %p370, %s365, 7
      %p372 = scmp.lt.s32.totalorder %s26, 0
      %s373 = scalar_select %p372, %s26, 0
      %s374 = sadd.s32 %s373, %s371
      %s375 = smul.addr %s369, 8
      %s376 = sadd.s32 %s374, %s375
      %s377 = smul.addr %s367, 32
      %s378 = sadd.s32 %s376, %s377
      %s379 = smul.addr %s378, 8
      %s380 = scalar_lea.vmem %s6, %s379
      %p381 = scmp.lt.s32.totalorder %s23, 1
      %s382 = scalar_select %p381, %s23, 1
      %p383 = scmp.lt.s32.totalorder %s24, 3
      %s384 = scalar_select %p383, %s24, 3
      %s385 = smul.addr %s382, 4
      %s386 = sadd.s32 %s384, %s385
      %s387 = smul.addr %s386, 8
      %s388 = scalar_lea.vmem %s0, %s387
      %p389 = scmp.lt.s32.totalorder %s23, 1
      %s390 = scalar_select %p389, %s23, 1
      %p391 = scmp.lt.s32.totalorder %s24, 3
      %s392 = scalar_select %p391, %s24, 3
      %s393 = smul.addr %s390, 4
      %s394 = sadd.s32 %s392, %s393
      %s395 = smul.addr %s394, 8
      %s396 = scalar_lea.vmem %s1, %s395
      %p397 = scmp.lt.s32.totalorder %s23, 1
      %s398 = scalar_select %p397, %s23, 1
      %p399 = scmp.lt.s32.totalorder %s24, 3
      %s400 = scalar_select %p399, %s24, 3
      %s401 = smul.addr %s398, 4
      %s402 = sadd.s32 %s400, %s401
      %s403 = smul.addr %s402, 8
      %s404 = scalar_lea.vmem %s2, %s403
      %p405 = scmp.lt.s32.totalorder %s26, 0
      %s406 = scalar_select %p405, %s26, 0
      %s407 = smul.addr %s406, 8
      %s408 = scalar_lea.vmem %s3, %s407
      %p409 = scmp.lt.s32.totalorder %s26, 0
      %s410 = scalar_select %p409, %s26, 0
      %s411 = smul.addr %s410, 8
      %s412 = scalar_lea.vmem %s4, %s411
      %s413 = smul.u32 8, %s25
      %p414 = scmp.lt.s32.totalorder %s413, 7
      %s415 = scalar_select %p414, %s413, 7
      %s416 = smul.addr %s415, 8
      %s417 = scalar_lea.vmem %s5, %s416
      %s418 = smul.u32 8, %s25
      %s419 = smul.u32 8, %s25
      %p420 = scmp.lt.s32.totalorder %s23, 1
      %s421 = scalar_select %p420, %s23, 1
      %p422 = scmp.lt.s32.totalorder %s24, 3
      %s423 = scalar_select %p422, %s24, 3
      %p424 = scmp.lt.s32.totalorder %s419, 7
      %s425 = scalar_select %p424, %s419, 7
      %p426 = scmp.lt.s32.totalorder %s26, 0
      %s427 = scalar_select %p426, %s26, 0
      %s428 = sadd.s32 %s427, %s425
      %s429 = smul.addr %s423, 8
      %s430 = sadd.s32 %s428, %s429
      %s431 = smul.addr %s421, 32
      %s432 = sadd.s32 %s430, %s431
      %s433 = smul.addr %s432, 8
      %s434 = scalar_lea.vmem %s6, %s433
      %s435 = smul.u32 8, %s25
      %v436 = vld [vmem:[%s408] sm:$0xff]
      %v437 = vld [vmem:[%s388] sm:$0xff]
      %v438 = vld [vmem:[%s396] sm:$0xff]
      %v439 = vld [vmem:[%s412] sm:$0xff]
      %vm440 = vcmask 64512
      %v442 = vsel %vm440, %v438, 0
      %444 = vmatprep.subr.mxu0 0.0
      %445 = vmatpush1.msra.mxu0 %v439
      %446 = vmatprep.subr.mxu0 0.0
      %447 = vmatpush1.msra.mxu0 0.0
      %448 = vmatprep.subr.mxu0 0.0
      %449 = vmatpush1.msra.mxu0 0.0
      %450 = vmatprep.subr.mxu0 0.0
      %451 = vmatpush1.msra.mxu0 0.0
      %452 = vmatprep.subr.mxu0 0.0
      %453 = vmatpush1.msra.mxu0 0.0
      %454 = vmatprep.subr.mxu0 0.0
      %455 = vmatpush1.msra.mxu0 0.0
      %456 = vmatprep.subr.mxu0 0.0
      %457 = vmatpush1.msra.mxu0 0.0
      %458 = vmatprep.subr.mxu0 0.0
      %459 = vmatpush1.msra.mxu0 0.0
      %460 = vmatprep.subr.mxu0 0.0
      %461 = vmatpush1.msra.mxu0 0.0
      %462 = vmatprep.subr.mxu0 0.0
      %463 = vmatpush1.msra.mxu0 0.0
      %464 = vmatprep.subr.mxu0 0.0
      %465 = vmatpush1.msra.mxu0 0.0
      %466 = vmatprep.subr.mxu0 0.0
      %467 = vmatpush1.msra.mxu0 0.0
      %468 = vmatprep.subr.mxu0 0.0
      %469 = vmatpush1.msra.mxu0 0.0
      %470 = vmatprep.subr.mxu0 0.0
      %471 = vmatpush1.msra.mxu0 0.0
      %472 = vmatprep.subr.mxu0 0.0
      %473 = vmatpush1.msra.mxu0 0.0
      %474 = vmatprep.subr.mxu0 0.0
      %475 = vmatpush1.msra.mxu0 0.0
      %476 = vmatprep.subr.mxu0 0.0
      %477 = vmatpush1.msra.mxu0 0.0
      %478 = vmatprep.subr.mxu0 0.0
      %479 = vmatpush1.msra.mxu0 0.0
      %480 = vmatprep.subr.mxu0 0.0
      %481 = vmatpush1.msra.mxu0 0.0
      %482 = vmatprep.subr.mxu0 0.0
      %483 = vmatpush1.msra.mxu0 0.0
      %484 = vmatprep.subr.mxu0 0.0
      %485 = vmatpush1.msra.mxu0 0.0
      %486 = vmatprep.subr.mxu0 0.0
      %487 = vmatpush1.msra.mxu0 0.0
      %488 = vmatprep.subr.mxu0 0.0
      %489 = vmatpush1.msra.mxu0 0.0
      %490 = vmatprep.subr.mxu0 0.0
      %491 = vmatpush1.msra.mxu0 0.0
      %492 = vmatprep.subr.mxu0 0.0
      %493 = vmatpush1.msra.mxu0 0.0
      %494 = vmatprep.subr.mxu0 0.0
      %495 = vmatpush1.msra.mxu0 0.0
      %496 = vmatprep.subr.mxu0 0.0
      %497 = vmatpush1.msra.mxu0 0.0
      %498 = vmatprep.subr.mxu0 0.0
      %499 = vmatpush1.msra.mxu0 0.0
      %500 = vmatprep.subr.mxu0 0.0
      %501 = vmatpush1.msra.mxu0 0.0
      %502 = vmatprep.subr.mxu0 0.0
      %503 = vmatpush1.msra.mxu0 0.0
      %504 = vmatprep.subr.mxu0 0.0
      %505 = vmatpush1.msra.mxu0 0.0
      %506 = vmatprep.subr.mxu0 0.0
      %507 = vmatpush1.msra.mxu0 0.0
      %508 = vmatprep.mubr.f32.mxu0 0.0
      %509 = vmatmul.mubr.f32.gmra.mrb[0].mxu0 %v442
      %v510 = vpop.f32.mrb[0].mxu0
      %v511 = vadd.f32 0.0, %v510
      %v512 = vpop.f32.mrb[0].mxu0
      %513 = vdwg.mxu0
      %v515 = vsel %vm440, %v437, 0
      %517 = vmatprep.subr.mxu0 0.0
      %518 = vmatpush1.msra.mxu0 %v436
      %519 = vmatprep.subr.mxu0 0.0
      %520 = vmatpush1.msra.mxu0 0.0
      %521 = vmatprep.subr.mxu0 0.0
      %522 = vmatpush1.msra.mxu0 0.0
      %523 = vmatprep.subr.mxu0 0.0
      %524 = vmatpush1.msra.mxu0 0.0
      %525 = vmatprep.subr.mxu0 0.0
      %526 = vmatpush1.msra.mxu0 0.0
      %527 = vmatprep.subr.mxu0 0.0
      %528 = vmatpush1.msra.mxu0 0.0
      %529 = vmatprep.subr.mxu0 0.0
      %530 = vmatpush1.msra.mxu0 0.0
      %531 = vmatprep.subr.mxu0 0.0
      %532 = vmatpush1.msra.mxu0 0.0
      %533 = vmatprep.subr.mxu0 0.0
      %534 = vmatpush1.msra.mxu0 0.0
      %535 = vmatprep.subr.mxu0 0.0
      %536 = vmatpush1.msra.mxu0 0.0
      %537 = vmatprep.subr.mxu0 0.0
      %538 = vmatpush1.msra.mxu0 0.0
      %539 = vmatprep.subr.mxu0 0.0
      %540 = vmatpush1.msra.mxu0 0.0
      %541 = vmatprep.subr.mxu0 0.0
      %542 = vmatpush1.msra.mxu0 0.0
      %543 = vmatprep.subr.mxu0 0.0
      %544 = vmatpush1.msra.mxu0 0.0
      %545 = vmatprep.subr.mxu0 0.0
      %546 = vmatpush1.msra.mxu0 0.0
      %547 = vmatprep.subr.mxu0 0.0
      %548 = vmatpush1.msra.mxu0 0.0
      %549 = vmatprep.subr.mxu0 0.0
      %550 = vmatpush1.msra.mxu0 0.0
      %551 = vmatprep.subr.mxu0 0.0
      %552 = vmatpush1.msra.mxu0 0.0
      %553 = vmatprep.subr.mxu0 0.0
      %554 = vmatpush1.msra.mxu0 0.0
      %555 = vmatprep.subr.mxu0 0.0
      %556 = vmatpush1.msra.mxu0 0.0
      %557 = vmatprep.subr.mxu0 0.0
      %558 = vmatpush1.msra.mxu0 0.0
      %559 = vmatprep.subr.mxu0 0.0
      %560 = vmatpush1.msra.mxu0 0.0
      %561 = vmatprep.subr.mxu0 0.0
      %562 = vmatpush1.msra.mxu0 0.0
      %563 = vmatprep.subr.mxu0 0.0
      %564 = vmatpush1.msra.mxu0 0.0
      %565 = vmatprep.subr.mxu0 0.0
      %566 = vmatpush1.msra.mxu0 0.0
      %567 = vmatprep.subr.mxu0 0.0
      %568 = vmatpush1.msra.mxu0 0.0
      %569 = vmatprep.subr.mxu0 0.0
      %570 = vmatpush1.msra.mxu0 0.0
      %571 = vmatprep.subr.mxu0 0.0
      %572 = vmatpush1.msra.mxu0 0.0
      %573 = vmatprep.subr.mxu0 0.0
      %574 = vmatpush1.msra.mxu0 0.0
      %575 = vmatprep.subr.mxu0 0.0
      %576 = vmatpush1.msra.mxu0 0.0
      %577 = vmatprep.subr.mxu0 0.0
      %578 = vmatpush1.msra.mxu0 0.0
      %579 = vmatprep.subr.mxu0 0.0
      %580 = vmatpush1.msra.mxu0 0.0
      %581 = vmatprep.mubr.f32.mxu0 0.0
      %582 = vmatmul.mubr.f32.gmra.mrb[0].mxu0 %v515
      %v583 = vpop.f32.mrb[0].mxu0
      %v584 = vadd.f32 %v511, %v583
      %v585 = vpop.f32.mrb[0].mxu0
      %586 = vdwg.mxu0
      %v587 = vld [vmem:[%s404] sm:$0xff]
      %v589 = vsel %vm440, %v587, 0
      %591 = vmatprep.subr.mxu0 0.0
      %592 = vmatpush1.msra.mxu0 %v436
      %593 = vmatprep.subr.mxu0 0.0
      %594 = vmatpush1.msra.mxu0 0.0
      %595 = vmatprep.subr.mxu0 0.0
      %596 = vmatpush1.msra.mxu0 0.0
      %597 = vmatprep.subr.mxu0 0.0
      %598 = vmatpush1.msra.mxu0 0.0
      %599 = vmatprep.subr.mxu0 0.0
      %600 = vmatpush1.msra.mxu0 0.0
      %601 = vmatprep.subr.mxu0 0.0
      %602 = vmatpush1.msra.mxu0 0.0
      %603 = vmatprep.subr.mxu0 0.0
      %604 = vmatpush1.msra.mxu0 0.0
      %605 = vmatprep.subr.mxu0 0.0
      %606 = vmatpush1.msra.mxu0 0.0
      %607 = vmatprep.subr.mxu0 0.0
      %608 = vmatpush1.msra.mxu0 0.0
      %609 = vmatprep.subr.mxu0 0.0
      %610 = vmatpush1.msra.mxu0 0.0
      %611 = vmatprep.subr.mxu0 0.0
      %612 = vmatpush1.msra.mxu0 0.0
      %613 = vmatprep.subr.mxu0 0.0
      %614 = vmatpush1.msra.mxu0 0.0
      %615 = vmatprep.subr.mxu0 0.0
      %616 = vmatpush1.msra.mxu0 0.0
      %617 = vmatprep.subr.mxu0 0.0
      %618 = vmatpush1.msra.mxu0 0.0
      %619 = vmatprep.subr.mxu0 0.0
      %620 = vmatpush1.msra.mxu0 0.0
      %621 = vmatprep.subr.mxu0 0.0
      %622 = vmatpush1.msra.mxu0 0.0
      %623 = vmatprep.subr.mxu0 0.0
      %624 = vmatpush1.msra.mxu0 0.0
      %625 = vmatprep.subr.mxu0 0.0
      %626 = vmatpush1.msra.mxu0 0.0
      %627 = vmatprep.subr.mxu0 0.0
      %628 = vmatpush1.msra.mxu0 0.0
      %629 = vmatprep.subr.mxu0 0.0
      %630 = vmatpush1.msra.mxu0 0.0
      %631 = vmatprep.subr.mxu0 0.0
      %632 = vmatpush1.msra.mxu0 0.0
      %633 = vmatprep.subr.mxu0 0.0
      %634 = vmatpush1.msra.mxu0 0.0
      %635 = vmatprep.subr.mxu0 0.0
      %636 = vmatpush1.msra.mxu0 0.0
      %637 = vmatprep.subr.mxu0 0.0
      %638 = vmatpush1.msra.mxu0 0.0
      %639 = vmatprep.subr.mxu0 0.0
      %640 = vmatpush1.msra.mxu0 0.0
      %641 = vmatprep.subr.mxu0 0.0
      %642 = vmatpush1.msra.mxu0 0.0
      %643 = vmatprep.subr.mxu0 0.0
      %644 = vmatpush1.msra.mxu0 0.0
      %645 = vmatprep.subr.mxu0 0.0
      %646 = vmatpush1.msra.mxu0 0.0
      %647 = vmatprep.subr.mxu0 0.0
      %648 = vmatpush1.msra.mxu0 0.0
      %649 = vmatprep.subr.mxu0 0.0
      %650 = vmatpush1.msra.mxu0 0.0
      %651 = vmatprep.subr.mxu0 0.0
      %652 = vmatpush1.msra.mxu0 0.0
      %653 = vmatprep.subr.mxu0 0.0
      %654 = vmatpush1.msra.mxu0 0.0
      %655 = vmatprep.mubr.f32.mxu0 0.0
      %656 = vmatmul.mubr.f32.gmra.mrb[0].mxu0 %v589
      %v657 = vpop.f32.mrb[0].mxu0
      %v658 = vadd.f32 0.0, %v657
      %v659 = vpop.f32.mrb[0].mxu0
      %660 = vdwg.mxu0
      %v661 = vld [vmem:[%s417] sm:$0xff]
      %v662 = vld [vmem:[%s417 + $0x8] sm:$0xff]
      %v663 = vld [vmem:[%s417 + $0x10] sm:$0xff]
      %v664 = vld [vmem:[%s417 + $0x18] sm:$0xff]
      %v665 = vld [vmem:[%s417 + $0x20] sm:$0xff]
      %v666 = vld [vmem:[%s417 + $0x28] sm:$0xff]
      %v667 = vld [vmem:[%s417 + $0x30] sm:$0xff]
      %v668 = vld [vmem:[%s417 + $0x38] sm:$0xff]
      %vm669 = vcmask 130048
      %v671 = vsel %vm669, %v661, 0
      %v674 = vsel %vm669, %v662, 0
      %v677 = vsel %vm669, %v663, 0
      %v680 = vsel %vm669, %v664, 0
      %v683 = vsel %vm669, %v665, 0
      %v686 = vsel %vm669, %v666, 0
      %v689 = vsel %vm669, %v667, 0
      %v692 = vsel %vm669, %v668, 0
      %694 = vmatprep.subr.mxu0 0.0
      %695 = vmatpush1.msra.mxu0 %v584
      %696 = vmatprep.subr.mxu0 0.0
      %697 = vmatpush1.msra.mxu0 %v658
      %698 = vmatprep.subr.mxu0 0.0
      %699 = vmatpush1.msra.mxu0 0.0
      %700 = vmatprep.subr.mxu0 0.0
      %701 = vmatpush1.msra.mxu0 0.0
      %702 = vmatprep.subr.mxu0 0.0
      %703 = vmatpush1.msra.mxu0 0.0
      %704 = vmatprep.subr.mxu0 0.0
      %705 = vmatpush1.msra.mxu0 0.0
      %706 = vmatprep.subr.mxu0 0.0
      %707 = vmatpush1.msra.mxu0 0.0
      %708 = vmatprep.subr.mxu0 0.0
      %709 = vmatpush1.msra.mxu0 0.0
      %710 = vmatprep.subr.mxu0 0.0
      %711 = vmatpush1.msra.mxu0 0.0
      %712 = vmatprep.subr.mxu0 0.0
      %713 = vmatpush1.msra.mxu0 0.0
      %714 = vmatprep.subr.mxu0 0.0
      %715 = vmatpush1.msra.mxu0 0.0
      %716 = vmatprep.subr.mxu0 0.0
      %717 = vmatpush1.msra.mxu0 0.0
      %718 = vmatprep.subr.mxu0 0.0
      %719 = vmatpush1.msra.mxu0 0.0
      %720 = vmatprep.subr.mxu0 0.0
      %721 = vmatpush1.msra.mxu0 0.0
      %722 = vmatprep.subr.mxu0 0.0
      %723 = vmatpush1.msra.mxu0 0.0
      %724 = vmatprep.subr.mxu0 0.0
      %725 = vmatpush1.msra.mxu0 0.0
      %726 = vmatprep.subr.mxu0 0.0
      %727 = vmatpush1.msra.mxu0 0.0
      %728 = vmatprep.subr.mxu0 0.0
      %729 = vmatpush1.msra.mxu0 0.0
      %730 = vmatprep.subr.mxu0 0.0
      %731 = vmatpush1.msra.mxu0 0.0
      %732 = vmatprep.subr.mxu0 0.0
      %733 = vmatpush1.msra.mxu0 0.0
      %734 = vmatprep.subr.mxu0 0.0
      %735 = vmatpush1.msra.mxu0 0.0
      %736 = vmatprep.subr.mxu0 0.0
      %737 = vmatpush1.msra.mxu0 0.0
      %738 = vmatprep.subr.mxu0 0.0
      %739 = vmatpush1.msra.mxu0 0.0
      %740 = vmatprep.subr.mxu0 0.0
      %741 = vmatpush1.msra.mxu0 0.0
      %742 = vmatprep.subr.mxu0 0.0
      %743 = vmatpush1.msra.mxu0 0.0
      %744 = vmatprep.subr.mxu0 0.0
      %745 = vmatpush1.msra.mxu0 0.0
      %746 = vmatprep.subr.mxu0 0.0
      %747 = vmatpush1.msra.mxu0 0.0
      %748 = vmatprep.subr.mxu0 0.0
      %749 = vmatpush1.msra.mxu0 0.0
      %750 = vmatprep.subr.mxu0 0.0
      %751 = vmatpush1.msra.mxu0 0.0
      %752 = vmatprep.subr.mxu0 0.0
      %753 = vmatpush1.msra.mxu0 0.0
      %754 = vmatprep.subr.mxu0 0.0
      %755 = vmatpush1.msra.mxu0 0.0
      %756 = vmatprep.subr.mxu0 0.0
      %757 = vmatpush1.msra.mxu0 0.0
      %758 = vmatprep.mubr.f32.mxu0 0.0
      %759 = vmatmul.mubr.f32.gmra.mrb[0].mxu0 %v671
      %v760 = vpop.f32.mrb[0].mxu0
      %v761 = vadd.f32 0.0, %v760
      %v762 = vpop.f32.mrb[0].mxu0
      %763 = vmatprep.mubr.f32.mxu0 0.0
      %764 = vmatmul.mubr.f32.gmra.mrb[0].mxu0 %v674
      %v765 = vpop.f32.mrb[0].mxu0
      %v766 = vadd.f32 0.0, %v765
      %v767 = vpop.f32.mrb[0].mxu0
      %768 = vmatprep.mubr.f32.mxu0 0.0
      %769 = vmatmul.mubr.f32.gmra.mrb[0].mxu0 %v677
      %v770 = vpop.f32.mrb[0].mxu0
      %v771 = vadd.f32 0.0, %v770
      %v772 = vpop.f32.mrb[0].mxu0
      %773 = vmatprep.mubr.f32.mxu0 0.0
      %774 = vmatmul.mubr.f32.gmra.mrb[0].mxu0 %v680
      %v775 = vpop.f32.mrb[0].mxu0
      %v776 = vadd.f32 0.0, %v775
      %v777 = vpop.f32.mrb[0].mxu0
      %778 = vmatprep.mubr.f32.mxu0 0.0
      %779 = vmatmul.mubr.f32.gmra.mrb[0].mxu0 %v683
      %v780 = vpop.f32.mrb[0].mxu0
      %v781 = vadd.f32 0.0, %v780
      %v782 = vpop.f32.mrb[0].mxu0
      %783 = vmatprep.mubr.f32.mxu0 0.0
      %784 = vmatmul.mubr.f32.gmra.mrb[0].mxu0 %v686
      %v785 = vpop.f32.mrb[0].mxu0
      %v786 = vadd.f32 0.0, %v785
      %v787 = vpop.f32.mrb[0].mxu0
      %788 = vmatprep.mubr.f32.mxu0 0.0
      %789 = vmatmul.mubr.f32.gmra.mrb[0].mxu0 %v689
      %v790 = vpop.f32.mrb[0].mxu0
      %v791 = vadd.f32 0.0, %v790
      %v792 = vpop.f32.mrb[0].mxu0
      %793 = vmatprep.mubr.f32.mxu0 0.0
      %794 = vmatmul.mubr.f32.gmra.mrb[0].mxu0 %v692
      %v795 = vpop.f32.mrb[0].mxu0
      %v796 = vadd.f32 0.0, %v795
      %v797 = vpop.f32.mrb[0].mxu0
      %798 = vdwg.mxu0
      %vm799 = vcmask 523264
      %800 = vst.msk [vmem:[%s434] sm:$0xff] %vm799, %v761
      %801 = vst.msk [vmem:[%s434 + $0x8] sm:$0xff] %vm799, %v766
      %802 = vst.msk [vmem:[%s434 + $0x10] sm:$0xff] %vm799, %v771
      %803 = vst.msk [vmem:[%s434 + $0x18] sm:$0xff] %vm799, %v776
      %804 = vst.msk [vmem:[%s434 + $0x20] sm:$0xff] %vm799, %v781
      %805 = vst.msk [vmem:[%s434 + $0x28] sm:$0xff] %vm799, %v786
      %806 = vst.msk [vmem:[%s434 + $0x30] sm:$0xff] %vm799, %v791
      %807 = vst.msk [vmem:[%s434 + $0x38] sm:$0xff] %vm799, %v796
      %s808 = smul.u32 8, %s25
      %p809 = scmp.lt.s32.totalorder %s23, 1
      %s810 = scalar_select %p809, %s23, 1
      %p811 = scmp.lt.s32.totalorder %s24, 3
      %s812 = scalar_select %p811, %s24, 3
      %p813 = scmp.lt.s32.totalorder %s808, 7
      %s814 = scalar_select %p813, %s808, 7
      %p815 = scmp.lt.s32.totalorder %s26, 0
      %s816 = scalar_select %p815, %s26, 0
      %s817 = sadd.s32 %s816, %s814
      %s818 = smul.addr %s812, 8
      %s819 = sadd.s32 %s817, %s818
      %s820 = smul.addr %s810, 32
      %s821 = sadd.s32 %s819, %s820
      %s822 = smul.addr %s821, 8
      %s823 = scalar_lea.vmem %s6, %s822
      // Predicated region
      $region45: #{_hitnet_forward_impl.18} parent=43 // pred_check
        %p824 = pneg %p229
      $region46: #{_hitnet_forward_impl.18} parent=43 // pred_check_branch
        %826 = sbr.rel (%p824) target = $region48
      $region47: #{_hitnet_forward_impl.18} parent=43 // pred_region
        %s827 = smul.u32 8, %s25
      $region48: #{_hitnet_forward_impl.18} parent=43 // pred_fallthru
        _
    $region44: #{_hitnet_forward_impl.18} parent=5 // pred_fallthru
      _
    %p828 = scmp.le.s32.totalorder 2, %s12
    // Predicated region
    $region49: #{_hitnet_forward_impl.18} parent=5 // pred_check
      %p829 = pneg %p828
    $region50: #{_hitnet_forward_impl.18} parent=5 // pred_check_branch
      %831 = sbr.rel (%p829) target = $region52
    $region51: #{_hitnet_forward_impl.18} parent=5 // pred_region
      %s832 = ssub.s32 %s12, 2
      // Predicated region
      $region53: #{_hitnet_forward_impl.18} parent=51 // pred_check
        %p833 = pneg %p235
      $region54: #{_hitnet_forward_impl.18} parent=51 // pred_check_branch
        %835 = sbr.rel (%p833) target = $region56
      $region55: #{_hitnet_forward_impl.18} parent=51 // pred_region
        %s836 = smul.u32 8, %s29
        %p837 = scmp.lt.s32.totalorder %s27, 1
        %s838 = scalar_select %p837, %s27, 1
        %p839 = scmp.lt.s32.totalorder %s28, 3
        %s840 = scalar_select %p839, %s28, 3
        %p841 = scmp.lt.s32.totalorder %s836, 7
        %s842 = scalar_select %p841, %s836, 7
        %p843 = scmp.lt.s32.totalorder %s30, 0
        %s844 = scalar_select %p843, %s30, 0
        %s845 = sadd.s32 %s844, %s842
        %s846 = smul.addr %s840, 8
        %s847 = sadd.s32 %s845, %s846
        %s848 = smul.addr %s838, 32
        %s849 = sadd.s32 %s847, %s848
        %s850 = smul.addr %s849, 8
        %s851 = scalar_lea.vmem %s6, %s850
      $region56: #{_hitnet_forward_impl.18} parent=51 // pred_fallthru
        _
    $region52: #{_hitnet_forward_impl.18} parent=5 // pred_fallthru
      _
  $region6: #{_hitnet_forward_impl.18} parent=0 // loop_footer
    %s16 = sadd.s32 1, %s12
  $region7: #{_hitnet_forward_impl.18} parent=0 // loop_footer_branch
    %11 = sbr.rel target = $region3
  $region8: #{_hitnet_forward_impl.18} parent=0 // loop_exit
    _

// kernel: _hitnet_forward_impl.16
$region0: #{_hitnet_forward_impl.16}
  #allocation0 [shape = 'u32[]', space=smem, size = 0x4, offset = 0x4, fixed_abs, tag = 'smem constant byte address 0x4 - core index']
  #allocation1 [shape = 'u32[144,128]{1,0:T(1,128)}', space=vmem, size = 0x12000, scoped, tag = 'internal scratch']
  %s0 = inlined_call_operand.vmem [shape: f32[2,4,4,4], index: 0, kind: input, shape index: {}]
  %s1 = inlined_call_operand.vmem [shape: f32[2,4,4,4], index: 1, kind: input, shape index: {}]
  %s2 = inlined_call_operand.vmem [shape: f32[2,4,4,4], index: 2, kind: input, shape index: {}]
  %s3 = inlined_call_operand.vmem [shape: f32[4,64], index: 3, kind: input, shape index: {}]
  %s4 = inlined_call_operand.vmem [shape: f32[4,64], index: 4, kind: input, shape index: {}]
  %s5 = inlined_call_operand.vmem [shape: f32[64,8], index: 5, kind: input, shape index: {}]
  %s6 = inlined_call_operand.vmem [shape: f32[2,4,64,64], index: 6, kind: output, shape index: {}]
  %s7 = sld [smem:[#allocation0]]
  $region57: #{_hitnet_forward_impl.16} parent=0
    _
  %s9 = ssub.s32 1, %s7
  %s10 = scalar_select 0, %s9, %s7
  loop: start=0, step=1, limit=10
  $region2: #{_hitnet_forward_impl.16} parent=0 // loop_pre_header
    _
  $region3: #{_hitnet_forward_impl.16} parent=0 // loop_header
    %s12 = sphi 0, %s16
    %p13 = scmp.ge.s32.totalorder %s12, 10
    %s19 = sphi 0, %s45
    %s20 = sphi 0, %s41
    %s21 = sphi 0, %s37
    %s22 = sphi 0, %s33
    %s23 = sphi 0, %s19
    %s24 = sphi 0, %s20
    %s25 = sphi 0, %s21
    %s26 = sphi 0, %s22
    %s27 = sphi 0, %s23
    %s28 = sphi 0, %s24
    %s29 = sphi 0, %s25
    %s30 = sphi 0, %s26
    %s50 = sphi 0, %s52
    %s53 = sphi 0, %s50
    %s54 = sphi 0, %s53
    %s70 = sphi 0, %s54
    %s78 = sphi 0, %s80
    %s81 = sphi 0, %s78
    %s82 = sphi 0, %s81
    %s98 = sphi 0, %s82
    %s106 = sphi 0, %s108
    %s109 = sphi 0, %s106
    %s110 = sphi 0, %s109
    %s126 = sphi 0, %s110
    %s132 = sphi 0, %s134
    %s135 = sphi 0, %s132
    %s136 = sphi 0, %s135
    %s152 = sphi 0, %s136
    %s158 = sphi 0, %s160
    %s161 = sphi 0, %s158
    %s162 = sphi 0, %s161
    %s178 = sphi 0, %s162
    %s184 = sphi 0, %s186
    %s187 = sphi 0, %s184
    %s188 = sphi 0, %s187
    %s204 = sphi 0, %s188
    %s216 = sphi 0, %s218
    %s219 = sphi 0, %s216
    %s220 = sphi 0, %s219
    %s236 = sphi 0, %s220
  $region4: #{_hitnet_forward_impl.16} parent=0 // loop_header_branch
    %15 = sbr.rel (%p13) target = $region8
  $region5: #{_hitnet_forward_impl.16} parent=0 // loop_body
    %s17 = ssub.s32 %s12, 1
    %s18 = ssub.s32 %s12, 2
    %s31 = sadd.s32 1, %s22
    %p32 = scmp.ge.s32.totalorder %s31, 1
    %s33 = scalar_select %p32, 0, %s31
    %s34 = sadd.s32 1, %s21
    %s35 = scalar_select %p32, %s34, %s21
    %p36 = scmp.ge.s32.totalorder %s35, 1
    %s37 = scalar_select %p36, 0, %s35
    %s38 = sadd.s32 1, %s20
    %s39 = scalar_select %p36, %s38, %s20
    %p40 = scmp.ge.s32.totalorder %s39, 4
    %s41 = scalar_select %p40, 0, %s39
    %s42 = sadd.s32 1, %s19
    %s43 = scalar_select %p40, %s42, %s19
    %p44 = scmp.ge.s32.totalorder %s43, 2
    %s45 = scalar_select %p44, 0, %s43
    %s46 = ssub.s32 %s19, %s45
    %s47 = ssub.s32 %s20, %s41
    %s48 = sor.u32 %s46, %s47
    %p49 = scmp.eq.s32.totalorder %s48, 0
    %s51 = sadd.s32 %s50, 1
    %s52 = scalar_select %p49, %s50, %s51
    %p55 = pneg %p49
    %p56 = scmp.eq.s32.totalorder %s12, 7
    %p57 = por %p55, %p56
    %p58 = scmp.ne.s32.totalorder %s50, %s53
    %p59 = scmp.eq.s32.totalorder %s12, 0
    %p60 = por %p58, %p59
    %p61 = scmp.ne.s32.totalorder %s50, %s53
    %p62 = scmp.eq.s32.totalorder %s17, 7
    %p63 = por %p61, %p62
    %p64 = scmp.ne.s32.totalorder %s53, %s54
    %p65 = scmp.eq.s32.totalorder %s17, 0
    %p66 = por %p64, %p65
    %p67 = scmp.ne.s32.totalorder %s53, %s54
    %p68 = scmp.eq.s32.totalorder %s18, 7
    %p69 = por %p67, %p68
    %p71 = scmp.ne.s32.totalorder %s54, %s70
    %p72 = scmp.eq.s32.totalorder %s18, 0
    %p73 = por %p71, %p72
    %s74 = ssub.s32 %s19, %s45
    %s75 = ssub.s32 %s20, %s41
    %s76 = sor.u32 %s74, %s75
    %p77 = scmp.eq.s32.totalorder %s76, 0
    %s79 = sadd.s32 %s78, 1
    %s80 = scalar_select %p77, %s78, %s79
    %p83 = pneg %p77
    %p84 = scmp.eq.s32.totalorder %s12, 7
    %p85 = por %p83, %p84
    %p86 = scmp.ne.s32.totalorder %s78, %s81
    %p87 = scmp.eq.s32.totalorder %s12, 0
    %p88 = por %p86, %p87
    %p89 = scmp.ne.s32.totalorder %s78, %s81
    %p90 = scmp.eq.s32.totalorder %s17, 7
    %p91 = por %p89, %p90
    %p92 = scmp.ne.s32.totalorder %s81, %s82
    %p93 = scmp.eq.s32.totalorder %s17, 0
    %p94 = por %p92, %p93
    %p95 = scmp.ne.s32.totalorder %s81, %s82
    %p96 = scmp.eq.s32.totalorder %s18, 7
    %p97 = por %p95, %p96
    %p99 = scmp.ne.s32.totalorder %s82, %s98
    %p100 = scmp.eq.s32.totalorder %s18, 0
    %p101 = por %p99, %p100
    %s102 = ssub.s32 %s19, %s45
    %s103 = ssub.s32 %s20, %s41
    %s104 = sor.u32 %s102, %s103
    %p105 = scmp.eq.s32.totalorder %s104, 0
    %s107 = sadd.s32 %s106, 1
    %s108 = scalar_select %p105, %s106, %s107
    %p111 = pneg %p105
    %p112 = scmp.eq.s32.totalorder %s12, 7
    %p113 = por %p111, %p112
    %p114 = scmp.ne.s32.totalorder %s106, %s109
    %p115 = scmp.eq.s32.totalorder %s12, 0
    %p116 = por %p114, %p115
    %p117 = scmp.ne.s32.totalorder %s106, %s109
    %p118 = scmp.eq.s32.totalorder %s17, 7
    %p119 = por %p117, %p118
    %p120 = scmp.ne.s32.totalorder %s109, %s110
    %p121 = scmp.eq.s32.totalorder %s17, 0
    %p122 = por %p120, %p121
    %p123 = scmp.ne.s32.totalorder %s109, %s110
    %p124 = scmp.eq.s32.totalorder %s18, 7
    %p125 = por %p123, %p124
    %p127 = scmp.ne.s32.totalorder %s110, %s126
    %p128 = scmp.eq.s32.totalorder %s18, 0
    %p129 = por %p127, %p128
    %s130 = ssub.s32 %s22, %s33
    %p131 = scmp.eq.s32.totalorder %s130, 0
    %s133 = sadd.s32 %s132, 1
    %s134 = scalar_select %p131, %s132, %s133
    %p137 = pneg %p131
    %p138 = scmp.eq.s32.totalorder %s12, 7
    %p139 = por %p137, %p138
    %p140 = scmp.ne.s32.totalorder %s132, %s135
    %p141 = scmp.eq.s32.totalorder %s12, 0
    %p142 = por %p140, %p141
    %p143 = scmp.ne.s32.totalorder %s132, %s135
    %p144 = scmp.eq.s32.totalorder %s17, 7
    %p145 = por %p143, %p144
    %p146 = scmp.ne.s32.totalorder %s135, %s136
    %p147 = scmp.eq.s32.totalorder %s17, 0
    %p148 = por %p146, %p147
    %p149 = scmp.ne.s32.totalorder %s135, %s136
    %p150 = scmp.eq.s32.totalorder %s18, 7
    %p151 = por %p149, %p150
    %p153 = scmp.ne.s32.totalorder %s136, %s152
    %p154 = scmp.eq.s32.totalorder %s18, 0
    %p155 = por %p153, %p154
    %s156 = ssub.s32 %s22, %s33
    %p157 = scmp.eq.s32.totalorder %s156, 0
    %s159 = sadd.s32 %s158, 1
    %s160 = scalar_select %p157, %s158, %s159
    %p163 = pneg %p157
    %p164 = scmp.eq.s32.totalorder %s12, 7
    %p165 = por %p163, %p164
    %p166 = scmp.ne.s32.totalorder %s158, %s161
    %p167 = scmp.eq.s32.totalorder %s12, 0
    %p168 = por %p166, %p167
    %p169 = scmp.ne.s32.totalorder %s158, %s161
    %p170 = scmp.eq.s32.totalorder %s17, 7
    %p171 = por %p169, %p170
    %p172 = scmp.ne.s32.totalorder %s161, %s162
    %p173 = scmp.eq.s32.totalorder %s17, 0
    %p174 = por %p172, %p173
    %p175 = scmp.ne.s32.totalorder %s161, %s162
    %p176 = scmp.eq.s32.totalorder %s18, 7
    %p177 = por %p175, %p176
    %p179 = scmp.ne.s32.totalorder %s162, %s178
    %p180 = scmp.eq.s32.totalorder %s18, 0
    %p181 = por %p179, %p180
    %s182 = ssub.s32 %s21, %s37
    %p183 = scmp.eq.s32.totalorder %s182, 0
    %s185 = sadd.s32 %s184, 1
    %s186 = scalar_select %p183, %s184, %s185
    %p189 = pneg %p183
    %p190 = scmp.eq.s32.totalorder %s12, 7
    %p191 = por %p189, %p190
    %p192 = scmp.ne.s32.totalorder %s184, %s187
    %p193 = scmp.eq.s32.totalorder %s12, 0
    %p194 = por %p192, %p193
    %p195 = scmp.ne.s32.totalorder %s184, %s187
    %p196 = scmp.eq.s32.totalorder %s17, 7
    %p197 = por %p195, %p196
    %p198 = scmp.ne.s32.totalorder %s187, %s188
    %p199 = scmp.eq.s32.totalorder %s17, 0
    %p200 = por %p198, %p199
    %p201 = scmp.ne.s32.totalorder %s187, %s188
    %p202 = scmp.eq.s32.totalorder %s18, 7
    %p203 = por %p201, %p202
    %p205 = scmp.ne.s32.totalorder %s188, %s204
    %p206 = scmp.eq.s32.totalorder %s18, 0
    %p207 = por %p205, %p206
    %s208 = ssub.s32 %s19, %s45
    %s209 = ssub.s32 %s20, %s41
    %s210 = sor.u32 %s208, %s209
    %s211 = ssub.s32 %s21, %s37
    %s212 = sor.u32 %s210, %s211
    %s213 = ssub.s32 %s22, %s33
    %s214 = sor.u32 %s212, %s213
    %p215 = scmp.eq.s32.totalorder %s214, 0
    %s217 = sadd.s32 %s216, 1
    %s218 = scalar_select %p215, %s216, %s217
    %p221 = pneg %p215
    %p222 = scmp.eq.s32.totalorder %s12, 7
    %p223 = por %p221, %p222
    %p224 = scmp.ne.s32.totalorder %s216, %s219
    %p225 = scmp.eq.s32.totalorder %s12, 0
    %p226 = por %p224, %p225
    %p227 = scmp.ne.s32.totalorder %s216, %s219
    %p228 = scmp.eq.s32.totalorder %s17, 7
    %p229 = por %p227, %p228
    %p230 = scmp.ne.s32.totalorder %s219, %s220
    %p231 = scmp.eq.s32.totalorder %s17, 0
    %p232 = por %p230, %p231
    %p233 = scmp.ne.s32.totalorder %s219, %s220
    %p234 = scmp.eq.s32.totalorder %s18, 7
    %p235 = por %p233, %p234
    %p237 = scmp.ne.s32.totalorder %s220, %s236
    %p238 = scmp.eq.s32.totalorder %s18, 0
    %p239 = por %p237, %p238
    %p240 = scmp.le.s32.totalorder 1, %s12
    %p241 = scmp.lt.s32.totalorder %s12, 9
    %p242 = pnand %p240, %p241
    %p243 = pneg %p242
    // Predicated region
    $region9: #{_hitnet_forward_impl.16} parent=5 // pred_check
      _
    $region10: #{_hitnet_forward_impl.16} parent=5 // pred_check_branch
      %245 = sbr.rel (%p242) target = $region12
    $region11: #{_hitnet_forward_impl.16} parent=5 // pred_region
      %s246 = ssub.s32 %s12, 1
      // Predicated region
      $region13: #{_hitnet_forward_impl.16} parent=11 // pred_check
        %p247 = pneg %p148
      $region14: #{_hitnet_forward_impl.16} parent=11 // pred_check_branch
        %249 = sbr.rel (%p247) target = $region16
      $region15: #{_hitnet_forward_impl.16} parent=11 // pred_region
        %p250 = scmp.lt.s32.totalorder %s26, 0
        %s251 = scalar_select %p250, %s26, 0
        %s252 = smul.addr %s251, 4
        %s253 = scalar_lea.vmem %s3, %s252
      $region16: #{_hitnet_forward_impl.16} parent=11 // pred_fallthru
        _
      // Predicated region
      $region17: #{_hitnet_forward_impl.16} parent=11 // pred_check
        %p254 = pneg %p174
      $region18: #{_hitnet_forward_impl.16} parent=11 // pred_check_branch
        %256 = sbr.rel (%p254) target = $region20
      $region19: #{_hitnet_forward_impl.16} parent=11 // pred_region
        %p257 = scmp.lt.s32.totalorder %s26, 0
        %s258 = scalar_select %p257, %s26, 0
        %s259 = smul.addr %s258, 4
        %s260 = scalar_lea.vmem %s4, %s259
      $region20: #{_hitnet_forward_impl.16} parent=11 // pred_fallthru
        _
      // Predicated region
      $region21: #{_hitnet_forward_impl.16} parent=11 // pred_check
        %p261 = pneg %p200
      $region22: #{_hitnet_forward_impl.16} parent=11 // pred_check_branch
        %263 = sbr.rel (%p261) target = $region24
      $region23: #{_hitnet_forward_impl.16} parent=11 // pred_region
        %s264 = smul.u32 8, %s25
        %p265 = scmp.lt.s32.totalorder %s264, 7
        %s266 = scalar_select %p265, %s264, 7
        %s267 = smul.addr %s266, 8
        %s268 = scalar_lea.vmem %s5, %s267
        %s269 = smul.u32 8, %s25
      $region24: #{_hitnet_forward_impl.16} parent=11 // pred_fallthru
        _
    $region12: #{_hitnet_forward_impl.16} parent=5 // pred_fallthru
      _
    %p270 = scmp.lt.s32.totalorder %s12, 8
    // Predicated region
    $region25: #{_hitnet_forward_impl.16} parent=5 // pred_check
      %p271 = pneg %p270
    $region26: #{_hitnet_forward_impl.16} parent=5 // pred_check_branch
      %273 = sbr.rel (%p271) target = $region28
    $region27: #{_hitnet_forward_impl.16} parent=5 // pred_region
      // Predicated region
      $region29: #{_hitnet_forward_impl.16} parent=27 // pred_check
        %p274 = pneg %p60
      $region30: #{_hitnet_forward_impl.16} parent=27 // pred_check_branch
        %276 = sbr.rel (%p274) target = $region32
      $region31: #{_hitnet_forward_impl.16} parent=27 // pred_region
        %p277 = scmp.lt.s32.totalorder %s19, 1
        %s278 = scalar_select %p277, %s19, 1
        %p279 = scmp.lt.s32.totalorder %s20, 3
        %s280 = scalar_select %p279, %s20, 3
        %s281 = smul.addr %s278, 4
        %s282 = sadd.s32 %s280, %s281
        %s283 = smul.addr %s282, 4
        %s284 = scalar_lea.vmem %s0, %s283
      $region32: #{_hitnet_forward_impl.16} parent=27 // pred_fallthru
        _
      // Predicated region
      $region33: #{_hitnet_forward_impl.16} parent=27 // pred_check
        %p285 = pneg %p88
      $region34: #{_hitnet_forward_impl.16} parent=27 // pred_check_branch
        %287 = sbr.rel (%p285) target = $region36
      $region35: #{_hitnet_forward_impl.16} parent=27 // pred_region
        %p288 = scmp.lt.s32.totalorder %s19, 1
        %s289 = scalar_select %p288, %s19, 1
        %p290 = scmp.lt.s32.totalorder %s20, 3
        %s291 = scalar_select %p290, %s20, 3
        %s292 = smul.addr %s289, 4
        %s293 = sadd.s32 %s291, %s292
        %s294 = smul.addr %s293, 4
        %s295 = scalar_lea.vmem %s1, %s294
      $region36: #{_hitnet_forward_impl.16} parent=27 // pred_fallthru
        _
      // Predicated region
      $region37: #{_hitnet_forward_impl.16} parent=27 // pred_check
        %p296 = pneg %p116
      $region38: #{_hitnet_forward_impl.16} parent=27 // pred_check_branch
        %298 = sbr.rel (%p296) target = $region40
      $region39: #{_hitnet_forward_impl.16} parent=27 // pred_region
        %p299 = scmp.lt.s32.totalorder %s19, 1
        %s300 = scalar_select %p299, %s19, 1
        %p301 = scmp.lt.s32.totalorder %s20, 3
        %s302 = scalar_select %p301, %s20, 3
        %s303 = smul.addr %s300, 4
        %s304 = sadd.s32 %s302, %s303
        %s305 = smul.addr %s304, 4
        %s306 = scalar_lea.vmem %s2, %s305
      $region40: #{_hitnet_forward_impl.16} parent=27 // pred_fallthru
        _
    $region28: #{_hitnet_forward_impl.16} parent=5 // pred_fallthru
      _
    %p307 = scmp.le.s32.totalorder 1, %s12
    %p308 = scmp.lt.s32.totalorder %s12, 9
    %p309 = pnand %p307, %p308
    %p310 = pneg %p309
    // Predicated region
    $region41: #{_hitnet_forward_impl.16} parent=5 // pred_check
      _
    $region42: #{_hitnet_forward_impl.16} parent=5 // pred_check_branch
      %312 = sbr.rel (%p309) target = $region44
    $region43: #{_hitnet_forward_impl.16} parent=5 // pred_region
      %s313 = ssub.s32 %s12, 1
      %p314 = scmp.lt.s32.totalorder %s23, 1
      %s315 = scalar_select %p314, %s23, 1
      %p316 = scmp.lt.s32.totalorder %s24, 3
      %s317 = scalar_select %p316, %s24, 3
      %s318 = smul.addr %s315, 4
      %s319 = sadd.s32 %s317, %s318
      %s320 = smul.addr %s319, 4
      %s321 = scalar_lea.vmem %s0, %s320
      %p322 = pneg %p66
      %p323 = pneg %p63
      %p324 = scmp.lt.s32.totalorder %s23, 1
      %s325 = scalar_select %p324, %s23, 1
      %p326 = scmp.lt.s32.totalorder %s24, 3
      %s327 = scalar_select %p326, %s24, 3
      %s328 = smul.addr %s325, 4
      %s329 = sadd.s32 %s327, %s328
      %s330 = smul.addr %s329, 4
      %s331 = scalar_lea.vmem %s1, %s330
      %p332 = pneg %p94
      %p333 = pneg %p91
      %p334 = scmp.lt.s32.totalorder %s23, 1
      %s335 = scalar_select %p334, %s23, 1
      %p336 = scmp.lt.s32.totalorder %s24, 3
      %s337 = scalar_select %p336, %s24, 3
      %s338 = smul.addr %s335, 4
      %s339 = sadd.s32 %s337, %s338
      %s340 = smul.addr %s339, 4
      %s341 = scalar_lea.vmem %s2, %s340
      %p342 = pneg %p122
      %p343 = pneg %p119
      %p344 = scmp.lt.s32.totalorder %s26, 0
      %s345 = scalar_select %p344, %s26, 0
      %s346 = smul.addr %s345, 4
      %s347 = scalar_lea.vmem %s3, %s346
      %p348 = pneg %p148
      %p349 = pneg %p145
      %p350 = scmp.lt.s32.totalorder %s26, 0
      %s351 = scalar_select %p350, %s26, 0
      %s352 = smul.addr %s351, 4
      %s353 = scalar_lea.vmem %s4, %s352
      %p354 = pneg %p174
      %p355 = pneg %p171
      %s356 = smul.u32 8, %s25
      %p357 = scmp.lt.s32.totalorder %s356, 7
      %s358 = scalar_select %p357, %s356, 7
      %s359 = smul.addr %s358, 8
      %s360 = scalar_lea.vmem %s5, %s359
      %p361 = pneg %p200
      %p362 = pneg %p197
      %p363 = pneg %p232
      %p364 = pneg %p229
      %s365 = smul.u32 8, %s25
      %p366 = scmp.lt.s32.totalorder %s23, 1
      %s367 = scalar_select %p366, %s23, 1
      %p368 = scmp.lt.s32.totalorder %s24, 3
      %s369 = scalar_select %p368, %s24, 3
      %p370 = scmp.lt.s32.totalorder %s365, 7
      %s371 = scalar_select %p370, %s365, 7
      %p372 = scmp.lt.s32.totalorder %s26, 0
      %s373 = scalar_select %p372, %s26, 0
      %s374 = sadd.s32 %s373, %s371
      %s375 = smul.addr %s369, 8
      %s376 = sadd.s32 %s374, %s375
      %s377 = smul.addr %s367, 32
      %s378 = sadd.s32 %s376, %s377
      %s379 = smul.addr %s378, 8
      %s380 = scalar_lea.vmem %s6, %s379
      %p381 = scmp.lt.s32.totalorder %s23, 1
      %s382 = scalar_select %p381, %s23, 1
      %p383 = scmp.lt.s32.totalorder %s24, 3
      %s384 = scalar_select %p383, %s24, 3
      %s385 = smul.addr %s382, 4
      %s386 = sadd.s32 %s384, %s385
      %s387 = smul.addr %s386, 4
      %s388 = scalar_lea.vmem %s0, %s387
      %p389 = scmp.lt.s32.totalorder %s23, 1
      %s390 = scalar_select %p389, %s23, 1
      %p391 = scmp.lt.s32.totalorder %s24, 3
      %s392 = scalar_select %p391, %s24, 3
      %s393 = smul.addr %s390, 4
      %s394 = sadd.s32 %s392, %s393
      %s395 = smul.addr %s394, 4
      %s396 = scalar_lea.vmem %s1, %s395
      %p397 = scmp.lt.s32.totalorder %s23, 1
      %s398 = scalar_select %p397, %s23, 1
      %p399 = scmp.lt.s32.totalorder %s24, 3
      %s400 = scalar_select %p399, %s24, 3
      %s401 = smul.addr %s398, 4
      %s402 = sadd.s32 %s400, %s401
      %s403 = smul.addr %s402, 4
      %s404 = scalar_lea.vmem %s2, %s403
      %p405 = scmp.lt.s32.totalorder %s26, 0
      %s406 = scalar_select %p405, %s26, 0
      %s407 = smul.addr %s406, 4
      %s408 = scalar_lea.vmem %s3, %s407
      %p409 = scmp.lt.s32.totalorder %s26, 0
      %s410 = scalar_select %p409, %s26, 0
      %s411 = smul.addr %s410, 4
      %s412 = scalar_lea.vmem %s4, %s411
      %s413 = smul.u32 8, %s25
      %p414 = scmp.lt.s32.totalorder %s413, 7
      %s415 = scalar_select %p414, %s413, 7
      %s416 = smul.addr %s415, 8
      %s417 = scalar_lea.vmem %s5, %s416
      %s418 = smul.u32 8, %s25
      %s419 = smul.u32 8, %s25
      %p420 = scmp.lt.s32.totalorder %s23, 1
      %s421 = scalar_select %p420, %s23, 1
      %p422 = scmp.lt.s32.totalorder %s24, 3
      %s423 = scalar_select %p422, %s24, 3
      %p424 = scmp.lt.s32.totalorder %s419, 7
      %s425 = scalar_select %p424, %s419, 7
      %p426 = scmp.lt.s32.totalorder %s26, 0
      %s427 = scalar_select %p426, %s26, 0
      %s428 = sadd.s32 %s427, %s425
      %s429 = smul.addr %s423, 8
      %s430 = sadd.s32 %s428, %s429
      %s431 = smul.addr %s421, 32
      %s432 = sadd.s32 %s430, %s431
      %s433 = smul.addr %s432, 8
      %s434 = scalar_lea.vmem %s6, %s433
      %s435 = smul.u32 8, %s25
      %v436 = vld [vmem:[%s408] sm:$0xf]
      %v437 = vld [vmem:[%s388] sm:$0xf]
      %v438 = vld [vmem:[%s396] sm:$0xf]
      %v439 = vld [vmem:[%s412] sm:$0xf]
      %vm440 = vcmask 31744
      %v442 = vsel %vm440, %v438, 0
      %vm444 = vcmask 1043456
      %v446 = vsel %vm444, %v439, 0
      %448 = vmatprep.subr.mxu0 0.0
      %449 = vmatpush1.msra.mxu0 %v446
      %450 = vmatprep.subr.mxu0 0.0
      %451 = vmatpush1.msra.mxu0 0.0
      %452 = vmatprep.subr.mxu0 0.0
      %453 = vmatpush1.msra.mxu0 0.0
      %454 = vmatprep.subr.mxu0 0.0
      %455 = vmatpush1.msra.mxu0 0.0
      %456 = vmatprep.subr.mxu0 0.0
      %457 = vmatpush1.msra.mxu0 0.0
      %458 = vmatprep.subr.mxu0 0.0
      %459 = vmatpush1.msra.mxu0 0.0
      %460 = vmatprep.subr.mxu0 0.0
      %461 = vmatpush1.msra.mxu0 0.0
      %462 = vmatprep.subr.mxu0 0.0
      %463 = vmatpush1.msra.mxu0 0.0
      %464 = vmatprep.subr.mxu0 0.0
      %465 = vmatpush1.msra.mxu0 0.0
      %466 = vmatprep.subr.mxu0 0.0
      %467 = vmatpush1.msra.mxu0 0.0
      %468 = vmatprep.subr.mxu0 0.0
      %469 = vmatpush1.msra.mxu0 0.0
      %470 = vmatprep.subr.mxu0 0.0
      %471 = vmatpush1.msra.mxu0 0.0
      %472 = vmatprep.subr.mxu0 0.0
      %473 = vmatpush1.msra.mxu0 0.0
      %474 = vmatprep.subr.mxu0 0.0
      %475 = vmatpush1.msra.mxu0 0.0
      %476 = vmatprep.subr.mxu0 0.0
      %477 = vmatpush1.msra.mxu0 0.0
      %478 = vmatprep.subr.mxu0 0.0
      %479 = vmatpush1.msra.mxu0 0.0
      %480 = vmatprep.subr.mxu0 0.0
      %481 = vmatpush1.msra.mxu0 0.0
      %482 = vmatprep.subr.mxu0 0.0
      %483 = vmatpush1.msra.mxu0 0.0
      %484 = vmatprep.subr.mxu0 0.0
      %485 = vmatpush1.msra.mxu0 0.0
      %486 = vmatprep.subr.mxu0 0.0
      %487 = vmatpush1.msra.mxu0 0.0
      %488 = vmatprep.subr.mxu0 0.0
      %489 = vmatpush1.msra.mxu0 0.0
      %490 = vmatprep.subr.mxu0 0.0
      %491 = vmatpush1.msra.mxu0 0.0
      %492 = vmatprep.subr.mxu0 0.0
      %493 = vmatpush1.msra.mxu0 0.0
      %494 = vmatprep.subr.mxu0 0.0
      %495 = vmatpush1.msra.mxu0 0.0
      %496 = vmatprep.subr.mxu0 0.0
      %497 = vmatpush1.msra.mxu0 0.0
      %498 = vmatprep.subr.mxu0 0.0
      %499 = vmatpush1.msra.mxu0 0.0
      %500 = vmatprep.subr.mxu0 0.0
      %501 = vmatpush1.msra.mxu0 0.0
      %502 = vmatprep.subr.mxu0 0.0
      %503 = vmatpush1.msra.mxu0 0.0
      %504 = vmatprep.subr.mxu0 0.0
      %505 = vmatpush1.msra.mxu0 0.0
      %506 = vmatprep.subr.mxu0 0.0
      %507 = vmatpush1.msra.mxu0 0.0
      %508 = vmatprep.subr.mxu0 0.0
      %509 = vmatpush1.msra.mxu0 0.0
      %510 = vmatprep.subr.mxu0 0.0
      %511 = vmatpush1.msra.mxu0 0.0
      %512 = vmatprep.mubr.f32.mxu0 0.0
      %513 = vmatmul.mubr.f32.gmra.mrb[0].mxu0 %v442
      %v514 = vpop.f32.mrb[0].mxu0
      %v515 = vadd.f32 0.0, %v514
      %v516 = vpop.f32.mrb[0].mxu0
      %517 = vdwg.mxu0
      %v519 = vsel %vm440, %v437, 0
      %v522 = vsel %vm444, %v436, 0
      %524 = vmatprep.subr.mxu0 0.0
      %525 = vmatpush1.msra.mxu0 %v522
      %526 = vmatprep.subr.mxu0 0.0
      %527 = vmatpush1.msra.mxu0 0.0
      %528 = vmatprep.subr.mxu0 0.0
      %529 = vmatpush1.msra.mxu0 0.0
      %530 = vmatprep.subr.mxu0 0.0
      %531 = vmatpush1.msra.mxu0 0.0
      %532 = vmatprep.subr.mxu0 0.0
      %533 = vmatpush1.msra.mxu0 0.0
      %534 = vmatprep.subr.mxu0 0.0
      %535 = vmatpush1.msra.mxu0 0.0
      %536 = vmatprep.subr.mxu0 0.0
      %537 = vmatpush1.msra.mxu0 0.0
      %538 = vmatprep.subr.mxu0 0.0
      %539 = vmatpush1.msra.mxu0 0.0
      %540 = vmatprep.subr.mxu0 0.0
      %541 = vmatpush1.msra.mxu0 0.0
      %542 = vmatprep.subr.mxu0 0.0
      %543 = vmatpush1.msra.mxu0 0.0
      %544 = vmatprep.subr.mxu0 0.0
      %545 = vmatpush1.msra.mxu0 0.0
      %546 = vmatprep.subr.mxu0 0.0
      %547 = vmatpush1.msra.mxu0 0.0
      %548 = vmatprep.subr.mxu0 0.0
      %549 = vmatpush1.msra.mxu0 0.0
      %550 = vmatprep.subr.mxu0 0.0
      %551 = vmatpush1.msra.mxu0 0.0
      %552 = vmatprep.subr.mxu0 0.0
      %553 = vmatpush1.msra.mxu0 0.0
      %554 = vmatprep.subr.mxu0 0.0
      %555 = vmatpush1.msra.mxu0 0.0
      %556 = vmatprep.subr.mxu0 0.0
      %557 = vmatpush1.msra.mxu0 0.0
      %558 = vmatprep.subr.mxu0 0.0
      %559 = vmatpush1.msra.mxu0 0.0
      %560 = vmatprep.subr.mxu0 0.0
      %561 = vmatpush1.msra.mxu0 0.0
      %562 = vmatprep.subr.mxu0 0.0
      %563 = vmatpush1.msra.mxu0 0.0
      %564 = vmatprep.subr.mxu0 0.0
      %565 = vmatpush1.msra.mxu0 0.0
      %566 = vmatprep.subr.mxu0 0.0
      %567 = vmatpush1.msra.mxu0 0.0
      %568 = vmatprep.subr.mxu0 0.0
      %569 = vmatpush1.msra.mxu0 0.0
      %570 = vmatprep.subr.mxu0 0.0
      %571 = vmatpush1.msra.mxu0 0.0
      %572 = vmatprep.subr.mxu0 0.0
      %573 = vmatpush1.msra.mxu0 0.0
      %574 = vmatprep.subr.mxu0 0.0
      %575 = vmatpush1.msra.mxu0 0.0
      %576 = vmatprep.subr.mxu0 0.0
      %577 = vmatpush1.msra.mxu0 0.0
      %578 = vmatprep.subr.mxu0 0.0
      %579 = vmatpush1.msra.mxu0 0.0
      %580 = vmatprep.subr.mxu0 0.0
      %581 = vmatpush1.msra.mxu0 0.0
      %582 = vmatprep.subr.mxu0 0.0
      %583 = vmatpush1.msra.mxu0 0.0
      %584 = vmatprep.subr.mxu0 0.0
      %585 = vmatpush1.msra.mxu0 0.0
      %586 = vmatprep.subr.mxu0 0.0
      %587 = vmatpush1.msra.mxu0 0.0
      %588 = vmatprep.mubr.f32.mxu0 0.0
      %589 = vmatmul.mubr.f32.gmra.mrb[0].mxu0 %v519
      %v590 = vpop.f32.mrb[0].mxu0
      %v591 = vadd.f32 %v515, %v590
      %v592 = vpop.f32.mrb[0].mxu0
      %593 = vdwg.mxu0
      %v594 = vld [vmem:[%s404] sm:$0xf]
      %v596 = vsel %vm440, %v594, 0
      %598 = vmatprep.subr.mxu0 0.0
      %599 = vmatpush1.msra.mxu0 %v522
      %600 = vmatprep.subr.mxu0 0.0
      %601 = vmatpush1.msra.mxu0 0.0
      %602 = vmatprep.subr.mxu0 0.0
      %603 = vmatpush1.msra.mxu0 0.0
      %604 = vmatprep.subr.mxu0 0.0
      %605 = vmatpush1.msra.mxu0 0.0
      %606 = vmatprep.subr.mxu0 0.0
      %607 = vmatpush1.msra.mxu0 0.0
      %608 = vmatprep.subr.mxu0 0.0
      %609 = vmatpush1.msra.mxu0 0.0
      %610 = vmatprep.subr.mxu0 0.0
      %611 = vmatpush1.msra.mxu0 0.0
      %612 = vmatprep.subr.mxu0 0.0
      %613 = vmatpush1.msra.mxu0 0.0
      %614 = vmatprep.subr.mxu0 0.0
      %615 = vmatpush1.msra.mxu0 0.0
      %616 = vmatprep.subr.mxu0 0.0
      %617 = vmatpush1.msra.mxu0 0.0
      %618 = vmatprep.subr.mxu0 0.0
      %619 = vmatpush1.msra.mxu0 0.0
      %620 = vmatprep.subr.mxu0 0.0
      %621 = vmatpush1.msra.mxu0 0.0
      %622 = vmatprep.subr.mxu0 0.0
      %623 = vmatpush1.msra.mxu0 0.0
      %624 = vmatprep.subr.mxu0 0.0
      %625 = vmatpush1.msra.mxu0 0.0
      %626 = vmatprep.subr.mxu0 0.0
      %627 = vmatpush1.msra.mxu0 0.0
      %628 = vmatprep.subr.mxu0 0.0
      %629 = vmatpush1.msra.mxu0 0.0
      %630 = vmatprep.subr.mxu0 0.0
      %631 = vmatpush1.msra.mxu0 0.0
      %632 = vmatprep.subr.mxu0 0.0
      %633 = vmatpush1.msra.mxu0 0.0
      %634 = vmatprep.subr.mxu0 0.0
      %635 = vmatpush1.msra.mxu0 0.0
      %636 = vmatprep.subr.mxu0 0.0
      %637 = vmatpush1.msra.mxu0 0.0
      %638 = vmatprep.subr.mxu0 0.0
      %639 = vmatpush1.msra.mxu0 0.0
      %640 = vmatprep.subr.mxu0 0.0
      %641 = vmatpush1.msra.mxu0 0.0
      %642 = vmatprep.subr.mxu0 0.0
      %643 = vmatpush1.msra.mxu0 0.0
      %644 = vmatprep.subr.mxu0 0.0
      %645 = vmatpush1.msra.mxu0 0.0
      %646 = vmatprep.subr.mxu0 0.0
      %647 = vmatpush1.msra.mxu0 0.0
      %648 = vmatprep.subr.mxu0 0.0
      %649 = vmatpush1.msra.mxu0 0.0
      %650 = vmatprep.subr.mxu0 0.0
      %651 = vmatpush1.msra.mxu0 0.0
      %652 = vmatprep.subr.mxu0 0.0
      %653 = vmatpush1.msra.mxu0 0.0
      %654 = vmatprep.subr.mxu0 0.0
      %655 = vmatpush1.msra.mxu0 0.0
      %656 = vmatprep.subr.mxu0 0.0
      %657 = vmatpush1.msra.mxu0 0.0
      %658 = vmatprep.subr.mxu0 0.0
      %659 = vmatpush1.msra.mxu0 0.0
      %660 = vmatprep.subr.mxu0 0.0
      %661 = vmatpush1.msra.mxu0 0.0
      %662 = vmatprep.mubr.f32.mxu0 0.0
      %663 = vmatmul.mubr.f32.gmra.mrb[0].mxu0 %v596
      %v664 = vpop.f32.mrb[0].mxu0
      %v665 = vadd.f32 0.0, %v664
      %v666 = vpop.f32.mrb[0].mxu0
      %667 = vdwg.mxu0
      %v669 = vrot.slane %v665, 4
      %v671 = vsel %vm444, %v591, %v669
      %v672 = vld [vmem:[%s417] sm:$0xff]
      %v673 = vld [vmem:[%s417 + $0x8] sm:$0xff]
      %v674 = vld [vmem:[%s417 + $0x10] sm:$0xff]
      %v675 = vld [vmem:[%s417 + $0x18] sm:$0xff]
      %v676 = vld [vmem:[%s417 + $0x20] sm:$0xff]
      %v677 = vld [vmem:[%s417 + $0x28] sm:$0xff]
      %v678 = vld [vmem:[%s417 + $0x30] sm:$0xff]
      %v679 = vld [vmem:[%s417 + $0x38] sm:$0xff]
      %vm680 = vcmask 64512
      %v682 = vsel %vm680, %v672, 0
      %v685 = vsel %vm680, %v673, 0
      %v688 = vsel %vm680, %v674, 0
      %v691 = vsel %vm680, %v675, 0
      %v694 = vsel %vm680, %v676, 0
      %v697 = vsel %vm680, %v677, 0
      %v700 = vsel %vm680, %v678, 0
      %v703 = vsel %vm680, %v679, 0
      %705 = vmatprep.subr.mxu0 0.0
      %706 = vmatpush1.msra.mxu0 %v671
      %707 = vmatprep.subr.mxu0 0.0
      %708 = vmatpush1.msra.mxu0 0.0
      %709 = vmatprep.subr.mxu0 0.0
      %710 = vmatpush1.msra.mxu0 0.0
      %711 = vmatprep.subr.mxu0 0.0
      %712 = vmatpush1.msra.mxu0 0.0
      %713 = vmatprep.subr.mxu0 0.0
      %714 = vmatpush1.msra.mxu0 0.0
      %715 = vmatprep.subr.mxu0 0.0
      %716 = vmatpush1.msra.mxu0 0.0
      %717 = vmatprep.subr.mxu0 0.0
      %718 = vmatpush1.msra.mxu0 0.0
      %719 = vmatprep.subr.mxu0 0.0
      %720 = vmatpush1.msra.mxu0 0.0
      %721 = vmatprep.subr.mxu0 0.0
      %722 = vmatpush1.msra.mxu0 0.0
      %723 = vmatprep.subr.mxu0 0.0
      %724 = vmatpush1.msra.mxu0 0.0
      %725 = vmatprep.subr.mxu0 0.0
      %726 = vmatpush1.msra.mxu0 0.0
      %727 = vmatprep.subr.mxu0 0.0
      %728 = vmatpush1.msra.mxu0 0.0
      %729 = vmatprep.subr.mxu0 0.0
      %730 = vmatpush1.msra.mxu0 0.0
      %731 = vmatprep.subr.mxu0 0.0
      %732 = vmatpush1.msra.mxu0 0.0
      %733 = vmatprep.subr.mxu0 0.0
      %734 = vmatpush1.msra.mxu0 0.0
      %735 = vmatprep.subr.mxu0 0.0
      %736 = vmatpush1.msra.mxu0 0.0
      %737 = vmatprep.subr.mxu0 0.0
      %738 = vmatpush1.msra.mxu0 0.0
      %739 = vmatprep.subr.mxu0 0.0
      %740 = vmatpush1.msra.mxu0 0.0
      %741 = vmatprep.subr.mxu0 0.0
      %742 = vmatpush1.msra.mxu0 0.0
      %743 = vmatprep.subr.mxu0 0.0
      %744 = vmatpush1.msra.mxu0 0.0
      %745 = vmatprep.subr.mxu0 0.0
      %746 = vmatpush1.msra.mxu0 0.0
      %747 = vmatprep.subr.mxu0 0.0
      %748 = vmatpush1.msra.mxu0 0.0
      %749 = vmatprep.subr.mxu0 0.0
      %750 = vmatpush1.msra.mxu0 0.0
      %751 = vmatprep.subr.mxu0 0.0
      %752 = vmatpush1.msra.mxu0 0.0
      %753 = vmatprep.subr.mxu0 0.0
      %754 = vmatpush1.msra.mxu0 0.0
      %755 = vmatprep.subr.mxu0 0.0
      %756 = vmatpush1.msra.mxu0 0.0
      %757 = vmatprep.subr.mxu0 0.0
      %758 = vmatpush1.msra.mxu0 0.0
      %759 = vmatprep.subr.mxu0 0.0
      %760 = vmatpush1.msra.mxu0 0.0
      %761 = vmatprep.subr.mxu0 0.0
      %762 = vmatpush1.msra.mxu0 0.0
      %763 = vmatprep.subr.mxu0 0.0
      %764 = vmatpush1.msra.mxu0 0.0
      %765 = vmatprep.subr.mxu0 0.0
      %766 = vmatpush1.msra.mxu0 0.0
      %767 = vmatprep.subr.mxu0 0.0
      %768 = vmatpush1.msra.mxu0 0.0
      %769 = vmatprep.mubr.f32.mxu0 0.0
      %770 = vmatmul.mubr.f32.gmra.mrb[0].mxu0 %v682
      %v771 = vpop.f32.mrb[0].mxu0
      %v772 = vadd.f32 0.0, %v771
      %v773 = vpop.f32.mrb[0].mxu0
      %774 = vmatprep.mubr.f32.mxu0 0.0
      %775 = vmatmul.mubr.f32.gmra.mrb[0].mxu0 %v685
      %v776 = vpop.f32.mrb[0].mxu0
      %v777 = vadd.f32 0.0, %v776
      %v778 = vpop.f32.mrb[0].mxu0
      %779 = vmatprep.mubr.f32.mxu0 0.0
      %780 = vmatmul.mubr.f32.gmra.mrb[0].mxu0 %v688
      %v781 = vpop.f32.mrb[0].mxu0
      %v782 = vadd.f32 0.0, %v781
      %v783 = vpop.f32.mrb[0].mxu0
      %784 = vmatprep.mubr.f32.mxu0 0.0
      %785 = vmatmul.mubr.f32.gmra.mrb[0].mxu0 %v691
      %v786 = vpop.f32.mrb[0].mxu0
      %v787 = vadd.f32 0.0, %v786
      %v788 = vpop.f32.mrb[0].mxu0
      %789 = vmatprep.mubr.f32.mxu0 0.0
      %790 = vmatmul.mubr.f32.gmra.mrb[0].mxu0 %v694
      %v791 = vpop.f32.mrb[0].mxu0
      %v792 = vadd.f32 0.0, %v791
      %v793 = vpop.f32.mrb[0].mxu0
      %794 = vmatprep.mubr.f32.mxu0 0.0
      %795 = vmatmul.mubr.f32.gmra.mrb[0].mxu0 %v697
      %v796 = vpop.f32.mrb[0].mxu0
      %v797 = vadd.f32 0.0, %v796
      %v798 = vpop.f32.mrb[0].mxu0
      %799 = vmatprep.mubr.f32.mxu0 0.0
      %800 = vmatmul.mubr.f32.gmra.mrb[0].mxu0 %v700
      %v801 = vpop.f32.mrb[0].mxu0
      %v802 = vadd.f32 0.0, %v801
      %v803 = vpop.f32.mrb[0].mxu0
      %804 = vmatprep.mubr.f32.mxu0 0.0
      %805 = vmatmul.mubr.f32.gmra.mrb[0].mxu0 %v703
      %v806 = vpop.f32.mrb[0].mxu0
      %v807 = vadd.f32 0.0, %v806
      %v808 = vpop.f32.mrb[0].mxu0
      %809 = vdwg.mxu0
      %vm810 = vcmask 523264
      %811 = vst.msk [vmem:[%s434] sm:$0xff] %vm810, %v772
      %812 = vst.msk [vmem:[%s434 + $0x8] sm:$0xff] %vm810, %v777
      %813 = vst.msk [vmem:[%s434 + $0x10] sm:$0xff] %vm810, %v782
      %814 = vst.msk [vmem:[%s434 + $0x18] sm:$0xff] %vm810, %v787
      %815 = vst.msk [vmem:[%s434 + $0x20] sm:$0xff] %vm810, %v792
      %816 = vst.msk [vmem:[%s434 + $0x28] sm:$0xff] %vm810, %v797
      %817 = vst.msk [vmem:[%s434 + $0x30] sm:$0xff] %vm810, %v802
      %818 = vst.msk [vmem:[%s434 + $0x38] sm:$0xff] %vm810, %v807
      %s819 = smul.u32 8, %s25
      %p820 = scmp.lt.s32.totalorder %s23, 1
      %s821 = scalar_select %p820, %s23, 1
      %p822 = scmp.lt.s32.totalorder %s24, 3
      %s823 = scalar_select %p822, %s24, 3
      %p824 = scmp.lt.s32.totalorder %s819, 7
      %s825 = scalar_select %p824, %s819, 7
      %p826 = scmp.lt.s32.totalorder %s26, 0
      %s827 = scalar_select %p826, %s26, 0
      %s828 = sadd.s32 %s827, %s825
      %s829 = smul.addr %s823, 8
      %s830 = sadd.s32 %s828, %s829
      %s831 = smul.addr %s821, 32
      %s832 = sadd.s32 %s830, %s831
      %s833 = smul.addr %s832, 8
      %s834 = scalar_lea.vmem %s6, %s833
      // Predicated region
      $region45: #{_hitnet_forward_impl.16} parent=43 // pred_check
        %p835 = pneg %p229
      $region46: #{_hitnet_forward_impl.16} parent=43 // pred_check_branch
        %837 = sbr.rel (%p835) target = $region48
      $region47: #{_hitnet_forward_impl.16} parent=43 // pred_region
        %s838 = smul.u32 8, %s25
      $region48: #{_hitnet_forward_impl.16} parent=43 // pred_fallthru
        _
    $region44: #{_hitnet_forward_impl.16} parent=5 // pred_fallthru
      _
    %p839 = scmp.le.s32.totalorder 2, %s12
    // Predicated region
    $region49: #{_hitnet_forward_impl.16} parent=5 // pred_check
      %p840 = pneg %p839
    $region50: #{_hitnet_forward_impl.16} parent=5 // pred_check_branch
      %842 = sbr.rel (%p840) target = $region52
    $region51: #{_hitnet_forward_impl.16} parent=5 // pred_region
      %s843 = ssub.s32 %s12, 2
      // Predicated region
      $region53: #{_hitnet_forward_impl.16} parent=51 // pred_check
        %p844 = pneg %p235
      $region54: #{_hitnet_forward_impl.16} parent=51 // pred_check_branch
        %846 = sbr.rel (%p844) target = $region56
      $region55: #{_hitnet_forward_impl.16} parent=51 // pred_region
        %s847 = smul.u32 8, %s29
        %p848 = scmp.lt.s32.totalorder %s27, 1
        %s849 = scalar_select %p848, %s27, 1
        %p850 = scmp.lt.s32.totalorder %s28, 3
        %s851 = scalar_select %p850, %s28, 3
        %p852 = scmp.lt.s32.totalorder %s847, 7
        %s853 = scalar_select %p852, %s847, 7
        %p854 = scmp.lt.s32.totalorder %s30, 0
        %s855 = scalar_select %p854, %s30, 0
        %s856 = sadd.s32 %s855, %s853
        %s857 = smul.addr %s851, 8
        %s858 = sadd.s32 %s856, %s857
        %s859 = smul.addr %s849, 32
        %s860 = sadd.s32 %s858, %s859
        %s861 = smul.addr %s860, 8
        %s862 = scalar_lea.vmem %s6, %s861
      $region56: #{_hitnet_forward_impl.16} parent=51 // pred_fallthru
        _
    $region52: #{_hitnet_forward_impl.16} parent=5 // pred_fallthru
      _
  $region6: #{_hitnet_forward_impl.16} parent=0 // loop_footer
    %s16 = sadd.s32 1, %s12
  $region7: #{_hitnet_forward_impl.16} parent=0 // loop_footer_branch
    %11 = sbr.rel target = $region3
  $region8: #{_hitnet_forward_impl.16} parent=0 // loop_exit
    _

// kernel: _hitnet_forward_impl.14
$region0: #{_hitnet_forward_impl.14}
  #allocation0 [shape = 'u32[]', space=smem, size = 0x4, offset = 0x4, fixed_abs, tag = 'smem constant byte address 0x4 - core index']
  #allocation1 [shape = 'u32[144,128]{1,0:T(1,128)}', space=vmem, size = 0x12000, scoped, tag = 'internal scratch']
  %s0 = inlined_call_operand.vmem [shape: f32[2,4,2,2], index: 0, kind: input, shape index: {}]
  %s1 = inlined_call_operand.vmem [shape: f32[2,4,2,2], index: 1, kind: input, shape index: {}]
  %s2 = inlined_call_operand.vmem [shape: f32[2,4,2,2], index: 2, kind: input, shape index: {}]
  %s3 = inlined_call_operand.vmem [shape: f32[2,64], index: 3, kind: input, shape index: {}]
  %s4 = inlined_call_operand.vmem [shape: f32[2,64], index: 4, kind: input, shape index: {}]
  %s5 = inlined_call_operand.vmem [shape: f32[64,4], index: 5, kind: input, shape index: {}]
  %s6 = inlined_call_operand.vmem [shape: f32[2,4,64,64], index: 6, kind: output, shape index: {}]
  %s7 = sld [smem:[#allocation0]]
  $region57: #{_hitnet_forward_impl.14} parent=0
    _
  %s9 = ssub.s32 1, %s7
  %s10 = scalar_select 0, %s9, %s7
  loop: start=0, step=1, limit=10
  $region2: #{_hitnet_forward_impl.14} parent=0 // loop_pre_header
    _
  $region3: #{_hitnet_forward_impl.14} parent=0 // loop_header
    %s12 = sphi 0, %s16
    %p13 = scmp.ge.s32.totalorder %s12, 10
    %s19 = sphi 0, %s45
    %s20 = sphi 0, %s41
    %s21 = sphi 0, %s37
    %s22 = sphi 0, %s33
    %s23 = sphi 0, %s19
    %s24 = sphi 0, %s20
    %s25 = sphi 0, %s21
    %s26 = sphi 0, %s22
    %s27 = sphi 0, %s23
    %s28 = sphi 0, %s24
    %s29 = sphi 0, %s25
    %s30 = sphi 0, %s26
    %s50 = sphi 0, %s52
    %s53 = sphi 0, %s50
    %s54 = sphi 0, %s53
    %s70 = sphi 0, %s54
    %s78 = sphi 0, %s80
    %s81 = sphi 0, %s78
    %s82 = sphi 0, %s81
    %s98 = sphi 0, %s82
    %s106 = sphi 0, %s108
    %s109 = sphi 0, %s106
    %s110 = sphi 0, %s109
    %s126 = sphi 0, %s110
    %s132 = sphi 0, %s134
    %s135 = sphi 0, %s132
    %s136 = sphi 0, %s135
    %s152 = sphi 0, %s136
    %s158 = sphi 0, %s160
    %s161 = sphi 0, %s158
    %s162 = sphi 0, %s161
    %s178 = sphi 0, %s162
    %s184 = sphi 0, %s186
    %s187 = sphi 0, %s184
    %s188 = sphi 0, %s187
    %s204 = sphi 0, %s188
    %s216 = sphi 0, %s218
    %s219 = sphi 0, %s216
    %s220 = sphi 0, %s219
    %s236 = sphi 0, %s220
  $region4: #{_hitnet_forward_impl.14} parent=0 // loop_header_branch
    %15 = sbr.rel (%p13) target = $region8
  $region5: #{_hitnet_forward_impl.14} parent=0 // loop_body
    %s17 = ssub.s32 %s12, 1
    %s18 = ssub.s32 %s12, 2
    %s31 = sadd.s32 1, %s22
    %p32 = scmp.ge.s32.totalorder %s31, 1
    %s33 = scalar_select %p32, 0, %s31
    %s34 = sadd.s32 1, %s21
    %s35 = scalar_select %p32, %s34, %s21
    %p36 = scmp.ge.s32.totalorder %s35, 1
    %s37 = scalar_select %p36, 0, %s35
    %s38 = sadd.s32 1, %s20
    %s39 = scalar_select %p36, %s38, %s20
    %p40 = scmp.ge.s32.totalorder %s39, 4
    %s41 = scalar_select %p40, 0, %s39
    %s42 = sadd.s32 1, %s19
    %s43 = scalar_select %p40, %s42, %s19
    %p44 = scmp.ge.s32.totalorder %s43, 2
    %s45 = scalar_select %p44, 0, %s43
    %s46 = ssub.s32 %s19, %s45
    %s47 = ssub.s32 %s20, %s41
    %s48 = sor.u32 %s46, %s47
    %p49 = scmp.eq.s32.totalorder %s48, 0
    %s51 = sadd.s32 %s50, 1
    %s52 = scalar_select %p49, %s50, %s51
    %p55 = pneg %p49
    %p56 = scmp.eq.s32.totalorder %s12, 7
    %p57 = por %p55, %p56
    %p58 = scmp.ne.s32.totalorder %s50, %s53
    %p59 = scmp.eq.s32.totalorder %s12, 0
    %p60 = por %p58, %p59
    %p61 = scmp.ne.s32.totalorder %s50, %s53
    %p62 = scmp.eq.s32.totalorder %s17, 7
    %p63 = por %p61, %p62
    %p64 = scmp.ne.s32.totalorder %s53, %s54
    %p65 = scmp.eq.s32.totalorder %s17, 0
    %p66 = por %p64, %p65
    %p67 = scmp.ne.s32.totalorder %s53, %s54
    %p68 = scmp.eq.s32.totalorder %s18, 7
    %p69 = por %p67, %p68
    %p71 = scmp.ne.s32.totalorder %s54, %s70
    %p72 = scmp.eq.s32.totalorder %s18, 0
    %p73 = por %p71, %p72
    %s74 = ssub.s32 %s19, %s45
    %s75 = ssub.s32 %s20, %s41
    %s76 = sor.u32 %s74, %s75
    %p77 = scmp.eq.s32.totalorder %s76, 0
    %s79 = sadd.s32 %s78, 1
    %s80 = scalar_select %p77, %s78, %s79
    %p83 = pneg %p77
    %p84 = scmp.eq.s32.totalorder %s12, 7
    %p85 = por %p83, %p84
    %p86 = scmp.ne.s32.totalorder %s78, %s81
    %p87 = scmp.eq.s32.totalorder %s12, 0
    %p88 = por %p86, %p87
    %p89 = scmp.ne.s32.totalorder %s78, %s81
    %p90 = scmp.eq.s32.totalorder %s17, 7
    %p91 = por %p89, %p90
    %p92 = scmp.ne.s32.totalorder %s81, %s82
    %p93 = scmp.eq.s32.totalorder %s17, 0
    %p94 = por %p92, %p93
    %p95 = scmp.ne.s32.totalorder %s81, %s82
    %p96 = scmp.eq.s32.totalorder %s18, 7
    %p97 = por %p95, %p96
    %p99 = scmp.ne.s32.totalorder %s82, %s98
    %p100 = scmp.eq.s32.totalorder %s18, 0
    %p101 = por %p99, %p100
    %s102 = ssub.s32 %s19, %s45
    %s103 = ssub.s32 %s20, %s41
    %s104 = sor.u32 %s102, %s103
    %p105 = scmp.eq.s32.totalorder %s104, 0
    %s107 = sadd.s32 %s106, 1
    %s108 = scalar_select %p105, %s106, %s107
    %p111 = pneg %p105
    %p112 = scmp.eq.s32.totalorder %s12, 7
    %p113 = por %p111, %p112
    %p114 = scmp.ne.s32.totalorder %s106, %s109
    %p115 = scmp.eq.s32.totalorder %s12, 0
    %p116 = por %p114, %p115
    %p117 = scmp.ne.s32.totalorder %s106, %s109
    %p118 = scmp.eq.s32.totalorder %s17, 7
    %p119 = por %p117, %p118
    %p120 = scmp.ne.s32.totalorder %s109, %s110
    %p121 = scmp.eq.s32.totalorder %s17, 0
    %p122 = por %p120, %p121
    %p123 = scmp.ne.s32.totalorder %s109, %s110
    %p124 = scmp.eq.s32.totalorder %s18, 7
    %p125 = por %p123, %p124
    %p127 = scmp.ne.s32.totalorder %s110, %s126
    %p128 = scmp.eq.s32.totalorder %s18, 0
    %p129 = por %p127, %p128
    %s130 = ssub.s32 %s22, %s33
    %p131 = scmp.eq.s32.totalorder %s130, 0
    %s133 = sadd.s32 %s132, 1
    %s134 = scalar_select %p131, %s132, %s133
    %p137 = pneg %p131
    %p138 = scmp.eq.s32.totalorder %s12, 7
    %p139 = por %p137, %p138
    %p140 = scmp.ne.s32.totalorder %s132, %s135
    %p141 = scmp.eq.s32.totalorder %s12, 0
    %p142 = por %p140, %p141
    %p143 = scmp.ne.s32.totalorder %s132, %s135
    %p144 = scmp.eq.s32.totalorder %s17, 7
    %p145 = por %p143, %p144
    %p146 = scmp.ne.s32.totalorder %s135, %s136
    %p147 = scmp.eq.s32.totalorder %s17, 0
    %p148 = por %p146, %p147
    %p149 = scmp.ne.s32.totalorder %s135, %s136
    %p150 = scmp.eq.s32.totalorder %s18, 7
    %p151 = por %p149, %p150
    %p153 = scmp.ne.s32.totalorder %s136, %s152
    %p154 = scmp.eq.s32.totalorder %s18, 0
    %p155 = por %p153, %p154
    %s156 = ssub.s32 %s22, %s33
    %p157 = scmp.eq.s32.totalorder %s156, 0
    %s159 = sadd.s32 %s158, 1
    %s160 = scalar_select %p157, %s158, %s159
    %p163 = pneg %p157
    %p164 = scmp.eq.s32.totalorder %s12, 7
    %p165 = por %p163, %p164
    %p166 = scmp.ne.s32.totalorder %s158, %s161
    %p167 = scmp.eq.s32.totalorder %s12, 0
    %p168 = por %p166, %p167
    %p169 = scmp.ne.s32.totalorder %s158, %s161
    %p170 = scmp.eq.s32.totalorder %s17, 7
    %p171 = por %p169, %p170
    %p172 = scmp.ne.s32.totalorder %s161, %s162
    %p173 = scmp.eq.s32.totalorder %s17, 0
    %p174 = por %p172, %p173
    %p175 = scmp.ne.s32.totalorder %s161, %s162
    %p176 = scmp.eq.s32.totalorder %s18, 7
    %p177 = por %p175, %p176
    %p179 = scmp.ne.s32.totalorder %s162, %s178
    %p180 = scmp.eq.s32.totalorder %s18, 0
    %p181 = por %p179, %p180
    %s182 = ssub.s32 %s21, %s37
    %p183 = scmp.eq.s32.totalorder %s182, 0
    %s185 = sadd.s32 %s184, 1
    %s186 = scalar_select %p183, %s184, %s185
    %p189 = pneg %p183
    %p190 = scmp.eq.s32.totalorder %s12, 7
    %p191 = por %p189, %p190
    %p192 = scmp.ne.s32.totalorder %s184, %s187
    %p193 = scmp.eq.s32.totalorder %s12, 0
    %p194 = por %p192, %p193
    %p195 = scmp.ne.s32.totalorder %s184, %s187
    %p196 = scmp.eq.s32.totalorder %s17, 7
    %p197 = por %p195, %p196
    %p198 = scmp.ne.s32.totalorder %s187, %s188
    %p199 = scmp.eq.s32.totalorder %s17, 0
    %p200 = por %p198, %p199
    %p201 = scmp.ne.s32.totalorder %s187, %s188
    %p202 = scmp.eq.s32.totalorder %s18, 7
    %p203 = por %p201, %p202
    %p205 = scmp.ne.s32.totalorder %s188, %s204
    %p206 = scmp.eq.s32.totalorder %s18, 0
    %p207 = por %p205, %p206
    %s208 = ssub.s32 %s19, %s45
    %s209 = ssub.s32 %s20, %s41
    %s210 = sor.u32 %s208, %s209
    %s211 = ssub.s32 %s21, %s37
    %s212 = sor.u32 %s210, %s211
    %s213 = ssub.s32 %s22, %s33
    %s214 = sor.u32 %s212, %s213
    %p215 = scmp.eq.s32.totalorder %s214, 0
    %s217 = sadd.s32 %s216, 1
    %s218 = scalar_select %p215, %s216, %s217
    %p221 = pneg %p215
    %p222 = scmp.eq.s32.totalorder %s12, 7
    %p223 = por %p221, %p222
    %p224 = scmp.ne.s32.totalorder %s216, %s219
    %p225 = scmp.eq.s32.totalorder %s12, 0
    %p226 = por %p224, %p225
    %p227 = scmp.ne.s32.totalorder %s216, %s219
    %p228 = scmp.eq.s32.totalorder %s17, 7
    %p229 = por %p227, %p228
    %p230 = scmp.ne.s32.totalorder %s219, %s220
    %p231 = scmp.eq.s32.totalorder %s17, 0
    %p232 = por %p230, %p231
    %p233 = scmp.ne.s32.totalorder %s219, %s220
    %p234 = scmp.eq.s32.totalorder %s18, 7
    %p235 = por %p233, %p234
    %p237 = scmp.ne.s32.totalorder %s220, %s236
    %p238 = scmp.eq.s32.totalorder %s18, 0
    %p239 = por %p237, %p238
    %p240 = scmp.le.s32.totalorder 1, %s12
    %p241 = scmp.lt.s32.totalorder %s12, 9
    %p242 = pnand %p240, %p241
    %p243 = pneg %p242
    // Predicated region
    $region9: #{_hitnet_forward_impl.14} parent=5 // pred_check
      _
    $region10: #{_hitnet_forward_impl.14} parent=5 // pred_check_branch
      %245 = sbr.rel (%p242) target = $region12
    $region11: #{_hitnet_forward_impl.14} parent=5 // pred_region
      %s246 = ssub.s32 %s12, 1
      // Predicated region
      $region13: #{_hitnet_forward_impl.14} parent=11 // pred_check
        %p247 = pneg %p148
      $region14: #{_hitnet_forward_impl.14} parent=11 // pred_check_branch
        %249 = sbr.rel (%p247) target = $region16
      $region15: #{_hitnet_forward_impl.14} parent=11 // pred_region
        %p250 = scmp.lt.s32.totalorder %s26, 0
        %s251 = scalar_select %p250, %s26, 0
        %s252 = smul.addr %s251, 2
        %s253 = scalar_lea.vmem %s3, %s252
      $region16: #{_hitnet_forward_impl.14} parent=11 // pred_fallthru
        _
      // Predicated region
      $region17: #{_hitnet_forward_impl.14} parent=11 // pred_check
        %p254 = pneg %p174
      $region18: #{_hitnet_forward_impl.14} parent=11 // pred_check_branch
        %256 = sbr.rel (%p254) target = $region20
      $region19: #{_hitnet_forward_impl.14} parent=11 // pred_region
        %p257 = scmp.lt.s32.totalorder %s26, 0
        %s258 = scalar_select %p257, %s26, 0
        %s259 = smul.addr %s258, 2
        %s260 = scalar_lea.vmem %s4, %s259
      $region20: #{_hitnet_forward_impl.14} parent=11 // pred_fallthru
        _
      // Predicated region
      $region21: #{_hitnet_forward_impl.14} parent=11 // pred_check
        %p261 = pneg %p200
      $region22: #{_hitnet_forward_impl.14} parent=11 // pred_check_branch
        %263 = sbr.rel (%p261) target = $region24
      $region23: #{_hitnet_forward_impl.14} parent=11 // pred_region
        %s264 = smul.u32 8, %s25
        %p265 = scmp.lt.s32.totalorder %s264, 7
        %s266 = scalar_select %p265, %s264, 7
        %s267 = smul.addr %s266, 8
        %s268 = scalar_lea.vmem %s5, %s267
        %s269 = smul.u32 8, %s25
      $region24: #{_hitnet_forward_impl.14} parent=11 // pred_fallthru
        _
    $region12: #{_hitnet_forward_impl.14} parent=5 // pred_fallthru
      _
    %p270 = scmp.lt.s32.totalorder %s12, 8
    // Predicated region
    $region25: #{_hitnet_forward_impl.14} parent=5 // pred_check
      %p271 = pneg %p270
    $region26: #{_hitnet_forward_impl.14} parent=5 // pred_check_branch
      %273 = sbr.rel (%p271) target = $region28
    $region27: #{_hitnet_forward_impl.14} parent=5 // pred_region
      // Predicated region
      $region29: #{_hitnet_forward_impl.14} parent=27 // pred_check
        %p274 = pneg %p60
      $region30: #{_hitnet_forward_impl.14} parent=27 // pred_check_branch
        %276 = sbr.rel (%p274) target = $region32
      $region31: #{_hitnet_forward_impl.14} parent=27 // pred_region
        %p277 = scmp.lt.s32.totalorder %s19, 1
        %s278 = scalar_select %p277, %s19, 1
        %p279 = scmp.lt.s32.totalorder %s20, 3
        %s280 = scalar_select %p279, %s20, 3
        %s281 = smul.addr %s278, 4
        %s282 = sadd.s32 %s280, %s281
        %s283 = smul.addr %s282, 2
        %s284 = scalar_lea.vmem %s0, %s283
      $region32: #{_hitnet_forward_impl.14} parent=27 // pred_fallthru
        _
      // Predicated region
      $region33: #{_hitnet_forward_impl.14} parent=27 // pred_check
        %p285 = pneg %p88
      $region34: #{_hitnet_forward_impl.14} parent=27 // pred_check_branch
        %287 = sbr.rel (%p285) target = $region36
      $region35: #{_hitnet_forward_impl.14} parent=27 // pred_region
        %p288 = scmp.lt.s32.totalorder %s19, 1
        %s289 = scalar_select %p288, %s19, 1
        %p290 = scmp.lt.s32.totalorder %s20, 3
        %s291 = scalar_select %p290, %s20, 3
        %s292 = smul.addr %s289, 4
        %s293 = sadd.s32 %s291, %s292
        %s294 = smul.addr %s293, 2
        %s295 = scalar_lea.vmem %s1, %s294
      $region36: #{_hitnet_forward_impl.14} parent=27 // pred_fallthru
        _
      // Predicated region
      $region37: #{_hitnet_forward_impl.14} parent=27 // pred_check
        %p296 = pneg %p116
      $region38: #{_hitnet_forward_impl.14} parent=27 // pred_check_branch
        %298 = sbr.rel (%p296) target = $region40
      $region39: #{_hitnet_forward_impl.14} parent=27 // pred_region
        %p299 = scmp.lt.s32.totalorder %s19, 1
        %s300 = scalar_select %p299, %s19, 1
        %p301 = scmp.lt.s32.totalorder %s20, 3
        %s302 = scalar_select %p301, %s20, 3
        %s303 = smul.addr %s300, 4
        %s304 = sadd.s32 %s302, %s303
        %s305 = smul.addr %s304, 2
        %s306 = scalar_lea.vmem %s2, %s305
      $region40: #{_hitnet_forward_impl.14} parent=27 // pred_fallthru
        _
    $region28: #{_hitnet_forward_impl.14} parent=5 // pred_fallthru
      _
    %p307 = scmp.le.s32.totalorder 1, %s12
    %p308 = scmp.lt.s32.totalorder %s12, 9
    %p309 = pnand %p307, %p308
    %p310 = pneg %p309
    // Predicated region
    $region41: #{_hitnet_forward_impl.14} parent=5 // pred_check
      _
    $region42: #{_hitnet_forward_impl.14} parent=5 // pred_check_branch
      %312 = sbr.rel (%p309) target = $region44
    $region43: #{_hitnet_forward_impl.14} parent=5 // pred_region
      %s313 = ssub.s32 %s12, 1
      %p314 = scmp.lt.s32.totalorder %s23, 1
      %s315 = scalar_select %p314, %s23, 1
      %p316 = scmp.lt.s32.totalorder %s24, 3
      %s317 = scalar_select %p316, %s24, 3
      %s318 = smul.addr %s315, 4
      %s319 = sadd.s32 %s317, %s318
      %s320 = smul.addr %s319, 2
      %s321 = scalar_lea.vmem %s0, %s320
      %p322 = pneg %p66
      %p323 = pneg %p63
      %p324 = scmp.lt.s32.totalorder %s23, 1
      %s325 = scalar_select %p324, %s23, 1
      %p326 = scmp.lt.s32.totalorder %s24, 3
      %s327 = scalar_select %p326, %s24, 3
      %s328 = smul.addr %s325, 4
      %s329 = sadd.s32 %s327, %s328
      %s330 = smul.addr %s329, 2
      %s331 = scalar_lea.vmem %s1, %s330
      %p332 = pneg %p94
      %p333 = pneg %p91
      %p334 = scmp.lt.s32.totalorder %s23, 1
      %s335 = scalar_select %p334, %s23, 1
      %p336 = scmp.lt.s32.totalorder %s24, 3
      %s337 = scalar_select %p336, %s24, 3
      %s338 = smul.addr %s335, 4
      %s339 = sadd.s32 %s337, %s338
      %s340 = smul.addr %s339, 2
      %s341 = scalar_lea.vmem %s2, %s340
      %p342 = pneg %p122
      %p343 = pneg %p119
      %p344 = scmp.lt.s32.totalorder %s26, 0
      %s345 = scalar_select %p344, %s26, 0
      %s346 = smul.addr %s345, 2
      %s347 = scalar_lea.vmem %s3, %s346
      %p348 = pneg %p148
      %p349 = pneg %p145
      %p350 = scmp.lt.s32.totalorder %s26, 0
      %s351 = scalar_select %p350, %s26, 0
      %s352 = smul.addr %s351, 2
      %s353 = scalar_lea.vmem %s4, %s352
      %p354 = pneg %p174
      %p355 = pneg %p171
      %s356 = smul.u32 8, %s25
      %p357 = scmp.lt.s32.totalorder %s356, 7
      %s358 = scalar_select %p357, %s356, 7
      %s359 = smul.addr %s358, 8
      %s360 = scalar_lea.vmem %s5, %s359
      %p361 = pneg %p200
      %p362 = pneg %p197
      %p363 = pneg %p232
      %p364 = pneg %p229
      %s365 = smul.u32 8, %s25
      %p366 = scmp.lt.s32.totalorder %s23, 1
      %s367 = scalar_select %p366, %s23, 1
      %p368 = scmp.lt.s32.totalorder %s24, 3
      %s369 = scalar_select %p368, %s24, 3
      %p370 = scmp.lt.s32.totalorder %s365, 7
      %s371 = scalar_select %p370, %s365, 7
      %p372 = scmp.lt.s32.totalorder %s26, 0
      %s373 = scalar_select %p372, %s26, 0
      %s374 = sadd.s32 %s373, %s371
      %s375 = smul.addr %s369, 8
      %s376 = sadd.s32 %s374, %s375
      %s377 = smul.addr %s367, 32
      %s378 = sadd.s32 %s376, %s377
      %s379 = smul.addr %s378, 8
      %s380 = scalar_lea.vmem %s6, %s379
      %p381 = scmp.lt.s32.totalorder %s23, 1
      %s382 = scalar_select %p381, %s23, 1
      %p383 = scmp.lt.s32.totalorder %s24, 3
      %s384 = scalar_select %p383, %s24, 3
      %s385 = smul.addr %s382, 4
      %s386 = sadd.s32 %s384, %s385
      %s387 = smul.addr %s386, 2
      %s388 = scalar_lea.vmem %s0, %s387
      %p389 = scmp.lt.s32.totalorder %s23, 1
      %s390 = scalar_select %p389, %s23, 1
      %p391 = scmp.lt.s32.totalorder %s24, 3
      %s392 = scalar_select %p391, %s24, 3
      %s393 = smul.addr %s390, 4
      %s394 = sadd.s32 %s392, %s393
      %s395 = smul.addr %s394, 2
      %s396 = scalar_lea.vmem %s1, %s395
      %p397 = scmp.lt.s32.totalorder %s23, 1
      %s398 = scalar_select %p397, %s23, 1
      %p399 = scmp.lt.s32.totalorder %s24, 3
      %s400 = scalar_select %p399, %s24, 3
      %s401 = smul.addr %s398, 4
      %s402 = sadd.s32 %s400, %s401
      %s403 = smul.addr %s402, 2
      %s404 = scalar_lea.vmem %s2, %s403
      %p405 = scmp.lt.s32.totalorder %s26, 0
      %s406 = scalar_select %p405, %s26, 0
      %s407 = smul.addr %s406, 2
      %s408 = scalar_lea.vmem %s3, %s407
      %p409 = scmp.lt.s32.totalorder %s26, 0
      %s410 = scalar_select %p409, %s26, 0
      %s411 = smul.addr %s410, 2
      %s412 = scalar_lea.vmem %s4, %s411
      %s413 = smul.u32 8, %s25
      %p414 = scmp.lt.s32.totalorder %s413, 7
      %s415 = scalar_select %p414, %s413, 7
      %s416 = smul.addr %s415, 8
      %s417 = scalar_lea.vmem %s5, %s416
      %s418 = smul.u32 8, %s25
      %s419 = smul.u32 8, %s25
      %p420 = scmp.lt.s32.totalorder %s23, 1
      %s421 = scalar_select %p420, %s23, 1
      %p422 = scmp.lt.s32.totalorder %s24, 3
      %s423 = scalar_select %p422, %s24, 3
      %p424 = scmp.lt.s32.totalorder %s419, 7
      %s425 = scalar_select %p424, %s419, 7
      %p426 = scmp.lt.s32.totalorder %s26, 0
      %s427 = scalar_select %p426, %s26, 0
      %s428 = sadd.s32 %s427, %s425
      %s429 = smul.addr %s423, 8
      %s430 = sadd.s32 %s428, %s429
      %s431 = smul.addr %s421, 32
      %s432 = sadd.s32 %s430, %s431
      %s433 = smul.addr %s432, 8
      %s434 = scalar_lea.vmem %s6, %s433
      %s435 = smul.u32 8, %s25
      %v436 = vld [vmem:[%s408] sm:$0x3]
      %v437 = vld [vmem:[%s388] sm:$0x3]
      %v438 = vld [vmem:[%s396] sm:$0x3]
      %v439 = vld [vmem:[%s412] sm:$0x3]
      %vm440 = vcmask 15360
      %v442 = vsel %vm440, %v438, 0
      %vm444 = vcmask 1041408
      %v446 = vsel %vm444, %v439, 0
      %448 = vmatprep.subr.mxu0 0.0
      %449 = vmatpush1.msra.mxu0 %v446
      %450 = vmatprep.subr.mxu0 0.0
      %451 = vmatpush1.msra.mxu0 0.0
      %452 = vmatprep.subr.mxu0 0.0
      %453 = vmatpush1.msra.mxu0 0.0
      %454 = vmatprep.subr.mxu0 0.0
      %455 = vmatpush1.msra.mxu0 0.0
      %456 = vmatprep.subr.mxu0 0.0
      %457 = vmatpush1.msra.mxu0 0.0
      %458 = vmatprep.subr.mxu0 0.0
      %459 = vmatpush1.msra.mxu0 0.0
      %460 = vmatprep.subr.mxu0 0.0
      %461 = vmatpush1.msra.mxu0 0.0
      %462 = vmatprep.subr.mxu0 0.0
      %463 = vmatpush1.msra.mxu0 0.0
      %464 = vmatprep.subr.mxu0 0.0
      %465 = vmatpush1.msra.mxu0 0.0
      %466 = vmatprep.subr.mxu0 0.0
      %467 = vmatpush1.msra.mxu0 0.0
      %468 = vmatprep.subr.mxu0 0.0
      %469 = vmatpush1.msra.mxu0 0.0
      %470 = vmatprep.subr.mxu0 0.0
      %471 = vmatpush1.msra.mxu0 0.0
      %472 = vmatprep.subr.mxu0 0.0
      %473 = vmatpush1.msra.mxu0 0.0
      %474 = vmatprep.subr.mxu0 0.0
      %475 = vmatpush1.msra.mxu0 0.0
      %476 = vmatprep.subr.mxu0 0.0
      %477 = vmatpush1.msra.mxu0 0.0
      %478 = vmatprep.subr.mxu0 0.0
      %479 = vmatpush1.msra.mxu0 0.0
      %480 = vmatprep.subr.mxu0 0.0
      %481 = vmatpush1.msra.mxu0 0.0
      %482 = vmatprep.subr.mxu0 0.0
      %483 = vmatpush1.msra.mxu0 0.0
      %484 = vmatprep.subr.mxu0 0.0
      %485 = vmatpush1.msra.mxu0 0.0
      %486 = vmatprep.subr.mxu0 0.0
      %487 = vmatpush1.msra.mxu0 0.0
      %488 = vmatprep.subr.mxu0 0.0
      %489 = vmatpush1.msra.mxu0 0.0
      %490 = vmatprep.subr.mxu0 0.0
      %491 = vmatpush1.msra.mxu0 0.0
      %492 = vmatprep.subr.mxu0 0.0
      %493 = vmatpush1.msra.mxu0 0.0
      %494 = vmatprep.subr.mxu0 0.0
      %495 = vmatpush1.msra.mxu0 0.0
      %496 = vmatprep.subr.mxu0 0.0
      %497 = vmatpush1.msra.mxu0 0.0
      %498 = vmatprep.subr.mxu0 0.0
      %499 = vmatpush1.msra.mxu0 0.0
      %500 = vmatprep.subr.mxu0 0.0
      %501 = vmatpush1.msra.mxu0 0.0
      %502 = vmatprep.subr.mxu0 0.0
      %503 = vmatpush1.msra.mxu0 0.0
      %504 = vmatprep.subr.mxu0 0.0
      %505 = vmatpush1.msra.mxu0 0.0
      %506 = vmatprep.subr.mxu0 0.0
      %507 = vmatpush1.msra.mxu0 0.0
      %508 = vmatprep.subr.mxu0 0.0
      %509 = vmatpush1.msra.mxu0 0.0
      %510 = vmatprep.subr.mxu0 0.0
      %511 = vmatpush1.msra.mxu0 0.0
      %512 = vmatprep.mubr.f32.mxu0 0.0
      %513 = vmatmul.mubr.f32.gmra.mrb[0].mxu0 %v442
      %v514 = vpop.f32.mrb[0].mxu0
      %v515 = vadd.f32 0.0, %v514
      %v516 = vpop.f32.mrb[0].mxu0
      %517 = vdwg.mxu0
      %v519 = vsel %vm440, %v437, 0
      %v522 = vsel %vm444, %v436, 0
      %524 = vmatprep.subr.mxu0 0.0
      %525 = vmatpush1.msra.mxu0 %v522
      %526 = vmatprep.subr.mxu0 0.0
      %527 = vmatpush1.msra.mxu0 0.0
      %528 = vmatprep.subr.mxu0 0.0
      %529 = vmatpush1.msra.mxu0 0.0
      %530 = vmatprep.subr.mxu0 0.0
      %531 = vmatpush1.msra.mxu0 0.0
      %532 = vmatprep.subr.mxu0 0.0
      %533 = vmatpush1.msra.mxu0 0.0
      %534 = vmatprep.subr.mxu0 0.0
      %535 = vmatpush1.msra.mxu0 0.0
      %536 = vmatprep.subr.mxu0 0.0
      %537 = vmatpush1.msra.mxu0 0.0
      %538 = vmatprep.subr.mxu0 0.0
      %539 = vmatpush1.msra.mxu0 0.0
      %540 = vmatprep.subr.mxu0 0.0
      %541 = vmatpush1.msra.mxu0 0.0
      %542 = vmatprep.subr.mxu0 0.0
      %543 = vmatpush1.msra.mxu0 0.0
      %544 = vmatprep.subr.mxu0 0.0
      %545 = vmatpush1.msra.mxu0 0.0
      %546 = vmatprep.subr.mxu0 0.0
      %547 = vmatpush1.msra.mxu0 0.0
      %548 = vmatprep.subr.mxu0 0.0
      %549 = vmatpush1.msra.mxu0 0.0
      %550 = vmatprep.subr.mxu0 0.0
      %551 = vmatpush1.msra.mxu0 0.0
      %552 = vmatprep.subr.mxu0 0.0
      %553 = vmatpush1.msra.mxu0 0.0
      %554 = vmatprep.subr.mxu0 0.0
      %555 = vmatpush1.msra.mxu0 0.0
      %556 = vmatprep.subr.mxu0 0.0
      %557 = vmatpush1.msra.mxu0 0.0
      %558 = vmatprep.subr.mxu0 0.0
      %559 = vmatpush1.msra.mxu0 0.0
      %560 = vmatprep.subr.mxu0 0.0
      %561 = vmatpush1.msra.mxu0 0.0
      %562 = vmatprep.subr.mxu0 0.0
      %563 = vmatpush1.msra.mxu0 0.0
      %564 = vmatprep.subr.mxu0 0.0
      %565 = vmatpush1.msra.mxu0 0.0
      %566 = vmatprep.subr.mxu0 0.0
      %567 = vmatpush1.msra.mxu0 0.0
      %568 = vmatprep.subr.mxu0 0.0
      %569 = vmatpush1.msra.mxu0 0.0
      %570 = vmatprep.subr.mxu0 0.0
      %571 = vmatpush1.msra.mxu0 0.0
      %572 = vmatprep.subr.mxu0 0.0
      %573 = vmatpush1.msra.mxu0 0.0
      %574 = vmatprep.subr.mxu0 0.0
      %575 = vmatpush1.msra.mxu0 0.0
      %576 = vmatprep.subr.mxu0 0.0
      %577 = vmatpush1.msra.mxu0 0.0
      %578 = vmatprep.subr.mxu0 0.0
      %579 = vmatpush1.msra.mxu0 0.0
      %580 = vmatprep.subr.mxu0 0.0
      %581 = vmatpush1.msra.mxu0 0.0
      %582 = vmatprep.subr.mxu0 0.0
      %583 = vmatpush1.msra.mxu0 0.0
      %584 = vmatprep.subr.mxu0 0.0
      %585 = vmatpush1.msra.mxu0 0.0
      %586 = vmatprep.subr.mxu0 0.0
      %587 = vmatpush1.msra.mxu0 0.0
      %588 = vmatprep.mubr.f32.mxu0 0.0
      %589 = vmatmul.mubr.f32.gmra.mrb[0].mxu0 %v519
      %v590 = vpop.f32.mrb[0].mxu0
      %v591 = vadd.f32 %v515, %v590
      %v592 = vpop.f32.mrb[0].mxu0
      %593 = vdwg.mxu0
      %v594 = vld [vmem:[%s404] sm:$0x3]
      %v596 = vsel %vm440, %v594, 0
      %598 = vmatprep.subr.mxu0 0.0
      %599 = vmatpush1.msra.mxu0 %v522
      %600 = vmatprep.subr.mxu0 0.0
      %601 = vmatpush1.msra.mxu0 0.0
      %602 = vmatprep.subr.mxu0 0.0
      %603 = vmatpush1.msra.mxu0 0.0
      %604 = vmatprep.subr.mxu0 0.0
      %605 = vmatpush1.msra.mxu0 0.0
      %606 = vmatprep.subr.mxu0 0.0
      %607 = vmatpush1.msra.mxu0 0.0
      %608 = vmatprep.subr.mxu0 0.0
      %609 = vmatpush1.msra.mxu0 0.0
      %610 = vmatprep.subr.mxu0 0.0
      %611 = vmatpush1.msra.mxu0 0.0
      %612 = vmatprep.subr.mxu0 0.0
      %613 = vmatpush1.msra.mxu0 0.0
      %614 = vmatprep.subr.mxu0 0.0
      %615 = vmatpush1.msra.mxu0 0.0
      %616 = vmatprep.subr.mxu0 0.0
      %617 = vmatpush1.msra.mxu0 0.0
      %618 = vmatprep.subr.mxu0 0.0
      %619 = vmatpush1.msra.mxu0 0.0
      %620 = vmatprep.subr.mxu0 0.0
      %621 = vmatpush1.msra.mxu0 0.0
      %622 = vmatprep.subr.mxu0 0.0
      %623 = vmatpush1.msra.mxu0 0.0
      %624 = vmatprep.subr.mxu0 0.0
      %625 = vmatpush1.msra.mxu0 0.0
      %626 = vmatprep.subr.mxu0 0.0
      %627 = vmatpush1.msra.mxu0 0.0
      %628 = vmatprep.subr.mxu0 0.0
      %629 = vmatpush1.msra.mxu0 0.0
      %630 = vmatprep.subr.mxu0 0.0
      %631 = vmatpush1.msra.mxu0 0.0
      %632 = vmatprep.subr.mxu0 0.0
      %633 = vmatpush1.msra.mxu0 0.0
      %634 = vmatprep.subr.mxu0 0.0
      %635 = vmatpush1.msra.mxu0 0.0
      %636 = vmatprep.subr.mxu0 0.0
      %637 = vmatpush1.msra.mxu0 0.0
      %638 = vmatprep.subr.mxu0 0.0
      %639 = vmatpush1.msra.mxu0 0.0
      %640 = vmatprep.subr.mxu0 0.0
      %641 = vmatpush1.msra.mxu0 0.0
      %642 = vmatprep.subr.mxu0 0.0
      %643 = vmatpush1.msra.mxu0 0.0
      %644 = vmatprep.subr.mxu0 0.0
      %645 = vmatpush1.msra.mxu0 0.0
      %646 = vmatprep.subr.mxu0 0.0
      %647 = vmatpush1.msra.mxu0 0.0
      %648 = vmatprep.subr.mxu0 0.0
      %649 = vmatpush1.msra.mxu0 0.0
      %650 = vmatprep.subr.mxu0 0.0
      %651 = vmatpush1.msra.mxu0 0.0
      %652 = vmatprep.subr.mxu0 0.0
      %653 = vmatpush1.msra.mxu0 0.0
      %654 = vmatprep.subr.mxu0 0.0
      %655 = vmatpush1.msra.mxu0 0.0
      %656 = vmatprep.subr.mxu0 0.0
      %657 = vmatpush1.msra.mxu0 0.0
      %658 = vmatprep.subr.mxu0 0.0
      %659 = vmatpush1.msra.mxu0 0.0
      %660 = vmatprep.subr.mxu0 0.0
      %661 = vmatpush1.msra.mxu0 0.0
      %662 = vmatprep.mubr.f32.mxu0 0.0
      %663 = vmatmul.mubr.f32.gmra.mrb[0].mxu0 %v596
      %v664 = vpop.f32.mrb[0].mxu0
      %v665 = vadd.f32 0.0, %v664
      %v666 = vpop.f32.mrb[0].mxu0
      %667 = vdwg.mxu0
      %v669 = vrot.slane %v665, 6
      %v671 = vsel %vm444, %v591, %v669
      %v672 = vld [vmem:[%s417] sm:$0xff]
      %v673 = vld [vmem:[%s417 + $0x8] sm:$0xff]
      %v674 = vld [vmem:[%s417 + $0x10] sm:$0xff]
      %v675 = vld [vmem:[%s417 + $0x18] sm:$0xff]
      %v676 = vld [vmem:[%s417 + $0x20] sm:$0xff]
      %v677 = vld [vmem:[%s417 + $0x28] sm:$0xff]
      %v678 = vld [vmem:[%s417 + $0x30] sm:$0xff]
      %v679 = vld [vmem:[%s417 + $0x38] sm:$0xff]
      %vm680 = vcmask 31744
      %v682 = vsel %vm680, %v672, 0
      %v685 = vsel %vm680, %v673, 0
      %v688 = vsel %vm680, %v674, 0
      %v691 = vsel %vm680, %v675, 0
      %v694 = vsel %vm680, %v676, 0
      %v697 = vsel %vm680, %v677, 0
      %v700 = vsel %vm680, %v678, 0
      %v703 = vsel %vm680, %v679, 0
      %vm705 = vcmask 1043456
      %v707 = vsel %vm705, %v671, 0
      %709 = vmatprep.subr.mxu0 0.0
      %710 = vmatpush1.msra.mxu0 %v707
      %711 = vmatprep.subr.mxu0 0.0
      %712 = vmatpush1.msra.mxu0 0.0
      %713 = vmatprep.subr.mxu0 0.0
      %714 = vmatpush1.msra.mxu0 0.0
      %715 = vmatprep.subr.mxu0 0.0
      %716 = vmatpush1.msra.mxu0 0.0
      %717 = vmatprep.subr.mxu0 0.0
      %718 = vmatpush1.msra.mxu0 0.0
      %719 = vmatprep.subr.mxu0 0.0
      %720 = vmatpush1.msra.mxu0 0.0
      %721 = vmatprep.subr.mxu0 0.0
      %722 = vmatpush1.msra.mxu0 0.0
      %723 = vmatprep.subr.mxu0 0.0
      %724 = vmatpush1.msra.mxu0 0.0
      %725 = vmatprep.subr.mxu0 0.0
      %726 = vmatpush1.msra.mxu0 0.0
      %727 = vmatprep.subr.mxu0 0.0
      %728 = vmatpush1.msra.mxu0 0.0
      %729 = vmatprep.subr.mxu0 0.0
      %730 = vmatpush1.msra.mxu0 0.0
      %731 = vmatprep.subr.mxu0 0.0
      %732 = vmatpush1.msra.mxu0 0.0
      %733 = vmatprep.subr.mxu0 0.0
      %734 = vmatpush1.msra.mxu0 0.0
      %735 = vmatprep.subr.mxu0 0.0
      %736 = vmatpush1.msra.mxu0 0.0
      %737 = vmatprep.subr.mxu0 0.0
      %738 = vmatpush1.msra.mxu0 0.0
      %739 = vmatprep.subr.mxu0 0.0
      %740 = vmatpush1.msra.mxu0 0.0
      %741 = vmatprep.subr.mxu0 0.0
      %742 = vmatpush1.msra.mxu0 0.0
      %743 = vmatprep.subr.mxu0 0.0
      %744 = vmatpush1.msra.mxu0 0.0
      %745 = vmatprep.subr.mxu0 0.0
      %746 = vmatpush1.msra.mxu0 0.0
      %747 = vmatprep.subr.mxu0 0.0
      %748 = vmatpush1.msra.mxu0 0.0
      %749 = vmatprep.subr.mxu0 0.0
      %750 = vmatpush1.msra.mxu0 0.0
      %751 = vmatprep.subr.mxu0 0.0
      %752 = vmatpush1.msra.mxu0 0.0
      %753 = vmatprep.subr.mxu0 0.0
      %754 = vmatpush1.msra.mxu0 0.0
      %755 = vmatprep.subr.mxu0 0.0
      %756 = vmatpush1.msra.mxu0 0.0
      %757 = vmatprep.subr.mxu0 0.0
      %758 = vmatpush1.msra.mxu0 0.0
      %759 = vmatprep.subr.mxu0 0.0
      %760 = vmatpush1.msra.mxu0 0.0
      %761 = vmatprep.subr.mxu0 0.0
      %762 = vmatpush1.msra.mxu0 0.0
      %763 = vmatprep.subr.mxu0 0.0
      %764 = vmatpush1.msra.mxu0 0.0
      %765 = vmatprep.subr.mxu0 0.0
      %766 = vmatpush1.msra.mxu0 0.0
      %767 = vmatprep.subr.mxu0 0.0
      %768 = vmatpush1.msra.mxu0 0.0
      %769 = vmatprep.subr.mxu0 0.0
      %770 = vmatpush1.msra.mxu0 0.0
      %771 = vmatprep.subr.mxu0 0.0
      %772 = vmatpush1.msra.mxu0 0.0
      %773 = vmatprep.mubr.f32.mxu0 0.0
      %774 = vmatmul.mubr.f32.gmra.mrb[0].mxu0 %v682
      %v775 = vpop.f32.mrb[0].mxu0
      %v776 = vadd.f32 0.0, %v775
      %v777 = vpop.f32.mrb[0].mxu0
      %778 = vmatprep.mubr.f32.mxu0 0.0
      %779 = vmatmul.mubr.f32.gmra.mrb[0].mxu0 %v685
      %v780 = vpop.f32.mrb[0].mxu0
      %v781 = vadd.f32 0.0, %v780
      %v782 = vpop.f32.mrb[0].mxu0
      %783 = vmatprep.mubr.f32.mxu0 0.0
      %784 = vmatmul.mubr.f32.gmra.mrb[0].mxu0 %v688
      %v785 = vpop.f32.mrb[0].mxu0
      %v786 = vadd.f32 0.0, %v785
      %v787 = vpop.f32.mrb[0].mxu0
      %788 = vmatprep.mubr.f32.mxu0 0.0
      %789 = vmatmul.mubr.f32.gmra.mrb[0].mxu0 %v691
      %v790 = vpop.f32.mrb[0].mxu0
      %v791 = vadd.f32 0.0, %v790
      %v792 = vpop.f32.mrb[0].mxu0
      %793 = vmatprep.mubr.f32.mxu0 0.0
      %794 = vmatmul.mubr.f32.gmra.mrb[0].mxu0 %v694
      %v795 = vpop.f32.mrb[0].mxu0
      %v796 = vadd.f32 0.0, %v795
      %v797 = vpop.f32.mrb[0].mxu0
      %798 = vmatprep.mubr.f32.mxu0 0.0
      %799 = vmatmul.mubr.f32.gmra.mrb[0].mxu0 %v697
      %v800 = vpop.f32.mrb[0].mxu0
      %v801 = vadd.f32 0.0, %v800
      %v802 = vpop.f32.mrb[0].mxu0
      %803 = vmatprep.mubr.f32.mxu0 0.0
      %804 = vmatmul.mubr.f32.gmra.mrb[0].mxu0 %v700
      %v805 = vpop.f32.mrb[0].mxu0
      %v806 = vadd.f32 0.0, %v805
      %v807 = vpop.f32.mrb[0].mxu0
      %808 = vmatprep.mubr.f32.mxu0 0.0
      %809 = vmatmul.mubr.f32.gmra.mrb[0].mxu0 %v703
      %v810 = vpop.f32.mrb[0].mxu0
      %v811 = vadd.f32 0.0, %v810
      %v812 = vpop.f32.mrb[0].mxu0
      %813 = vdwg.mxu0
      %vm814 = vcmask 523264
      %815 = vst.msk [vmem:[%s434] sm:$0xff] %vm814, %v776
      %816 = vst.msk [vmem:[%s434 + $0x8] sm:$0xff] %vm814, %v781
      %817 = vst.msk [vmem:[%s434 + $0x10] sm:$0xff] %vm814, %v786
      %818 = vst.msk [vmem:[%s434 + $0x18] sm:$0xff] %vm814, %v791
      %819 = vst.msk [vmem:[%s434 + $0x20] sm:$0xff] %vm814, %v796
      %820 = vst.msk [vmem:[%s434 + $0x28] sm:$0xff] %vm814, %v801
      %821 = vst.msk [vmem:[%s434 + $0x30] sm:$0xff] %vm814, %v806
      %822 = vst.msk [vmem:[%s434 + $0x38] sm:$0xff] %vm814, %v811
      %s823 = smul.u32 8, %s25
      %p824 = scmp.lt.s32.totalorder %s23, 1
      %s825 = scalar_select %p824, %s23, 1
      %p826 = scmp.lt.s32.totalorder %s24, 3
      %s827 = scalar_select %p826, %s24, 3
      %p828 = scmp.lt.s32.totalorder %s823, 7
      %s829 = scalar_select %p828, %s823, 7
      %p830 = scmp.lt.s32.totalorder %s26, 0
      %s831 = scalar_select %p830, %s26, 0
      %s832 = sadd.s32 %s831, %s829
      %s833 = smul.addr %s827, 8
      %s834 = sadd.s32 %s832, %s833
      %s835 = smul.addr %s825, 32
      %s836 = sadd.s32 %s834, %s835
      %s837 = smul.addr %s836, 8
      %s838 = scalar_lea.vmem %s6, %s837
      // Predicated region
      $region45: #{_hitnet_forward_impl.14} parent=43 // pred_check
        %p839 = pneg %p229
      $region46: #{_hitnet_forward_impl.14} parent=43 // pred_check_branch
        %841 = sbr.rel (%p839) target = $region48
      $region47: #{_hitnet_forward_impl.14} parent=43 // pred_region
        %s842 = smul.u32 8, %s25
      $region48: #{_hitnet_forward_impl.14} parent=43 // pred_fallthru
        _
    $region44: #{_hitnet_forward_impl.14} parent=5 // pred_fallthru
      _
    %p843 = scmp.le.s32.totalorder 2, %s12
    // Predicated region
    $region49: #{_hitnet_forward_impl.14} parent=5 // pred_check
      %p844 = pneg %p843
    $region50: #{_hitnet_forward_impl.14} parent=5 // pred_check_branch
      %846 = sbr.rel (%p844) target = $region52
    $region51: #{_hitnet_forward_impl.14} parent=5 // pred_region
      %s847 = ssub.s32 %s12, 2
      // Predicated region
      $region53: #{_hitnet_forward_impl.14} parent=51 // pred_check
        %p848 = pneg %p235
      $region54: #{_hitnet_forward_impl.14} parent=51 // pred_check_branch
        %850 = sbr.rel (%p848) target = $region56
      $region55: #{_hitnet_forward_impl.14} parent=51 // pred_region
        %s851 = smul.u32 8, %s29
        %p852 = scmp.lt.s32.totalorder %s27, 1
        %s853 = scalar_select %p852, %s27, 1
        %p854 = scmp.lt.s32.totalorder %s28, 3
        %s855 = scalar_select %p854, %s28, 3
        %p856 = scmp.lt.s32.totalorder %s851, 7
        %s857 = scalar_select %p856, %s851, 7
        %p858 = scmp.lt.s32.totalorder %s30, 0
        %s859 = scalar_select %p858, %s30, 0
        %s860 = sadd.s32 %s859, %s857
        %s861 = smul.addr %s855, 8
        %s862 = sadd.s32 %s860, %s861
        %s863 = smul.addr %s853, 32
        %s864 = sadd.s32 %s862, %s863
        %s865 = smul.addr %s864, 8
        %s866 = scalar_lea.vmem %s6, %s865
      $region56: #{_hitnet_forward_impl.14} parent=51 // pred_fallthru
        _
    $region52: #{_hitnet_forward_impl.14} parent=5 // pred_fallthru
      _
  $region6: #{_hitnet_forward_impl.14} parent=0 // loop_footer
    %s16 = sadd.s32 1, %s12
  $region7: #{_hitnet_forward_impl.14} parent=0 // loop_footer_branch
    %11 = sbr.rel target = $region3
  $region8: #{_hitnet_forward_impl.14} parent=0 // loop_exit
    _

// kernel: _hitnet_forward_impl.17
$region0: #{_hitnet_forward_impl.17}
  #allocation0 [shape = 'u32[]', space=smem, size = 0x4, offset = 0x4, fixed_abs, tag = 'smem constant byte address 0x4 - core index']
  #allocation1 [shape = 'u32[144,128]{1,0:T(1,128)}', space=vmem, size = 0x12000, scoped, tag = 'internal scratch']
  %s0 = inlined_call_operand.vmem [shape: f32[2,10,4,4], index: 0, kind: input, shape index: {}]
  %s1 = inlined_call_operand.vmem [shape: f32[4,64], index: 1, kind: input, shape index: {}]
  %s2 = inlined_call_operand.vmem [shape: f32[64,4], index: 2, kind: input, shape index: {}]
  %s3 = inlined_call_operand.vmem [shape: f32[2,10,64,64], index: 3, kind: output, shape index: {}]
  %s4 = sld [smem:[#allocation0]]
  $region45: #{_hitnet_forward_impl.17} parent=0
    _
  %s6 = ssub.s32 1, %s4
  %s7 = scalar_select 0, %s6, %s4
  loop: start=0, step=1, limit=22
  $region2: #{_hitnet_forward_impl.17} parent=0 // loop_pre_header
    _
  $region3: #{_hitnet_forward_impl.17} parent=0 // loop_header
    %s9 = sphi 0, %s13
    %p10 = scmp.ge.s32.totalorder %s9, 22
    %s16 = sphi 0, %s42
    %s17 = sphi 0, %s38
    %s18 = sphi 0, %s34
    %s19 = sphi 0, %s30
    %s20 = sphi 0, %s16
    %s21 = sphi 0, %s17
    %s22 = sphi 0, %s18
    %s23 = sphi 0, %s19
    %s24 = sphi 0, %s20
    %s25 = sphi 0, %s21
    %s26 = sphi 0, %s22
    %s27 = sphi 0, %s23
    %s47 = sphi 0, %s49
    %s50 = sphi 0, %s47
    %s51 = sphi 0, %s50
    %s67 = sphi 0, %s51
    %s73 = sphi 0, %s75
    %s76 = sphi 0, %s73
    %s77 = sphi 0, %s76
    %s93 = sphi 0, %s77
    %s99 = sphi 0, %s101
    %s102 = sphi 0, %s99
    %s103 = sphi 0, %s102
    %s119 = sphi 0, %s103
    %s131 = sphi 0, %s133
    %s134 = sphi 0, %s131
    %s135 = sphi 0, %s134
    %s151 = sphi 0, %s135
  $region4: #{_hitnet_forward_impl.17} parent=0 // loop_header_branch
    %12 = sbr.rel (%p10) target = $region8
  $region5: #{_hitnet_forward_impl.17} parent=0 // loop_body
    %s14 = ssub.s32 %s9, 1
    %s15 = ssub.s32 %s9, 2
    %s28 = sadd.s32 1, %s19
    %p29 = scmp.ge.s32.totalorder %s28, 1
    %s30 = scalar_select %p29, 0, %s28
    %s31 = sadd.s32 1, %s18
    %s32 = scalar_select %p29, %s31, %s18
    %p33 = scmp.ge.s32.totalorder %s32, 1
    %s34 = scalar_select %p33, 0, %s32
    %s35 = sadd.s32 1, %s17
    %s36 = scalar_select %p33, %s35, %s17
    %p37 = scmp.ge.s32.totalorder %s36, 10
    %s38 = scalar_select %p37, 0, %s36
    %s39 = sadd.s32 1, %s16
    %s40 = scalar_select %p37, %s39, %s16
    %p41 = scmp.ge.s32.totalorder %s40, 2
    %s42 = scalar_select %p41, 0, %s40
    %s43 = ssub.s32 %s16, %s42
    %s44 = ssub.s32 %s17, %s38
    %s45 = sor.u32 %s43, %s44
    %p46 = scmp.eq.s32.totalorder %s45, 0
    %s48 = sadd.s32 %s47, 1
    %s49 = scalar_select %p46, %s47, %s48
    %p52 = pneg %p46
    %p53 = scmp.eq.s32.totalorder %s9, 19
    %p54 = por %p52, %p53
    %p55 = scmp.ne.s32.totalorder %s47, %s50
    %p56 = scmp.eq.s32.totalorder %s9, 0
    %p57 = por %p55, %p56
    %p58 = scmp.ne.s32.totalorder %s47, %s50
    %p59 = scmp.eq.s32.totalorder %s14, 19
    %p60 = por %p58, %p59
    %p61 = scmp.ne.s32.totalorder %s50, %s51
    %p62 = scmp.eq.s32.totalorder %s14, 0
    %p63 = por %p61, %p62
    %p64 = scmp.ne.s32.totalorder %s50, %s51
    %p65 = scmp.eq.s32.totalorder %s15, 19
    %p66 = por %p64, %p65
    %p68 = scmp.ne.s32.totalorder %s51, %s67
    %p69 = scmp.eq.s32.totalorder %s15, 0
    %p70 = por %p68, %p69
    %s71 = ssub.s32 %s19, %s30
    %p72 = scmp.eq.s32.totalorder %s71, 0
    %s74 = sadd.s32 %s73, 1
    %s75 = scalar_select %p72, %s73, %s74
    %p78 = pneg %p72
    %p79 = scmp.eq.s32.totalorder %s9, 19
    %p80 = por %p78, %p79
    %p81 = scmp.ne.s32.totalorder %s73, %s76
    %p82 = scmp.eq.s32.totalorder %s9, 0
    %p83 = por %p81, %p82
    %p84 = scmp.ne.s32.totalorder %s73, %s76
    %p85 = scmp.eq.s32.totalorder %s14, 19
    %p86 = por %p84, %p85
    %p87 = scmp.ne.s32.totalorder %s76, %s77
    %p88 = scmp.eq.s32.totalorder %s14, 0
    %p89 = por %p87, %p88
    %p90 = scmp.ne.s32.totalorder %s76, %s77
    %p91 = scmp.eq.s32.totalorder %s15, 19
    %p92 = por %p90, %p91
    %p94 = scmp.ne.s32.totalorder %s77, %s93
    %p95 = scmp.eq.s32.totalorder %s15, 0
    %p96 = por %p94, %p95
    %s97 = ssub.s32 %s18, %s34
    %p98 = scmp.eq.s32.totalorder %s97, 0
    %s100 = sadd.s32 %s99, 1
    %s101 = scalar_select %p98, %s99, %s100
    %p104 = pneg %p98
    %p105 = scmp.eq.s32.totalorder %s9, 19
    %p106 = por %p104, %p105
    %p107 = scmp.ne.s32.totalorder %s99, %s102
    %p108 = scmp.eq.s32.totalorder %s9, 0
    %p109 = por %p107, %p108
    %p110 = scmp.ne.s32.totalorder %s99, %s102
    %p111 = scmp.eq.s32.totalorder %s14, 19
    %p112 = por %p110, %p111
    %p113 = scmp.ne.s32.totalorder %s102, %s103
    %p114 = scmp.eq.s32.totalorder %s14, 0
    %p115 = por %p113, %p114
    %p116 = scmp.ne.s32.totalorder %s102, %s103
    %p117 = scmp.eq.s32.totalorder %s15, 19
    %p118 = por %p116, %p117
    %p120 = scmp.ne.s32.totalorder %s103, %s119
    %p121 = scmp.eq.s32.totalorder %s15, 0
    %p122 = por %p120, %p121
    %s123 = ssub.s32 %s16, %s42
    %s124 = ssub.s32 %s17, %s38
    %s125 = sor.u32 %s123, %s124
    %s126 = ssub.s32 %s18, %s34
    %s127 = sor.u32 %s125, %s126
    %s128 = ssub.s32 %s19, %s30
    %s129 = sor.u32 %s127, %s128
    %p130 = scmp.eq.s32.totalorder %s129, 0
    %s132 = sadd.s32 %s131, 1
    %s133 = scalar_select %p130, %s131, %s132
    %p136 = pneg %p130
    %p137 = scmp.eq.s32.totalorder %s9, 19
    %p138 = por %p136, %p137
    %p139 = scmp.ne.s32.totalorder %s131, %s134
    %p140 = scmp.eq.s32.totalorder %s9, 0
    %p141 = por %p139, %p140
    %p142 = scmp.ne.s32.totalorder %s131, %s134
    %p143 = scmp.eq.s32.totalorder %s14, 19
    %p144 = por %p142, %p143
    %p145 = scmp.ne.s32.totalorder %s134, %s135
    %p146 = scmp.eq.s32.totalorder %s14, 0
    %p147 = por %p145, %p146
    %p148 = scmp.ne.s32.totalorder %s134, %s135
    %p149 = scmp.eq.s32.totalorder %s15, 19
    %p150 = por %p148, %p149
    %p152 = scmp.ne.s32.totalorder %s135, %s151
    %p153 = scmp.eq.s32.totalorder %s15, 0
    %p154 = por %p152, %p153
    %p155 = scmp.le.s32.totalorder 1, %s9
    %p156 = scmp.lt.s32.totalorder %s9, 21
    %p157 = pnand %p155, %p156
    %p158 = pneg %p157
    // Predicated region
    $region9: #{_hitnet_forward_impl.17} parent=5 // pred_check
      _
    $region10: #{_hitnet_forward_impl.17} parent=5 // pred_check_branch
      %160 = sbr.rel (%p157) target = $region12
    $region11: #{_hitnet_forward_impl.17} parent=5 // pred_region
      %s161 = ssub.s32 %s9, 1
      // Predicated region
      $region13: #{_hitnet_forward_impl.17} parent=11 // pred_check
        %p162 = pneg %p89
      $region14: #{_hitnet_forward_impl.17} parent=11 // pred_check_branch
        %164 = sbr.rel (%p162) target = $region16
      $region15: #{_hitnet_forward_impl.17} parent=11 // pred_region
        %p165 = scmp.lt.s32.totalorder %s23, 0
        %s166 = scalar_select %p165, %s23, 0
        %s167 = smul.addr %s166, 4
        %s168 = scalar_lea.vmem %s1, %s167
      $region16: #{_hitnet_forward_impl.17} parent=11 // pred_fallthru
        _
      // Predicated region
      $region17: #{_hitnet_forward_impl.17} parent=11 // pred_check
        %p169 = pneg %p115
      $region18: #{_hitnet_forward_impl.17} parent=11 // pred_check_branch
        %171 = sbr.rel (%p169) target = $region20
      $region19: #{_hitnet_forward_impl.17} parent=11 // pred_region
        %s172 = smul.u32 8, %s22
        %p173 = scmp.lt.s32.totalorder %s172, 7
        %s174 = scalar_select %p173, %s172, 7
        %s175 = smul.addr %s174, 8
        %s176 = scalar_lea.vmem %s2, %s175
        %s177 = smul.u32 8, %s22
      $region20: #{_hitnet_forward_impl.17} parent=11 // pred_fallthru
        _
    $region12: #{_hitnet_forward_impl.17} parent=5 // pred_fallthru
      _
    %p178 = scmp.lt.s32.totalorder %s9, 20
    // Predicated region
    $region21: #{_hitnet_forward_impl.17} parent=5 // pred_check
      %p179 = pneg %p178
    $region22: #{_hitnet_forward_impl.17} parent=5 // pred_check_branch
      %181 = sbr.rel (%p179) target = $region24
    $region23: #{_hitnet_forward_impl.17} parent=5 // pred_region
      // Predicated region
      $region25: #{_hitnet_forward_impl.17} parent=23 // pred_check
        %p182 = pneg %p57
      $region26: #{_hitnet_forward_impl.17} parent=23 // pred_check_branch
        %184 = sbr.rel (%p182) target = $region28
      $region27: #{_hitnet_forward_impl.17} parent=23 // pred_region
        %p185 = scmp.lt.s32.totalorder %s16, 1
        %s186 = scalar_select %p185, %s16, 1
        %p187 = scmp.lt.s32.totalorder %s17, 9
        %s188 = scalar_select %p187, %s17, 9
        %s189 = smul.addr %s186, 10
        %s190 = sadd.s32 %s188, %s189
        %s191 = smul.addr %s190, 4
        %s192 = scalar_lea.vmem %s0, %s191
      $region28: #{_hitnet_forward_impl.17} parent=23 // pred_fallthru
        _
    $region24: #{_hitnet_forward_impl.17} parent=5 // pred_fallthru
      _
    %p193 = scmp.le.s32.totalorder 1, %s9
    %p194 = scmp.lt.s32.totalorder %s9, 21
    %p195 = pnand %p193, %p194
    %p196 = pneg %p195
    // Predicated region
    $region29: #{_hitnet_forward_impl.17} parent=5 // pred_check
      _
    $region30: #{_hitnet_forward_impl.17} parent=5 // pred_check_branch
      %198 = sbr.rel (%p195) target = $region32
    $region31: #{_hitnet_forward_impl.17} parent=5 // pred_region
      %s199 = ssub.s32 %s9, 1
      %p200 = scmp.lt.s32.totalorder %s20, 1
      %s201 = scalar_select %p200, %s20, 1
      %p202 = scmp.lt.s32.totalorder %s21, 9
      %s203 = scalar_select %p202, %s21, 9
      %s204 = smul.addr %s201, 10
      %s205 = sadd.s32 %s203, %s204
      %s206 = smul.addr %s205, 4
      %s207 = scalar_lea.vmem %s0, %s206
      %p208 = pneg %p63
      %p209 = pneg %p60
      %p210 = scmp.lt.s32.totalorder %s23, 0
      %s211 = scalar_select %p210, %s23, 0
      %s212 = smul.addr %s211, 4
      %s213 = scalar_lea.vmem %s1, %s212
      %p214 = pneg %p89
      %p215 = pneg %p86
      %s216 = smul.u32 8, %s22
      %p217 = scmp.lt.s32.totalorder %s216, 7
      %s218 = scalar_select %p217, %s216, 7
      %s219 = smul.addr %s218, 8
      %s220 = scalar_lea.vmem %s2, %s219
      %p221 = pneg %p115
      %p222 = pneg %p112
      %p223 = pneg %p147
      %p224 = pneg %p144
      %s225 = smul.u32 8, %s22
      %p226 = scmp.lt.s32.totalorder %s20, 1
      %s227 = scalar_select %p226, %s20, 1
      %p228 = scmp.lt.s32.totalorder %s21, 9
      %s229 = scalar_select %p228, %s21, 9
      %p230 = scmp.lt.s32.totalorder %s225, 7
      %s231 = scalar_select %p230, %s225, 7
      %p232 = scmp.lt.s32.totalorder %s23, 0
      %s233 = scalar_select %p232, %s23, 0
      %s234 = sadd.s32 %s233, %s231
      %s235 = smul.addr %s229, 8
      %s236 = sadd.s32 %s234, %s235
      %s237 = smul.addr %s227, 80
      %s238 = sadd.s32 %s236, %s237
      %s239 = smul.addr %s238, 8
      %s240 = scalar_lea.vmem %s3, %s239
      %p241 = scmp.lt.s32.totalorder %s20, 1
      %s242 = scalar_select %p241, %s20, 1
      %p243 = scmp.lt.s32.totalorder %s21, 9
      %s244 = scalar_select %p243, %s21, 9
      %s245 = smul.addr %s242, 10
      %s246 = sadd.s32 %s244, %s245
      %s247 = smul.addr %s246, 4
      %s248 = scalar_lea.vmem %s0, %s247
      %p249 = scmp.lt.s32.totalorder %s23, 0
      %s250 = scalar_select %p249, %s23, 0
      %s251 = smul.addr %s250, 4
      %s252 = scalar_lea.vmem %s1, %s251
      %s253 = smul.u32 8, %s22
      %p254 = scmp.lt.s32.totalorder %s253, 7
      %s255 = scalar_select %p254, %s253, 7
      %s256 = smul.addr %s255, 8
      %s257 = scalar_lea.vmem %s2, %s256
      %s258 = smul.u32 8, %s22
      %s259 = smul.u32 8, %s22
      %p260 = scmp.lt.s32.totalorder %s20, 1
      %s261 = scalar_select %p260, %s20, 1
      %p262 = scmp.lt.s32.totalorder %s21, 9
      %s263 = scalar_select %p262, %s21, 9
      %p264 = scmp.lt.s32.totalorder %s259, 7
      %s265 = scalar_select %p264, %s259, 7
      %p266 = scmp.lt.s32.totalorder %s23, 0
      %s267 = scalar_select %p266, %s23, 0
      %s268 = sadd.s32 %s267, %s265
      %s269 = smul.addr %s263, 8
      %s270 = sadd.s32 %s268, %s269
      %s271 = smul.addr %s261, 80
      %s272 = sadd.s32 %s270, %s271
      %s273 = smul.addr %s272, 8
      %s274 = scalar_lea.vmem %s3, %s273
      %s275 = smul.u32 8, %s22
      %v276 = vld [vmem:[%s248] sm:$0xf]
      %v277 = vld [vmem:[%s252] sm:$0xf]
      %vm278 = vcmask 31744
      %v280 = vsel %vm278, %v276, 0
      %vm282 = vcmask 1043456
      %v284 = vsel %vm282, %v277, 0
      %286 = vmatprep.subr.mxu0 0.0
      %287 = vmatpush1.msra.mxu0 %v284
      %288 = vmatprep.subr.mxu0 0.0
      %289 = vmatpush1.msra.mxu0 0.0
      %290 = vmatprep.subr.mxu0 0.0
      %291 = vmatpush1.msra.mxu0 0.0
      %292 = vmatprep.subr.mxu0 0.0
      %293 = vmatpush1.msra.mxu0 0.0
      %294 = vmatprep.subr.mxu0 0.0
      %295 = vmatpush1.msra.mxu0 0.0
      %296 = vmatprep.subr.mxu0 0.0
      %297 = vmatpush1.msra.mxu0 0.0
      %298 = vmatprep.subr.mxu0 0.0
      %299 = vmatpush1.msra.mxu0 0.0
      %300 = vmatprep.subr.mxu0 0.0
      %301 = vmatpush1.msra.mxu0 0.0
      %302 = vmatprep.subr.mxu0 0.0
      %303 = vmatpush1.msra.mxu0 0.0
      %304 = vmatprep.subr.mxu0 0.0
      %305 = vmatpush1.msra.mxu0 0.0
      %306 = vmatprep.subr.mxu0 0.0
      %307 = vmatpush1.msra.mxu0 0.0
      %308 = vmatprep.subr.mxu0 0.0
      %309 = vmatpush1.msra.mxu0 0.0
      %310 = vmatprep.subr.mxu0 0.0
      %311 = vmatpush1.msra.mxu0 0.0
      %312 = vmatprep.subr.mxu0 0.0
      %313 = vmatpush1.msra.mxu0 0.0
      %314 = vmatprep.subr.mxu0 0.0
      %315 = vmatpush1.msra.mxu0 0.0
      %316 = vmatprep.subr.mxu0 0.0
      %317 = vmatpush1.msra.mxu0 0.0
      %318 = vmatprep.subr.mxu0 0.0
      %319 = vmatpush1.msra.mxu0 0.0
      %320 = vmatprep.subr.mxu0 0.0
      %321 = vmatpush1.msra.mxu0 0.0
      %322 = vmatprep.subr.mxu0 0.0
      %323 = vmatpush1.msra.mxu0 0.0
      %324 = vmatprep.subr.mxu0 0.0
      %325 = vmatpush1.msra.mxu0 0.0
      %326 = vmatprep.subr.mxu0 0.0
      %327 = vmatpush1.msra.mxu0 0.0
      %328 = vmatprep.subr.mxu0 0.0
      %329 = vmatpush1.msra.mxu0 0.0
      %330 = vmatprep.subr.mxu0 0.0
      %331 = vmatpush1.msra.mxu0 0.0
      %332 = vmatprep.subr.mxu0 0.0
      %333 = vmatpush1.msra.mxu0 0.0
      %334 = vmatprep.subr.mxu0 0.0
      %335 = vmatpush1.msra.mxu0 0.0
      %336 = vmatprep.subr.mxu0 0.0
      %337 = vmatpush1.msra.mxu0 0.0
      %338 = vmatprep.subr.mxu0 0.0
      %339 = vmatpush1.msra.mxu0 0.0
      %340 = vmatprep.subr.mxu0 0.0
      %341 = vmatpush1.msra.mxu0 0.0
      %342 = vmatprep.subr.mxu0 0.0
      %343 = vmatpush1.msra.mxu0 0.0
      %344 = vmatprep.subr.mxu0 0.0
      %345 = vmatpush1.msra.mxu0 0.0
      %346 = vmatprep.subr.mxu0 0.0
      %347 = vmatpush1.msra.mxu0 0.0
      %348 = vmatprep.subr.mxu0 0.0
      %349 = vmatpush1.msra.mxu0 0.0
      %350 = vmatprep.mubr.f32.mxu0 0.0
      %351 = vmatmul.mubr.f32.gmra.mrb[0].mxu0 %v280
      %v352 = vpop.f32.mrb[0].mxu0
      %v353 = vadd.f32 0.0, %v352
      %v354 = vpop.f32.mrb[0].mxu0
      %355 = vdwg.mxu0
      %v356 = vld [vmem:[%s257] sm:$0xff]
      %v357 = vld [vmem:[%s257 + $0x8] sm:$0xff]
      %v358 = vld [vmem:[%s257 + $0x10] sm:$0xff]
      %v359 = vld [vmem:[%s257 + $0x18] sm:$0xff]
      %v360 = vld [vmem:[%s257 + $0x20] sm:$0xff]
      %v361 = vld [vmem:[%s257 + $0x28] sm:$0xff]
      %v362 = vld [vmem:[%s257 + $0x30] sm:$0xff]
      %v363 = vld [vmem:[%s257 + $0x38] sm:$0xff]
      %v365 = vsel %vm278, %v356, 0
      %v368 = vsel %vm278, %v357, 0
      %v371 = vsel %vm278, %v358, 0
      %v374 = vsel %vm278, %v359, 0
      %v377 = vsel %vm278, %v360, 0
      %v380 = vsel %vm278, %v361, 0
      %v383 = vsel %vm278, %v362, 0
      %v386 = vsel %vm278, %v363, 0
      %v389 = vsel %vm282, %v353, 0
      %391 = vmatprep.subr.mxu0 0.0
      %392 = vmatpush1.msra.mxu0 %v389
      %393 = vmatprep.subr.mxu0 0.0
      %394 = vmatpush1.msra.mxu0 0.0
      %395 = vmatprep.subr.mxu0 0.0
      %396 = vmatpush1.msra.mxu0 0.0
      %397 = vmatprep.subr.mxu0 0.0
      %398 = vmatpush1.msra.mxu0 0.0
      %399 = vmatprep.subr.mxu0 0.0
      %400 = vmatpush1.msra.mxu0 0.0
      %401 = vmatprep.subr.mxu0 0.0
      %402 = vmatpush1.msra.mxu0 0.0
      %403 = vmatprep.subr.mxu0 0.0
      %404 = vmatpush1.msra.mxu0 0.0
      %405 = vmatprep.subr.mxu0 0.0
      %406 = vmatpush1.msra.mxu0 0.0
      %407 = vmatprep.subr.mxu0 0.0
      %408 = vmatpush1.msra.mxu0 0.0
      %409 = vmatprep.subr.mxu0 0.0
      %410 = vmatpush1.msra.mxu0 0.0
      %411 = vmatprep.subr.mxu0 0.0
      %412 = vmatpush1.msra.mxu0 0.0
      %413 = vmatprep.subr.mxu0 0.0
      %414 = vmatpush1.msra.mxu0 0.0
      %415 = vmatprep.subr.mxu0 0.0
      %416 = vmatpush1.msra.mxu0 0.0
      %417 = vmatprep.subr.mxu0 0.0
      %418 = vmatpush1.msra.mxu0 0.0
      %419 = vmatprep.subr.mxu0 0.0
      %420 = vmatpush1.msra.mxu0 0.0
      %421 = vmatprep.subr.mxu0 0.0
      %422 = vmatpush1.msra.mxu0 0.0
      %423 = vmatprep.subr.mxu0 0.0
      %424 = vmatpush1.msra.mxu0 0.0
      %425 = vmatprep.subr.mxu0 0.0
      %426 = vmatpush1.msra.mxu0 0.0
      %427 = vmatprep.subr.mxu0 0.0
      %428 = vmatpush1.msra.mxu0 0.0
      %429 = vmatprep.subr.mxu0 0.0
      %430 = vmatpush1.msra.mxu0 0.0
      %431 = vmatprep.subr.mxu0 0.0
      %432 = vmatpush1.msra.mxu0 0.0
      %433 = vmatprep.subr.mxu0 0.0
      %434 = vmatpush1.msra.mxu0 0.0
      %435 = vmatprep.subr.mxu0 0.0
      %436 = vmatpush1.msra.mxu0 0.0
      %437 = vmatprep.subr.mxu0 0.0
      %438 = vmatpush1.msra.mxu0 0.0
      %439 = vmatprep.subr.mxu0 0.0
      %440 = vmatpush1.msra.mxu0 0.0
      %441 = vmatprep.subr.mxu0 0.0
      %442 = vmatpush1.msra.mxu0 0.0
      %443 = vmatprep.subr.mxu0 0.0
      %444 = vmatpush1.msra.mxu0 0.0
      %445 = vmatprep.subr.mxu0 0.0
      %446 = vmatpush1.msra.mxu0 0.0
      %447 = vmatprep.subr.mxu0 0.0
      %448 = vmatpush1.msra.mxu0 0.0
      %449 = vmatprep.subr.mxu0 0.0
      %450 = vmatpush1.msra.mxu0 0.0
      %451 = vmatprep.subr.mxu0 0.0
      %452 = vmatpush1.msra.mxu0 0.0
      %453 = vmatprep.subr.mxu0 0.0
      %454 = vmatpush1.msra.mxu0 0.0
      %455 = vmatprep.mubr.f32.mxu0 0.0
      %456 = vmatmul.mubr.f32.gmra.mrb[0].mxu0 %v365
      %v457 = vpop.f32.mrb[0].mxu0
      %v458 = vadd.f32 0.0, %v457
      %v459 = vpop.f32.mrb[0].mxu0
      %460 = vmatprep.mubr.f32.mxu0 0.0
      %461 = vmatmul.mubr.f32.gmra.mrb[0].mxu0 %v368
      %v462 = vpop.f32.mrb[0].mxu0
      %v463 = vadd.f32 0.0, %v462
      %v464 = vpop.f32.mrb[0].mxu0
      %465 = vmatprep.mubr.f32.mxu0 0.0
      %466 = vmatmul.mubr.f32.gmra.mrb[0].mxu0 %v371
      %v467 = vpop.f32.mrb[0].mxu0
      %v468 = vadd.f32 0.0, %v467
      %v469 = vpop.f32.mrb[0].mxu0
      %470 = vmatprep.mubr.f32.mxu0 0.0
      %471 = vmatmul.mubr.f32.gmra.mrb[0].mxu0 %v374
      %v472 = vpop.f32.mrb[0].mxu0
      %v473 = vadd.f32 0.0, %v472
      %v474 = vpop.f32.mrb[0].mxu0
      %475 = vmatprep.mubr.f32.mxu0 0.0
      %476 = vmatmul.mubr.f32.gmra.mrb[0].mxu0 %v377
      %v477 = vpop.f32.mrb[0].mxu0
      %v478 = vadd.f32 0.0, %v477
      %v479 = vpop.f32.mrb[0].mxu0
      %480 = vmatprep.mubr.f32.mxu0 0.0
      %481 = vmatmul.mubr.f32.gmra.mrb[0].mxu0 %v380
      %v482 = vpop.f32.mrb[0].mxu0
      %v483 = vadd.f32 0.0, %v482
      %v484 = vpop.f32.mrb[0].mxu0
      %485 = vmatprep.mubr.f32.mxu0 0.0
      %486 = vmatmul.mubr.f32.gmra.mrb[0].mxu0 %v383
      %v487 = vpop.f32.mrb[0].mxu0
      %v488 = vadd.f32 0.0, %v487
      %v489 = vpop.f32.mrb[0].mxu0
      %490 = vmatprep.mubr.f32.mxu0 0.0
      %491 = vmatmul.mubr.f32.gmra.mrb[0].mxu0 %v386
      %v492 = vpop.f32.mrb[0].mxu0
      %v493 = vadd.f32 0.0, %v492
      %v494 = vpop.f32.mrb[0].mxu0
      %495 = vdwg.mxu0
      %vm496 = vcmask 523264
      %497 = vst.msk [vmem:[%s274] sm:$0xff] %vm496, %v458
      %498 = vst.msk [vmem:[%s274 + $0x8] sm:$0xff] %vm496, %v463
      %499 = vst.msk [vmem:[%s274 + $0x10] sm:$0xff] %vm496, %v468
      %500 = vst.msk [vmem:[%s274 + $0x18] sm:$0xff] %vm496, %v473
      %501 = vst.msk [vmem:[%s274 + $0x20] sm:$0xff] %vm496, %v478
      %502 = vst.msk [vmem:[%s274 + $0x28] sm:$0xff] %vm496, %v483
      %503 = vst.msk [vmem:[%s274 + $0x30] sm:$0xff] %vm496, %v488
      %504 = vst.msk [vmem:[%s274 + $0x38] sm:$0xff] %vm496, %v493
      %s505 = smul.u32 8, %s22
      %p506 = scmp.lt.s32.totalorder %s20, 1
      %s507 = scalar_select %p506, %s20, 1
      %p508 = scmp.lt.s32.totalorder %s21, 9
      %s509 = scalar_select %p508, %s21, 9
      %p510 = scmp.lt.s32.totalorder %s505, 7
      %s511 = scalar_select %p510, %s505, 7
      %p512 = scmp.lt.s32.totalorder %s23, 0
      %s513 = scalar_select %p512, %s23, 0
      %s514 = sadd.s32 %s513, %s511
      %s515 = smul.addr %s509, 8
      %s516 = sadd.s32 %s514, %s515
      %s517 = smul.addr %s507, 80
      %s518 = sadd.s32 %s516, %s517
      %s519 = smul.addr %s518, 8
      %s520 = scalar_lea.vmem %s3, %s519
      // Predicated region
      $region33: #{_hitnet_forward_impl.17} parent=31 // pred_check
        %p521 = pneg %p144
      $region34: #{_hitnet_forward_impl.17} parent=31 // pred_check_branch
        %523 = sbr.rel (%p521) target = $region36
      $region35: #{_hitnet_forward_impl.17} parent=31 // pred_region
        %s524 = smul.u32 8, %s22
      $region36: #{_hitnet_forward_impl.17} parent=31 // pred_fallthru
        _
    $region32: #{_hitnet_forward_impl.17} parent=5 // pred_fallthru
      _
    %p525 = scmp.le.s32.totalorder 2, %s9
    // Predicated region
    $region37: #{_hitnet_forward_impl.17} parent=5 // pred_check
      %p526 = pneg %p525
    $region38: #{_hitnet_forward_impl.17} parent=5 // pred_check_branch
      %528 = sbr.rel (%p526) target = $region40
    $region39: #{_hitnet_forward_impl.17} parent=5 // pred_region
      %s529 = ssub.s32 %s9, 2
      // Predicated region
      $region41: #{_hitnet_forward_impl.17} parent=39 // pred_check
        %p530 = pneg %p150
      $region42: #{_hitnet_forward_impl.17} parent=39 // pred_check_branch
        %532 = sbr.rel (%p530) target = $region44
      $region43: #{_hitnet_forward_impl.17} parent=39 // pred_region
        %s533 = smul.u32 8, %s26
        %p534 = scmp.lt.s32.totalorder %s24, 1
        %s535 = scalar_select %p534, %s24, 1
        %p536 = scmp.lt.s32.totalorder %s25, 9
        %s537 = scalar_select %p536, %s25, 9
        %p538 = scmp.lt.s32.totalorder %s533, 7
        %s539 = scalar_select %p538, %s533, 7
        %p540 = scmp.lt.s32.totalorder %s27, 0
        %s541 = scalar_select %p540, %s27, 0
        %s542 = sadd.s32 %s541, %s539
        %s543 = smul.addr %s537, 8
        %s544 = sadd.s32 %s542, %s543
        %s545 = smul.addr %s535, 80
        %s546 = sadd.s32 %s544, %s545
        %s547 = smul.addr %s546, 8
        %s548 = scalar_lea.vmem %s3, %s547
      $region44: #{_hitnet_forward_impl.17} parent=39 // pred_fallthru
        _
    $region40: #{_hitnet_forward_impl.17} parent=5 // pred_fallthru
      _
  $region6: #{_hitnet_forward_impl.17} parent=0 // loop_footer
    %s13 = sadd.s32 1, %s9
  $region7: #{_hitnet_forward_impl.17} parent=0 // loop_footer_branch
    %8 = sbr.rel target = $region3
  $region8: #{_hitnet_forward_impl.17} parent=0 // loop_exit
    _

// kernel: _hitnet_forward_impl.22
$region0: #{_hitnet_forward_impl.22}
  #allocation0 [shape = 'u32[]', space=smem, size = 0x4, offset = 0x4, fixed_abs, tag = 'smem constant byte address 0x4 - core index']
  #allocation1 [shape = 'u32[144,128]{1,0:T(1,128)}', space=vmem, size = 0x12000, scoped, tag = 'internal scratch']
  %s0 = inlined_call_operand.vmem [shape: f32[2,4,32,32], index: 0, kind: input, shape index: {}]
  %s1 = inlined_call_operand.vmem [shape: f32[2,4,32,32], index: 1, kind: input, shape index: {}]
  %s2 = inlined_call_operand.vmem [shape: f32[2,4,32,32], index: 2, kind: input, shape index: {}]
  %s3 = inlined_call_operand.vmem [shape: f32[32,64], index: 3, kind: input, shape index: {}]
  %s4 = inlined_call_operand.vmem [shape: f32[32,64], index: 4, kind: input, shape index: {}]
  %s5 = inlined_call_operand.vmem [shape: f32[64,64], index: 5, kind: input, shape index: {}]
  %s6 = inlined_call_operand.vmem [shape: f32[2,4,64,64], index: 6, kind: output, shape index: {}]
  %s7 = sld [smem:[#allocation0]]
  $region57: #{_hitnet_forward_impl.22} parent=0
    _
  %s9 = ssub.s32 1, %s7
  %s10 = scalar_select 0, %s9, %s7
  loop: start=0, step=1, limit=10
  $region2: #{_hitnet_forward_impl.22} parent=0 // loop_pre_header
    _
  $region3: #{_hitnet_forward_impl.22} parent=0 // loop_header
    %s12 = sphi 0, %s16
    %p13 = scmp.ge.s32.totalorder %s12, 10
    %s19 = sphi 0, %s45
    %s20 = sphi 0, %s41
    %s21 = sphi 0, %s37
    %s22 = sphi 0, %s33
    %s23 = sphi 0, %s19
    %s24 = sphi 0, %s20
    %s25 = sphi 0, %s21
    %s26 = sphi 0, %s22
    %s27 = sphi 0, %s23
    %s28 = sphi 0, %s24
    %s29 = sphi 0, %s25
    %s30 = sphi 0, %s26
    %s50 = sphi 0, %s52
    %s53 = sphi 0, %s50
    %s54 = sphi 0, %s53
    %s70 = sphi 0, %s54
    %s78 = sphi 0, %s80
    %s81 = sphi 0, %s78
    %s82 = sphi 0, %s81
    %s98 = sphi 0, %s82
    %s106 = sphi 0, %s108
    %s109 = sphi 0, %s106
    %s110 = sphi 0, %s109
    %s126 = sphi 0, %s110
    %s132 = sphi 0, %s134
    %s135 = sphi 0, %s132
    %s136 = sphi 0, %s135
    %s152 = sphi 0, %s136
    %s158 = sphi 0, %s160
    %s161 = sphi 0, %s158
    %s162 = sphi 0, %s161
    %s178 = sphi 0, %s162
    %s184 = sphi 0, %s186
    %s187 = sphi 0, %s184
    %s188 = sphi 0, %s187
    %s204 = sphi 0, %s188
    %s216 = sphi 0, %s218
    %s219 = sphi 0, %s216
    %s220 = sphi 0, %s219
    %s236 = sphi 0, %s220
  $region4: #{_hitnet_forward_impl.22} parent=0 // loop_header_branch
    %15 = sbr.rel (%p13) target = $region8
  $region5: #{_hitnet_forward_impl.22} parent=0 // loop_body
    %s17 = ssub.s32 %s12, 1
    %s18 = ssub.s32 %s12, 2
    %s31 = sadd.s32 1, %s22
    %p32 = scmp.ge.s32.totalorder %s31, 1
    %s33 = scalar_select %p32, 0, %s31
    %s34 = sadd.s32 1, %s21
    %s35 = scalar_select %p32, %s34, %s21
    %p36 = scmp.ge.s32.totalorder %s35, 1
    %s37 = scalar_select %p36, 0, %s35
    %s38 = sadd.s32 1, %s20
    %s39 = scalar_select %p36, %s38, %s20
    %p40 = scmp.ge.s32.totalorder %s39, 4
    %s41 = scalar_select %p40, 0, %s39
    %s42 = sadd.s32 1, %s19
    %s43 = scalar_select %p40, %s42, %s19
    %p44 = scmp.ge.s32.totalorder %s43, 2
    %s45 = scalar_select %p44, 0, %s43
    %s46 = ssub.s32 %s19, %s45
    %s47 = ssub.s32 %s20, %s41
    %s48 = sor.u32 %s46, %s47
    %p49 = scmp.eq.s32.totalorder %s48, 0
    %s51 = sadd.s32 %s50, 1
    %s52 = scalar_select %p49, %s50, %s51
    %p55 = pneg %p49
    %p56 = scmp.eq.s32.totalorder %s12, 7
    %p57 = por %p55, %p56
    %p58 = scmp.ne.s32.totalorder %s50, %s53
    %p59 = scmp.eq.s32.totalorder %s12, 0
    %p60 = por %p58, %p59
    %p61 = scmp.ne.s32.totalorder %s50, %s53
    %p62 = scmp.eq.s32.totalorder %s17, 7
    %p63 = por %p61, %p62
    %p64 = scmp.ne.s32.totalorder %s53, %s54
    %p65 = scmp.eq.s32.totalorder %s17, 0
    %p66 = por %p64, %p65
    %p67 = scmp.ne.s32.totalorder %s53, %s54
    %p68 = scmp.eq.s32.totalorder %s18, 7
    %p69 = por %p67, %p68
    %p71 = scmp.ne.s32.totalorder %s54, %s70
    %p72 = scmp.eq.s32.totalorder %s18, 0
    %p73 = por %p71, %p72
    %s74 = ssub.s32 %s19, %s45
    %s75 = ssub.s32 %s20, %s41
    %s76 = sor.u32 %s74, %s75
    %p77 = scmp.eq.s32.totalorder %s76, 0
    %s79 = sadd.s32 %s78, 1
    %s80 = scalar_select %p77, %s78, %s79
    %p83 = pneg %p77
    %p84 = scmp.eq.s32.totalorder %s12, 7
    %p85 = por %p83, %p84
    %p86 = scmp.ne.s32.totalorder %s78, %s81
    %p87 = scmp.eq.s32.totalorder %s12, 0
    %p88 = por %p86, %p87
    %p89 = scmp.ne.s32.totalorder %s78, %s81
    %p90 = scmp.eq.s32.totalorder %s17, 7
    %p91 = por %p89, %p90
    %p92 = scmp.ne.s32.totalorder %s81, %s82
    %p93 = scmp.eq.s32.totalorder %s17, 0
    %p94 = por %p92, %p93
    %p95 = scmp.ne.s32.totalorder %s81, %s82
    %p96 = scmp.eq.s32.totalorder %s18, 7
    %p97 = por %p95, %p96
    %p99 = scmp.ne.s32.totalorder %s82, %s98
    %p100 = scmp.eq.s32.totalorder %s18, 0
    %p101 = por %p99, %p100
    %s102 = ssub.s32 %s19, %s45
    %s103 = ssub.s32 %s20, %s41
    %s104 = sor.u32 %s102, %s103
    %p105 = scmp.eq.s32.totalorder %s104, 0
    %s107 = sadd.s32 %s106, 1
    %s108 = scalar_select %p105, %s106, %s107
    %p111 = pneg %p105
    %p112 = scmp.eq.s32.totalorder %s12, 7
    %p113 = por %p111, %p112
    %p114 = scmp.ne.s32.totalorder %s106, %s109
    %p115 = scmp.eq.s32.totalorder %s12, 0
    %p116 = por %p114, %p115
    %p117 = scmp.ne.s32.totalorder %s106, %s109
    %p118 = scmp.eq.s32.totalorder %s17, 7
    %p119 = por %p117, %p118
    %p120 = scmp.ne.s32.totalorder %s109, %s110
    %p121 = scmp.eq.s32.totalorder %s17, 0
    %p122 = por %p120, %p121
    %p123 = scmp.ne.s32.totalorder %s109, %s110
    %p124 = scmp.eq.s32.totalorder %s18, 7
    %p125 = por %p123, %p124
    %p127 = scmp.ne.s32.totalorder %s110, %s126
    %p128 = scmp.eq.s32.totalorder %s18, 0
    %p129 = por %p127, %p128
    %s130 = ssub.s32 %s22, %s33
    %p131 = scmp.eq.s32.totalorder %s130, 0
    %s133 = sadd.s32 %s132, 1
    %s134 = scalar_select %p131, %s132, %s133
    %p137 = pneg %p131
    %p138 = scmp.eq.s32.totalorder %s12, 7
    %p139 = por %p137, %p138
    %p140 = scmp.ne.s32.totalorder %s132, %s135
    %p141 = scmp.eq.s32.totalorder %s12, 0
    %p142 = por %p140, %p141
    %p143 = scmp.ne.s32.totalorder %s132, %s135
    %p144 = scmp.eq.s32.totalorder %s17, 7
    %p145 = por %p143, %p144
    %p146 = scmp.ne.s32.totalorder %s135, %s136
    %p147 = scmp.eq.s32.totalorder %s17, 0
    %p148 = por %p146, %p147
    %p149 = scmp.ne.s32.totalorder %s135, %s136
    %p150 = scmp.eq.s32.totalorder %s18, 7
    %p151 = por %p149, %p150
    %p153 = scmp.ne.s32.totalorder %s136, %s152
    %p154 = scmp.eq.s32.totalorder %s18, 0
    %p155 = por %p153, %p154
    %s156 = ssub.s32 %s22, %s33
    %p157 = scmp.eq.s32.totalorder %s156, 0
    %s159 = sadd.s32 %s158, 1
    %s160 = scalar_select %p157, %s158, %s159
    %p163 = pneg %p157
    %p164 = scmp.eq.s32.totalorder %s12, 7
    %p165 = por %p163, %p164
    %p166 = scmp.ne.s32.totalorder %s158, %s161
    %p167 = scmp.eq.s32.totalorder %s12, 0
    %p168 = por %p166, %p167
    %p169 = scmp.ne.s32.totalorder %s158, %s161
    %p170 = scmp.eq.s32.totalorder %s17, 7
    %p171 = por %p169, %p170
    %p172 = scmp.ne.s32.totalorder %s161, %s162
    %p173 = scmp.eq.s32.totalorder %s17, 0
    %p174 = por %p172, %p173
    %p175 = scmp.ne.s32.totalorder %s161, %s162
    %p176 = scmp.eq.s32.totalorder %s18, 7
    %p177 = por %p175, %p176
    %p179 = scmp.ne.s32.totalorder %s162, %s178
    %p180 = scmp.eq.s32.totalorder %s18, 0
    %p181 = por %p179, %p180
    %s182 = ssub.s32 %s21, %s37
    %p183 = scmp.eq.s32.totalorder %s182, 0
    %s185 = sadd.s32 %s184, 1
    %s186 = scalar_select %p183, %s184, %s185
    %p189 = pneg %p183
    %p190 = scmp.eq.s32.totalorder %s12, 7
    %p191 = por %p189, %p190
    %p192 = scmp.ne.s32.totalorder %s184, %s187
    %p193 = scmp.eq.s32.totalorder %s12, 0
    %p194 = por %p192, %p193
    %p195 = scmp.ne.s32.totalorder %s184, %s187
    %p196 = scmp.eq.s32.totalorder %s17, 7
    %p197 = por %p195, %p196
    %p198 = scmp.ne.s32.totalorder %s187, %s188
    %p199 = scmp.eq.s32.totalorder %s17, 0
    %p200 = por %p198, %p199
    %p201 = scmp.ne.s32.totalorder %s187, %s188
    %p202 = scmp.eq.s32.totalorder %s18, 7
    %p203 = por %p201, %p202
    %p205 = scmp.ne.s32.totalorder %s188, %s204
    %p206 = scmp.eq.s32.totalorder %s18, 0
    %p207 = por %p205, %p206
    %s208 = ssub.s32 %s19, %s45
    %s209 = ssub.s32 %s20, %s41
    %s210 = sor.u32 %s208, %s209
    %s211 = ssub.s32 %s21, %s37
    %s212 = sor.u32 %s210, %s211
    %s213 = ssub.s32 %s22, %s33
    %s214 = sor.u32 %s212, %s213
    %p215 = scmp.eq.s32.totalorder %s214, 0
    %s217 = sadd.s32 %s216, 1
    %s218 = scalar_select %p215, %s216, %s217
    %p221 = pneg %p215
    %p222 = scmp.eq.s32.totalorder %s12, 7
    %p223 = por %p221, %p222
    %p224 = scmp.ne.s32.totalorder %s216, %s219
    %p225 = scmp.eq.s32.totalorder %s12, 0
    %p226 = por %p224, %p225
    %p227 = scmp.ne.s32.totalorder %s216, %s219
    %p228 = scmp.eq.s32.totalorder %s17, 7
    %p229 = por %p227, %p228
    %p230 = scmp.ne.s32.totalorder %s219, %s220
    %p231 = scmp.eq.s32.totalorder %s17, 0
    %p232 = por %p230, %p231
    %p233 = scmp.ne.s32.totalorder %s219, %s220
    %p234 = scmp.eq.s32.totalorder %s18, 7
    %p235 = por %p233, %p234
    %p237 = scmp.ne.s32.totalorder %s220, %s236
    %p238 = scmp.eq.s32.totalorder %s18, 0
    %p239 = por %p237, %p238
    %p240 = scmp.le.s32.totalorder 1, %s12
    %p241 = scmp.lt.s32.totalorder %s12, 9
    %p242 = pnand %p240, %p241
    %p243 = pneg %p242
    // Predicated region
    $region9: #{_hitnet_forward_impl.22} parent=5 // pred_check
      _
    $region10: #{_hitnet_forward_impl.22} parent=5 // pred_check_branch
      %245 = sbr.rel (%p242) target = $region12
    $region11: #{_hitnet_forward_impl.22} parent=5 // pred_region
      %s246 = ssub.s32 %s12, 1
      // Predicated region
      $region13: #{_hitnet_forward_impl.22} parent=11 // pred_check
        %p247 = pneg %p148
      $region14: #{_hitnet_forward_impl.22} parent=11 // pred_check_branch
        %249 = sbr.rel (%p247) target = $region16
      $region15: #{_hitnet_forward_impl.22} parent=11 // pred_region
        %p250 = scmp.lt.s32.totalorder %s26, 0
        %s251 = scalar_select %p250, %s26, 0
        %s252 = smul.addr %s251, 8
        %s253 = scalar_lea.vmem %s3, %s252
      $region16: #{_hitnet_forward_impl.22} parent=11 // pred_fallthru
        _
      // Predicated region
      $region17: #{_hitnet_forward_impl.22} parent=11 // pred_check
        %p254 = pneg %p174
      $region18: #{_hitnet_forward_impl.22} parent=11 // pred_check_branch
        %256 = sbr.rel (%p254) target = $region20
      $region19: #{_hitnet_forward_impl.22} parent=11 // pred_region
        %p257 = scmp.lt.s32.totalorder %s26, 0
        %s258 = scalar_select %p257, %s26, 0
        %s259 = smul.addr %s258, 8
        %s260 = scalar_lea.vmem %s4, %s259
      $region20: #{_hitnet_forward_impl.22} parent=11 // pred_fallthru
        _
      // Predicated region
      $region21: #{_hitnet_forward_impl.22} parent=11 // pred_check
        %p261 = pneg %p200
      $region22: #{_hitnet_forward_impl.22} parent=11 // pred_check_branch
        %263 = sbr.rel (%p261) target = $region24
      $region23: #{_hitnet_forward_impl.22} parent=11 // pred_region
        %s264 = smul.u32 8, %s25
        %p265 = scmp.lt.s32.totalorder %s264, 7
        %s266 = scalar_select %p265, %s264, 7
        %s267 = smul.addr %s266, 8
        %s268 = scalar_lea.vmem %s5, %s267
        %s269 = smul.u32 8, %s25
      $region24: #{_hitnet_forward_impl.22} parent=11 // pred_fallthru
        _
    $region12: #{_hitnet_forward_impl.22} parent=5 // pred_fallthru
      _
    %p270 = scmp.lt.s32.totalorder %s12, 8
    // Predicated region
    $region25: #{_hitnet_forward_impl.22} parent=5 // pred_check
      %p271 = pneg %p270
    $region26: #{_hitnet_forward_impl.22} parent=5 // pred_check_branch
      %273 = sbr.rel (%p271) target = $region28
    $region27: #{_hitnet_forward_impl.22} parent=5 // pred_region
      // Predicated region
      $region29: #{_hitnet_forward_impl.22} parent=27 // pred_check
        %p274 = pneg %p60
      $region30: #{_hitnet_forward_impl.22} parent=27 // pred_check_branch
        %276 = sbr.rel (%p274) target = $region32
      $region31: #{_hitnet_forward_impl.22} parent=27 // pred_region
        %p277 = scmp.lt.s32.totalorder %s19, 1
        %s278 = scalar_select %p277, %s19, 1
        %p279 = scmp.lt.s32.totalorder %s20, 3
        %s280 = scalar_select %p279, %s20, 3
        %s281 = smul.addr %s280, 4
        %s282 = smul.addr %s278, 16
        %s283 = sadd.s32 %s281, %s282
        %s284 = smul.addr %s283, 8
        %s285 = scalar_lea.vmem %s0, %s284
      $region32: #{_hitnet_forward_impl.22} parent=27 // pred_fallthru
        _
      // Predicated region
      $region33: #{_hitnet_forward_impl.22} parent=27 // pred_check
        %p286 = pneg %p88
      $region34: #{_hitnet_forward_impl.22} parent=27 // pred_check_branch
        %288 = sbr.rel (%p286) target = $region36
      $region35: #{_hitnet_forward_impl.22} parent=27 // pred_region
        %p289 = scmp.lt.s32.totalorder %s19, 1
        %s290 = scalar_select %p289, %s19, 1
        %p291 = scmp.lt.s32.totalorder %s20, 3
        %s292 = scalar_select %p291, %s20, 3
        %s293 = smul.addr %s292, 4
        %s294 = smul.addr %s290, 16
        %s295 = sadd.s32 %s293, %s294
        %s296 = smul.addr %s295, 8
        %s297 = scalar_lea.vmem %s1, %s296
      $region36: #{_hitnet_forward_impl.22} parent=27 // pred_fallthru
        _
      // Predicated region
      $region37: #{_hitnet_forward_impl.22} parent=27 // pred_check
        %p298 = pneg %p116
      $region38: #{_hitnet_forward_impl.22} parent=27 // pred_check_branch
        %300 = sbr.rel (%p298) target = $region40
      $region39: #{_hitnet_forward_impl.22} parent=27 // pred_region
        %p301 = scmp.lt.s32.totalorder %s19, 1
        %s302 = scalar_select %p301, %s19, 1
        %p303 = scmp.lt.s32.totalorder %s20, 3
        %s304 = scalar_select %p303, %s20, 3
        %s305 = smul.addr %s304, 4
        %s306 = smul.addr %s302, 16
        %s307 = sadd.s32 %s305, %s306
        %s308 = smul.addr %s307, 8
        %s309 = scalar_lea.vmem %s2, %s308
      $region40: #{_hitnet_forward_impl.22} parent=27 // pred_fallthru
        _
    $region28: #{_hitnet_forward_impl.22} parent=5 // pred_fallthru
      _
    %p310 = scmp.le.s32.totalorder 1, %s12
    %p311 = scmp.lt.s32.totalorder %s12, 9
    %p312 = pnand %p310, %p311
    %p313 = pneg %p312
    // Predicated region
    $region41: #{_hitnet_forward_impl.22} parent=5 // pred_check
      _
    $region42: #{_hitnet_forward_impl.22} parent=5 // pred_check_branch
      %315 = sbr.rel (%p312) target = $region44
    $region43: #{_hitnet_forward_impl.22} parent=5 // pred_region
      %s316 = ssub.s32 %s12, 1
      %p317 = scmp.lt.s32.totalorder %s23, 1
      %s318 = scalar_select %p317, %s23, 1
      %p319 = scmp.lt.s32.totalorder %s24, 3
      %s320 = scalar_select %p319, %s24, 3
      %s321 = smul.addr %s320, 4
      %s322 = smul.addr %s318, 16
      %s323 = sadd.s32 %s321, %s322
      %s324 = smul.addr %s323, 8
      %s325 = scalar_lea.vmem %s0, %s324
      %p326 = pneg %p66
      %p327 = pneg %p63
      %p328 = scmp.lt.s32.totalorder %s23, 1
      %s329 = scalar_select %p328, %s23, 1
      %p330 = scmp.lt.s32.totalorder %s24, 3
      %s331 = scalar_select %p330, %s24, 3
      %s332 = smul.addr %s331, 4
      %s333 = smul.addr %s329, 16
      %s334 = sadd.s32 %s332, %s333
      %s335 = smul.addr %s334, 8
      %s336 = scalar_lea.vmem %s1, %s335
      %p337 = pneg %p94
      %p338 = pneg %p91
      %p339 = scmp.lt.s32.totalorder %s23, 1
      %s340 = scalar_select %p339, %s23, 1
      %p341 = scmp.lt.s32.totalorder %s24, 3
      %s342 = scalar_select %p341, %s24, 3
      %s343 = smul.addr %s342, 4
      %s344 = smul.addr %s340, 16
      %s345 = sadd.s32 %s343, %s344
      %s346 = smul.addr %s345, 8
      %s347 = scalar_lea.vmem %s2, %s346
      %p348 = pneg %p122
      %p349 = pneg %p119
      %p350 = scmp.lt.s32.totalorder %s26, 0
      %s351 = scalar_select %p350, %s26, 0
      %s352 = smul.addr %s351, 8
      %s353 = scalar_lea.vmem %s3, %s352
      %p354 = pneg %p148
      %p355 = pneg %p145
      %p356 = scmp.lt.s32.totalorder %s26, 0
      %s357 = scalar_select %p356, %s26, 0
      %s358 = smul.addr %s357, 8
      %s359 = scalar_lea.vmem %s4, %s358
      %p360 = pneg %p174
      %p361 = pneg %p171
      %s362 = smul.u32 8, %s25
      %p363 = scmp.lt.s32.totalorder %s362, 7
      %s364 = scalar_select %p363, %s362, 7
      %s365 = smul.addr %s364, 8
      %s366 = scalar_lea.vmem %s5, %s365
      %p367 = pneg %p200
      %p368 = pneg %p197
      %p369 = pneg %p232
      %p370 = pneg %p229
      %s371 = smul.u32 8, %s25
      %p372 = scmp.lt.s32.totalorder %s23, 1
      %s373 = scalar_select %p372, %s23, 1
      %p374 = scmp.lt.s32.totalorder %s24, 3
      %s375 = scalar_select %p374, %s24, 3
      %p376 = scmp.lt.s32.totalorder %s371, 7
      %s377 = scalar_select %p376, %s371, 7
      %p378 = scmp.lt.s32.totalorder %s26, 0
      %s379 = scalar_select %p378, %s26, 0
      %s380 = sadd.s32 %s379, %s377
      %s381 = smul.addr %s375, 8
      %s382 = sadd.s32 %s380, %s381
      %s383 = smul.addr %s373, 32
      %s384 = sadd.s32 %s382, %s383
      %s385 = smul.addr %s384, 8
      %s386 = scalar_lea.vmem %s6, %s385
      %p387 = scmp.lt.s32.totalorder %s23, 1
      %s388 = scalar_select %p387, %s23, 1
      %p389 = scmp.lt.s32.totalorder %s24, 3
      %s390 = scalar_select %p389, %s24, 3
      %s391 = smul.addr %s390, 4
      %s392 = smul.addr %s388, 16
      %s393 = sadd.s32 %s391, %s392
      %s394 = smul.addr %s393, 8
      %s395 = scalar_lea.vmem %s0, %s394
      %p396 = scmp.lt.s32.totalorder %s23, 1
      %s397 = scalar_select %p396, %s23, 1
      %p398 = scmp.lt.s32.totalorder %s24, 3
      %s399 = scalar_select %p398, %s24, 3
      %s400 = smul.addr %s399, 4
      %s401 = smul.addr %s397, 16
      %s402 = sadd.s32 %s400, %s401
      %s403 = smul.addr %s402, 8
      %s404 = scalar_lea.vmem %s1, %s403
      %p405 = scmp.lt.s32.totalorder %s23, 1
      %s406 = scalar_select %p405, %s23, 1
      %p407 = scmp.lt.s32.totalorder %s24, 3
      %s408 = scalar_select %p407, %s24, 3
      %s409 = smul.addr %s408, 4
      %s410 = smul.addr %s406, 16
      %s411 = sadd.s32 %s409, %s410
      %s412 = smul.addr %s411, 8
      %s413 = scalar_lea.vmem %s2, %s412
      %p414 = scmp.lt.s32.totalorder %s26, 0
      %s415 = scalar_select %p414, %s26, 0
      %s416 = smul.addr %s415, 8
      %s417 = scalar_lea.vmem %s3, %s416
      %p418 = scmp.lt.s32.totalorder %s26, 0
      %s419 = scalar_select %p418, %s26, 0
      %s420 = smul.addr %s419, 8
      %s421 = scalar_lea.vmem %s4, %s420
      %s422 = smul.u32 8, %s25
      %p423 = scmp.lt.s32.totalorder %s422, 7
      %s424 = scalar_select %p423, %s422, 7
      %s425 = smul.addr %s424, 8
      %s426 = scalar_lea.vmem %s5, %s425
      %s427 = smul.u32 8, %s25
      %s428 = smul.u32 8, %s25
      %p429 = scmp.lt.s32.totalorder %s23, 1
      %s430 = scalar_select %p429, %s23, 1
      %p431 = scmp.lt.s32.totalorder %s24, 3
      %s432 = scalar_select %p431, %s24, 3
      %p433 = scmp.lt.s32.totalorder %s428, 7
      %s434 = scalar_select %p433, %s428, 7
      %p435 = scmp.lt.s32.totalorder %s26, 0
      %s436 = scalar_select %p435, %s26, 0
      %s437 = sadd.s32 %s436, %s434
      %s438 = smul.addr %s432, 8
      %s439 = sadd.s32 %s437, %s438
      %s440 = smul.addr %s430, 32
      %s441 = sadd.s32 %s439, %s440
      %s442 = smul.addr %s441, 8
      %s443 = scalar_lea.vmem %s6, %s442
      %s444 = smul.u32 8, %s25
      %v445 = vld [vmem:[%s417] sm:$0xff]
      %v446 = vld [vmem:[%s417 + $0x8] sm:$0xff]
      %v447 = vld [vmem:[%s417 + $0x10] sm:$0xff]
      %v448 = vld [vmem:[%s417 + $0x18] sm:$0xff]
      %v449 = vld [vmem:[%s395] sm:$0xff]
      %v450 = vld [vmem:[%s395 + $0x8] sm:$0xff]
      %v451 = vld [vmem:[%s395 + $0x10] sm:$0xff]
      %v452 = vld [vmem:[%s395 + $0x18] sm:$0xff]
      %v453 = vld [vmem:[%s404] sm:$0xff]
      %v454 = vld [vmem:[%s404 + $0x8] sm:$0xff]
      %v455 = vld [vmem:[%s404 + $0x10] sm:$0xff]
      %v456 = vld [vmem:[%s404 + $0x18] sm:$0xff]
      %v457 = vld [vmem:[%s421] sm:$0xff]
      %v458 = vld [vmem:[%s421 + $0x8] sm:$0xff]
      %v459 = vld [vmem:[%s421 + $0x10] sm:$0xff]
      %v460 = vld [vmem:[%s421 + $0x18] sm:$0xff]
      %vm461 = vcmask 261120
      %v463 = vsel %vm461, %v453, 0
      %v466 = vsel %vm461, %v454, 0
      %v469 = vsel %vm461, %v455, 0
      %v472 = vsel %vm461, %v456, 0
      %474 = vmatprep.subr.mxu0 0.0
      %475 = vmatpush1.msra.mxu0 %v457
      %476 = vmatprep.subr.mxu0 0.0
      %477 = vmatpush1.msra.mxu0 %v458
      %478 = vmatprep.subr.mxu0 0.0
      %479 = vmatpush1.msra.mxu0 %v459
      %480 = vmatprep.subr.mxu0 0.0
      %481 = vmatpush1.msra.mxu0 %v460
      %482 = vmatprep.subr.mxu0 0.0
      %483 = vmatpush1.msra.mxu0 0.0
      %484 = vmatprep.subr.mxu0 0.0
      %485 = vmatpush1.msra.mxu0 0.0
      %486 = vmatprep.subr.mxu0 0.0
      %487 = vmatpush1.msra.mxu0 0.0
      %488 = vmatprep.subr.mxu0 0.0
      %489 = vmatpush1.msra.mxu0 0.0
      %490 = vmatprep.subr.mxu0 0.0
      %491 = vmatpush1.msra.mxu0 0.0
      %492 = vmatprep.subr.mxu0 0.0
      %493 = vmatpush1.msra.mxu0 0.0
      %494 = vmatprep.subr.mxu0 0.0
      %495 = vmatpush1.msra.mxu0 0.0
      %496 = vmatprep.subr.mxu0 0.0
      %497 = vmatpush1.msra.mxu0 0.0
      %498 = vmatprep.subr.mxu0 0.0
      %499 = vmatpush1.msra.mxu0 0.0
      %500 = vmatprep.subr.mxu0 0.0
      %501 = vmatpush1.msra.mxu0 0.0
      %502 = vmatprep.subr.mxu0 0.0
      %503 = vmatpush1.msra.mxu0 0.0
      %504 = vmatprep.subr.mxu0 0.0
      %505 = vmatpush1.msra.mxu0 0.0
      %506 = vmatprep.subr.mxu0 0.0
      %507 = vmatpush1.msra.mxu0 0.0
      %508 = vmatprep.subr.mxu0 0.0
      %509 = vmatpush1.msra.mxu0 0.0
      %510 = vmatprep.subr.mxu0 0.0
      %511 = vmatpush1.msra.mxu0 0.0
      %512 = vmatprep.subr.mxu0 0.0
      %513 = vmatpush1.msra.mxu0 0.0
      %514 = vmatprep.subr.mxu0 0.0
      %515 = vmatpush1.msra.mxu0 0.0
      %516 = vmatprep.subr.mxu0 0.0
      %517 = vmatpush1.msra.mxu0 0.0
      %518 = vmatprep.subr.mxu0 0.0
      %519 = vmatpush1.msra.mxu0 0.0
      %520 = vmatprep.subr.mxu0 0.0
      %521 = vmatpush1.msra.mxu0 0.0
      %522 = vmatprep.subr.mxu0 0.0
      %523 = vmatpush1.msra.mxu0 0.0
      %524 = vmatprep.subr.mxu0 0.0
      %525 = vmatpush1.msra.mxu0 0.0
      %526 = vmatprep.subr.mxu0 0.0
      %527 = vmatpush1.msra.mxu0 0.0
      %528 = vmatprep.subr.mxu0 0.0
      %529 = vmatpush1.msra.mxu0 0.0
      %530 = vmatprep.subr.mxu0 0.0
      %531 = vmatpush1.msra.mxu0 0.0
      %532 = vmatprep.subr.mxu0 0.0
      %533 = vmatpush1.msra.mxu0 0.0
      %534 = vmatprep.subr.mxu0 0.0
      %535 = vmatpush1.msra.mxu0 0.0
      %536 = vmatprep.subr.mxu0 0.0
      %537 = vmatpush1.msra.mxu0 0.0
      %538 = vmatprep.mubr.f32.mxu0 0.0
      %539 = vmatmul.mubr.f32.gmra.mrb[0].mxu0 %v463
      %v540 = vpop.f32.mrb[0].mxu0
      %v541 = vadd.f32 0.0, %v540
      %v542 = vpop.f32.mrb[0].mxu0
      %543 = vmatprep.mubr.f32.mxu0 0.0
      %544 = vmatmul.mubr.f32.gmra.mrb[0].mxu0 %v466
      %v545 = vpop.f32.mrb[0].mxu0
      %v546 = vadd.f32 0.0, %v545
      %v547 = vpop.f32.mrb[0].mxu0
      %548 = vmatprep.mubr.f32.mxu0 0.0
      %549 = vmatmul.mubr.f32.gmra.mrb[0].mxu0 %v469
      %v550 = vpop.f32.mrb[0].mxu0
      %v551 = vadd.f32 0.0, %v550
      %v552 = vpop.f32.mrb[0].mxu0
      %553 = vmatprep.mubr.f32.mxu0 0.0
      %554 = vmatmul.mubr.f32.gmra.mrb[0].mxu0 %v472
      %v555 = vpop.f32.mrb[0].mxu0
      %v556 = vadd.f32 0.0, %v555
      %v557 = vpop.f32.mrb[0].mxu0
      %558 = vdwg.mxu0
      %v560 = vsel %vm461, %v449, 0
      %v563 = vsel %vm461, %v450, 0
      %v566 = vsel %vm461, %v451, 0
      %v569 = vsel %vm461, %v452, 0
      %571 = vmatprep.subr.mxu0 0.0
      %572 = vmatpush1.msra.mxu0 %v445
      %573 = vmatprep.subr.mxu0 0.0
      %574 = vmatpush1.msra.mxu0 %v446
      %575 = vmatprep.subr.mxu0 0.0
      %576 = vmatpush1.msra.mxu0 %v447
      %577 = vmatprep.subr.mxu0 0.0
      %578 = vmatpush1.msra.mxu0 %v448
      %579 = vmatprep.subr.mxu0 0.0
      %580 = vmatpush1.msra.mxu0 0.0
      %581 = vmatprep.subr.mxu0 0.0
      %582 = vmatpush1.msra.mxu0 0.0
      %583 = vmatprep.subr.mxu0 0.0
      %584 = vmatpush1.msra.mxu0 0.0
      %585 = vmatprep.subr.mxu0 0.0
      %586 = vmatpush1.msra.mxu0 0.0
      %587 = vmatprep.subr.mxu0 0.0
      %588 = vmatpush1.msra.mxu0 0.0
      %589 = vmatprep.subr.mxu0 0.0
      %590 = vmatpush1.msra.mxu0 0.0
      %591 = vmatprep.subr.mxu0 0.0
      %592 = vmatpush1.msra.mxu0 0.0
      %593 = vmatprep.subr.mxu0 0.0
      %594 = vmatpush1.msra.mxu0 0.0
      %595 = vmatprep.subr.mxu0 0.0
      %596 = vmatpush1.msra.mxu0 0.0
      %597 = vmatprep.subr.mxu0 0.0
      %598 = vmatpush1.msra.mxu0 0.0
      %599 = vmatprep.subr.mxu0 0.0
      %600 = vmatpush1.msra.mxu0 0.0
      %601 = vmatprep.subr.mxu0 0.0
      %602 = vmatpush1.msra.mxu0 0.0
      %603 = vmatprep.subr.mxu0 0.0
      %604 = vmatpush1.msra.mxu0 0.0
      %605 = vmatprep.subr.mxu0 0.0
      %606 = vmatpush1.msra.mxu0 0.0
      %607 = vmatprep.subr.mxu0 0.0
      %608 = vmatpush1.msra.mxu0 0.0
      %609 = vmatprep.subr.mxu0 0.0
      %610 = vmatpush1.msra.mxu0 0.0
      %611 = vmatprep.subr.mxu0 0.0
      %612 = vmatpush1.msra.mxu0 0.0
      %613 = vmatprep.subr.mxu0 0.0
      %614 = vmatpush1.msra.mxu0 0.0
      %615 = vmatprep.subr.mxu0 0.0
      %616 = vmatpush1.msra.mxu0 0.0
      %617 = vmatprep.subr.mxu0 0.0
      %618 = vmatpush1.msra.mxu0 0.0
      %619 = vmatprep.subr.mxu0 0.0
      %620 = vmatpush1.msra.mxu0 0.0
      %621 = vmatprep.subr.mxu0 0.0
      %622 = vmatpush1.msra.mxu0 0.0
      %623 = vmatprep.subr.mxu0 0.0
      %624 = vmatpush1.msra.mxu0 0.0
      %625 = vmatprep.subr.mxu0 0.0
      %626 = vmatpush1.msra.mxu0 0.0
      %627 = vmatprep.subr.mxu0 0.0
      %628 = vmatpush1.msra.mxu0 0.0
      %629 = vmatprep.subr.mxu0 0.0
      %630 = vmatpush1.msra.mxu0 0.0
      %631 = vmatprep.subr.mxu0 0.0
      %632 = vmatpush1.msra.mxu0 0.0
      %633 = vmatprep.subr.mxu0 0.0
      %634 = vmatpush1.msra.mxu0 0.0
      %635 = vmatprep.mubr.f32.mxu0 0.0
      %636 = vmatmul.mubr.f32.gmra.mrb[0].mxu0 %v560
      %v637 = vpop.f32.mrb[0].mxu0
      %v638 = vadd.f32 %v541, %v637
      %v639 = vpop.f32.mrb[0].mxu0
      %640 = vmatprep.mubr.f32.mxu0 0.0
      %641 = vmatmul.mubr.f32.gmra.mrb[0].mxu0 %v563
      %v642 = vpop.f32.mrb[0].mxu0
      %v643 = vadd.f32 %v546, %v642
      %v644 = vpop.f32.mrb[0].mxu0
      %645 = vmatprep.mubr.f32.mxu0 0.0
      %646 = vmatmul.mubr.f32.gmra.mrb[0].mxu0 %v566
      %v647 = vpop.f32.mrb[0].mxu0
      %v648 = vadd.f32 %v551, %v647
      %v649 = vpop.f32.mrb[0].mxu0
      %650 = vmatprep.mubr.f32.mxu0 0.0
      %651 = vmatmul.mubr.f32.gmra.mrb[0].mxu0 %v569
      %v652 = vpop.f32.mrb[0].mxu0
      %v653 = vadd.f32 %v556, %v652
      %v654 = vpop.f32.mrb[0].mxu0
      %655 = vdwg.mxu0
      %v656 = vld [vmem:[%s413] sm:$0xff]
      %v657 = vld [vmem:[%s413 + $0x8] sm:$0xff]
      %v658 = vld [vmem:[%s413 + $0x10] sm:$0xff]
      %v659 = vld [vmem:[%s413 + $0x18] sm:$0xff]
      %v661 = vsel %vm461, %v656, 0
      %v664 = vsel %vm461, %v657, 0
      %v667 = vsel %vm461, %v658, 0
      %v670 = vsel %vm461, %v659, 0
      %672 = vmatprep.subr.mxu0 0.0
      %673 = vmatpush1.msra.mxu0 %v445
      %674 = vmatprep.subr.mxu0 0.0
      %675 = vmatpush1.msra.mxu0 %v446
      %676 = vmatprep.subr.mxu0 0.0
      %677 = vmatpush1.msra.mxu0 %v447
      %678 = vmatprep.subr.mxu0 0.0
      %679 = vmatpush1.msra.mxu0 %v448
      %680 = vmatprep.subr.mxu0 0.0
      %681 = vmatpush1.msra.mxu0 0.0
      %682 = vmatprep.subr.mxu0 0.0
      %683 = vmatpush1.msra.mxu0 0.0
      %684 = vmatprep.subr.mxu0 0.0
      %685 = vmatpush1.msra.mxu0 0.0
      %686 = vmatprep.subr.mxu0 0.0
      %687 = vmatpush1.msra.mxu0 0.0
      %688 = vmatprep.subr.mxu0 0.0
      %689 = vmatpush1.msra.mxu0 0.0
      %690 = vmatprep.subr.mxu0 0.0
      %691 = vmatpush1.msra.mxu0 0.0
      %692 = vmatprep.subr.mxu0 0.0
      %693 = vmatpush1.msra.mxu0 0.0
      %694 = vmatprep.subr.mxu0 0.0
      %695 = vmatpush1.msra.mxu0 0.0
      %696 = vmatprep.subr.mxu0 0.0
      %697 = vmatpush1.msra.mxu0 0.0
      %698 = vmatprep.subr.mxu0 0.0
      %699 = vmatpush1.msra.mxu0 0.0
      %700 = vmatprep.subr.mxu0 0.0
      %701 = vmatpush1.msra.mxu0 0.0
      %702 = vmatprep.subr.mxu0 0.0
      %703 = vmatpush1.msra.mxu0 0.0
      %704 = vmatprep.subr.mxu0 0.0
      %705 = vmatpush1.msra.mxu0 0.0
      %706 = vmatprep.subr.mxu0 0.0
      %707 = vmatpush1.msra.mxu0 0.0
      %708 = vmatprep.subr.mxu0 0.0
      %709 = vmatpush1.msra.mxu0 0.0
      %710 = vmatprep.subr.mxu0 0.0
      %711 = vmatpush1.msra.mxu0 0.0
      %712 = vmatprep.subr.mxu0 0.0
      %713 = vmatpush1.msra.mxu0 0.0
      %714 = vmatprep.subr.mxu0 0.0
      %715 = vmatpush1.msra.mxu0 0.0
      %716 = vmatprep.subr.mxu0 0.0
      %717 = vmatpush1.msra.mxu0 0.0
      %718 = vmatprep.subr.mxu0 0.0
      %719 = vmatpush1.msra.mxu0 0.0
      %720 = vmatprep.subr.mxu0 0.0
      %721 = vmatpush1.msra.mxu0 0.0
      %722 = vmatprep.subr.mxu0 0.0
      %723 = vmatpush1.msra.mxu0 0.0
      %724 = vmatprep.subr.mxu0 0.0
      %725 = vmatpush1.msra.mxu0 0.0
      %726 = vmatprep.subr.mxu0 0.0
      %727 = vmatpush1.msra.mxu0 0.0
      %728 = vmatprep.subr.mxu0 0.0
      %729 = vmatpush1.msra.mxu0 0.0
      %730 = vmatprep.subr.mxu0 0.0
      %731 = vmatpush1.msra.mxu0 0.0
      %732 = vmatprep.subr.mxu0 0.0
      %733 = vmatpush1.msra.mxu0 0.0
      %734 = vmatprep.subr.mxu0 0.0
      %735 = vmatpush1.msra.mxu0 0.0
      %736 = vmatprep.mubr.f32.mxu0 0.0
      %737 = vmatmul.mubr.f32.gmra.mrb[0].mxu0 %v661
      %v738 = vpop.f32.mrb[0].mxu0
      %v739 = vadd.f32 0.0, %v738
      %v740 = vpop.f32.mrb[0].mxu0
      %741 = vmatprep.mubr.f32.mxu0 0.0
      %742 = vmatmul.mubr.f32.gmra.mrb[0].mxu0 %v664
      %v743 = vpop.f32.mrb[0].mxu0
      %v744 = vadd.f32 0.0, %v743
      %v745 = vpop.f32.mrb[0].mxu0
      %746 = vmatprep.mubr.f32.mxu0 0.0
      %747 = vmatmul.mubr.f32.gmra.mrb[0].mxu0 %v667
      %v748 = vpop.f32.mrb[0].mxu0
      %v749 = vadd.f32 0.0, %v748
      %v750 = vpop.f32.mrb[0].mxu0
      %751 = vmatprep.mubr.f32.mxu0 0.0
      %752 = vmatmul.mubr.f32.gmra.mrb[0].mxu0 %v670
      %v753 = vpop.f32.mrb[0].mxu0
      %v754 = vadd.f32 0.0, %v753
      %v755 = vpop.f32.mrb[0].mxu0
      %756 = vdwg.mxu0
      %v757 = vld [vmem:[%s426] sm:$0xff]
      %v758 = vld [vmem:[%s426 + $0x8] sm:$0xff]
      %v759 = vld [vmem:[%s426 + $0x10] sm:$0xff]
      %v760 = vld [vmem:[%s426 + $0x18] sm:$0xff]
      %v761 = vld [vmem:[%s426 + $0x20] sm:$0xff]
      %v762 = vld [vmem:[%s426 + $0x28] sm:$0xff]
      %v763 = vld [vmem:[%s426 + $0x30] sm:$0xff]
      %v764 = vld [vmem:[%s426 + $0x38] sm:$0xff]
      %vm765 = vcmask 523264
      %v767 = vsel %vm765, %v757, 0
      %v770 = vsel %vm765, %v758, 0
      %v773 = vsel %vm765, %v759, 0
      %v776 = vsel %vm765, %v760, 0
      %v779 = vsel %vm765, %v761, 0
      %v782 = vsel %vm765, %v762, 0
      %v785 = vsel %vm765, %v763, 0
      %v788 = vsel %vm765, %v764, 0
      %790 = vmatprep.subr.mxu0 0.0
      %791 = vmatpush1.msra.mxu0 %v638
      %792 = vmatprep.subr.mxu0 0.0
      %793 = vmatpush1.msra.mxu0 %v643
      %794 = vmatprep.subr.mxu0 0.0
      %795 = vmatpush1.msra.mxu0 %v648
      %796 = vmatprep.subr.mxu0 0.0
      %797 = vmatpush1.msra.mxu0 %v653
      %798 = vmatprep.subr.mxu0 0.0
      %799 = vmatpush1.msra.mxu0 %v739
      %800 = vmatprep.subr.mxu0 0.0
      %801 = vmatpush1.msra.mxu0 %v744
      %802 = vmatprep.subr.mxu0 0.0
      %803 = vmatpush1.msra.mxu0 %v749
      %804 = vmatprep.subr.mxu0 0.0
      %805 = vmatpush1.msra.mxu0 %v754
      %806 = vmatprep.subr.mxu0 0.0
      %807 = vmatpush1.msra.mxu0 0.0
      %808 = vmatprep.subr.mxu0 0.0
      %809 = vmatpush1.msra.mxu0 0.0
      %810 = vmatprep.subr.mxu0 0.0
      %811 = vmatpush1.msra.mxu0 0.0
      %812 = vmatprep.subr.mxu0 0.0
      %813 = vmatpush1.msra.mxu0 0.0
      %814 = vmatprep.subr.mxu0 0.0
      %815 = vmatpush1.msra.mxu0 0.0
      %816 = vmatprep.subr.mxu0 0.0
      %817 = vmatpush1.msra.mxu0 0.0
      %818 = vmatprep.subr.mxu0 0.0
      %819 = vmatpush1.msra.mxu0 0.0
      %820 = vmatprep.subr.mxu0 0.0
      %821 = vmatpush1.msra.mxu0 0.0
      %822 = vmatprep.subr.mxu0 0.0
      %823 = vmatpush1.msra.mxu0 0.0
      %824 = vmatprep.subr.mxu0 0.0
      %825 = vmatpush1.msra.mxu0 0.0
      %826 = vmatprep.subr.mxu0 0.0
      %827 = vmatpush1.msra.mxu0 0.0
      %828 = vmatprep.subr.mxu0 0.0
      %829 = vmatpush1.msra.mxu0 0.0
      %830 = vmatprep.subr.mxu0 0.0
      %831 = vmatpush1.msra.mxu0 0.0
      %832 = vmatprep.subr.mxu0 0.0
      %833 = vmatpush1.msra.mxu0 0.0
      %834 = vmatprep.subr.mxu0 0.0
      %835 = vmatpush1.msra.mxu0 0.0
      %836 = vmatprep.subr.mxu0 0.0
      %837 = vmatpush1.msra.mxu0 0.0
      %838 = vmatprep.subr.mxu0 0.0
      %839 = vmatpush1.msra.mxu0 0.0
      %840 = vmatprep.subr.mxu0 0.0
      %841 = vmatpush1.msra.mxu0 0.0
      %842 = vmatprep.subr.mxu0 0.0
      %843 = vmatpush1.msra.mxu0 0.0
      %844 = vmatprep.subr.mxu0 0.0
      %845 = vmatpush1.msra.mxu0 0.0
      %846 = vmatprep.subr.mxu0 0.0
      %847 = vmatpush1.msra.mxu0 0.0
      %848 = vmatprep.subr.mxu0 0.0
      %849 = vmatpush1.msra.mxu0 0.0
      %850 = vmatprep.subr.mxu0 0.0
      %851 = vmatpush1.msra.mxu0 0.0
      %852 = vmatprep.subr.mxu0 0.0
      %853 = vmatpush1.msra.mxu0 0.0
      %854 = vmatprep.mubr.f32.mxu0 0.0
      %855 = vmatmul.mubr.f32.gmra.mrb[0].mxu0 %v767
      %v856 = vpop.f32.mrb[0].mxu0
      %v857 = vadd.f32 0.0, %v856
      %v858 = vpop.f32.mrb[0].mxu0
      %859 = vmatprep.mubr.f32.mxu0 0.0
      %860 = vmatmul.mubr.f32.gmra.mrb[0].mxu0 %v770
      %v861 = vpop.f32.mrb[0].mxu0
      %v862 = vadd.f32 0.0, %v861
      %v863 = vpop.f32.mrb[0].mxu0
      %864 = vmatprep.mubr.f32.mxu0 0.0
      %865 = vmatmul.mubr.f32.gmra.mrb[0].mxu0 %v773
      %v866 = vpop.f32.mrb[0].mxu0
      %v867 = vadd.f32 0.0, %v866
      %v868 = vpop.f32.mrb[0].mxu0
      %869 = vmatprep.mubr.f32.mxu0 0.0
      %870 = vmatmul.mubr.f32.gmra.mrb[0].mxu0 %v776
      %v871 = vpop.f32.mrb[0].mxu0
      %v872 = vadd.f32 0.0, %v871
      %v873 = vpop.f32.mrb[0].mxu0
      %874 = vmatprep.mubr.f32.mxu0 0.0
      %875 = vmatmul.mubr.f32.gmra.mrb[0].mxu0 %v779
      %v876 = vpop.f32.mrb[0].mxu0
      %v877 = vadd.f32 0.0, %v876
      %v878 = vpop.f32.mrb[0].mxu0
      %879 = vmatprep.mubr.f32.mxu0 0.0
      %880 = vmatmul.mubr.f32.gmra.mrb[0].mxu0 %v782
      %v881 = vpop.f32.mrb[0].mxu0
      %v882 = vadd.f32 0.0, %v881
      %v883 = vpop.f32.mrb[0].mxu0
      %884 = vmatprep.mubr.f32.mxu0 0.0
      %885 = vmatmul.mubr.f32.gmra.mrb[0].mxu0 %v785
      %v886 = vpop.f32.mrb[0].mxu0
      %v887 = vadd.f32 0.0, %v886
      %v888 = vpop.f32.mrb[0].mxu0
      %889 = vmatprep.mubr.f32.mxu0 0.0
      %890 = vmatmul.mubr.f32.gmra.mrb[0].mxu0 %v788
      %v891 = vpop.f32.mrb[0].mxu0
      %v892 = vadd.f32 0.0, %v891
      %v893 = vpop.f32.mrb[0].mxu0
      %894 = vdwg.mxu0
      %895 = vst.msk [vmem:[%s443] sm:$0xff] %vm765, %v857
      %896 = vst.msk [vmem:[%s443 + $0x8] sm:$0xff] %vm765, %v862
      %897 = vst.msk [vmem:[%s443 + $0x10] sm:$0xff] %vm765, %v867
      %898 = vst.msk [vmem:[%s443 + $0x18] sm:$0xff] %vm765, %v872
      %899 = vst.msk [vmem:[%s443 + $0x20] sm:$0xff] %vm765, %v877
      %900 = vst.msk [vmem:[%s443 + $0x28] sm:$0xff] %vm765, %v882
      %901 = vst.msk [vmem:[%s443 + $0x30] sm:$0xff] %vm765, %v887
      %902 = vst.msk [vmem:[%s443 + $0x38] sm:$0xff] %vm765, %v892
      %s903 = smul.u32 8, %s25
      %p904 = scmp.lt.s32.totalorder %s23, 1
      %s905 = scalar_select %p904, %s23, 1
      %p906 = scmp.lt.s32.totalorder %s24, 3
      %s907 = scalar_select %p906, %s24, 3
      %p908 = scmp.lt.s32.totalorder %s903, 7
      %s909 = scalar_select %p908, %s903, 7
      %p910 = scmp.lt.s32.totalorder %s26, 0
      %s911 = scalar_select %p910, %s26, 0
      %s912 = sadd.s32 %s911, %s909
      %s913 = smul.addr %s907, 8
      %s914 = sadd.s32 %s912, %s913
      %s915 = smul.addr %s905, 32
      %s916 = sadd.s32 %s914, %s915
      %s917 = smul.addr %s916, 8
      %s918 = scalar_lea.vmem %s6, %s917
      // Predicated region
      $region45: #{_hitnet_forward_impl.22} parent=43 // pred_check
        %p919 = pneg %p229
      $region46: #{_hitnet_forward_impl.22} parent=43 // pred_check_branch
        %921 = sbr.rel (%p919) target = $region48
      $region47: #{_hitnet_forward_impl.22} parent=43 // pred_region
        %s922 = smul.u32 8, %s25
      $region48: #{_hitnet_forward_impl.22} parent=43 // pred_fallthru
        _
    $region44: #{_hitnet_forward_impl.22} parent=5 // pred_fallthru
      _
    %p923 = scmp.le.s32.totalorder 2, %s12
    // Predicated region
    $region49: #{_hitnet_forward_impl.22} parent=5 // pred_check
      %p924 = pneg %p923
    $region50: #{_hitnet_forward_impl.22} parent=5 // pred_check_branch
      %926 = sbr.rel (%p924) target = $region52
    $region51: #{_hitnet_forward_impl.22} parent=5 // pred_region
      %s927 = ssub.s32 %s12, 2
      // Predicated region
      $region53: #{_hitnet_forward_impl.22} parent=51 // pred_check
        %p928 = pneg %p235
      $region54: #{_hitnet_forward_impl.22} parent=51 // pred_check_branch
        %930 = sbr.rel (%p928) target = $region56
      $region55: #{_hitnet_forward_impl.22} parent=51 // pred_region
        %s931 = smul.u32 8, %s29
        %p932 = scmp.lt.s32.totalorder %s27, 1
        %s933 = scalar_select %p932, %s27, 1
        %p934 = scmp.lt.s32.totalorder %s28, 3
        %s935 = scalar_select %p934, %s28, 3
        %p936 = scmp.lt.s32.totalorder %s931, 7
        %s937 = scalar_select %p936, %s931, 7
        %p938 = scmp.lt.s32.totalorder %s30, 0
        %s939 = scalar_select %p938, %s30, 0
        %s940 = sadd.s32 %s939, %s937
        %s941 = smul.addr %s935, 8
        %s942 = sadd.s32 %s940, %s941
        %s943 = smul.addr %s933, 32
        %s944 = sadd.s32 %s942, %s943
        %s945 = smul.addr %s944, 8
        %s946 = scalar_lea.vmem %s6, %s945
      $region56: #{_hitnet_forward_impl.22} parent=51 // pred_fallthru
        _
    $region52: #{_hitnet_forward_impl.22} parent=5 // pred_fallthru
      _
  $region6: #{_hitnet_forward_impl.22} parent=0 // loop_footer
    %s16 = sadd.s32 1, %s12
  $region7: #{_hitnet_forward_impl.22} parent=0 // loop_footer_branch
    %11 = sbr.rel target = $region3
  $region8: #{_hitnet_forward_impl.22} parent=0 // loop_exit
    _

// kernel: _hitnet_forward_impl.12
$region0: #{_hitnet_forward_impl.12}
  #allocation0 [shape = 'u32[]', space=smem, size = 0x4, offset = 0x4, fixed_abs, tag = 'smem constant byte address 0x4 - core index']
  #allocation1 [shape = 'u32[144,128]{1,0:T(1,128)}', space=vmem, size = 0x12000, scoped, tag = 'internal scratch']
  %s0 = inlined_call_operand.vmem [shape: f32[2,2,1,1], index: 0, kind: input, shape index: {}]
  %s1 = inlined_call_operand.vmem [shape: f32[2,2,1,1], index: 1, kind: input, shape index: {}]
  %s2 = inlined_call_operand.vmem [shape: f32[2,2,1,1], index: 2, kind: input, shape index: {}]
  %s3 = inlined_call_operand.vmem [shape: f32[1,64], index: 3, kind: input, shape index: {}]
  %s4 = inlined_call_operand.vmem [shape: f32[1,64], index: 4, kind: input, shape index: {}]
  %s5 = inlined_call_operand.vmem [shape: f32[64,2], index: 5, kind: input, shape index: {}]
  %s6 = inlined_call_operand.vmem [shape: f32[2,2,64,64], index: 6, kind: output, shape index: {}]
  %s7 = sld [smem:[#allocation0]]
  $region57: #{_hitnet_forward_impl.12} parent=0
    _
  %s9 = ssub.s32 1, %s7
  %s10 = scalar_select 0, %s9, %s7
  loop: start=0, step=1, limit=6
  $region2: #{_hitnet_forward_impl.12} parent=0 // loop_pre_header
    _
  $region3: #{_hitnet_forward_impl.12} parent=0 // loop_header
    %s12 = sphi 0, %s16
    %p13 = scmp.ge.s32.totalorder %s12, 6
    %s19 = sphi 0, %s45
    %s20 = sphi 0, %s41
    %s21 = sphi 0, %s37
    %s22 = sphi 0, %s33
    %s23 = sphi 0, %s19
    %s24 = sphi 0, %s20
    %s25 = sphi 0, %s21
    %s26 = sphi 0, %s22
    %s27 = sphi 0, %s23
    %s28 = sphi 0, %s24
    %s29 = sphi 0, %s25
    %s30 = sphi 0, %s26
    %s50 = sphi 0, %s52
    %s53 = sphi 0, %s50
    %s54 = sphi 0, %s53
    %s70 = sphi 0, %s54
    %s78 = sphi 0, %s80
    %s81 = sphi 0, %s78
    %s82 = sphi 0, %s81
    %s98 = sphi 0, %s82
    %s106 = sphi 0, %s108
    %s109 = sphi 0, %s106
    %s110 = sphi 0, %s109
    %s126 = sphi 0, %s110
    %s132 = sphi 0, %s134
    %s135 = sphi 0, %s132
    %s136 = sphi 0, %s135
    %s152 = sphi 0, %s136
    %s158 = sphi 0, %s160
    %s161 = sphi 0, %s158
    %s162 = sphi 0, %s161
    %s178 = sphi 0, %s162
    %s184 = sphi 0, %s186
    %s187 = sphi 0, %s184
    %s188 = sphi 0, %s187
    %s204 = sphi 0, %s188
    %s216 = sphi 0, %s218
    %s219 = sphi 0, %s216
    %s220 = sphi 0, %s219
    %s236 = sphi 0, %s220
  $region4: #{_hitnet_forward_impl.12} parent=0 // loop_header_branch
    %15 = sbr.rel (%p13) target = $region8
  $region5: #{_hitnet_forward_impl.12} parent=0 // loop_body
    %s17 = ssub.s32 %s12, 1
    %s18 = ssub.s32 %s12, 2
    %s31 = sadd.s32 1, %s22
    %p32 = scmp.ge.s32.totalorder %s31, 1
    %s33 = scalar_select %p32, 0, %s31
    %s34 = sadd.s32 1, %s21
    %s35 = scalar_select %p32, %s34, %s21
    %p36 = scmp.ge.s32.totalorder %s35, 1
    %s37 = scalar_select %p36, 0, %s35
    %s38 = sadd.s32 1, %s20
    %s39 = scalar_select %p36, %s38, %s20
    %p40 = scmp.ge.s32.totalorder %s39, 2
    %s41 = scalar_select %p40, 0, %s39
    %s42 = sadd.s32 1, %s19
    %s43 = scalar_select %p40, %s42, %s19
    %p44 = scmp.ge.s32.totalorder %s43, 2
    %s45 = scalar_select %p44, 0, %s43
    %s46 = ssub.s32 %s19, %s45
    %s47 = ssub.s32 %s20, %s41
    %s48 = sor.u32 %s46, %s47
    %p49 = scmp.eq.s32.totalorder %s48, 0
    %s51 = sadd.s32 %s50, 1
    %s52 = scalar_select %p49, %s50, %s51
    %p55 = pneg %p49
    %p56 = scmp.eq.s32.totalorder %s12, 3
    %p57 = por %p55, %p56
    %p58 = scmp.ne.s32.totalorder %s50, %s53
    %p59 = scmp.eq.s32.totalorder %s12, 0
    %p60 = por %p58, %p59
    %p61 = scmp.ne.s32.totalorder %s50, %s53
    %p62 = scmp.eq.s32.totalorder %s17, 3
    %p63 = por %p61, %p62
    %p64 = scmp.ne.s32.totalorder %s53, %s54
    %p65 = scmp.eq.s32.totalorder %s17, 0
    %p66 = por %p64, %p65
    %p67 = scmp.ne.s32.totalorder %s53, %s54
    %p68 = scmp.eq.s32.totalorder %s18, 3
    %p69 = por %p67, %p68
    %p71 = scmp.ne.s32.totalorder %s54, %s70
    %p72 = scmp.eq.s32.totalorder %s18, 0
    %p73 = por %p71, %p72
    %s74 = ssub.s32 %s19, %s45
    %s75 = ssub.s32 %s20, %s41
    %s76 = sor.u32 %s74, %s75
    %p77 = scmp.eq.s32.totalorder %s76, 0
    %s79 = sadd.s32 %s78, 1
    %s80 = scalar_select %p77, %s78, %s79
    %p83 = pneg %p77
    %p84 = scmp.eq.s32.totalorder %s12, 3
    %p85 = por %p83, %p84
    %p86 = scmp.ne.s32.totalorder %s78, %s81
    %p87 = scmp.eq.s32.totalorder %s12, 0
    %p88 = por %p86, %p87
    %p89 = scmp.ne.s32.totalorder %s78, %s81
    %p90 = scmp.eq.s32.totalorder %s17, 3
    %p91 = por %p89, %p90
    %p92 = scmp.ne.s32.totalorder %s81, %s82
    %p93 = scmp.eq.s32.totalorder %s17, 0
    %p94 = por %p92, %p93
    %p95 = scmp.ne.s32.totalorder %s81, %s82
    %p96 = scmp.eq.s32.totalorder %s18, 3
    %p97 = por %p95, %p96
    %p99 = scmp.ne.s32.totalorder %s82, %s98
    %p100 = scmp.eq.s32.totalorder %s18, 0
    %p101 = por %p99, %p100
    %s102 = ssub.s32 %s19, %s45
    %s103 = ssub.s32 %s20, %s41
    %s104 = sor.u32 %s102, %s103
    %p105 = scmp.eq.s32.totalorder %s104, 0
    %s107 = sadd.s32 %s106, 1
    %s108 = scalar_select %p105, %s106, %s107
    %p111 = pneg %p105
    %p112 = scmp.eq.s32.totalorder %s12, 3
    %p113 = por %p111, %p112
    %p114 = scmp.ne.s32.totalorder %s106, %s109
    %p115 = scmp.eq.s32.totalorder %s12, 0
    %p116 = por %p114, %p115
    %p117 = scmp.ne.s32.totalorder %s106, %s109
    %p118 = scmp.eq.s32.totalorder %s17, 3
    %p119 = por %p117, %p118
    %p120 = scmp.ne.s32.totalorder %s109, %s110
    %p121 = scmp.eq.s32.totalorder %s17, 0
    %p122 = por %p120, %p121
    %p123 = scmp.ne.s32.totalorder %s109, %s110
    %p124 = scmp.eq.s32.totalorder %s18, 3
    %p125 = por %p123, %p124
    %p127 = scmp.ne.s32.totalorder %s110, %s126
    %p128 = scmp.eq.s32.totalorder %s18, 0
    %p129 = por %p127, %p128
    %s130 = ssub.s32 %s22, %s33
    %p131 = scmp.eq.s32.totalorder %s130, 0
    %s133 = sadd.s32 %s132, 1
    %s134 = scalar_select %p131, %s132, %s133
    %p137 = pneg %p131
    %p138 = scmp.eq.s32.totalorder %s12, 3
    %p139 = por %p137, %p138
    %p140 = scmp.ne.s32.totalorder %s132, %s135
    %p141 = scmp.eq.s32.totalorder %s12, 0
    %p142 = por %p140, %p141
    %p143 = scmp.ne.s32.totalorder %s132, %s135
    %p144 = scmp.eq.s32.totalorder %s17, 3
    %p145 = por %p143, %p144
    %p146 = scmp.ne.s32.totalorder %s135, %s136
    %p147 = scmp.eq.s32.totalorder %s17, 0
    %p148 = por %p146, %p147
    %p149 = scmp.ne.s32.totalorder %s135, %s136
    %p150 = scmp.eq.s32.totalorder %s18, 3
    %p151 = por %p149, %p150
    %p153 = scmp.ne.s32.totalorder %s136, %s152
    %p154 = scmp.eq.s32.totalorder %s18, 0
    %p155 = por %p153, %p154
    %s156 = ssub.s32 %s22, %s33
    %p157 = scmp.eq.s32.totalorder %s156, 0
    %s159 = sadd.s32 %s158, 1
    %s160 = scalar_select %p157, %s158, %s159
    %p163 = pneg %p157
    %p164 = scmp.eq.s32.totalorder %s12, 3
    %p165 = por %p163, %p164
    %p166 = scmp.ne.s32.totalorder %s158, %s161
    %p167 = scmp.eq.s32.totalorder %s12, 0
    %p168 = por %p166, %p167
    %p169 = scmp.ne.s32.totalorder %s158, %s161
    %p170 = scmp.eq.s32.totalorder %s17, 3
    %p171 = por %p169, %p170
    %p172 = scmp.ne.s32.totalorder %s161, %s162
    %p173 = scmp.eq.s32.totalorder %s17, 0
    %p174 = por %p172, %p173
    %p175 = scmp.ne.s32.totalorder %s161, %s162
    %p176 = scmp.eq.s32.totalorder %s18, 3
    %p177 = por %p175, %p176
    %p179 = scmp.ne.s32.totalorder %s162, %s178
    %p180 = scmp.eq.s32.totalorder %s18, 0
    %p181 = por %p179, %p180
    %s182 = ssub.s32 %s21, %s37
    %p183 = scmp.eq.s32.totalorder %s182, 0
    %s185 = sadd.s32 %s184, 1
    %s186 = scalar_select %p183, %s184, %s185
    %p189 = pneg %p183
    %p190 = scmp.eq.s32.totalorder %s12, 3
    %p191 = por %p189, %p190
    %p192 = scmp.ne.s32.totalorder %s184, %s187
    %p193 = scmp.eq.s32.totalorder %s12, 0
    %p194 = por %p192, %p193
    %p195 = scmp.ne.s32.totalorder %s184, %s187
    %p196 = scmp.eq.s32.totalorder %s17, 3
    %p197 = por %p195, %p196
    %p198 = scmp.ne.s32.totalorder %s187, %s188
    %p199 = scmp.eq.s32.totalorder %s17, 0
    %p200 = por %p198, %p199
    %p201 = scmp.ne.s32.totalorder %s187, %s188
    %p202 = scmp.eq.s32.totalorder %s18, 3
    %p203 = por %p201, %p202
    %p205 = scmp.ne.s32.totalorder %s188, %s204
    %p206 = scmp.eq.s32.totalorder %s18, 0
    %p207 = por %p205, %p206
    %s208 = ssub.s32 %s19, %s45
    %s209 = ssub.s32 %s20, %s41
    %s210 = sor.u32 %s208, %s209
    %s211 = ssub.s32 %s21, %s37
    %s212 = sor.u32 %s210, %s211
    %s213 = ssub.s32 %s22, %s33
    %s214 = sor.u32 %s212, %s213
    %p215 = scmp.eq.s32.totalorder %s214, 0
    %s217 = sadd.s32 %s216, 1
    %s218 = scalar_select %p215, %s216, %s217
    %p221 = pneg %p215
    %p222 = scmp.eq.s32.totalorder %s12, 3
    %p223 = por %p221, %p222
    %p224 = scmp.ne.s32.totalorder %s216, %s219
    %p225 = scmp.eq.s32.totalorder %s12, 0
    %p226 = por %p224, %p225
    %p227 = scmp.ne.s32.totalorder %s216, %s219
    %p228 = scmp.eq.s32.totalorder %s17, 3
    %p229 = por %p227, %p228
    %p230 = scmp.ne.s32.totalorder %s219, %s220
    %p231 = scmp.eq.s32.totalorder %s17, 0
    %p232 = por %p230, %p231
    %p233 = scmp.ne.s32.totalorder %s219, %s220
    %p234 = scmp.eq.s32.totalorder %s18, 3
    %p235 = por %p233, %p234
    %p237 = scmp.ne.s32.totalorder %s220, %s236
    %p238 = scmp.eq.s32.totalorder %s18, 0
    %p239 = por %p237, %p238
    %p240 = scmp.le.s32.totalorder 1, %s12
    %p241 = scmp.lt.s32.totalorder %s12, 5
    %p242 = pnand %p240, %p241
    %p243 = pneg %p242
    // Predicated region
    $region9: #{_hitnet_forward_impl.12} parent=5 // pred_check
      _
    $region10: #{_hitnet_forward_impl.12} parent=5 // pred_check_branch
      %245 = sbr.rel (%p242) target = $region12
    $region11: #{_hitnet_forward_impl.12} parent=5 // pred_region
      %s246 = ssub.s32 %s12, 1
      // Predicated region
      $region13: #{_hitnet_forward_impl.12} parent=11 // pred_check
        %p247 = pneg %p148
      $region14: #{_hitnet_forward_impl.12} parent=11 // pred_check_branch
        %249 = sbr.rel (%p247) target = $region16
      $region15: #{_hitnet_forward_impl.12} parent=11 // pred_region
        %p250 = scmp.lt.s32.totalorder %s26, 0
        %s251 = scalar_select %p250, %s26, 0
        %s252 = scalar_lea.vmem %s3, %s251
      $region16: #{_hitnet_forward_impl.12} parent=11 // pred_fallthru
        _
      // Predicated region
      $region17: #{_hitnet_forward_impl.12} parent=11 // pred_check
        %p253 = pneg %p174
      $region18: #{_hitnet_forward_impl.12} parent=11 // pred_check_branch
        %255 = sbr.rel (%p253) target = $region20
      $region19: #{_hitnet_forward_impl.12} parent=11 // pred_region
        %p256 = scmp.lt.s32.totalorder %s26, 0
        %s257 = scalar_select %p256, %s26, 0
        %s258 = scalar_lea.vmem %s4, %s257
      $region20: #{_hitnet_forward_impl.12} parent=11 // pred_fallthru
        _
      // Predicated region
      $region21: #{_hitnet_forward_impl.12} parent=11 // pred_check
        %p259 = pneg %p200
      $region22: #{_hitnet_forward_impl.12} parent=11 // pred_check_branch
        %261 = sbr.rel (%p259) target = $region24
      $region23: #{_hitnet_forward_impl.12} parent=11 // pred_region
        %s262 = smul.u32 8, %s25
        %p263 = scmp.lt.s32.totalorder %s262, 7
        %s264 = scalar_select %p263, %s262, 7
        %s265 = smul.addr %s264, 8
        %s266 = scalar_lea.vmem %s5, %s265
        %s267 = smul.u32 8, %s25
      $region24: #{_hitnet_forward_impl.12} parent=11 // pred_fallthru
        _
    $region12: #{_hitnet_forward_impl.12} parent=5 // pred_fallthru
      _
    %p268 = scmp.lt.s32.totalorder %s12, 4
    // Predicated region
    $region25: #{_hitnet_forward_impl.12} parent=5 // pred_check
      %p269 = pneg %p268
    $region26: #{_hitnet_forward_impl.12} parent=5 // pred_check_branch
      %271 = sbr.rel (%p269) target = $region28
    $region27: #{_hitnet_forward_impl.12} parent=5 // pred_region
      // Predicated region
      $region29: #{_hitnet_forward_impl.12} parent=27 // pred_check
        %p272 = pneg %p60
      $region30: #{_hitnet_forward_impl.12} parent=27 // pred_check_branch
        %274 = sbr.rel (%p272) target = $region32
      $region31: #{_hitnet_forward_impl.12} parent=27 // pred_region
        %p275 = scmp.lt.s32.totalorder %s19, 1
        %s276 = scalar_select %p275, %s19, 1
        %p277 = scmp.lt.s32.totalorder %s20, 1
        %s278 = scalar_select %p277, %s20, 1
        %s279 = smul.addr %s276, 2
        %s280 = sadd.s32 %s278, %s279
        %s281 = scalar_lea.vmem %s0, %s280
      $region32: #{_hitnet_forward_impl.12} parent=27 // pred_fallthru
        _
      // Predicated region
      $region33: #{_hitnet_forward_impl.12} parent=27 // pred_check
        %p282 = pneg %p88
      $region34: #{_hitnet_forward_impl.12} parent=27 // pred_check_branch
        %284 = sbr.rel (%p282) target = $region36
      $region35: #{_hitnet_forward_impl.12} parent=27 // pred_region
        %p285 = scmp.lt.s32.totalorder %s19, 1
        %s286 = scalar_select %p285, %s19, 1
        %p287 = scmp.lt.s32.totalorder %s20, 1
        %s288 = scalar_select %p287, %s20, 1
        %s289 = smul.addr %s286, 2
        %s290 = sadd.s32 %s288, %s289
        %s291 = scalar_lea.vmem %s1, %s290
      $region36: #{_hitnet_forward_impl.12} parent=27 // pred_fallthru
        _
      // Predicated region
      $region37: #{_hitnet_forward_impl.12} parent=27 // pred_check
        %p292 = pneg %p116
      $region38: #{_hitnet_forward_impl.12} parent=27 // pred_check_branch
        %294 = sbr.rel (%p292) target = $region40
      $region39: #{_hitnet_forward_impl.12} parent=27 // pred_region
        %p295 = scmp.lt.s32.totalorder %s19, 1
        %s296 = scalar_select %p295, %s19, 1
        %p297 = scmp.lt.s32.totalorder %s20, 1
        %s298 = scalar_select %p297, %s20, 1
        %s299 = smul.addr %s296, 2
        %s300 = sadd.s32 %s298, %s299
        %s301 = scalar_lea.vmem %s2, %s300
      $region40: #{_hitnet_forward_impl.12} parent=27 // pred_fallthru
        _
    $region28: #{_hitnet_forward_impl.12} parent=5 // pred_fallthru
      _
    %p302 = scmp.le.s32.totalorder 1, %s12
    %p303 = scmp.lt.s32.totalorder %s12, 5
    %p304 = pnand %p302, %p303
    %p305 = pneg %p304
    // Predicated region
    $region41: #{_hitnet_forward_impl.12} parent=5 // pred_check
      _
    $region42: #{_hitnet_forward_impl.12} parent=5 // pred_check_branch
      %307 = sbr.rel (%p304) target = $region44
    $region43: #{_hitnet_forward_impl.12} parent=5 // pred_region
      %s308 = ssub.s32 %s12, 1
      %p309 = scmp.lt.s32.totalorder %s23, 1
      %s310 = scalar_select %p309, %s23, 1
      %p311 = scmp.lt.s32.totalorder %s24, 1
      %s312 = scalar_select %p311, %s24, 1
      %s313 = smul.addr %s310, 2
      %s314 = sadd.s32 %s312, %s313
      %s315 = scalar_lea.vmem %s0, %s314
      %p316 = pneg %p66
      %p317 = pneg %p63
      %p318 = scmp.lt.s32.totalorder %s23, 1
      %s319 = scalar_select %p318, %s23, 1
      %p320 = scmp.lt.s32.totalorder %s24, 1
      %s321 = scalar_select %p320, %s24, 1
      %s322 = smul.addr %s319, 2
      %s323 = sadd.s32 %s321, %s322
      %s324 = scalar_lea.vmem %s1, %s323
      %p325 = pneg %p94
      %p326 = pneg %p91
      %p327 = scmp.lt.s32.totalorder %s23, 1
      %s328 = scalar_select %p327, %s23, 1
      %p329 = scmp.lt.s32.totalorder %s24, 1
      %s330 = scalar_select %p329, %s24, 1
      %s331 = smul.addr %s328, 2
      %s332 = sadd.s32 %s330, %s331
      %s333 = scalar_lea.vmem %s2, %s332
      %p334 = pneg %p122
      %p335 = pneg %p119
      %p336 = scmp.lt.s32.totalorder %s26, 0
      %s337 = scalar_select %p336, %s26, 0
      %s338 = scalar_lea.vmem %s3, %s337
      %p339 = pneg %p148
      %p340 = pneg %p145
      %p341 = scmp.lt.s32.totalorder %s26, 0
      %s342 = scalar_select %p341, %s26, 0
      %s343 = scalar_lea.vmem %s4, %s342
      %p344 = pneg %p174
      %p345 = pneg %p171
      %s346 = smul.u32 8, %s25
      %p347 = scmp.lt.s32.totalorder %s346, 7
      %s348 = scalar_select %p347, %s346, 7
      %s349 = smul.addr %s348, 8
      %s350 = scalar_lea.vmem %s5, %s349
      %p351 = pneg %p200
      %p352 = pneg %p197
      %p353 = pneg %p232
      %p354 = pneg %p229
      %s355 = smul.u32 8, %s25
      %p356 = scmp.lt.s32.totalorder %s23, 1
      %s357 = scalar_select %p356, %s23, 1
      %p358 = scmp.lt.s32.totalorder %s24, 1
      %s359 = scalar_select %p358, %s24, 1
      %p360 = scmp.lt.s32.totalorder %s355, 7
      %s361 = scalar_select %p360, %s355, 7
      %p362 = scmp.lt.s32.totalorder %s26, 0
      %s363 = scalar_select %p362, %s26, 0
      %s364 = sadd.s32 %s363, %s361
      %s365 = smul.addr %s359, 8
      %s366 = sadd.s32 %s364, %s365
      %s367 = smul.addr %s357, 16
      %s368 = sadd.s32 %s366, %s367
      %s369 = smul.addr %s368, 8
      %s370 = scalar_lea.vmem %s6, %s369
      %p371 = scmp.lt.s32.totalorder %s23, 1
      %s372 = scalar_select %p371, %s23, 1
      %p373 = scmp.lt.s32.totalorder %s24, 1
      %s374 = scalar_select %p373, %s24, 1
      %s375 = smul.addr %s372, 2
      %s376 = sadd.s32 %s374, %s375
      %s377 = scalar_lea.vmem %s0, %s376
      %p378 = scmp.lt.s32.totalorder %s23, 1
      %s379 = scalar_select %p378, %s23, 1
      %p380 = scmp.lt.s32.totalorder %s24, 1
      %s381 = scalar_select %p380, %s24, 1
      %s382 = smul.addr %s379, 2
      %s383 = sadd.s32 %s381, %s382
      %s384 = scalar_lea.vmem %s1, %s383
      %p385 = scmp.lt.s32.totalorder %s23, 1
      %s386 = scalar_select %p385, %s23, 1
      %p387 = scmp.lt.s32.totalorder %s24, 1
      %s388 = scalar_select %p387, %s24, 1
      %s389 = smul.addr %s386, 2
      %s390 = sadd.s32 %s388, %s389
      %s391 = scalar_lea.vmem %s2, %s390
      %p392 = scmp.lt.s32.totalorder %s26, 0
      %s393 = scalar_select %p392, %s26, 0
      %s394 = scalar_lea.vmem %s3, %s393
      %p395 = scmp.lt.s32.totalorder %s26, 0
      %s396 = scalar_select %p395, %s26, 0
      %s397 = scalar_lea.vmem %s4, %s396
      %s398 = smul.u32 8, %s25
      %p399 = scmp.lt.s32.totalorder %s398, 7
      %s400 = scalar_select %p399, %s398, 7
      %s401 = smul.addr %s400, 8
      %s402 = scalar_lea.vmem %s5, %s401
      %s403 = smul.u32 8, %s25
      %s404 = smul.u32 8, %s25
      %p405 = scmp.lt.s32.totalorder %s23, 1
      %s406 = scalar_select %p405, %s23, 1
      %p407 = scmp.lt.s32.totalorder %s24, 1
      %s408 = scalar_select %p407, %s24, 1
      %p409 = scmp.lt.s32.totalorder %s404, 7
      %s410 = scalar_select %p409, %s404, 7
      %p411 = scmp.lt.s32.totalorder %s26, 0
      %s412 = scalar_select %p411, %s26, 0
      %s413 = sadd.s32 %s412, %s410
      %s414 = smul.addr %s408, 8
      %s415 = sadd.s32 %s413, %s414
      %s416 = smul.addr %s406, 16
      %s417 = sadd.s32 %s415, %s416
      %s418 = smul.addr %s417, 8
      %s419 = scalar_lea.vmem %s6, %s418
      %s420 = smul.u32 8, %s25
      %v421 = vld [vmem:[%s394] sm:$0x1]
      %v422 = vld [vmem:[%s377] sm:$0x1]
      %v423 = vld [vmem:[%s384] sm:$0x1]
      %v424 = vld [vmem:[%s397] sm:$0x1]
      %vm425 = vcmask 7168
      %v427 = vsel %vm425, %v423, 0
      %vm429 = vcmask 1040384
      %v431 = vsel %vm429, %v424, 0
      %433 = vmatprep.subr.mxu0 0.0
      %434 = vmatpush1.msra.mxu0 %v431
      %435 = vmatprep.subr.mxu0 0.0
      %436 = vmatpush1.msra.mxu0 0.0
      %437 = vmatprep.subr.mxu0 0.0
      %438 = vmatpush1.msra.mxu0 0.0
      %439 = vmatprep.subr.mxu0 0.0
      %440 = vmatpush1.msra.mxu0 0.0
      %441 = vmatprep.subr.mxu0 0.0
      %442 = vmatpush1.msra.mxu0 0.0
      %443 = vmatprep.subr.mxu0 0.0
      %444 = vmatpush1.msra.mxu0 0.0
      %445 = vmatprep.subr.mxu0 0.0
      %446 = vmatpush1.msra.mxu0 0.0
      %447 = vmatprep.subr.mxu0 0.0
      %448 = vmatpush1.msra.mxu0 0.0
      %449 = vmatprep.subr.mxu0 0.0
      %450 = vmatpush1.msra.mxu0 0.0
      %451 = vmatprep.subr.mxu0 0.0
      %452 = vmatpush1.msra.mxu0 0.0
      %453 = vmatprep.subr.mxu0 0.0
      %454 = vmatpush1.msra.mxu0 0.0
      %455 = vmatprep.subr.mxu0 0.0
      %456 = vmatpush1.msra.mxu0 0.0
      %457 = vmatprep.subr.mxu0 0.0
      %458 = vmatpush1.msra.mxu0 0.0
      %459 = vmatprep.subr.mxu0 0.0
      %460 = vmatpush1.msra.mxu0 0.0
      %461 = vmatprep.subr.mxu0 0.0
      %462 = vmatpush1.msra.mxu0 0.0
      %463 = vmatprep.subr.mxu0 0.0
      %464 = vmatpush1.msra.mxu0 0.0
      %465 = vmatprep.subr.mxu0 0.0
      %466 = vmatpush1.msra.mxu0 0.0
      %467 = vmatprep.subr.mxu0 0.0
      %468 = vmatpush1.msra.mxu0 0.0
      %469 = vmatprep.subr.mxu0 0.0
      %470 = vmatpush1.msra.mxu0 0.0
      %471 = vmatprep.subr.mxu0 0.0
      %472 = vmatpush1.msra.mxu0 0.0
      %473 = vmatprep.subr.mxu0 0.0
      %474 = vmatpush1.msra.mxu0 0.0
      %475 = vmatprep.subr.mxu0 0.0
      %476 = vmatpush1.msra.mxu0 0.0
      %477 = vmatprep.subr.mxu0 0.0
      %478 = vmatpush1.msra.mxu0 0.0
      %479 = vmatprep.subr.mxu0 0.0
      %480 = vmatpush1.msra.mxu0 0.0
      %481 = vmatprep.subr.mxu0 0.0
      %482 = vmatpush1.msra.mxu0 0.0
      %483 = vmatprep.subr.mxu0 0.0
      %484 = vmatpush1.msra.mxu0 0.0
      %485 = vmatprep.subr.mxu0 0.0
      %486 = vmatpush1.msra.mxu0 0.0
      %487 = vmatprep.subr.mxu0 0.0
      %488 = vmatpush1.msra.mxu0 0.0
      %489 = vmatprep.subr.mxu0 0.0
      %490 = vmatpush1.msra.mxu0 0.0
      %491 = vmatprep.subr.mxu0 0.0
      %492 = vmatpush1.msra.mxu0 0.0
      %493 = vmatprep.subr.mxu0 0.0
      %494 = vmatpush1.msra.mxu0 0.0
      %495 = vmatprep.subr.mxu0 0.0
      %496 = vmatpush1.msra.mxu0 0.0
      %497 = vmatprep.mubr.f32.mxu0 0.0
      %498 = vmatmul.mubr.f32.gmra.mrb[0].mxu0 %v427
      %v499 = vpop.f32.mrb[0].mxu0
      %v500 = vadd.f32 0.0, %v499
      %v501 = vpop.f32.mrb[0].mxu0
      %502 = vdwg.mxu0
      %v504 = vsel %vm425, %v422, 0
      %v507 = vsel %vm429, %v421, 0
      %509 = vmatprep.subr.mxu0 0.0
      %510 = vmatpush1.msra.mxu0 %v507
      %511 = vmatprep.subr.mxu0 0.0
      %512 = vmatpush1.msra.mxu0 0.0
      %513 = vmatprep.subr.mxu0 0.0
      %514 = vmatpush1.msra.mxu0 0.0
      %515 = vmatprep.subr.mxu0 0.0
      %516 = vmatpush1.msra.mxu0 0.0
      %517 = vmatprep.subr.mxu0 0.0
      %518 = vmatpush1.msra.mxu0 0.0
      %519 = vmatprep.subr.mxu0 0.0
      %520 = vmatpush1.msra.mxu0 0.0
      %521 = vmatprep.subr.mxu0 0.0
      %522 = vmatpush1.msra.mxu0 0.0
      %523 = vmatprep.subr.mxu0 0.0
      %524 = vmatpush1.msra.mxu0 0.0
      %525 = vmatprep.subr.mxu0 0.0
      %526 = vmatpush1.msra.mxu0 0.0
      %527 = vmatprep.subr.mxu0 0.0
      %528 = vmatpush1.msra.mxu0 0.0
      %529 = vmatprep.subr.mxu0 0.0
      %530 = vmatpush1.msra.mxu0 0.0
      %531 = vmatprep.subr.mxu0 0.0
      %532 = vmatpush1.msra.mxu0 0.0
      %533 = vmatprep.subr.mxu0 0.0
      %534 = vmatpush1.msra.mxu0 0.0
      %535 = vmatprep.subr.mxu0 0.0
      %536 = vmatpush1.msra.mxu0 0.0
      %537 = vmatprep.subr.mxu0 0.0
      %538 = vmatpush1.msra.mxu0 0.0
      %539 = vmatprep.subr.mxu0 0.0
      %540 = vmatpush1.msra.mxu0 0.0
      %541 = vmatprep.subr.mxu0 0.0
      %542 = vmatpush1.msra.mxu0 0.0
      %543 = vmatprep.subr.mxu0 0.0
      %544 = vmatpush1.msra.mxu0 0.0
      %545 = vmatprep.subr.mxu0 0.0
      %546 = vmatpush1.msra.mxu0 0.0
      %547 = vmatprep.subr.mxu0 0.0
      %548 = vmatpush1.msra.mxu0 0.0
      %549 = vmatprep.subr.mxu0 0.0
      %550 = vmatpush1.msra.mxu0 0.0
      %551 = vmatprep.subr.mxu0 0.0
      %552 = vmatpush1.msra.mxu0 0.0
      %553 = vmatprep.subr.mxu0 0.0
      %554 = vmatpush1.msra.mxu0 0.0
      %555 = vmatprep.subr.mxu0 0.0
      %556 = vmatpush1.msra.mxu0 0.0
      %557 = vmatprep.subr.mxu0 0.0
      %558 = vmatpush1.msra.mxu0 0.0
      %559 = vmatprep.subr.mxu0 0.0
      %560 = vmatpush1.msra.mxu0 0.0
      %561 = vmatprep.subr.mxu0 0.0
      %562 = vmatpush1.msra.mxu0 0.0
      %563 = vmatprep.subr.mxu0 0.0
      %564 = vmatpush1.msra.mxu0 0.0
      %565 = vmatprep.subr.mxu0 0.0
      %566 = vmatpush1.msra.mxu0 0.0
      %567 = vmatprep.subr.mxu0 0.0
      %568 = vmatpush1.msra.mxu0 0.0
      %569 = vmatprep.subr.mxu0 0.0
      %570 = vmatpush1.msra.mxu0 0.0
      %571 = vmatprep.subr.mxu0 0.0
      %572 = vmatpush1.msra.mxu0 0.0
      %573 = vmatprep.mubr.f32.mxu0 0.0
      %574 = vmatmul.mubr.f32.gmra.mrb[0].mxu0 %v504
      %v575 = vpop.f32.mrb[0].mxu0
      %v576 = vadd.f32 %v500, %v575
      %v577 = vpop.f32.mrb[0].mxu0
      %578 = vdwg.mxu0
      %v579 = vld [vmem:[%s391] sm:$0x1]
      %v581 = vsel %vm425, %v579, 0
      %583 = vmatprep.subr.mxu0 0.0
      %584 = vmatpush1.msra.mxu0 %v507
      %585 = vmatprep.subr.mxu0 0.0
      %586 = vmatpush1.msra.mxu0 0.0
      %587 = vmatprep.subr.mxu0 0.0
      %588 = vmatpush1.msra.mxu0 0.0
      %589 = vmatprep.subr.mxu0 0.0
      %590 = vmatpush1.msra.mxu0 0.0
      %591 = vmatprep.subr.mxu0 0.0
      %592 = vmatpush1.msra.mxu0 0.0
      %593 = vmatprep.subr.mxu0 0.0
      %594 = vmatpush1.msra.mxu0 0.0
      %595 = vmatprep.subr.mxu0 0.0
      %596 = vmatpush1.msra.mxu0 0.0
      %597 = vmatprep.subr.mxu0 0.0
      %598 = vmatpush1.msra.mxu0 0.0
      %599 = vmatprep.subr.mxu0 0.0
      %600 = vmatpush1.msra.mxu0 0.0
      %601 = vmatprep.subr.mxu0 0.0
      %602 = vmatpush1.msra.mxu0 0.0
      %603 = vmatprep.subr.mxu0 0.0
      %604 = vmatpush1.msra.mxu0 0.0
      %605 = vmatprep.subr.mxu0 0.0
      %606 = vmatpush1.msra.mxu0 0.0
      %607 = vmatprep.subr.mxu0 0.0
      %608 = vmatpush1.msra.mxu0 0.0
      %609 = vmatprep.subr.mxu0 0.0
      %610 = vmatpush1.msra.mxu0 0.0
      %611 = vmatprep.subr.mxu0 0.0
      %612 = vmatpush1.msra.mxu0 0.0
      %613 = vmatprep.subr.mxu0 0.0
      %614 = vmatpush1.msra.mxu0 0.0
      %615 = vmatprep.subr.mxu0 0.0
      %616 = vmatpush1.msra.mxu0 0.0
      %617 = vmatprep.subr.mxu0 0.0
      %618 = vmatpush1.msra.mxu0 0.0
      %619 = vmatprep.subr.mxu0 0.0
      %620 = vmatpush1.msra.mxu0 0.0
      %621 = vmatprep.subr.mxu0 0.0
      %622 = vmatpush1.msra.mxu0 0.0
      %623 = vmatprep.subr.mxu0 0.0
      %624 = vmatpush1.msra.mxu0 0.0
      %625 = vmatprep.subr.mxu0 0.0
      %626 = vmatpush1.msra.mxu0 0.0
      %627 = vmatprep.subr.mxu0 0.0
      %628 = vmatpush1.msra.mxu0 0.0
      %629 = vmatprep.subr.mxu0 0.0
      %630 = vmatpush1.msra.mxu0 0.0
      %631 = vmatprep.subr.mxu0 0.0
      %632 = vmatpush1.msra.mxu0 0.0
      %633 = vmatprep.subr.mxu0 0.0
      %634 = vmatpush1.msra.mxu0 0.0
      %635 = vmatprep.subr.mxu0 0.0
      %636 = vmatpush1.msra.mxu0 0.0
      %637 = vmatprep.subr.mxu0 0.0
      %638 = vmatpush1.msra.mxu0 0.0
      %639 = vmatprep.subr.mxu0 0.0
      %640 = vmatpush1.msra.mxu0 0.0
      %641 = vmatprep.subr.mxu0 0.0
      %642 = vmatpush1.msra.mxu0 0.0
      %643 = vmatprep.subr.mxu0 0.0
      %644 = vmatpush1.msra.mxu0 0.0
      %645 = vmatprep.subr.mxu0 0.0
      %646 = vmatpush1.msra.mxu0 0.0
      %647 = vmatprep.mubr.f32.mxu0 0.0
      %648 = vmatmul.mubr.f32.gmra.mrb[0].mxu0 %v581
      %v649 = vpop.f32.mrb[0].mxu0
      %v650 = vadd.f32 0.0, %v649
      %v651 = vpop.f32.mrb[0].mxu0
      %652 = vdwg.mxu0
      %v654 = vrot.slane %v650, 7
      %v656 = vsel %vm429, %v576, %v654
      %v657 = vld [vmem:[%s402] sm:$0xff]
      %v658 = vld [vmem:[%s402 + $0x8] sm:$0xff]
      %v659 = vld [vmem:[%s402 + $0x10] sm:$0xff]
      %v660 = vld [vmem:[%s402 + $0x18] sm:$0xff]
      %v661 = vld [vmem:[%s402 + $0x20] sm:$0xff]
      %v662 = vld [vmem:[%s402 + $0x28] sm:$0xff]
      %v663 = vld [vmem:[%s402 + $0x30] sm:$0xff]
      %v664 = vld [vmem:[%s402 + $0x38] sm:$0xff]
      %vm665 = vcmask 15360
      %v667 = vsel %vm665, %v657, 0
      %v670 = vsel %vm665, %v658, 0
      %v673 = vsel %vm665, %v659, 0
      %v676 = vsel %vm665, %v660, 0
      %v679 = vsel %vm665, %v661, 0
      %v682 = vsel %vm665, %v662, 0
      %v685 = vsel %vm665, %v663, 0
      %v688 = vsel %vm665, %v664, 0
      %vm690 = vcmask 1041408
      %v692 = vsel %vm690, %v656, 0
      %694 = vmatprep.subr.mxu0 0.0
      %695 = vmatpush1.msra.mxu0 %v692
      %696 = vmatprep.subr.mxu0 0.0
      %697 = vmatpush1.msra.mxu0 0.0
      %698 = vmatprep.subr.mxu0 0.0
      %699 = vmatpush1.msra.mxu0 0.0
      %700 = vmatprep.subr.mxu0 0.0
      %701 = vmatpush1.msra.mxu0 0.0
      %702 = vmatprep.subr.mxu0 0.0
      %703 = vmatpush1.msra.mxu0 0.0
      %704 = vmatprep.subr.mxu0 0.0
      %705 = vmatpush1.msra.mxu0 0.0
      %706 = vmatprep.subr.mxu0 0.0
      %707 = vmatpush1.msra.mxu0 0.0
      %708 = vmatprep.subr.mxu0 0.0
      %709 = vmatpush1.msra.mxu0 0.0
      %710 = vmatprep.subr.mxu0 0.0
      %711 = vmatpush1.msra.mxu0 0.0
      %712 = vmatprep.subr.mxu0 0.0
      %713 = vmatpush1.msra.mxu0 0.0
      %714 = vmatprep.subr.mxu0 0.0
      %715 = vmatpush1.msra.mxu0 0.0
      %716 = vmatprep.subr.mxu0 0.0
      %717 = vmatpush1.msra.mxu0 0.0
      %718 = vmatprep.subr.mxu0 0.0
      %719 = vmatpush1.msra.mxu0 0.0
      %720 = vmatprep.subr.mxu0 0.0
      %721 = vmatpush1.msra.mxu0 0.0
      %722 = vmatprep.subr.mxu0 0.0
      %723 = vmatpush1.msra.mxu0 0.0
      %724 = vmatprep.subr.mxu0 0.0
      %725 = vmatpush1.msra.mxu0 0.0
      %726 = vmatprep.subr.mxu0 0.0
      %727 = vmatpush1.msra.mxu0 0.0
      %728 = vmatprep.subr.mxu0 0.0
      %729 = vmatpush1.msra.mxu0 0.0
      %730 = vmatprep.subr.mxu0 0.0
      %731 = vmatpush1.msra.mxu0 0.0
      %732 = vmatprep.subr.mxu0 0.0
      %733 = vmatpush1.msra.mxu0 0.0
      %734 = vmatprep.subr.mxu0 0.0
      %735 = vmatpush1.msra.mxu0 0.0
      %736 = vmatprep.subr.mxu0 0.0
      %737 = vmatpush1.msra.mxu0 0.0
      %738 = vmatprep.subr.mxu0 0.0
      %739 = vmatpush1.msra.mxu0 0.0
      %740 = vmatprep.subr.mxu0 0.0
      %741 = vmatpush1.msra.mxu0 0.0
      %742 = vmatprep.subr.mxu0 0.0
      %743 = vmatpush1.msra.mxu0 0.0
      %744 = vmatprep.subr.mxu0 0.0
      %745 = vmatpush1.msra.mxu0 0.0
      %746 = vmatprep.subr.mxu0 0.0
      %747 = vmatpush1.msra.mxu0 0.0
      %748 = vmatprep.subr.mxu0 0.0
      %749 = vmatpush1.msra.mxu0 0.0
      %750 = vmatprep.subr.mxu0 0.0
      %751 = vmatpush1.msra.mxu0 0.0
      %752 = vmatprep.subr.mxu0 0.0
      %753 = vmatpush1.msra.mxu0 0.0
      %754 = vmatprep.subr.mxu0 0.0
      %755 = vmatpush1.msra.mxu0 0.0
      %756 = vmatprep.subr.mxu0 0.0
      %757 = vmatpush1.msra.mxu0 0.0
      %758 = vmatprep.mubr.f32.mxu0 0.0
      %759 = vmatmul.mubr.f32.gmra.mrb[0].mxu0 %v667
      %v760 = vpop.f32.mrb[0].mxu0
      %v761 = vadd.f32 0.0, %v760
      %v762 = vpop.f32.mrb[0].mxu0
      %763 = vmatprep.mubr.f32.mxu0 0.0
      %764 = vmatmul.mubr.f32.gmra.mrb[0].mxu0 %v670
      %v765 = vpop.f32.mrb[0].mxu0
      %v766 = vadd.f32 0.0, %v765
      %v767 = vpop.f32.mrb[0].mxu0
      %768 = vmatprep.mubr.f32.mxu0 0.0
      %769 = vmatmul.mubr.f32.gmra.mrb[0].mxu0 %v673
      %v770 = vpop.f32.mrb[0].mxu0
      %v771 = vadd.f32 0.0, %v770
      %v772 = vpop.f32.mrb[0].mxu0
      %773 = vmatprep.mubr.f32.mxu0 0.0
      %774 = vmatmul.mubr.f32.gmra.mrb[0].mxu0 %v676
      %v775 = vpop.f32.mrb[0].mxu0
      %v776 = vadd.f32 0.0, %v775
      %v777 = vpop.f32.mrb[0].mxu0
      %778 = vmatprep.mubr.f32.mxu0 0.0
      %779 = vmatmul.mubr.f32.gmra.mrb[0].mxu0 %v679
      %v780 = vpop.f32.mrb[0].mxu0
      %v781 = vadd.f32 0.0, %v780
      %v782 = vpop.f32.mrb[0].mxu0
      %783 = vmatprep.mubr.f32.mxu0 0.0
      %784 = vmatmul.mubr.f32.gmra.mrb[0].mxu0 %v682
      %v785 = vpop.f32.mrb[0].mxu0
      %v786 = vadd.f32 0.0, %v785
      %v787 = vpop.f32.mrb[0].mxu0
      %788 = vmatprep.mubr.f32.mxu0 0.0
      %789 = vmatmul.mubr.f32.gmra.mrb[0].mxu0 %v685
      %v790 = vpop.f32.mrb[0].mxu0
      %v791 = vadd.f32 0.0, %v790
      %v792 = vpop.f32.mrb[0].mxu0
      %793 = vmatprep.mubr.f32.mxu0 0.0
      %794 = vmatmul.mubr.f32.gmra.mrb[0].mxu0 %v688
      %v795 = vpop.f32.mrb[0].mxu0
      %v796 = vadd.f32 0.0, %v795
      %v797 = vpop.f32.mrb[0].mxu0
      %798 = vdwg.mxu0
      %vm799 = vcmask 523264
      %800 = vst.msk [vmem:[%s419] sm:$0xff] %vm799, %v761
      %801 = vst.msk [vmem:[%s419 + $0x8] sm:$0xff] %vm799, %v766
      %802 = vst.msk [vmem:[%s419 + $0x10] sm:$0xff] %vm799, %v771
      %803 = vst.msk [vmem:[%s419 + $0x18] sm:$0xff] %vm799, %v776
      %804 = vst.msk [vmem:[%s419 + $0x20] sm:$0xff] %vm799, %v781
      %805 = vst.msk [vmem:[%s419 + $0x28] sm:$0xff] %vm799, %v786
      %806 = vst.msk [vmem:[%s419 + $0x30] sm:$0xff] %vm799, %v791
      %807 = vst.msk [vmem:[%s419 + $0x38] sm:$0xff] %vm799, %v796
      %s808 = smul.u32 8, %s25
      %p809 = scmp.lt.s32.totalorder %s23, 1
      %s810 = scalar_select %p809, %s23, 1
      %p811 = scmp.lt.s32.totalorder %s24, 1
      %s812 = scalar_select %p811, %s24, 1
      %p813 = scmp.lt.s32.totalorder %s808, 7
      %s814 = scalar_select %p813, %s808, 7
      %p815 = scmp.lt.s32.totalorder %s26, 0
      %s816 = scalar_select %p815, %s26, 0
      %s817 = sadd.s32 %s816, %s814
      %s818 = smul.addr %s812, 8
      %s819 = sadd.s32 %s817, %s818
      %s820 = smul.addr %s810, 16
      %s821 = sadd.s32 %s819, %s820
      %s822 = smul.addr %s821, 8
      %s823 = scalar_lea.vmem %s6, %s822
      // Predicated region
      $region45: #{_hitnet_forward_impl.12} parent=43 // pred_check
        %p824 = pneg %p229
      $region46: #{_hitnet_forward_impl.12} parent=43 // pred_check_branch
        %826 = sbr.rel (%p824) target = $region48
      $region47: #{_hitnet_forward_impl.12} parent=43 // pred_region
        %s827 = smul.u32 8, %s25
      $region48: #{_hitnet_forward_impl.12} parent=43 // pred_fallthru
        _
    $region44: #{_hitnet_forward_impl.12} parent=5 // pred_fallthru
      _
    %p828 = scmp.le.s32.totalorder 2, %s12
    // Predicated region
    $region49: #{_hitnet_forward_impl.12} parent=5 // pred_check
      %p829 = pneg %p828
    $region50: #{_hitnet_forward_impl.12} parent=5 // pred_check_branch
      %831 = sbr.rel (%p829) target = $region52
    $region51: #{_hitnet_forward_impl.12} parent=5 // pred_region
      %s832 = ssub.s32 %s12, 2
      // Predicated region
      $region53: #{_hitnet_forward_impl.12} parent=51 // pred_check
        %p833 = pneg %p235
      $region54: #{_hitnet_forward_impl.12} parent=51 // pred_check_branch
        %835 = sbr.rel (%p833) target = $region56
      $region55: #{_hitnet_forward_impl.12} parent=51 // pred_region
        %s836 = smul.u32 8, %s29
        %p837 = scmp.lt.s32.totalorder %s27, 1
        %s838 = scalar_select %p837, %s27, 1
        %p839 = scmp.lt.s32.totalorder %s28, 1
        %s840 = scalar_select %p839, %s28, 1
        %p841 = scmp.lt.s32.totalorder %s836, 7
        %s842 = scalar_select %p841, %s836, 7
        %p843 = scmp.lt.s32.totalorder %s30, 0
        %s844 = scalar_select %p843, %s30, 0
        %s845 = sadd.s32 %s844, %s842
        %s846 = smul.addr %s840, 8
        %s847 = sadd.s32 %s845, %s846
        %s848 = smul.addr %s838, 16
        %s849 = sadd.s32 %s847, %s848
        %s850 = smul.addr %s849, 8
        %s851 = scalar_lea.vmem %s6, %s850
      $region56: #{_hitnet_forward_impl.12} parent=51 // pred_fallthru
        _
    $region52: #{_hitnet_forward_impl.12} parent=5 // pred_fallthru
      _
  $region6: #{_hitnet_forward_impl.12} parent=0 // loop_footer
    %s16 = sadd.s32 1, %s12
  $region7: #{_hitnet_forward_impl.12} parent=0 // loop_footer_branch
    %11 = sbr.rel target = $region3
  $region8: #{_hitnet_forward_impl.12} parent=0 // loop_exit
    _

// kernel: _hitnet_forward_impl.15
$region0: #{_hitnet_forward_impl.15}
  #allocation0 [shape = 'u32[]', space=smem, size = 0x4, offset = 0x4, fixed_abs, tag = 'smem constant byte address 0x4 - core index']
  #allocation1 [shape = 'u32[144,128]{1,0:T(1,128)}', space=vmem, size = 0x12000, scoped, tag = 'internal scratch']
  %s0 = inlined_call_operand.vmem [shape: f32[2,10,2,2], index: 0, kind: input, shape index: {}]
  %s1 = inlined_call_operand.vmem [shape: f32[2,64], index: 1, kind: input, shape index: {}]
  %s2 = inlined_call_operand.vmem [shape: f32[64,2], index: 2, kind: input, shape index: {}]
  %s3 = inlined_call_operand.vmem [shape: f32[2,10,64,64], index: 3, kind: output, shape index: {}]
  %s4 = sld [smem:[#allocation0]]
  $region45: #{_hitnet_forward_impl.15} parent=0
    _
  %s6 = ssub.s32 1, %s4
  %s7 = scalar_select 0, %s6, %s4
  loop: start=0, step=1, limit=22
  $region2: #{_hitnet_forward_impl.15} parent=0 // loop_pre_header
    _
  $region3: #{_hitnet_forward_impl.15} parent=0 // loop_header
    %s9 = sphi 0, %s13
    %p10 = scmp.ge.s32.totalorder %s9, 22
    %s16 = sphi 0, %s42
    %s17 = sphi 0, %s38
    %s18 = sphi 0, %s34
    %s19 = sphi 0, %s30
    %s20 = sphi 0, %s16
    %s21 = sphi 0, %s17
    %s22 = sphi 0, %s18
    %s23 = sphi 0, %s19
    %s24 = sphi 0, %s20
    %s25 = sphi 0, %s21
    %s26 = sphi 0, %s22
    %s27 = sphi 0, %s23
    %s47 = sphi 0, %s49
    %s50 = sphi 0, %s47
    %s51 = sphi 0, %s50
    %s67 = sphi 0, %s51
    %s73 = sphi 0, %s75
    %s76 = sphi 0, %s73
    %s77 = sphi 0, %s76
    %s93 = sphi 0, %s77
    %s99 = sphi 0, %s101
    %s102 = sphi 0, %s99
    %s103 = sphi 0, %s102
    %s119 = sphi 0, %s103
    %s131 = sphi 0, %s133
    %s134 = sphi 0, %s131
    %s135 = sphi 0, %s134
    %s151 = sphi 0, %s135
  $region4: #{_hitnet_forward_impl.15} parent=0 // loop_header_branch
    %12 = sbr.rel (%p10) target = $region8
  $region5: #{_hitnet_forward_impl.15} parent=0 // loop_body
    %s14 = ssub.s32 %s9, 1
    %s15 = ssub.s32 %s9, 2
    %s28 = sadd.s32 1, %s19
    %p29 = scmp.ge.s32.totalorder %s28, 1
    %s30 = scalar_select %p29, 0, %s28
    %s31 = sadd.s32 1, %s18
    %s32 = scalar_select %p29, %s31, %s18
    %p33 = scmp.ge.s32.totalorder %s32, 1
    %s34 = scalar_select %p33, 0, %s32
    %s35 = sadd.s32 1, %s17
    %s36 = scalar_select %p33, %s35, %s17
    %p37 = scmp.ge.s32.totalorder %s36, 10
    %s38 = scalar_select %p37, 0, %s36
    %s39 = sadd.s32 1, %s16
    %s40 = scalar_select %p37, %s39, %s16
    %p41 = scmp.ge.s32.totalorder %s40, 2
    %s42 = scalar_select %p41, 0, %s40
    %s43 = ssub.s32 %s16, %s42
    %s44 = ssub.s32 %s17, %s38
    %s45 = sor.u32 %s43, %s44
    %p46 = scmp.eq.s32.totalorder %s45, 0
    %s48 = sadd.s32 %s47, 1
    %s49 = scalar_select %p46, %s47, %s48
    %p52 = pneg %p46
    %p53 = scmp.eq.s32.totalorder %s9, 19
    %p54 = por %p52, %p53
    %p55 = scmp.ne.s32.totalorder %s47, %s50
    %p56 = scmp.eq.s32.totalorder %s9, 0
    %p57 = por %p55, %p56
    %p58 = scmp.ne.s32.totalorder %s47, %s50
    %p59 = scmp.eq.s32.totalorder %s14, 19
    %p60 = por %p58, %p59
    %p61 = scmp.ne.s32.totalorder %s50, %s51
    %p62 = scmp.eq.s32.totalorder %s14, 0
    %p63 = por %p61, %p62
    %p64 = scmp.ne.s32.totalorder %s50, %s51
    %p65 = scmp.eq.s32.totalorder %s15, 19
    %p66 = por %p64, %p65
    %p68 = scmp.ne.s32.totalorder %s51, %s67
    %p69 = scmp.eq.s32.totalorder %s15, 0
    %p70 = por %p68, %p69
    %s71 = ssub.s32 %s19, %s30
    %p72 = scmp.eq.s32.totalorder %s71, 0
    %s74 = sadd.s32 %s73, 1
    %s75 = scalar_select %p72, %s73, %s74
    %p78 = pneg %p72
    %p79 = scmp.eq.s32.totalorder %s9, 19
    %p80 = por %p78, %p79
    %p81 = scmp.ne.s32.totalorder %s73, %s76
    %p82 = scmp.eq.s32.totalorder %s9, 0
    %p83 = por %p81, %p82
    %p84 = scmp.ne.s32.totalorder %s73, %s76
    %p85 = scmp.eq.s32.totalorder %s14, 19
    %p86 = por %p84, %p85
    %p87 = scmp.ne.s32.totalorder %s76, %s77
    %p88 = scmp.eq.s32.totalorder %s14, 0
    %p89 = por %p87, %p88
    %p90 = scmp.ne.s32.totalorder %s76, %s77
    %p91 = scmp.eq.s32.totalorder %s15, 19
    %p92 = por %p90, %p91
    %p94 = scmp.ne.s32.totalorder %s77, %s93
    %p95 = scmp.eq.s32.totalorder %s15, 0
    %p96 = por %p94, %p95
    %s97 = ssub.s32 %s18, %s34
    %p98 = scmp.eq.s32.totalorder %s97, 0
    %s100 = sadd.s32 %s99, 1
    %s101 = scalar_select %p98, %s99, %s100
    %p104 = pneg %p98
    %p105 = scmp.eq.s32.totalorder %s9, 19
    %p106 = por %p104, %p105
    %p107 = scmp.ne.s32.totalorder %s99, %s102
    %p108 = scmp.eq.s32.totalorder %s9, 0
    %p109 = por %p107, %p108
    %p110 = scmp.ne.s32.totalorder %s99, %s102
    %p111 = scmp.eq.s32.totalorder %s14, 19
    %p112 = por %p110, %p111
    %p113 = scmp.ne.s32.totalorder %s102, %s103
    %p114 = scmp.eq.s32.totalorder %s14, 0
    %p115 = por %p113, %p114
    %p116 = scmp.ne.s32.totalorder %s102, %s103
    %p117 = scmp.eq.s32.totalorder %s15, 19
    %p118 = por %p116, %p117
    %p120 = scmp.ne.s32.totalorder %s103, %s119
    %p121 = scmp.eq.s32.totalorder %s15, 0
    %p122 = por %p120, %p121
    %s123 = ssub.s32 %s16, %s42
    %s124 = ssub.s32 %s17, %s38
    %s125 = sor.u32 %s123, %s124
    %s126 = ssub.s32 %s18, %s34
    %s127 = sor.u32 %s125, %s126
    %s128 = ssub.s32 %s19, %s30
    %s129 = sor.u32 %s127, %s128
    %p130 = scmp.eq.s32.totalorder %s129, 0
    %s132 = sadd.s32 %s131, 1
    %s133 = scalar_select %p130, %s131, %s132
    %p136 = pneg %p130
    %p137 = scmp.eq.s32.totalorder %s9, 19
    %p138 = por %p136, %p137
    %p139 = scmp.ne.s32.totalorder %s131, %s134
    %p140 = scmp.eq.s32.totalorder %s9, 0
    %p141 = por %p139, %p140
    %p142 = scmp.ne.s32.totalorder %s131, %s134
    %p143 = scmp.eq.s32.totalorder %s14, 19
    %p144 = por %p142, %p143
    %p145 = scmp.ne.s32.totalorder %s134, %s135
    %p146 = scmp.eq.s32.totalorder %s14, 0
    %p147 = por %p145, %p146
    %p148 = scmp.ne.s32.totalorder %s134, %s135
    %p149 = scmp.eq.s32.totalorder %s15, 19
    %p150 = por %p148, %p149
    %p152 = scmp.ne.s32.totalorder %s135, %s151
    %p153 = scmp.eq.s32.totalorder %s15, 0
    %p154 = por %p152, %p153
    %p155 = scmp.le.s32.totalorder 1, %s9
    %p156 = scmp.lt.s32.totalorder %s9, 21
    %p157 = pnand %p155, %p156
    %p158 = pneg %p157
    // Predicated region
    $region9: #{_hitnet_forward_impl.15} parent=5 // pred_check
      _
    $region10: #{_hitnet_forward_impl.15} parent=5 // pred_check_branch
      %160 = sbr.rel (%p157) target = $region12
    $region11: #{_hitnet_forward_impl.15} parent=5 // pred_region
      %s161 = ssub.s32 %s9, 1
      // Predicated region
      $region13: #{_hitnet_forward_impl.15} parent=11 // pred_check
        %p162 = pneg %p89
      $region14: #{_hitnet_forward_impl.15} parent=11 // pred_check_branch
        %164 = sbr.rel (%p162) target = $region16
      $region15: #{_hitnet_forward_impl.15} parent=11 // pred_region
        %p165 = scmp.lt.s32.totalorder %s23, 0
        %s166 = scalar_select %p165, %s23, 0
        %s167 = smul.addr %s166, 2
        %s168 = scalar_lea.vmem %s1, %s167
      $region16: #{_hitnet_forward_impl.15} parent=11 // pred_fallthru
        _
      // Predicated region
      $region17: #{_hitnet_forward_impl.15} parent=11 // pred_check
        %p169 = pneg %p115
      $region18: #{_hitnet_forward_impl.15} parent=11 // pred_check_branch
        %171 = sbr.rel (%p169) target = $region20
      $region19: #{_hitnet_forward_impl.15} parent=11 // pred_region
        %s172 = smul.u32 8, %s22
        %p173 = scmp.lt.s32.totalorder %s172, 7
        %s174 = scalar_select %p173, %s172, 7
        %s175 = smul.addr %s174, 8
        %s176 = scalar_lea.vmem %s2, %s175
        %s177 = smul.u32 8, %s22
      $region20: #{_hitnet_forward_impl.15} parent=11 // pred_fallthru
        _
    $region12: #{_hitnet_forward_impl.15} parent=5 // pred_fallthru
      _
    %p178 = scmp.lt.s32.totalorder %s9, 20
    // Predicated region
    $region21: #{_hitnet_forward_impl.15} parent=5 // pred_check
      %p179 = pneg %p178
    $region22: #{_hitnet_forward_impl.15} parent=5 // pred_check_branch
      %181 = sbr.rel (%p179) target = $region24
    $region23: #{_hitnet_forward_impl.15} parent=5 // pred_region
      // Predicated region
      $region25: #{_hitnet_forward_impl.15} parent=23 // pred_check
        %p182 = pneg %p57
      $region26: #{_hitnet_forward_impl.15} parent=23 // pred_check_branch
        %184 = sbr.rel (%p182) target = $region28
      $region27: #{_hitnet_forward_impl.15} parent=23 // pred_region
        %p185 = scmp.lt.s32.totalorder %s16, 1
        %s186 = scalar_select %p185, %s16, 1
        %p187 = scmp.lt.s32.totalorder %s17, 9
        %s188 = scalar_select %p187, %s17, 9
        %s189 = smul.addr %s186, 10
        %s190 = sadd.s32 %s188, %s189
        %s191 = smul.addr %s190, 2
        %s192 = scalar_lea.vmem %s0, %s191
      $region28: #{_hitnet_forward_impl.15} parent=23 // pred_fallthru
        _
    $region24: #{_hitnet_forward_impl.15} parent=5 // pred_fallthru
      _
    %p193 = scmp.le.s32.totalorder 1, %s9
    %p194 = scmp.lt.s32.totalorder %s9, 21
    %p195 = pnand %p193, %p194
    %p196 = pneg %p195
    // Predicated region
    $region29: #{_hitnet_forward_impl.15} parent=5 // pred_check
      _
    $region30: #{_hitnet_forward_impl.15} parent=5 // pred_check_branch
      %198 = sbr.rel (%p195) target = $region32
    $region31: #{_hitnet_forward_impl.15} parent=5 // pred_region
      %s199 = ssub.s32 %s9, 1
      %p200 = scmp.lt.s32.totalorder %s20, 1
      %s201 = scalar_select %p200, %s20, 1
      %p202 = scmp.lt.s32.totalorder %s21, 9
      %s203 = scalar_select %p202, %s21, 9
      %s204 = smul.addr %s201, 10
      %s205 = sadd.s32 %s203, %s204
      %s206 = smul.addr %s205, 2
      %s207 = scalar_lea.vmem %s0, %s206
      %p208 = pneg %p63
      %p209 = pneg %p60
      %p210 = scmp.lt.s32.totalorder %s23, 0
      %s211 = scalar_select %p210, %s23, 0
      %s212 = smul.addr %s211, 2
      %s213 = scalar_lea.vmem %s1, %s212
      %p214 = pneg %p89
      %p215 = pneg %p86
      %s216 = smul.u32 8, %s22
      %p217 = scmp.lt.s32.totalorder %s216, 7
      %s218 = scalar_select %p217, %s216, 7
      %s219 = smul.addr %s218, 8
      %s220 = scalar_lea.vmem %s2, %s219
      %p221 = pneg %p115
      %p222 = pneg %p112
      %p223 = pneg %p147
      %p224 = pneg %p144
      %s225 = smul.u32 8, %s22
      %p226 = scmp.lt.s32.totalorder %s20, 1
      %s227 = scalar_select %p226, %s20, 1
      %p228 = scmp.lt.s32.totalorder %s21, 9
      %s229 = scalar_select %p228, %s21, 9
      %p230 = scmp.lt.s32.totalorder %s225, 7
      %s231 = scalar_select %p230, %s225, 7
      %p232 = scmp.lt.s32.totalorder %s23, 0
      %s233 = scalar_select %p232, %s23, 0
      %s234 = sadd.s32 %s233, %s231
      %s235 = smul.addr %s229, 8
      %s236 = sadd.s32 %s234, %s235
      %s237 = smul.addr %s227, 80
      %s238 = sadd.s32 %s236, %s237
      %s239 = smul.addr %s238, 8
      %s240 = scalar_lea.vmem %s3, %s239
      %p241 = scmp.lt.s32.totalorder %s20, 1
      %s242 = scalar_select %p241, %s20, 1
      %p243 = scmp.lt.s32.totalorder %s21, 9
      %s244 = scalar_select %p243, %s21, 9
      %s245 = smul.addr %s242, 10
      %s246 = sadd.s32 %s244, %s245
      %s247 = smul.addr %s246, 2
      %s248 = scalar_lea.vmem %s0, %s247
      %p249 = scmp.lt.s32.totalorder %s23, 0
      %s250 = scalar_select %p249, %s23, 0
      %s251 = smul.addr %s250, 2
      %s252 = scalar_lea.vmem %s1, %s251
      %s253 = smul.u32 8, %s22
      %p254 = scmp.lt.s32.totalorder %s253, 7
      %s255 = scalar_select %p254, %s253, 7
      %s256 = smul.addr %s255, 8
      %s257 = scalar_lea.vmem %s2, %s256
      %s258 = smul.u32 8, %s22
      %s259 = smul.u32 8, %s22
      %p260 = scmp.lt.s32.totalorder %s20, 1
      %s261 = scalar_select %p260, %s20, 1
      %p262 = scmp.lt.s32.totalorder %s21, 9
      %s263 = scalar_select %p262, %s21, 9
      %p264 = scmp.lt.s32.totalorder %s259, 7
      %s265 = scalar_select %p264, %s259, 7
      %p266 = scmp.lt.s32.totalorder %s23, 0
      %s267 = scalar_select %p266, %s23, 0
      %s268 = sadd.s32 %s267, %s265
      %s269 = smul.addr %s263, 8
      %s270 = sadd.s32 %s268, %s269
      %s271 = smul.addr %s261, 80
      %s272 = sadd.s32 %s270, %s271
      %s273 = smul.addr %s272, 8
      %s274 = scalar_lea.vmem %s3, %s273
      %s275 = smul.u32 8, %s22
      %v276 = vld [vmem:[%s248] sm:$0x3]
      %v277 = vld [vmem:[%s252] sm:$0x3]
      %vm278 = vcmask 15360
      %v280 = vsel %vm278, %v276, 0
      %vm282 = vcmask 1041408
      %v284 = vsel %vm282, %v277, 0
      %286 = vmatprep.subr.mxu0 0.0
      %287 = vmatpush1.msra.mxu0 %v284
      %288 = vmatprep.subr.mxu0 0.0
      %289 = vmatpush1.msra.mxu0 0.0
      %290 = vmatprep.subr.mxu0 0.0
      %291 = vmatpush1.msra.mxu0 0.0
      %292 = vmatprep.subr.mxu0 0.0
      %293 = vmatpush1.msra.mxu0 0.0
      %294 = vmatprep.subr.mxu0 0.0
      %295 = vmatpush1.msra.mxu0 0.0
      %296 = vmatprep.subr.mxu0 0.0
      %297 = vmatpush1.msra.mxu0 0.0
      %298 = vmatprep.subr.mxu0 0.0
      %299 = vmatpush1.msra.mxu0 0.0
      %300 = vmatprep.subr.mxu0 0.0
      %301 = vmatpush1.msra.mxu0 0.0
      %302 = vmatprep.subr.mxu0 0.0
      %303 = vmatpush1.msra.mxu0 0.0
      %304 = vmatprep.subr.mxu0 0.0
      %305 = vmatpush1.msra.mxu0 0.0
      %306 = vmatprep.subr.mxu0 0.0
      %307 = vmatpush1.msra.mxu0 0.0
      %308 = vmatprep.subr.mxu0 0.0
      %309 = vmatpush1.msra.mxu0 0.0
      %310 = vmatprep.subr.mxu0 0.0
      %311 = vmatpush1.msra.mxu0 0.0
      %312 = vmatprep.subr.mxu0 0.0
      %313 = vmatpush1.msra.mxu0 0.0
      %314 = vmatprep.subr.mxu0 0.0
      %315 = vmatpush1.msra.mxu0 0.0
      %316 = vmatprep.subr.mxu0 0.0
      %317 = vmatpush1.msra.mxu0 0.0
      %318 = vmatprep.subr.mxu0 0.0
      %319 = vmatpush1.msra.mxu0 0.0
      %320 = vmatprep.subr.mxu0 0.0
      %321 = vmatpush1.msra.mxu0 0.0
      %322 = vmatprep.subr.mxu0 0.0
      %323 = vmatpush1.msra.mxu0 0.0
      %324 = vmatprep.subr.mxu0 0.0
      %325 = vmatpush1.msra.mxu0 0.0
      %326 = vmatprep.subr.mxu0 0.0
      %327 = vmatpush1.msra.mxu0 0.0
      %328 = vmatprep.subr.mxu0 0.0
      %329 = vmatpush1.msra.mxu0 0.0
      %330 = vmatprep.subr.mxu0 0.0
      %331 = vmatpush1.msra.mxu0 0.0
      %332 = vmatprep.subr.mxu0 0.0
      %333 = vmatpush1.msra.mxu0 0.0
      %334 = vmatprep.subr.mxu0 0.0
      %335 = vmatpush1.msra.mxu0 0.0
      %336 = vmatprep.subr.mxu0 0.0
      %337 = vmatpush1.msra.mxu0 0.0
      %338 = vmatprep.subr.mxu0 0.0
      %339 = vmatpush1.msra.mxu0 0.0
      %340 = vmatprep.subr.mxu0 0.0
      %341 = vmatpush1.msra.mxu0 0.0
      %342 = vmatprep.subr.mxu0 0.0
      %343 = vmatpush1.msra.mxu0 0.0
      %344 = vmatprep.subr.mxu0 0.0
      %345 = vmatpush1.msra.mxu0 0.0
      %346 = vmatprep.subr.mxu0 0.0
      %347 = vmatpush1.msra.mxu0 0.0
      %348 = vmatprep.subr.mxu0 0.0
      %349 = vmatpush1.msra.mxu0 0.0
      %350 = vmatprep.mubr.f32.mxu0 0.0
      %351 = vmatmul.mubr.f32.gmra.mrb[0].mxu0 %v280
      %v352 = vpop.f32.mrb[0].mxu0
      %v353 = vadd.f32 0.0, %v352
      %v354 = vpop.f32.mrb[0].mxu0
      %355 = vdwg.mxu0
      %v356 = vld [vmem:[%s257] sm:$0xff]
      %v357 = vld [vmem:[%s257 + $0x8] sm:$0xff]
      %v358 = vld [vmem:[%s257 + $0x10] sm:$0xff]
      %v359 = vld [vmem:[%s257 + $0x18] sm:$0xff]
      %v360 = vld [vmem:[%s257 + $0x20] sm:$0xff]
      %v361 = vld [vmem:[%s257 + $0x28] sm:$0xff]
      %v362 = vld [vmem:[%s257 + $0x30] sm:$0xff]
      %v363 = vld [vmem:[%s257 + $0x38] sm:$0xff]
      %v365 = vsel %vm278, %v356, 0
      %v368 = vsel %vm278, %v357, 0
      %v371 = vsel %vm278, %v358, 0
      %v374 = vsel %vm278, %v359, 0
      %v377 = vsel %vm278, %v360, 0
      %v380 = vsel %vm278, %v361, 0
      %v383 = vsel %vm278, %v362, 0
      %v386 = vsel %vm278, %v363, 0
      %v389 = vsel %vm282, %v353, 0
      %391 = vmatprep.subr.mxu0 0.0
      %392 = vmatpush1.msra.mxu0 %v389
      %393 = vmatprep.subr.mxu0 0.0
      %394 = vmatpush1.msra.mxu0 0.0
      %395 = vmatprep.subr.mxu0 0.0
      %396 = vmatpush1.msra.mxu0 0.0
      %397 = vmatprep.subr.mxu0 0.0
      %398 = vmatpush1.msra.mxu0 0.0
      %399 = vmatprep.subr.mxu0 0.0
      %400 = vmatpush1.msra.mxu0 0.0
      %401 = vmatprep.subr.mxu0 0.0
      %402 = vmatpush1.msra.mxu0 0.0
      %403 = vmatprep.subr.mxu0 0.0
      %404 = vmatpush1.msra.mxu0 0.0
      %405 = vmatprep.subr.mxu0 0.0
      %406 = vmatpush1.msra.mxu0 0.0
      %407 = vmatprep.subr.mxu0 0.0
      %408 = vmatpush1.msra.mxu0 0.0
      %409 = vmatprep.subr.mxu0 0.0
      %410 = vmatpush1.msra.mxu0 0.0
      %411 = vmatprep.subr.mxu0 0.0
      %412 = vmatpush1.msra.mxu0 0.0
      %413 = vmatprep.subr.mxu0 0.0
      %414 = vmatpush1.msra.mxu0 0.0
      %415 = vmatprep.subr.mxu0 0.0
      %416 = vmatpush1.msra.mxu0 0.0
      %417 = vmatprep.subr.mxu0 0.0
      %418 = vmatpush1.msra.mxu0 0.0
      %419 = vmatprep.subr.mxu0 0.0
      %420 = vmatpush1.msra.mxu0 0.0
      %421 = vmatprep.subr.mxu0 0.0
      %422 = vmatpush1.msra.mxu0 0.0
      %423 = vmatprep.subr.mxu0 0.0
      %424 = vmatpush1.msra.mxu0 0.0
      %425 = vmatprep.subr.mxu0 0.0
      %426 = vmatpush1.msra.mxu0 0.0
      %427 = vmatprep.subr.mxu0 0.0
      %428 = vmatpush1.msra.mxu0 0.0
      %429 = vmatprep.subr.mxu0 0.0
      %430 = vmatpush1.msra.mxu0 0.0
      %431 = vmatprep.subr.mxu0 0.0
      %432 = vmatpush1.msra.mxu0 0.0
      %433 = vmatprep.subr.mxu0 0.0
      %434 = vmatpush1.msra.mxu0 0.0
      %435 = vmatprep.subr.mxu0 0.0
      %436 = vmatpush1.msra.mxu0 0.0
      %437 = vmatprep.subr.mxu0 0.0
      %438 = vmatpush1.msra.mxu0 0.0
      %439 = vmatprep.subr.mxu0 0.0
      %440 = vmatpush1.msra.mxu0 0.0
      %441 = vmatprep.subr.mxu0 0.0
      %442 = vmatpush1.msra.mxu0 0.0
      %443 = vmatprep.subr.mxu0 0.0
      %444 = vmatpush1.msra.mxu0 0.0
      %445 = vmatprep.subr.mxu0 0.0
      %446 = vmatpush1.msra.mxu0 0.0
      %447 = vmatprep.subr.mxu0 0.0
      %448 = vmatpush1.msra.mxu0 0.0
      %449 = vmatprep.subr.mxu0 0.0
      %450 = vmatpush1.msra.mxu0 0.0
      %451 = vmatprep.subr.mxu0 0.0
      %452 = vmatpush1.msra.mxu0 0.0
      %453 = vmatprep.subr.mxu0 0.0
      %454 = vmatpush1.msra.mxu0 0.0
      %455 = vmatprep.mubr.f32.mxu0 0.0
      %456 = vmatmul.mubr.f32.gmra.mrb[0].mxu0 %v365
      %v457 = vpop.f32.mrb[0].mxu0
      %v458 = vadd.f32 0.0, %v457
      %v459 = vpop.f32.mrb[0].mxu0
      %460 = vmatprep.mubr.f32.mxu0 0.0
      %461 = vmatmul.mubr.f32.gmra.mrb[0].mxu0 %v368
      %v462 = vpop.f32.mrb[0].mxu0
      %v463 = vadd.f32 0.0, %v462
      %v464 = vpop.f32.mrb[0].mxu0
      %465 = vmatprep.mubr.f32.mxu0 0.0
      %466 = vmatmul.mubr.f32.gmra.mrb[0].mxu0 %v371
      %v467 = vpop.f32.mrb[0].mxu0
      %v468 = vadd.f32 0.0, %v467
      %v469 = vpop.f32.mrb[0].mxu0
      %470 = vmatprep.mubr.f32.mxu0 0.0
      %471 = vmatmul.mubr.f32.gmra.mrb[0].mxu0 %v374
      %v472 = vpop.f32.mrb[0].mxu0
      %v473 = vadd.f32 0.0, %v472
      %v474 = vpop.f32.mrb[0].mxu0
      %475 = vmatprep.mubr.f32.mxu0 0.0
      %476 = vmatmul.mubr.f32.gmra.mrb[0].mxu0 %v377
      %v477 = vpop.f32.mrb[0].mxu0
      %v478 = vadd.f32 0.0, %v477
      %v479 = vpop.f32.mrb[0].mxu0
      %480 = vmatprep.mubr.f32.mxu0 0.0
      %481 = vmatmul.mubr.f32.gmra.mrb[0].mxu0 %v380
      %v482 = vpop.f32.mrb[0].mxu0
      %v483 = vadd.f32 0.0, %v482
      %v484 = vpop.f32.mrb[0].mxu0
      %485 = vmatprep.mubr.f32.mxu0 0.0
      %486 = vmatmul.mubr.f32.gmra.mrb[0].mxu0 %v383
      %v487 = vpop.f32.mrb[0].mxu0
      %v488 = vadd.f32 0.0, %v487
      %v489 = vpop.f32.mrb[0].mxu0
      %490 = vmatprep.mubr.f32.mxu0 0.0
      %491 = vmatmul.mubr.f32.gmra.mrb[0].mxu0 %v386
      %v492 = vpop.f32.mrb[0].mxu0
      %v493 = vadd.f32 0.0, %v492
      %v494 = vpop.f32.mrb[0].mxu0
      %495 = vdwg.mxu0
      %vm496 = vcmask 523264
      %497 = vst.msk [vmem:[%s274] sm:$0xff] %vm496, %v458
      %498 = vst.msk [vmem:[%s274 + $0x8] sm:$0xff] %vm496, %v463
      %499 = vst.msk [vmem:[%s274 + $0x10] sm:$0xff] %vm496, %v468
      %500 = vst.msk [vmem:[%s274 + $0x18] sm:$0xff] %vm496, %v473
      %501 = vst.msk [vmem:[%s274 + $0x20] sm:$0xff] %vm496, %v478
      %502 = vst.msk [vmem:[%s274 + $0x28] sm:$0xff] %vm496, %v483
      %503 = vst.msk [vmem:[%s274 + $0x30] sm:$0xff] %vm496, %v488
      %504 = vst.msk [vmem:[%s274 + $0x38] sm:$0xff] %vm496, %v493
      %s505 = smul.u32 8, %s22
      %p506 = scmp.lt.s32.totalorder %s20, 1
      %s507 = scalar_select %p506, %s20, 1
      %p508 = scmp.lt.s32.totalorder %s21, 9
      %s509 = scalar_select %p508, %s21, 9
      %p510 = scmp.lt.s32.totalorder %s505, 7
      %s511 = scalar_select %p510, %s505, 7
      %p512 = scmp.lt.s32.totalorder %s23, 0
      %s513 = scalar_select %p512, %s23, 0
      %s514 = sadd.s32 %s513, %s511
      %s515 = smul.addr %s509, 8
      %s516 = sadd.s32 %s514, %s515
      %s517 = smul.addr %s507, 80
      %s518 = sadd.s32 %s516, %s517
      %s519 = smul.addr %s518, 8
      %s520 = scalar_lea.vmem %s3, %s519
      // Predicated region
      $region33: #{_hitnet_forward_impl.15} parent=31 // pred_check
        %p521 = pneg %p144
      $region34: #{_hitnet_forward_impl.15} parent=31 // pred_check_branch
        %523 = sbr.rel (%p521) target = $region36
      $region35: #{_hitnet_forward_impl.15} parent=31 // pred_region
        %s524 = smul.u32 8, %s22
      $region36: #{_hitnet_forward_impl.15} parent=31 // pred_fallthru
        _
    $region32: #{_hitnet_forward_impl.15} parent=5 // pred_fallthru
      _
    %p525 = scmp.le.s32.totalorder 2, %s9
    // Predicated region
    $region37: #{_hitnet_forward_impl.15} parent=5 // pred_check
      %p526 = pneg %p525
    $region38: #{_hitnet_forward_impl.15} parent=5 // pred_check_branch
      %528 = sbr.rel (%p526) target = $region40
    $region39: #{_hitnet_forward_impl.15} parent=5 // pred_region
      %s529 = ssub.s32 %s9, 2
      // Predicated region
      $region41: #{_hitnet_forward_impl.15} parent=39 // pred_check
        %p530 = pneg %p150
      $region42: #{_hitnet_forward_impl.15} parent=39 // pred_check_branch
        %532 = sbr.rel (%p530) target = $region44
      $region43: #{_hitnet_forward_impl.15} parent=39 // pred_region
        %s533 = smul.u32 8, %s26
        %p534 = scmp.lt.s32.totalorder %s24, 1
        %s535 = scalar_select %p534, %s24, 1
        %p536 = scmp.lt.s32.totalorder %s25, 9
        %s537 = scalar_select %p536, %s25, 9
        %p538 = scmp.lt.s32.totalorder %s533, 7
        %s539 = scalar_select %p538, %s533, 7
        %p540 = scmp.lt.s32.totalorder %s27, 0
        %s541 = scalar_select %p540, %s27, 0
        %s542 = sadd.s32 %s541, %s539
        %s543 = smul.addr %s537, 8
        %s544 = sadd.s32 %s542, %s543
        %s545 = smul.addr %s535, 80
        %s546 = sadd.s32 %s544, %s545
        %s547 = smul.addr %s546, 8
        %s548 = scalar_lea.vmem %s3, %s547
      $region44: #{_hitnet_forward_impl.15} parent=39 // pred_fallthru
        _
    $region40: #{_hitnet_forward_impl.15} parent=5 // pred_fallthru
      _
  $region6: #{_hitnet_forward_impl.15} parent=0 // loop_footer
    %s13 = sadd.s32 1, %s9
  $region7: #{_hitnet_forward_impl.15} parent=0 // loop_footer_branch
    %8 = sbr.rel target = $region3
  $region8: #{_hitnet_forward_impl.15} parent=0 // loop_exit
    _

// kernel: _hitnet_forward_impl.13
$region0: #{_hitnet_forward_impl.13}
  #allocation0 [shape = 'u32[]', space=smem, size = 0x4, offset = 0x4, fixed_abs, tag = 'smem constant byte address 0x4 - core index']
  #allocation1 [shape = 'u32[144,128]{1,0:T(1,128)}', space=vmem, size = 0x12000, scoped, tag = 'internal scratch']
  %s0 = inlined_call_operand.vmem [shape: f32[2,4,1,1], index: 0, kind: input, shape index: {}]
  %s1 = inlined_call_operand.vmem [shape: f32[1,64], index: 1, kind: input, shape index: {}]
  %s2 = inlined_call_operand.vmem [shape: f32[64,1], index: 2, kind: input, shape index: {}]
  %s3 = inlined_call_operand.vmem [shape: f32[2,4,64,64], index: 3, kind: output, shape index: {}]
  %s4 = sld [smem:[#allocation0]]
  $region45: #{_hitnet_forward_impl.13} parent=0
    _
  %s6 = ssub.s32 1, %s4
  %s7 = scalar_select 0, %s6, %s4
  loop: start=0, step=1, limit=10
  $region2: #{_hitnet_forward_impl.13} parent=0 // loop_pre_header
    _
  $region3: #{_hitnet_forward_impl.13} parent=0 // loop_header
    %s9 = sphi 0, %s13
    %p10 = scmp.ge.s32.totalorder %s9, 10
    %s16 = sphi 0, %s42
    %s17 = sphi 0, %s38
    %s18 = sphi 0, %s34
    %s19 = sphi 0, %s30
    %s20 = sphi 0, %s16
    %s21 = sphi 0, %s17
    %s22 = sphi 0, %s18
    %s23 = sphi 0, %s19
    %s24 = sphi 0, %s20
    %s25 = sphi 0, %s21
    %s26 = sphi 0, %s22
    %s27 = sphi 0, %s23
    %s47 = sphi 0, %s49
    %s50 = sphi 0, %s47
    %s51 = sphi 0, %s50
    %s67 = sphi 0, %s51
    %s73 = sphi 0, %s75
    %s76 = sphi 0, %s73
    %s77 = sphi 0, %s76
    %s93 = sphi 0, %s77
    %s99 = sphi 0, %s101
    %s102 = sphi 0, %s99
    %s103 = sphi 0, %s102
    %s119 = sphi 0, %s103
    %s131 = sphi 0, %s133
    %s134 = sphi 0, %s131
    %s135 = sphi 0, %s134
    %s151 = sphi 0, %s135
  $region4: #{_hitnet_forward_impl.13} parent=0 // loop_header_branch
    %12 = sbr.rel (%p10) target = $region8
  $region5: #{_hitnet_forward_impl.13} parent=0 // loop_body
    %s14 = ssub.s32 %s9, 1
    %s15 = ssub.s32 %s9, 2
    %s28 = sadd.s32 1, %s19
    %p29 = scmp.ge.s32.totalorder %s28, 1
    %s30 = scalar_select %p29, 0, %s28
    %s31 = sadd.s32 1, %s18
    %s32 = scalar_select %p29, %s31, %s18
    %p33 = scmp.ge.s32.totalorder %s32, 1
    %s34 = scalar_select %p33, 0, %s32
    %s35 = sadd.s32 1, %s17
    %s36 = scalar_select %p33, %s35, %s17
    %p37 = scmp.ge.s32.totalorder %s36, 4
    %s38 = scalar_select %p37, 0, %s36
    %s39 = sadd.s32 1, %s16
    %s40 = scalar_select %p37, %s39, %s16
    %p41 = scmp.ge.s32.totalorder %s40, 2
    %s42 = scalar_select %p41, 0, %s40
    %s43 = ssub.s32 %s16, %s42
    %s44 = ssub.s32 %s17, %s38
    %s45 = sor.u32 %s43, %s44
    %p46 = scmp.eq.s32.totalorder %s45, 0
    %s48 = sadd.s32 %s47, 1
    %s49 = scalar_select %p46, %s47, %s48
    %p52 = pneg %p46
    %p53 = scmp.eq.s32.totalorder %s9, 7
    %p54 = por %p52, %p53
    %p55 = scmp.ne.s32.totalorder %s47, %s50
    %p56 = scmp.eq.s32.totalorder %s9, 0
    %p57 = por %p55, %p56
    %p58 = scmp.ne.s32.totalorder %s47, %s50
    %p59 = scmp.eq.s32.totalorder %s14, 7
    %p60 = por %p58, %p59
    %p61 = scmp.ne.s32.totalorder %s50, %s51
    %p62 = scmp.eq.s32.totalorder %s14, 0
    %p63 = por %p61, %p62
    %p64 = scmp.ne.s32.totalorder %s50, %s51
    %p65 = scmp.eq.s32.totalorder %s15, 7
    %p66 = por %p64, %p65
    %p68 = scmp.ne.s32.totalorder %s51, %s67
    %p69 = scmp.eq.s32.totalorder %s15, 0
    %p70 = por %p68, %p69
    %s71 = ssub.s32 %s19, %s30
    %p72 = scmp.eq.s32.totalorder %s71, 0
    %s74 = sadd.s32 %s73, 1
    %s75 = scalar_select %p72, %s73, %s74
    %p78 = pneg %p72
    %p79 = scmp.eq.s32.totalorder %s9, 7
    %p80 = por %p78, %p79
    %p81 = scmp.ne.s32.totalorder %s73, %s76
    %p82 = scmp.eq.s32.totalorder %s9, 0
    %p83 = por %p81, %p82
    %p84 = scmp.ne.s32.totalorder %s73, %s76
    %p85 = scmp.eq.s32.totalorder %s14, 7
    %p86 = por %p84, %p85
    %p87 = scmp.ne.s32.totalorder %s76, %s77
    %p88 = scmp.eq.s32.totalorder %s14, 0
    %p89 = por %p87, %p88
    %p90 = scmp.ne.s32.totalorder %s76, %s77
    %p91 = scmp.eq.s32.totalorder %s15, 7
    %p92 = por %p90, %p91
    %p94 = scmp.ne.s32.totalorder %s77, %s93
    %p95 = scmp.eq.s32.totalorder %s15, 0
    %p96 = por %p94, %p95
    %s97 = ssub.s32 %s18, %s34
    %p98 = scmp.eq.s32.totalorder %s97, 0
    %s100 = sadd.s32 %s99, 1
    %s101 = scalar_select %p98, %s99, %s100
    %p104 = pneg %p98
    %p105 = scmp.eq.s32.totalorder %s9, 7
    %p106 = por %p104, %p105
    %p107 = scmp.ne.s32.totalorder %s99, %s102
    %p108 = scmp.eq.s32.totalorder %s9, 0
    %p109 = por %p107, %p108
    %p110 = scmp.ne.s32.totalorder %s99, %s102
    %p111 = scmp.eq.s32.totalorder %s14, 7
    %p112 = por %p110, %p111
    %p113 = scmp.ne.s32.totalorder %s102, %s103
    %p114 = scmp.eq.s32.totalorder %s14, 0
    %p115 = por %p113, %p114
    %p116 = scmp.ne.s32.totalorder %s102, %s103
    %p117 = scmp.eq.s32.totalorder %s15, 7
    %p118 = por %p116, %p117
    %p120 = scmp.ne.s32.totalorder %s103, %s119
    %p121 = scmp.eq.s32.totalorder %s15, 0
    %p122 = por %p120, %p121
    %s123 = ssub.s32 %s16, %s42
    %s124 = ssub.s32 %s17, %s38
    %s125 = sor.u32 %s123, %s124
    %s126 = ssub.s32 %s18, %s34
    %s127 = sor.u32 %s125, %s126
    %s128 = ssub.s32 %s19, %s30
    %s129 = sor.u32 %s127, %s128
    %p130 = scmp.eq.s32.totalorder %s129, 0
    %s132 = sadd.s32 %s131, 1
    %s133 = scalar_select %p130, %s131, %s132
    %p136 = pneg %p130
    %p137 = scmp.eq.s32.totalorder %s9, 7
    %p138 = por %p136, %p137
    %p139 = scmp.ne.s32.totalorder %s131, %s134
    %p140 = scmp.eq.s32.totalorder %s9, 0
    %p141 = por %p139, %p140
    %p142 = scmp.ne.s32.totalorder %s131, %s134
    %p143 = scmp.eq.s32.totalorder %s14, 7
    %p144 = por %p142, %p143
    %p145 = scmp.ne.s32.totalorder %s134, %s135
    %p146 = scmp.eq.s32.totalorder %s14, 0
    %p147 = por %p145, %p146
    %p148 = scmp.ne.s32.totalorder %s134, %s135
    %p149 = scmp.eq.s32.totalorder %s15, 7
    %p150 = por %p148, %p149
    %p152 = scmp.ne.s32.totalorder %s135, %s151
    %p153 = scmp.eq.s32.totalorder %s15, 0
    %p154 = por %p152, %p153
    %p155 = scmp.le.s32.totalorder 1, %s9
    %p156 = scmp.lt.s32.totalorder %s9, 9
    %p157 = pnand %p155, %p156
    %p158 = pneg %p157
    // Predicated region
    $region9: #{_hitnet_forward_impl.13} parent=5 // pred_check
      _
    $region10: #{_hitnet_forward_impl.13} parent=5 // pred_check_branch
      %160 = sbr.rel (%p157) target = $region12
    $region11: #{_hitnet_forward_impl.13} parent=5 // pred_region
      %s161 = ssub.s32 %s9, 1
      // Predicated region
      $region13: #{_hitnet_forward_impl.13} parent=11 // pred_check
        %p162 = pneg %p89
      $region14: #{_hitnet_forward_impl.13} parent=11 // pred_check_branch
        %164 = sbr.rel (%p162) target = $region16
      $region15: #{_hitnet_forward_impl.13} parent=11 // pred_region
        %p165 = scmp.lt.s32.totalorder %s23, 0
        %s166 = scalar_select %p165, %s23, 0
        %s167 = scalar_lea.vmem %s1, %s166
      $region16: #{_hitnet_forward_impl.13} parent=11 // pred_fallthru
        _
      // Predicated region
      $region17: #{_hitnet_forward_impl.13} parent=11 // pred_check
        %p168 = pneg %p115
      $region18: #{_hitnet_forward_impl.13} parent=11 // pred_check_branch
        %170 = sbr.rel (%p168) target = $region20
      $region19: #{_hitnet_forward_impl.13} parent=11 // pred_region
        %s171 = smul.u32 8, %s22
        %p172 = scmp.lt.s32.totalorder %s171, 7
        %s173 = scalar_select %p172, %s171, 7
        %s174 = smul.addr %s173, 8
        %s175 = scalar_lea.vmem %s2, %s174
        %s176 = smul.u32 8, %s22
      $region20: #{_hitnet_forward_impl.13} parent=11 // pred_fallthru
        _
    $region12: #{_hitnet_forward_impl.13} parent=5 // pred_fallthru
      _
    %p177 = scmp.lt.s32.totalorder %s9, 8
    // Predicated region
    $region21: #{_hitnet_forward_impl.13} parent=5 // pred_check
      %p178 = pneg %p177
    $region22: #{_hitnet_forward_impl.13} parent=5 // pred_check_branch
      %180 = sbr.rel (%p178) target = $region24
    $region23: #{_hitnet_forward_impl.13} parent=5 // pred_region
      // Predicated region
      $region25: #{_hitnet_forward_impl.13} parent=23 // pred_check
        %p181 = pneg %p57
      $region26: #{_hitnet_forward_impl.13} parent=23 // pred_check_branch
        %183 = sbr.rel (%p181) target = $region28
      $region27: #{_hitnet_forward_impl.13} parent=23 // pred_region
        %p184 = scmp.lt.s32.totalorder %s16, 1
        %s185 = scalar_select %p184, %s16, 1
        %p186 = scmp.lt.s32.totalorder %s17, 3
        %s187 = scalar_select %p186, %s17, 3
        %s188 = smul.addr %s185, 4
        %s189 = sadd.s32 %s187, %s188
        %s190 = scalar_lea.vmem %s0, %s189
      $region28: #{_hitnet_forward_impl.13} parent=23 // pred_fallthru
        _
    $region24: #{_hitnet_forward_impl.13} parent=5 // pred_fallthru
      _
    %p191 = scmp.le.s32.totalorder 1, %s9
    %p192 = scmp.lt.s32.totalorder %s9, 9
    %p193 = pnand %p191, %p192
    %p194 = pneg %p193
    // Predicated region
    $region29: #{_hitnet_forward_impl.13} parent=5 // pred_check
      _
    $region30: #{_hitnet_forward_impl.13} parent=5 // pred_check_branch
      %196 = sbr.rel (%p193) target = $region32
    $region31: #{_hitnet_forward_impl.13} parent=5 // pred_region
      %s197 = ssub.s32 %s9, 1
      %p198 = scmp.lt.s32.totalorder %s20, 1
      %s199 = scalar_select %p198, %s20, 1
      %p200 = scmp.lt.s32.totalorder %s21, 3
      %s201 = scalar_select %p200, %s21, 3
      %s202 = smul.addr %s199, 4
      %s203 = sadd.s32 %s201, %s202
      %s204 = scalar_lea.vmem %s0, %s203
      %p205 = pneg %p63
      %p206 = pneg %p60
      %p207 = scmp.lt.s32.totalorder %s23, 0
      %s208 = scalar_select %p207, %s23, 0
      %s209 = scalar_lea.vmem %s1, %s208
      %p210 = pneg %p89
      %p211 = pneg %p86
      %s212 = smul.u32 8, %s22
      %p213 = scmp.lt.s32.totalorder %s212, 7
      %s214 = scalar_select %p213, %s212, 7
      %s215 = smul.addr %s214, 8
      %s216 = scalar_lea.vmem %s2, %s215
      %p217 = pneg %p115
      %p218 = pneg %p112
      %p219 = pneg %p147
      %p220 = pneg %p144
      %s221 = smul.u32 8, %s22
      %p222 = scmp.lt.s32.totalorder %s20, 1
      %s223 = scalar_select %p222, %s20, 1
      %p224 = scmp.lt.s32.totalorder %s21, 3
      %s225 = scalar_select %p224, %s21, 3
      %p226 = scmp.lt.s32.totalorder %s221, 7
      %s227 = scalar_select %p226, %s221, 7
      %p228 = scmp.lt.s32.totalorder %s23, 0
      %s229 = scalar_select %p228, %s23, 0
      %s230 = sadd.s32 %s229, %s227
      %s231 = smul.addr %s225, 8
      %s232 = sadd.s32 %s230, %s231
      %s233 = smul.addr %s223, 32
      %s234 = sadd.s32 %s232, %s233
      %s235 = smul.addr %s234, 8
      %s236 = scalar_lea.vmem %s3, %s235
      %p237 = scmp.lt.s32.totalorder %s20, 1
      %s238 = scalar_select %p237, %s20, 1
      %p239 = scmp.lt.s32.totalorder %s21, 3
      %s240 = scalar_select %p239, %s21, 3
      %s241 = smul.addr %s238, 4
      %s242 = sadd.s32 %s240, %s241
      %s243 = scalar_lea.vmem %s0, %s242
      %p244 = scmp.lt.s32.totalorder %s23, 0
      %s245 = scalar_select %p244, %s23, 0
      %s246 = scalar_lea.vmem %s1, %s245
      %s247 = smul.u32 8, %s22
      %p248 = scmp.lt.s32.totalorder %s247, 7
      %s249 = scalar_select %p248, %s247, 7
      %s250 = smul.addr %s249, 8
      %s251 = scalar_lea.vmem %s2, %s250
      %s252 = smul.u32 8, %s22
      %s253 = smul.u32 8, %s22
      %p254 = scmp.lt.s32.totalorder %s20, 1
      %s255 = scalar_select %p254, %s20, 1
      %p256 = scmp.lt.s32.totalorder %s21, 3
      %s257 = scalar_select %p256, %s21, 3
      %p258 = scmp.lt.s32.totalorder %s253, 7
      %s259 = scalar_select %p258, %s253, 7
      %p260 = scmp.lt.s32.totalorder %s23, 0
      %s261 = scalar_select %p260, %s23, 0
      %s262 = sadd.s32 %s261, %s259
      %s263 = smul.addr %s257, 8
      %s264 = sadd.s32 %s262, %s263
      %s265 = smul.addr %s255, 32
      %s266 = sadd.s32 %s264, %s265
      %s267 = smul.addr %s266, 8
      %s268 = scalar_lea.vmem %s3, %s267
      %s269 = smul.u32 8, %s22
      %v270 = vld [vmem:[%s243] sm:$0x1]
      %v271 = vld [vmem:[%s246] sm:$0x1]
      %vm272 = vcmask 7168
      %v274 = vsel %vm272, %v270, 0
      %vm276 = vcmask 1040384
      %v278 = vsel %vm276, %v271, 0
      %280 = vmatprep.subr.mxu0 0.0
      %281 = vmatpush1.msra.mxu0 %v278
      %282 = vmatprep.subr.mxu0 0.0
      %283 = vmatpush1.msra.mxu0 0.0
      %284 = vmatprep.subr.mxu0 0.0
      %285 = vmatpush1.msra.mxu0 0.0
      %286 = vmatprep.subr.mxu0 0.0
      %287 = vmatpush1.msra.mxu0 0.0
      %288 = vmatprep.subr.mxu0 0.0
      %289 = vmatpush1.msra.mxu0 0.0
      %290 = vmatprep.subr.mxu0 0.0
      %291 = vmatpush1.msra.mxu0 0.0
      %292 = vmatprep.subr.mxu0 0.0
      %293 = vmatpush1.msra.mxu0 0.0
      %294 = vmatprep.subr.mxu0 0.0
      %295 = vmatpush1.msra.mxu0 0.0
      %296 = vmatprep.subr.mxu0 0.0
      %297 = vmatpush1.msra.mxu0 0.0
      %298 = vmatprep.subr.mxu0 0.0
      %299 = vmatpush1.msra.mxu0 0.0
      %300 = vmatprep.subr.mxu0 0.0
      %301 = vmatpush1.msra.mxu0 0.0
      %302 = vmatprep.subr.mxu0 0.0
      %303 = vmatpush1.msra.mxu0 0.0
      %304 = vmatprep.subr.mxu0 0.0
      %305 = vmatpush1.msra.mxu0 0.0
      %306 = vmatprep.subr.mxu0 0.0
      %307 = vmatpush1.msra.mxu0 0.0
      %308 = vmatprep.subr.mxu0 0.0
      %309 = vmatpush1.msra.mxu0 0.0
      %310 = vmatprep.subr.mxu0 0.0
      %311 = vmatpush1.msra.mxu0 0.0
      %312 = vmatprep.subr.mxu0 0.0
      %313 = vmatpush1.msra.mxu0 0.0
      %314 = vmatprep.subr.mxu0 0.0
      %315 = vmatpush1.msra.mxu0 0.0
      %316 = vmatprep.subr.mxu0 0.0
      %317 = vmatpush1.msra.mxu0 0.0
      %318 = vmatprep.subr.mxu0 0.0
      %319 = vmatpush1.msra.mxu0 0.0
      %320 = vmatprep.subr.mxu0 0.0
      %321 = vmatpush1.msra.mxu0 0.0
      %322 = vmatprep.subr.mxu0 0.0
      %323 = vmatpush1.msra.mxu0 0.0
      %324 = vmatprep.subr.mxu0 0.0
      %325 = vmatpush1.msra.mxu0 0.0
      %326 = vmatprep.subr.mxu0 0.0
      %327 = vmatpush1.msra.mxu0 0.0
      %328 = vmatprep.subr.mxu0 0.0
      %329 = vmatpush1.msra.mxu0 0.0
      %330 = vmatprep.subr.mxu0 0.0
      %331 = vmatpush1.msra.mxu0 0.0
      %332 = vmatprep.subr.mxu0 0.0
      %333 = vmatpush1.msra.mxu0 0.0
      %334 = vmatprep.subr.mxu0 0.0
      %335 = vmatpush1.msra.mxu0 0.0
      %336 = vmatprep.subr.mxu0 0.0
      %337 = vmatpush1.msra.mxu0 0.0
      %338 = vmatprep.subr.mxu0 0.0
      %339 = vmatpush1.msra.mxu0 0.0
      %340 = vmatprep.subr.mxu0 0.0
      %341 = vmatpush1.msra.mxu0 0.0
      %342 = vmatprep.subr.mxu0 0.0
      %343 = vmatpush1.msra.mxu0 0.0
      %344 = vmatprep.mubr.f32.mxu0 0.0
      %345 = vmatmul.mubr.f32.gmra.mrb[0].mxu0 %v274
      %v346 = vpop.f32.mrb[0].mxu0
      %v347 = vadd.f32 0.0, %v346
      %v348 = vpop.f32.mrb[0].mxu0
      %349 = vdwg.mxu0
      %v350 = vld [vmem:[%s251] sm:$0xff]
      %v351 = vld [vmem:[%s251 + $0x8] sm:$0xff]
      %v352 = vld [vmem:[%s251 + $0x10] sm:$0xff]
      %v353 = vld [vmem:[%s251 + $0x18] sm:$0xff]
      %v354 = vld [vmem:[%s251 + $0x20] sm:$0xff]
      %v355 = vld [vmem:[%s251 + $0x28] sm:$0xff]
      %v356 = vld [vmem:[%s251 + $0x30] sm:$0xff]
      %v357 = vld [vmem:[%s251 + $0x38] sm:$0xff]
      %v359 = vsel %vm272, %v350, 0
      %v362 = vsel %vm272, %v351, 0
      %v365 = vsel %vm272, %v352, 0
      %v368 = vsel %vm272, %v353, 0
      %v371 = vsel %vm272, %v354, 0
      %v374 = vsel %vm272, %v355, 0
      %v377 = vsel %vm272, %v356, 0
      %v380 = vsel %vm272, %v357, 0
      %v383 = vsel %vm276, %v347, 0
      %385 = vmatprep.subr.mxu0 0.0
      %386 = vmatpush1.msra.mxu0 %v383
      %387 = vmatprep.subr.mxu0 0.0
      %388 = vmatpush1.msra.mxu0 0.0
      %389 = vmatprep.subr.mxu0 0.0
      %390 = vmatpush1.msra.mxu0 0.0
      %391 = vmatprep.subr.mxu0 0.0
      %392 = vmatpush1.msra.mxu0 0.0
      %393 = vmatprep.subr.mxu0 0.0
      %394 = vmatpush1.msra.mxu0 0.0
      %395 = vmatprep.subr.mxu0 0.0
      %396 = vmatpush1.msra.mxu0 0.0
      %397 = vmatprep.subr.mxu0 0.0
      %398 = vmatpush1.msra.mxu0 0.0
      %399 = vmatprep.subr.mxu0 0.0
      %400 = vmatpush1.msra.mxu0 0.0
      %401 = vmatprep.subr.mxu0 0.0
      %402 = vmatpush1.msra.mxu0 0.0
      %403 = vmatprep.subr.mxu0 0.0
      %404 = vmatpush1.msra.mxu0 0.0
      %405 = vmatprep.subr.mxu0 0.0
      %406 = vmatpush1.msra.mxu0 0.0
      %407 = vmatprep.subr.mxu0 0.0
      %408 = vmatpush1.msra.mxu0 0.0
      %409 = vmatprep.subr.mxu0 0.0
      %410 = vmatpush1.msra.mxu0 0.0
      %411 = vmatprep.subr.mxu0 0.0
      %412 = vmatpush1.msra.mxu0 0.0
      %413 = vmatprep.subr.mxu0 0.0
      %414 = vmatpush1.msra.mxu0 0.0
      %415 = vmatprep.subr.mxu0 0.0
      %416 = vmatpush1.msra.mxu0 0.0
      %417 = vmatprep.subr.mxu0 0.0
      %418 = vmatpush1.msra.mxu0 0.0
      %419 = vmatprep.subr.mxu0 0.0
      %420 = vmatpush1.msra.mxu0 0.0
      %421 = vmatprep.subr.mxu0 0.0
      %422 = vmatpush1.msra.mxu0 0.0
      %423 = vmatprep.subr.mxu0 0.0
      %424 = vmatpush1.msra.mxu0 0.0
      %425 = vmatprep.subr.mxu0 0.0
      %426 = vmatpush1.msra.mxu0 0.0
      %427 = vmatprep.subr.mxu0 0.0
      %428 = vmatpush1.msra.mxu0 0.0
      %429 = vmatprep.subr.mxu0 0.0
      %430 = vmatpush1.msra.mxu0 0.0
      %431 = vmatprep.subr.mxu0 0.0
      %432 = vmatpush1.msra.mxu0 0.0
      %433 = vmatprep.subr.mxu0 0.0
      %434 = vmatpush1.msra.mxu0 0.0
      %435 = vmatprep.subr.mxu0 0.0
      %436 = vmatpush1.msra.mxu0 0.0
      %437 = vmatprep.subr.mxu0 0.0
      %438 = vmatpush1.msra.mxu0 0.0
      %439 = vmatprep.subr.mxu0 0.0
      %440 = vmatpush1.msra.mxu0 0.0
      %441 = vmatprep.subr.mxu0 0.0
      %442 = vmatpush1.msra.mxu0 0.0
      %443 = vmatprep.subr.mxu0 0.0
      %444 = vmatpush1.msra.mxu0 0.0
      %445 = vmatprep.subr.mxu0 0.0
      %446 = vmatpush1.msra.mxu0 0.0
      %447 = vmatprep.subr.mxu0 0.0
      %448 = vmatpush1.msra.mxu0 0.0
      %449 = vmatprep.mubr.f32.mxu0 0.0
      %450 = vmatmul.mubr.f32.gmra.mrb[0].mxu0 %v359
      %v451 = vpop.f32.mrb[0].mxu0
      %v452 = vadd.f32 0.0, %v451
      %v453 = vpop.f32.mrb[0].mxu0
      %454 = vmatprep.mubr.f32.mxu0 0.0
      %455 = vmatmul.mubr.f32.gmra.mrb[0].mxu0 %v362
      %v456 = vpop.f32.mrb[0].mxu0
      %v457 = vadd.f32 0.0, %v456
      %v458 = vpop.f32.mrb[0].mxu0
      %459 = vmatprep.mubr.f32.mxu0 0.0
      %460 = vmatmul.mubr.f32.gmra.mrb[0].mxu0 %v365
      %v461 = vpop.f32.mrb[0].mxu0
      %v462 = vadd.f32 0.0, %v461
      %v463 = vpop.f32.mrb[0].mxu0
      %464 = vmatprep.mubr.f32.mxu0 0.0
      %465 = vmatmul.mubr.f32.gmra.mrb[0].mxu0 %v368
      %v466 = vpop.f32.mrb[0].mxu0
      %v467 = vadd.f32 0.0, %v466
      %v468 = vpop.f32.mrb[0].mxu0
      %469 = vmatprep.mubr.f32.mxu0 0.0
      %470 = vmatmul.mubr.f32.gmra.mrb[0].mxu0 %v371
      %v471 = vpop.f32.mrb[0].mxu0
      %v472 = vadd.f32 0.0, %v471
      %v473 = vpop.f32.mrb[0].mxu0
      %474 = vmatprep.mubr.f32.mxu0 0.0
      %475 = vmatmul.mubr.f32.gmra.mrb[0].mxu0 %v374
      %v476 = vpop.f32.mrb[0].mxu0
      %v477 = vadd.f32 0.0, %v476
      %v478 = vpop.f32.mrb[0].mxu0
      %479 = vmatprep.mubr.f32.mxu0 0.0
      %480 = vmatmul.mubr.f32.gmra.mrb[0].mxu0 %v377
      %v481 = vpop.f32.mrb[0].mxu0
      %v482 = vadd.f32 0.0, %v481
      %v483 = vpop.f32.mrb[0].mxu0
      %484 = vmatprep.mubr.f32.mxu0 0.0
      %485 = vmatmul.mubr.f32.gmra.mrb[0].mxu0 %v380
      %v486 = vpop.f32.mrb[0].mxu0
      %v487 = vadd.f32 0.0, %v486
      %v488 = vpop.f32.mrb[0].mxu0
      %489 = vdwg.mxu0
      %vm490 = vcmask 523264
      %491 = vst.msk [vmem:[%s268] sm:$0xff] %vm490, %v452
      %492 = vst.msk [vmem:[%s268 + $0x8] sm:$0xff] %vm490, %v457
      %493 = vst.msk [vmem:[%s268 + $0x10] sm:$0xff] %vm490, %v462
      %494 = vst.msk [vmem:[%s268 + $0x18] sm:$0xff] %vm490, %v467
      %495 = vst.msk [vmem:[%s268 + $0x20] sm:$0xff] %vm490, %v472
      %496 = vst.msk [vmem:[%s268 + $0x28] sm:$0xff] %vm490, %v477
      %497 = vst.msk [vmem:[%s268 + $0x30] sm:$0xff] %vm490, %v482
      %498 = vst.msk [vmem:[%s268 + $0x38] sm:$0xff] %vm490, %v487
      %s499 = smul.u32 8, %s22
      %p500 = scmp.lt.s32.totalorder %s20, 1
      %s501 = scalar_select %p500, %s20, 1
      %p502 = scmp.lt.s32.totalorder %s21, 3
      %s503 = scalar_select %p502, %s21, 3
      %p504 = scmp.lt.s32.totalorder %s499, 7
      %s505 = scalar_select %p504, %s499, 7
      %p506 = scmp.lt.s32.totalorder %s23, 0
      %s507 = scalar_select %p506, %s23, 0
      %s508 = sadd.s32 %s507, %s505
      %s509 = smul.addr %s503, 8
      %s510 = sadd.s32 %s508, %s509
      %s511 = smul.addr %s501, 32
      %s512 = sadd.s32 %s510, %s511
      %s513 = smul.addr %s512, 8
      %s514 = scalar_lea.vmem %s3, %s513
      // Predicated region
      $region33: #{_hitnet_forward_impl.13} parent=31 // pred_check
        %p515 = pneg %p144
      $region34: #{_hitnet_forward_impl.13} parent=31 // pred_check_branch
        %517 = sbr.rel (%p515) target = $region36
      $region35: #{_hitnet_forward_impl.13} parent=31 // pred_region
        %s518 = smul.u32 8, %s22
      $region36: #{_hitnet_forward_impl.13} parent=31 // pred_fallthru
        _
    $region32: #{_hitnet_forward_impl.13} parent=5 // pred_fallthru
      _
    %p519 = scmp.le.s32.totalorder 2, %s9
    // Predicated region
    $region37: #{_hitnet_forward_impl.13} parent=5 // pred_check
      %p520 = pneg %p519
    $region38: #{_hitnet_forward_impl.13} parent=5 // pred_check_branch
      %522 = sbr.rel (%p520) target = $region40
    $region39: #{_hitnet_forward_impl.13} parent=5 // pred_region
      %s523 = ssub.s32 %s9, 2
      // Predicated region
      $region41: #{_hitnet_forward_impl.13} parent=39 // pred_check
        %p524 = pneg %p150
      $region42: #{_hitnet_forward_impl.13} parent=39 // pred_check_branch
        %526 = sbr.rel (%p524) target = $region44
      $region43: #{_hitnet_forward_impl.13} parent=39 // pred_region
        %s527 = smul.u32 8, %s26
        %p528 = scmp.lt.s32.totalorder %s24, 1
        %s529 = scalar_select %p528, %s24, 1
        %p530 = scmp.lt.s32.totalorder %s25, 3
        %s531 = scalar_select %p530, %s25, 3
        %p532 = scmp.lt.s32.totalorder %s527, 7
        %s533 = scalar_select %p532, %s527, 7
        %p534 = scmp.lt.s32.totalorder %s27, 0
        %s535 = scalar_select %p534, %s27, 0
        %s536 = sadd.s32 %s535, %s533
        %s537 = smul.addr %s531, 8
        %s538 = sadd.s32 %s536, %s537
        %s539 = smul.addr %s529, 32
        %s540 = sadd.s32 %s538, %s539
        %s541 = smul.addr %s540, 8
        %s542 = scalar_lea.vmem %s3, %s541
      $region44: #{_hitnet_forward_impl.13} parent=39 // pred_fallthru
        _
    $region40: #{_hitnet_forward_impl.13} parent=5 // pred_fallthru
      _
  $region6: #{_hitnet_forward_impl.13} parent=0 // loop_footer
    %s13 = sadd.s32 1, %s9
  $region7: #{_hitnet_forward_impl.13} parent=0 // loop_footer_branch
    %8 = sbr.rel target = $region3
  $region8: #{_hitnet_forward_impl.13} parent=0 // loop_exit
    _

</llo_original>
